<compile_context>
chip_gen: v6e
topology: v6e:2x2x1
jax: 0.10.0
libtpu: 0.0.40
codegen_flags: <defaults>
</compile_context>

<pallas_src>
import math
import numpy as np
import jax
import jax.numpy as jnp
from jax.experimental import pallas as pl
from jax.experimental.pallas import tpu as pltpu

F32 = jnp.float32
NEG_INF = -1e30  # finite large-negative mask value (safe with row-max subtraction)


def _vmem():
    return pl.BlockSpec(memory_space=pltpu.MemorySpace.VMEM)


# --------------------------------------------------------------------------------------
# In-kernel helpers (traced inside the Pallas kernels, not separate pallas_calls)
# --------------------------------------------------------------------------------------

def _layernorm(x, g, b, eps=1e-5):
    mu = jnp.mean(x, axis=-1, keepdims=True)
    var = jnp.mean((x - mu) ** 2, axis=-1, keepdims=True)
    return (x - mu) * jax.lax.rsqrt(var + eps) * g + b


def _multi_head_attention(xq, xkv, mask, wqkv_ref, bqkv_ref, wo_ref, bo_ref, num_heads):
    """Multi-head attention on flattened sequences.

    xq:   [Mq, D] f32,  xkv: [Mk, D] f32
    mask: [Mq, Mk] additive (0 / NEG_INF) -- block-diagonal so all B*C sequences
          are processed in one shot.
    wqkv_ref: [3, H, D, Dh] per-head Q/K/V projection weights (leading-dim indexed,
              avoids unaligned lane slicing since Dh=8 < 128).
    bqkv_ref: [3, H, 1, Dh];  wo_ref: [H, Dh, D];  bo_ref: [1, D].
    Returns the attention output after the output projection: [Mq, D].
    """
    dh = wqkv_ref.shape[3]
    scale = 1.0 / math.sqrt(dh)
    acc = None
    for h in range(num_heads):
        qh = jnp.dot(xq, wqkv_ref[0, h], preferred_element_type=jnp.float32) + bqkv_ref[0, h]
        kh = jnp.dot(xkv, wqkv_ref[1, h], preferred_element_type=jnp.float32) + bqkv_ref[1, h]
        vh = jnp.dot(xkv, wqkv_ref[2, h], preferred_element_type=jnp.float32) + bqkv_ref[2, h]
        # scores = q @ k^T * scale + additive mask
        s = jax.lax.dot_general(qh, kh, (((1,), (1,)), ((), ())),
                                preferred_element_type=jnp.float32) * scale
        s = s + mask
        s = s - jnp.max(s, axis=-1, keepdims=True)
        p = jnp.exp(s)
        p = p * pl.reciprocal(jnp.sum(p, axis=-1, keepdims=True), approx=True)
        oh = jnp.dot(p, vh, preferred_element_type=jnp.float32)          # [Mq, Dh]
        part = jnp.dot(oh, wo_ref[h], preferred_element_type=jnp.float32)  # head-merge folded
        acc = part if acc is None else acc + part                          # into out-projection
    return acc + bo_ref[...]


# --------------------------------------------------------------------------------------
# Pallas kernels
# --------------------------------------------------------------------------------------

def _embed_encoder_kernel(xc_ref, xpr_ref, rep_ref, shift_ref, first_ref,
                          emb_w_ref, emb_b_ref, sos_ref, pe_ref,
                          xbias_ref, xpn_ref, mean_ref, std_ref):
    """Fused: instance-norm (over L) + patch embedding + sos-shift + positional encoding.

    xc:    [BC, L]         raw channel-independent series
    xpr:   [BC*S, P]       raw (un-normalized) patches
    rep:   [BC*S, BC]      0/1 group-repeat operator (row r -> group r//S)
    shift: [BC*S, BC*S]    0/1 "shift down by one inside each group, drop last" operator
    first: [BC*S, 1]       1.0 at the first patch of each group (gets the sos token)
    emb_w: [P, D], emb_b: [1, D], sos: [1, D], pe: [BC*S, D] (pos. encoding per row)
    """
    xc = xc_ref[...].astype(jnp.float32)
    mu = jnp.mean(xc, axis=-1, keepdims=True)                      # [BC, 1]
    var = jnp.mean((xc - mu) ** 2, axis=-1, keepdims=True)         # unbiased=False
    std = jnp.sqrt(var + 1e-5)
    rep = rep_ref[...]
    mu_r = jnp.dot(rep, mu, preferred_element_type=jnp.float32)    # [BC*S, 1]
    std_r = jnp.dot(rep, std, preferred_element_type=jnp.float32)
    mean_ref[...] = mu_r
    std_ref[...] = std_r

    xpn = (xpr_ref[...].astype(jnp.float32) - mu_r) / std_r        # normalized patches
    xpn_ref[...] = xpn

    emb = jnp.dot(xpn, emb_w_ref[...], preferred_element_type=jnp.float32) + emb_b_ref[...]
    # AddSosTokenAndDropLast expressed as a constant linear operator + sos insertion
    shifted = jnp.dot(shift_ref[...], emb, preferred_element_type=jnp.float32)
    xbias_ref[...] = (shifted + first_ref[...] * sos_ref[...] + pe_ref[...]).astype(xbias_ref.dtype)


def _embed_noise_kernel(xpn_ref, noise_ref, ca_ref, cb_ref, emb_w_ref, emb_b_ref, pe_ref, o_ref):
    """Fused: diffusion forward mix + patch embedding + positional encoding."""
    mix = ca_ref[...] * xpn_ref[...].astype(jnp.float32) + cb_ref[...] * noise_ref[...].astype(jnp.float32)
    emb = jnp.dot(mix, emb_w_ref[...], preferred_element_type=jnp.float32) + emb_b_ref[...]
    o_ref[...] = (emb + pe_ref[...]).astype(o_ref.dtype)


def _make_encoder_block_kernel(num_heads):
    def kernel(x_ref, mask_ref, wqkv_ref, bqkv_ref, wo_ref, bo_ref,
               ln1g_ref, ln1b_ref, w1_ref, b1_ref, w2_ref, b2_ref,
               ln2g_ref, ln2b_ref, o_ref):
        x = x_ref[...].astype(jnp.float32)                                      # [BC*S, D]
        attn = _multi_head_attention(x, x, mask_ref[...], wqkv_ref, bqkv_ref,
                                     wo_ref, bo_ref, num_heads)
        h = _layernorm(x + attn, ln1g_ref[...], ln1b_ref[...])
        f = jnp.maximum(jnp.dot(h, w1_ref[...], preferred_element_type=jnp.float32) + b1_ref[...], 0.0)
        f = jnp.dot(f, w2_ref[...], preferred_element_type=jnp.float32) + b2_ref[...]
        o_ref[...] = _layernorm(h + f, ln2g_ref[...], ln2b_ref[...]).astype(o_ref.dtype)
    return kernel


def _make_decoder_block_kernel(num_heads):
    def kernel(q_ref, kv_ref, tgt_mask_ref, src_mask_ref,
               s_wqkv_ref, s_bqkv_ref, s_wo_ref, s_bo_ref,
               c_wqkv_ref, c_bqkv_ref, c_wo_ref, c_bo_ref,
               ln1g_ref, ln1b_ref, ln2g_ref, ln2b_ref, ln3g_ref, ln3b_ref,
               w1_ref, b1_ref, w2_ref, b2_ref, o_ref):
        x = q_ref[...].astype(jnp.float32)                                      # [BC*S, D]
        kv = kv_ref[...].astype(jnp.float32)
        # masked self-attention (noisy patches attend only to themselves)
        a = _multi_head_attention(x, x, tgt_mask_ref[...], s_wqkv_ref, s_bqkv_ref,
                                  s_wo_ref, s_bo_ref, num_heads)
        x = _layernorm(x + a, ln1g_ref[...], ln1b_ref[...])
        # causal cross-attention against the encoder output
        a = _multi_head_attention(x, kv, src_mask_ref[...], c_wqkv_ref, c_bqkv_ref,
                                  c_wo_ref, c_bo_ref, num_heads)
        x = _layernorm(x + a, ln2g_ref[...], ln2b_ref[...])
        # feed-forward
        f = jnp.maximum(jnp.dot(x, w1_ref[...], preferred_element_type=jnp.float32) + b1_ref[...], 0.0)
        f = jnp.dot(f, w2_ref[...], preferred_element_type=jnp.float32) + b2_ref[...]
        o_ref[...] = _layernorm(x + f, ln3g_ref[...], ln3b_ref[...]).astype(o_ref.dtype)
    return kernel


def _head_kernel(q_ref, g_ref, b_ref, w_ref, wb_ref, mean_ref, std_ref, o_ref):
    """Fused: final decoder LayerNorm + ARFlattenHead linear + de-normalization."""
    x = _layernorm(q_ref[...].astype(jnp.float32), g_ref[...], b_ref[...])
    y = jnp.dot(x, w_ref[...], preferred_element_type=jnp.float32) + wb_ref[...]   # [BC*S, P]
    o_ref[...] = (y * std_ref[...] + mean_ref[...]).astype(o_ref.dtype)


# --------------------------------------------------------------------------------------
# pallas_call wrappers
# --------------------------------------------------------------------------------------

def embed_encoder_input(xc, x_patch_raw, rep, shift, first, emb_w, emb_b, sos, pe_rows):
    BC, _ = xc.shape
    BCS, P = x_patch_raw.shape
    D = emb_w.shape[1]
    return pl.pallas_call(
        _embed_encoder_kernel,
        out_shape=(jax.ShapeDtypeStruct((BCS, D), F32),
                   jax.ShapeDtypeStruct((BCS, P), F32),
                   jax.ShapeDtypeStruct((BCS, 1), F32),
                   jax.ShapeDtypeStruct((BCS, 1), F32)),
        in_specs=[_vmem()] * 9,
        out_specs=(_vmem(), _vmem(), _vmem(), _vmem()),
    )(xc, x_patch_raw, rep, shift, first, emb_w, emb_b, sos, pe_rows)


def embed_noisy_patches(x_patch, noise, coef_a, coef_b, emb_w, emb_b, pe_rows):
    BCS, _ = x_patch.shape
    D = emb_w.shape[1]
    return pl.pallas_call(
        _embed_noise_kernel,
        out_shape=jax.ShapeDtypeStruct((BCS, D), F32),
        in_specs=[_vmem()] * 7,
        out_specs=_vmem(),
    )(x_patch, noise, coef_a, coef_b, emb_w, emb_b, pe_rows)


def encoder_block(x, mask, p, num_heads):
    BCS, D = x.shape
    return pl.pallas_call(
        _make_encoder_block_kernel(num_heads),
        out_shape=jax.ShapeDtypeStruct((BCS, D), F32),
        in_specs=[_vmem()] * 14,
        out_specs=_vmem(),
    )(x, mask, p['wqkv'], p['bqkv'], p['wo_h'], p['bo'],
      p['ln1_g'], p['ln1_b'], p['ffn_w1'], p['ffn_b1'], p['ffn_w2'], p['ffn_b2'],
      p['ln2_g'], p['ln2_b'])


def decoder_block(q, kv, tgt_mask, src_mask, p, num_heads):
    BCS, D = q.shape
    return pl.pallas_call(
        _make_decoder_block_kernel(num_heads),
        out_shape=jax.ShapeDtypeStruct((BCS, D), F32),
        in_specs=[_vmem()] * 22,
        out_specs=_vmem(),
    )(q, kv, tgt_mask, src_mask,
      p['self']['wqkv'], p['self']['bqkv'], p['self']['wo_h'], p['self']['bo'],
      p['cross']['wqkv'], p['cross']['bqkv'], p['cross']['wo_h'], p['cross']['bo'],
      p['ln1_g'], p['ln1_b'], p['ln2_g'], p['ln2_b'], p['ln3_g'], p['ln3_b'],
      p['ffn_w1'], p['ffn_b1'], p['ffn_w2'], p['ffn_b2'])


def projection_head(q, g, b, w, wb, mean_rows, std_rows):
    BCS, _ = q.shape
    P = w.shape[1]
    return pl.pallas_call(
        _head_kernel,
        out_shape=jax.ShapeDtypeStruct((BCS, P), F32),
        in_specs=[_vmem()] * 7,
        out_specs=_vmem(),
    )(q, g, b, w, wb, mean_rows, std_rows)


# --------------------------------------------------------------------------------------
# Constants: positional encoding, diffusion schedule
# --------------------------------------------------------------------------------------

def sinusoidal_pe(max_len, d_model):
    position = np.arange(max_len)[:, None].astype(np.float64)
    div_term = np.exp(np.arange(0, d_model, 2).astype(np.float64) * (-math.log(10000.0) / d_model))
    pe = np.zeros((max_len, d_model), dtype=np.float64)
    pe[:, 0::2] = np.sin(position * div_term)
    pe[:, 1::2] = np.cos(position * div_term)
    return jnp.asarray(pe, dtype=F32)


def cosine_alpha_bars(T, s=0.008):
    steps = np.arange(T + 1, dtype=np.float64)
    f = np.cos(((steps / T) + s) / (1 + s) * np.pi / 2) ** 2
    alpha_bar = f / f[0]
    betas = np.clip(1.0 - alpha_bar[1:] / alpha_bar[:-1], 0.0, 0.999)
    alphas = 1.0 - betas
    return jnp.asarray(np.cumprod(alphas), dtype=F32)


# --------------------------------------------------------------------------------------
# Parameter init (deterministic, synthetic)
# --------------------------------------------------------------------------------------

def _init_linear(key, fan_in, fan_out):
    k1, k2 = jax.random.split(key)
    lim = 1.0 / math.sqrt(fan_in)
    w = jax.random.uniform(k1, (fan_in, fan_out), dtype=F32, minval=-lim, maxval=lim)
    b = jax.random.uniform(k2, (1, fan_out), dtype=F32, minval=-lim, maxval=lim)
    return w, b


def _ln_params(D):
    return jnp.ones((1, D), F32), jnp.zeros((1, D), F32)


def _init_mha(key, D, H):
    Dh = D // H
    ks = jax.random.split(key, 4)
    wq, bq = _init_linear(ks[0], D, D)
    wk, bk = _init_linear(ks[1], D, D)
    wv, bv = _init_linear(ks[2], D, D)
    wo, bo = _init_linear(ks[3], D, D)

    def split_cols(a):  # [., D] -> [H, ., Dh]
        return jnp.stack([a[:, h * Dh:(h + 1) * Dh] for h in range(H)], axis=0)

    wqkv = jnp.stack([split_cols(wq), split_cols(wk), split_cols(wv)], axis=0)  # [3, H, D, Dh]
    bqkv = jnp.stack([split_cols(bq), split_cols(bk), split_cols(bv)], axis=0)  # [3, H, 1, Dh]
    wo_h = jnp.stack([wo[h * Dh:(h + 1) * Dh, :] for h in range(H)], axis=0)    # [H, Dh, D]
    return dict(wqkv=wqkv, bqkv=bqkv, wo_h=wo_h, bo=bo)


def _init_enc_layer(key, D, FF, H):
    k1, k2, k3 = jax.random.split(key, 3)
    w1, b1 = _init_linear(k2, D, FF)
    w2, b2 = _init_linear(k3, FF, D)
    g1, bb1 = _ln_params(D)
    g2, bb2 = _ln_params(D)
    p = _init_mha(k1, D, H)
    p.update(ln1_g=g1, ln1_b=bb1, ffn_w1=w1, ffn_b1=b1, ffn_w2=w2, ffn_b2=b2,
             ln2_g=g2, ln2_b=bb2)
    return p


def _init_dec_layer(key, D, FF, H):
    k1, k2, k3, k4 = jax.random.split(key, 4)
    w1, b1 = _init_linear(k3, D, FF)
    w2, b2 = _init_linear(k4, FF, D)
    g1, bb1 = _ln_params(D)
    g2, bb2 = _ln_params(D)
    g3, bb3 = _ln_params(D)
    return {'self': _init_mha(k1, D, H), 'cross': _init_mha(k2, D, H),
            'ln1_g': g1, 'ln1_b': bb1, 'ln2_g': g2, 'ln2_b': bb2,
            'ln3_g': g3, 'ln3_b': bb3,
            'ffn_w1': w1, 'ffn_b1': b1, 'ffn_w2': w2, 'ffn_b2': b2}


def init_params(key, cfg):
    D, P, FF, H = cfg['d_model'], cfg['patch_len'], cfg['d_ff'], cfg['n_heads']
    assert D % H == 0
    n_keys = 3 + cfg['e_layers'] + cfg['d_layers']
    keys = list(jax.random.split(key, n_keys))
    ki = iter(keys)
    emb_w, emb_b = _init_linear(next(ki), P, D)    # PatchEmbedding: Linear(patch_len, d_model)
    proj_w, proj_b = _init_linear(next(ki), D, P)  # ARFlattenHead:  Linear(d_model, patch_len)
    sos = jax.random.normal(next(ki), (1, D), dtype=F32)
    encoder = [_init_enc_layer(next(ki), D, FF, H) for _ in range(cfg['e_layers'])]
    decoder = [_init_dec_layer(next(ki), D, FF, H) for _ in range(cfg['d_layers'])]
    gf, bf = _ln_params(D)
    return dict(emb_w=emb_w, emb_b=emb_b, proj_w=proj_w, proj_b=proj_b, sos=sos,
                encoder=encoder, decoder=decoder, dec_norm_g=gf, dec_norm_b=bf,
                pe=sinusoidal_pe(512, D),
                alpha_bars=cosine_alpha_bars(cfg['time_steps']))


# --------------------------------------------------------------------------------------
# Full pretrain forward (Model.forward with task_name == 'pretrain')
# --------------------------------------------------------------------------------------

def timedart_pretrain(x, params, cfg, rng):
    B, L, C = x.shape
    P, stride, H = cfg['patch_len'], cfg['stride'], cfg['n_heads']
    S = (L - P) // stride + 1
    BC = B * C
    BCS = BC * S

    # ChannelIndependence layout: [B, L, C] -> [B*C, L]
    xc = jnp.transpose(x, (0, 2, 1)).reshape(BC, L)

    # Patch / unfold -> [BC*S, P] (free reshape since stride == patch_len; gather fallback)
    if stride == P:
        x_patch_raw = xc.reshape(BCS, P)
    else:
        idx = np.arange(S)[:, None] * stride + np.arange(P)[None, :]
        x_patch_raw = xc[:, idx].reshape(BCS, P)

    # Static helper operators / masks built on host (constants under jit)
    rows = np.arange(BCS)
    rep = jnp.asarray((rows[:, None] // S) == np.arange(BC)[None, :], dtype=F32)        # [BCS, BC]
    shift = jnp.asarray(((rows[:, None] - 1) == rows[None, :]) & (rows[:, None] % S != 0),
                        dtype=F32)                                                       # [BCS, BCS]
    first = jnp.asarray(rows % S == 0, dtype=F32)[:, None]                               # [BCS, 1]
    same_group = (rows[:, None] // S) == (rows[None, :] // S)
    causal_mask = jnp.asarray(
        np.where(same_group & (rows[None, :] <= rows[:, None]), 0.0, NEG_INF), dtype=F32)
    self_mask = jnp.asarray(
        np.where(rows[:, None] == rows[None, :], 0.0, NEG_INF), dtype=F32)
    pe_rows = jnp.tile(params['pe'][:S], (BC, 1))                                        # [BCS, D]

    # 1) fused: instance-norm + patch embedding + sos-shift + positional encoding
    x_bias, x_patch, mean_rows, std_rows = embed_encoder_input(
        xc, x_patch_raw, rep, shift, first,
        params['emb_w'], params['emb_b'], params['sos'], pe_rows)

    # 2) causal transformer encoder (backbone == 'Transformer'), one fused kernel per block
    x_out = x_bias
    for lp in params['encoder']:
        x_out = encoder_block(x_out, causal_mask, lp, H)

    # 3) diffusion forward process coefficients (per B*C sample)
    k_t, k_n = jax.random.split(rng)
    t = jax.random.randint(k_t, (BC,), 0, cfg['time_steps'])
    noise = jax.random.normal(k_n, (BCS, P), dtype=F32)
    ab = params['alpha_bars'][t]
    coef_a = jnp.repeat(jnp.sqrt(ab)[:, None], S, axis=0)        # [BCS, 1]
    coef_b = jnp.repeat(jnp.sqrt(1.0 - ab)[:, None], S, axis=0)

    # 4) fused: diffusion mix + patch embedding + positional encoding (no sos here)
    nx_emb = embed_noisy_patches(x_patch, noise, coef_a, coef_b,
                                 params['emb_w'], params['emb_b'], pe_rows)

    # 5) denoising patch decoder (self-only tgt mask, causal cross mask), fused per block
    q = nx_emb
    for lp in params['decoder']:
        q = decoder_block(q, x_out, self_mask, causal_mask, lp, H)

    # 6) fused: final LayerNorm + ARFlattenHead projection + de-normalization
    out_bc = projection_head(q, params['dec_norm_g'], params['dec_norm_b'],
                             params['proj_w'], params['proj_b'], mean_rows, std_rows)

    # [BC*S, P] -> [B, C, S*P] -> [B, L, C]
    pred = jnp.transpose(out_bc.reshape(B, C, S * P), (0, 2, 1))
    return pred


# --------------------------------------------------------------------------------------

if __name__ == "__main__":
    cfg = dict(input_len=16, patch_len=4, stride=4, d_model=32, n_heads=4, d_ff=64,
               e_layers=2, d_layers=1, time_steps=16, num_features=3, batch=2)

    key = jax.random.PRNGKey(0)
    k_param, k_x, k_diff = jax.random.split(key, 3)

    params = init_params(k_param, cfg)
    x = jax.random.normal(k_x, (cfg['batch'], cfg['input_len'], cfg['num_features']), dtype=F32)

    fwd = jax.jit(lambda xx, pp, rr: timedart_pretrain(xx, pp, cfg, rr))
    out = jax.block_until_ready(fwd(x, params, k_diff))

    assert out.shape == (cfg['batch'], cfg['input_len'], cfg['num_features'])
    assert bool(jnp.all(jnp.isfinite(out)))
    print("KERNEL_OK")
</pallas_src>

<mosaic_0001>
module attributes {stable_mosaic.version = 11 : i64} {
  func.func @_embed_encoder_kernel(%arg0: memref<6x16xf32, #tpu.memory_space<vmem>>, %arg1: memref<24x4xf32, #tpu.memory_space<vmem>>, %arg2: memref<24x6xf32, #tpu.memory_space<vmem>>, %arg3: memref<24x24xf32, #tpu.memory_space<vmem>>, %arg4: memref<24x1xf32, #tpu.memory_space<vmem>>, %arg5: memref<4x32xf32, #tpu.memory_space<vmem>>, %arg6: memref<1x32xf32, #tpu.memory_space<vmem>>, %arg7: memref<1x32xf32, #tpu.memory_space<vmem>>, %arg8: memref<24x32xf32, #tpu.memory_space<vmem>>, %arg9: memref<24x32xf32, #tpu.memory_space<vmem>>, %arg10: memref<24x4xf32, #tpu.memory_space<vmem>>, %arg11: memref<24x1xf32, #tpu.memory_space<vmem>>, %arg12: memref<24x1xf32, #tpu.memory_space<vmem>>) attributes {dimension_semantics = [], scalar_prefetch = 0 : i64, scratch_operands = 0 : i64, tpu.core_type = #tpu.core_type<tc>} {
    %c0 = arith.constant 0 : index
    %c0_0 = arith.constant 0 : index
    %0 = vector.load %arg0[%c0, %c0_0] : memref<6x16xf32, #tpu.memory_space<vmem>>, vector<6x16xf32>
    %cst = arith.constant dense<0.000000e+00> : vector<6xf32>
    %1 = vector.multi_reduction <add>, %0, %cst [1] : vector<6x16xf32> to vector<6xf32>
    %2 = vector.shape_cast %1 : vector<6xf32> to vector<6x1xf32>
    %cst_1 = arith.constant 1.600000e+01 : f32
    %3 = vector.broadcast %cst_1 : f32 to vector<6x1xf32>
    %4 = arith.divf %2, %3 : vector<6x1xf32>
    %5 = vector.broadcast %4 : vector<6x1xf32> to vector<6x16xf32>
    %6 = arith.subf %0, %5 : vector<6x16xf32>
    %7 = arith.mulf %6, %6 : vector<6x16xf32>
    %cst_2 = arith.constant dense<0.000000e+00> : vector<6xf32>
    %8 = vector.multi_reduction <add>, %7, %cst_2 [1] : vector<6x16xf32> to vector<6xf32>
    %9 = vector.shape_cast %8 : vector<6xf32> to vector<6x1xf32>
    %cst_3 = arith.constant 1.600000e+01 : f32
    %10 = vector.broadcast %cst_3 : f32 to vector<6x1xf32>
    %11 = arith.divf %9, %10 : vector<6x1xf32>
    %cst_4 = arith.constant 9.99999974E-6 : f32
    %12 = vector.broadcast %cst_4 : f32 to vector<6x1xf32>
    %13 = arith.addf %11, %12 : vector<6x1xf32>
    %14 = math.sqrt %13 : vector<6x1xf32>
    %c0_5 = arith.constant 0 : index
    %c0_6 = arith.constant 0 : index
    %15 = vector.load %arg2[%c0_5, %c0_6] : memref<24x6xf32, #tpu.memory_space<vmem>>, vector<24x6xf32>
    %cst_7 = arith.constant dense<0.000000e+00> : vector<24x1xf32>
    %16 = tpu.matmul %15, %4, %cst_7 {dimension_numbers = #tpu.dot_dimension_numbers<[1], [0], [0], [1], [0, 0, 1, 1], [], []>} : vector<24x6xf32>, vector<6x1xf32>, vector<24x1xf32> -> vector<24x1xf32>
    %cst_8 = arith.constant dense<0.000000e+00> : vector<24x1xf32>
    %17 = tpu.matmul %15, %14, %cst_8 {dimension_numbers = #tpu.dot_dimension_numbers<[1], [0], [0], [1], [0, 0, 1, 1], [], []>} : vector<24x6xf32>, vector<6x1xf32>, vector<24x1xf32> -> vector<24x1xf32>
    %c0_9 = arith.constant 0 : index
    %c0_10 = arith.constant 0 : index
    %18 = vector.load %arg11[%c0_9, %c0_10] : memref<24x1xf32, #tpu.memory_space<vmem>>, vector<24x1xf32>
    tpu.vector_store %arg11[%c0_9, %c0_10], %16 {strides = array<i32>} : memref<24x1xf32, #tpu.memory_space<vmem>>, vector<24x1xf32>,
    %c0_11 = arith.constant 0 : index
    %c0_12 = arith.constant 0 : index
    %19 = vector.load %arg12[%c0_11, %c0_12] : memref<24x1xf32, #tpu.memory_space<vmem>>, vector<24x1xf32>
    tpu.vector_store %arg12[%c0_11, %c0_12], %17 {strides = array<i32>} : memref<24x1xf32, #tpu.memory_space<vmem>>, vector<24x1xf32>,
    %c0_13 = arith.constant 0 : index
    %c0_14 = arith.constant 0 : index
    %20 = vector.load %arg1[%c0_13, %c0_14] : memref<24x4xf32, #tpu.memory_space<vmem>>, vector<24x4xf32>
    %21 = vector.broadcast %16 : vector<24x1xf32> to vector<24x4xf32>
    %22 = arith.subf %20, %21 : vector<24x4xf32>
    %23 = vector.broadcast %17 : vector<24x1xf32> to vector<24x4xf32>
    %24 = arith.divf %22, %23 : vector<24x4xf32>
    %c0_15 = arith.constant 0 : index
    %c0_16 = arith.constant 0 : index
    %25 = vector.load %arg10[%c0_15, %c0_16] : memref<24x4xf32, #tpu.memory_space<vmem>>, vector<24x4xf32>
    tpu.vector_store %arg10[%c0_15, %c0_16], %24 {strides = array<i32>} : memref<24x4xf32, #tpu.memory_space<vmem>>, vector<24x4xf32>,
    %c0_17 = arith.constant 0 : index
    %c0_18 = arith.constant 0 : index
    %26 = vector.load %arg5[%c0_17, %c0_18] : memref<4x32xf32, #tpu.memory_space<vmem>>, vector<4x32xf32>
    %cst_19 = arith.constant dense<0.000000e+00> : vector<24x32xf32>
    %27 = tpu.matmul %24, %26, %cst_19 {dimension_numbers = #tpu.dot_dimension_numbers<[1], [0], [0], [1], [0, 0, 1, 1], [], []>} : vector<24x4xf32>, vector<4x32xf32>, vector<24x32xf32> -> vector<24x32xf32>
    %c0_20 = arith.constant 0 : index
    %c0_21 = arith.constant 0 : index
    %28 = vector.load %arg6[%c0_20, %c0_21] : memref<1x32xf32, #tpu.memory_space<vmem>>, vector<1x32xf32>
    %29 = vector.broadcast %28 : vector<1x32xf32> to vector<24x32xf32>
    %30 = arith.addf %27, %29 : vector<24x32xf32>
    %c0_22 = arith.constant 0 : index
    %c0_23 = arith.constant 0 : index
    %31 = vector.load %arg3[%c0_22, %c0_23] : memref<24x24xf32, #tpu.memory_space<vmem>>, vector<24x24xf32>
    %cst_24 = arith.constant dense<0.000000e+00> : vector<24x32xf32>
    %32 = tpu.matmul %31, %30, %cst_24 {dimension_numbers = #tpu.dot_dimension_numbers<[1], [0], [0], [1], [0, 0, 1, 1], [], []>} : vector<24x24xf32>, vector<24x32xf32>, vector<24x32xf32> -> vector<24x32xf32>
    %c0_25 = arith.constant 0 : index
    %c0_26 = arith.constant 0 : index
    %33 = vector.load %arg4[%c0_25, %c0_26] : memref<24x1xf32, #tpu.memory_space<vmem>>, vector<24x1xf32>
    %c0_27 = arith.constant 0 : index
    %c0_28 = arith.constant 0 : index
    %34 = vector.load %arg7[%c0_27, %c0_28] : memref<1x32xf32, #tpu.memory_space<vmem>>, vector<1x32xf32>
    %35 = vector.broadcast %33 : vector<24x1xf32> to vector<24x32xf32>
    %36 = vector.broadcast %34 : vector<1x32xf32> to vector<24x32xf32>
    %37 = arith.mulf %35, %36 : vector<24x32xf32>
    %38 = arith.addf %32, %37 : vector<24x32xf32>
    %c0_29 = arith.constant 0 : index
    %c0_30 = arith.constant 0 : index
    %39 = vector.load %arg8[%c0_29, %c0_30] : memref<24x32xf32, #tpu.memory_space<vmem>>, vector<24x32xf32>
    %40 = arith.addf %38, %39 : vector<24x32xf32>
    %c0_31 = arith.constant 0 : index
    %c0_32 = arith.constant 0 : index
    %41 = vector.load %arg9[%c0_31, %c0_32] : memref<24x32xf32, #tpu.memory_space<vmem>>, vector<24x32xf32>
    tpu.vector_store %arg9[%c0_31, %c0_32], %40 {strides = array<i32>} : memref<24x32xf32, #tpu.memory_space<vmem>>, vector<24x32xf32>,
    return
  }
}

module attributes {stable_mosaic.version = 11 : i64} {
  func.func @_embed_noise_kernel(%arg0: memref<24x4xf32, #tpu.memory_space<vmem>>, %arg1: memref<24x4xf32, #tpu.memory_space<vmem>>, %arg2: memref<24x1xf32, #tpu.memory_space<vmem>>, %arg3: memref<24x1xf32, #tpu.memory_space<vmem>>, %arg4: memref<4x32xf32, #tpu.memory_space<vmem>>, %arg5: memref<1x32xf32, #tpu.memory_space<vmem>>, %arg6: memref<24x32xf32, #tpu.memory_space<vmem>>, %arg7: memref<24x32xf32, #tpu.memory_space<vmem>>) attributes {dimension_semantics = [], scalar_prefetch = 0 : i64, scratch_operands = 0 : i64, tpu.core_type = #tpu.core_type<tc>} {
    %c0 = arith.constant 0 : index
    %c0_0 = arith.constant 0 : index
    %0 = vector.load %arg2[%c0, %c0_0] : memref<24x1xf32, #tpu.memory_space<vmem>>, vector<24x1xf32>
    %c0_1 = arith.constant 0 : index
    %c0_2 = arith.constant 0 : index
    %1 = vector.load %arg0[%c0_1, %c0_2] : memref<24x4xf32, #tpu.memory_space<vmem>>, vector<24x4xf32>
    %2 = vector.broadcast %0 : vector<24x1xf32> to vector<24x4xf32>
    %3 = arith.mulf %2, %1 : vector<24x4xf32>
    %c0_3 = arith.constant 0 : index
    %c0_4 = arith.constant 0 : index
    %4 = vector.load %arg3[%c0_3, %c0_4] : memref<24x1xf32, #tpu.memory_space<vmem>>, vector<24x1xf32>
    %c0_5 = arith.constant 0 : index
    %c0_6 = arith.constant 0 : index
    %5 = vector.load %arg1[%c0_5, %c0_6] : memref<24x4xf32, #tpu.memory_space<vmem>>, vector<24x4xf32>
    %6 = vector.broadcast %4 : vector<24x1xf32> to vector<24x4xf32>
    %7 = arith.mulf %6, %5 : vector<24x4xf32>
    %8 = arith.addf %3, %7 : vector<24x4xf32>
    %c0_7 = arith.constant 0 : index
    %c0_8 = arith.constant 0 : index
    %9 = vector.load %arg4[%c0_7, %c0_8] : memref<4x32xf32, #tpu.memory_space<vmem>>, vector<4x32xf32>
    %cst = arith.constant dense<0.000000e+00> : vector<24x32xf32>
    %10 = tpu.matmul %8, %9, %cst {dimension_numbers = #tpu.dot_dimension_numbers<[1], [0], [0], [1], [0, 0, 1, 1], [], []>} : vector<24x4xf32>, vector<4x32xf32>, vector<24x32xf32> -> vector<24x32xf32>
    %c0_9 = arith.constant 0 : index
    %c0_10 = arith.constant 0 : index
    %11 = vector.load %arg5[%c0_9, %c0_10] : memref<1x32xf32, #tpu.memory_space<vmem>>, vector<1x32xf32>
    %12 = vector.broadcast %11 : vector<1x32xf32> to vector<24x32xf32>
    %13 = arith.addf %10, %12 : vector<24x32xf32>
    %c0_11 = arith.constant 0 : index
    %c0_12 = arith.constant 0 : index
    %14 = vector.load %arg6[%c0_11, %c0_12] : memref<24x32xf32, #tpu.memory_space<vmem>>, vector<24x32xf32>
    %15 = arith.addf %13, %14 : vector<24x32xf32>
    %c0_13 = arith.constant 0 : index
    %c0_14 = arith.constant 0 : index
    %16 = vector.load %arg7[%c0_13, %c0_14] : memref<24x32xf32, #tpu.memory_space<vmem>>, vector<24x32xf32>
    tpu.vector_store %arg7[%c0_13, %c0_14], %15 {strides = array<i32>} : memref<24x32xf32, #tpu.memory_space<vmem>>, vector<24x32xf32>,
    return
  }
}

module attributes {stable_mosaic.version = 11 : i64} {
  func.func @kernel(%arg0: memref<24x32xf32, #tpu.memory_space<vmem>>, %arg1: memref<24x24xf32, #tpu.memory_space<vmem>>, %arg2: memref<3x4x32x8xf32, #tpu.memory_space<vmem>>, %arg3: memref<3x4x1x8xf32, #tpu.memory_space<vmem>>, %arg4: memref<4x8x32xf32, #tpu.memory_space<vmem>>, %arg5: memref<1x32xf32, #tpu.memory_space<vmem>>, %arg6: memref<1x32xf32, #tpu.memory_space<vmem>>, %arg7: memref<1x32xf32, #tpu.memory_space<vmem>>, %arg8: memref<32x64xf32, #tpu.memory_space<vmem>>, %arg9: memref<1x64xf32, #tpu.memory_space<vmem>>, %arg10: memref<64x32xf32, #tpu.memory_space<vmem>>, %arg11: memref<1x32xf32, #tpu.memory_space<vmem>>, %arg12: memref<1x32xf32, #tpu.memory_space<vmem>>, %arg13: memref<1x32xf32, #tpu.memory_space<vmem>>, %arg14: memref<24x32xf32, #tpu.memory_space<vmem>>) attributes {dimension_semantics = [], scalar_prefetch = 0 : i64, scratch_operands = 0 : i64, tpu.core_type = #tpu.core_type<tc>} {
    %c0 = arith.constant 0 : index
    %c0_0 = arith.constant 0 : index
    %0 = vector.load %arg0[%c0, %c0_0] : memref<24x32xf32, #tpu.memory_space<vmem>>, vector<24x32xf32>
    %c0_1 = arith.constant 0 : index
    %c0_2 = arith.constant 0 : index
    %1 = vector.load %arg1[%c0_1, %c0_2] : memref<24x24xf32, #tpu.memory_space<vmem>>, vector<24x24xf32>
    %c0_3 = arith.constant 0 : index
    %c0_4 = arith.constant 0 : index
    %c0_5 = arith.constant 0 : index
    %c0_6 = arith.constant 0 : index
    %2 = vector.load %arg2[%c0_3, %c0_4, %c0_5, %c0_6] : memref<3x4x32x8xf32, #tpu.memory_space<vmem>>, vector<1x1x32x8xf32>
    %3 = vector.shape_cast %2 : vector<1x1x32x8xf32> to vector<32x8xf32>
    %cst = arith.constant dense<0.000000e+00> : vector<24x8xf32>
    %4 = tpu.matmul %0, %3, %cst {dimension_numbers = #tpu.dot_dimension_numbers<[1], [0], [0], [1], [0, 0, 1, 1], [], []>} : vector<24x32xf32>, vector<32x8xf32>, vector<24x8xf32> -> vector<24x8xf32>
    %c0_7 = arith.constant 0 : index
    %c0_8 = arith.constant 0 : index
    %c0_9 = arith.constant 0 : index
    %c0_10 = arith.constant 0 : index
    %5 = vector.load %arg3[%c0_7, %c0_8, %c0_9, %c0_10] : memref<3x4x1x8xf32, #tpu.memory_space<vmem>>, vector<1x1x1x8xf32>
    %6 = vector.shape_cast %5 : vector<1x1x1x8xf32> to vector<1x8xf32>
    %7 = vector.broadcast %6 : vector<1x8xf32> to vector<24x8xf32>
    %8 = arith.addf %4, %7 : vector<24x8xf32>
    %c1 = arith.constant 1 : index
    %c0_11 = arith.constant 0 : index
    %c0_12 = arith.constant 0 : index
    %c0_13 = arith.constant 0 : index
    %9 = vector.load %arg2[%c1, %c0_11, %c0_12, %c0_13] : memref<3x4x32x8xf32, #tpu.memory_space<vmem>>, vector<1x1x32x8xf32>
    %10 = vector.shape_cast %9 : vector<1x1x32x8xf32> to vector<32x8xf32>
    %cst_14 = arith.constant dense<0.000000e+00> : vector<24x8xf32>
    %11 = tpu.matmul %0, %10, %cst_14 {dimension_numbers = #tpu.dot_dimension_numbers<[1], [0], [0], [1], [0, 0, 1, 1], [], []>} : vector<24x32xf32>, vector<32x8xf32>, vector<24x8xf32> -> vector<24x8xf32>
    %c1_15 = arith.constant 1 : index
    %c0_16 = arith.constant 0 : index
    %c0_17 = arith.constant 0 : index
    %c0_18 = arith.constant 0 : index
    %12 = vector.load %arg3[%c1_15, %c0_16, %c0_17, %c0_18] : memref<3x4x1x8xf32, #tpu.memory_space<vmem>>, vector<1x1x1x8xf32>
    %13 = vector.shape_cast %12 : vector<1x1x1x8xf32> to vector<1x8xf32>
    %14 = vector.broadcast %13 : vector<1x8xf32> to vector<24x8xf32>
    %15 = arith.addf %11, %14 : vector<24x8xf32>
    %c2 = arith.constant 2 : index
    %c0_19 = arith.constant 0 : index
    %c0_20 = arith.constant 0 : index
    %c0_21 = arith.constant 0 : index
    %16 = vector.load %arg2[%c2, %c0_19, %c0_20, %c0_21] : memref<3x4x32x8xf32, #tpu.memory_space<vmem>>, vector<1x1x32x8xf32>
    %17 = vector.shape_cast %16 : vector<1x1x32x8xf32> to vector<32x8xf32>
    %cst_22 = arith.constant dense<0.000000e+00> : vector<24x8xf32>
    %18 = tpu.matmul %0, %17, %cst_22 {dimension_numbers = #tpu.dot_dimension_numbers<[1], [0], [0], [1], [0, 0, 1, 1], [], []>} : vector<24x32xf32>, vector<32x8xf32>, vector<24x8xf32> -> vector<24x8xf32>
    %c2_23 = arith.constant 2 : index
    %c0_24 = arith.constant 0 : index
    %c0_25 = arith.constant 0 : index
    %c0_26 = arith.constant 0 : index
    %19 = vector.load %arg3[%c2_23, %c0_24, %c0_25, %c0_26] : memref<3x4x1x8xf32, #tpu.memory_space<vmem>>, vector<1x1x1x8xf32>
    %20 = vector.shape_cast %19 : vector<1x1x1x8xf32> to vector<1x8xf32>
    %21 = vector.broadcast %20 : vector<1x8xf32> to vector<24x8xf32>
    %22 = arith.addf %18, %21 : vector<24x8xf32>
    %cst_27 = arith.constant dense<0.000000e+00> : vector<24x24xf32>
    %23 = tpu.matmul %8, %15, %cst_27 {dimension_numbers = #tpu.dot_dimension_numbers<[1], [1], [0], [0], [0, 0, 1, 0], [], []>} : vector<24x8xf32>, vector<24x8xf32>, vector<24x24xf32> -> vector<24x24xf32>
    %cst_28 = arith.constant 0.353553385 : f32
    %24 = vector.broadcast %cst_28 : f32 to vector<24x24xf32>
    %25 = arith.mulf %23, %24 : vector<24x24xf32>
    %26 = arith.addf %25, %1 : vector<24x24xf32>
    %cst_29 = arith.constant dense<0xFF800000> : vector<24xf32>
    %27 = vector.multi_reduction <maximumf>, %26, %cst_29 [1] : vector<24x24xf32> to vector<24xf32>
    %28 = vector.shape_cast %27 : vector<24xf32> to vector<24x1xf32>
    %29 = vector.broadcast %28 : vector<24x1xf32> to vector<24x24xf32>
    %30 = arith.subf %26, %29 : vector<24x24xf32>
    %31 = math.exp %30 : vector<24x24xf32>
    %cst_30 = arith.constant dense<0.000000e+00> : vector<24xf32>
    %32 = vector.multi_reduction <add>, %31, %cst_30 [1] : vector<24x24xf32> to vector<24xf32>
    %33 = vector.shape_cast %32 : vector<24xf32> to vector<24x1xf32>
    %34 = tpu.reciprocal %33 {approx = true} : vector<24x1xf32> -> vector<24x1xf32>
    %35 = vector.broadcast %34 : vector<24x1xf32> to vector<24x24xf32>
    %36 = arith.mulf %31, %35 : vector<24x24xf32>
    %cst_31 = arith.constant dense<0.000000e+00> : vector<24x8xf32>
    %37 = tpu.matmul %36, %22, %cst_31 {dimension_numbers = #tpu.dot_dimension_numbers<[1], [0], [0], [1], [0, 0, 1, 1], [], []>} : vector<24x24xf32>, vector<24x8xf32>, vector<24x8xf32> -> vector<24x8xf32>
    %c0_32 = arith.constant 0 : index
    %c0_33 = arith.constant 0 : index
    %c0_34 = arith.constant 0 : index
    %38 = vector.load %arg4[%c0_32, %c0_33, %c0_34] : memref<4x8x32xf32, #tpu.memory_space<vmem>>, vector<1x8x32xf32>
    %39 = vector.shape_cast %38 : vector<1x8x32xf32> to vector<8x32xf32>
    %cst_35 = arith.constant dense<0.000000e+00> : vector<24x32xf32>
    %40 = tpu.matmul %37, %39, %cst_35 {dimension_numbers = #tpu.dot_dimension_numbers<[1], [0], [0], [1], [0, 0, 1, 1], [], []>} : vector<24x8xf32>, vector<8x32xf32>, vector<24x32xf32> -> vector<24x32xf32>
    %c0_36 = arith.constant 0 : index
    %c1_37 = arith.constant 1 : index
    %c0_38 = arith.constant 0 : index
    %c0_39 = arith.constant 0 : index
    %41 = vector.load %arg2[%c0_36, %c1_37, %c0_38, %c0_39] : memref<3x4x32x8xf32, #tpu.memory_space<vmem>>, vector<1x1x32x8xf32>
    %42 = vector.shape_cast %41 : vector<1x1x32x8xf32> to vector<32x8xf32>
    %cst_40 = arith.constant dense<0.000000e+00> : vector<24x8xf32>
    %43 = tpu.matmul %0, %42, %cst_40 {dimension_numbers = #tpu.dot_dimension_numbers<[1], [0], [0], [1], [0, 0, 1, 1], [], []>} : vector<24x32xf32>, vector<32x8xf32>, vector<24x8xf32> -> vector<24x8xf32>
    %c0_41 = arith.constant 0 : index
    %c1_42 = arith.constant 1 : index
    %c0_43 = arith.constant 0 : index
    %c0_44 = arith.constant 0 : index
    %44 = vector.load %arg3[%c0_41, %c1_42, %c0_43, %c0_44] : memref<3x4x1x8xf32, #tpu.memory_space<vmem>>, vector<1x1x1x8xf32>
    %45 = vector.shape_cast %44 : vector<1x1x1x8xf32> to vector<1x8xf32>
    %46 = vector.broadcast %45 : vector<1x8xf32> to vector<24x8xf32>
    %47 = arith.addf %43, %46 : vector<24x8xf32>
    %c1_45 = arith.constant 1 : index
    %c1_46 = arith.constant 1 : index
    %c0_47 = arith.constant 0 : index
    %c0_48 = arith.constant 0 : index
    %48 = vector.load %arg2[%c1_45, %c1_46, %c0_47, %c0_48] : memref<3x4x32x8xf32, #tpu.memory_space<vmem>>, vector<1x1x32x8xf32>
    %49 = vector.shape_cast %48 : vector<1x1x32x8xf32> to vector<32x8xf32>
    %cst_49 = arith.constant dense<0.000000e+00> : vector<24x8xf32>
    %50 = tpu.matmul %0, %49, %cst_49 {dimension_numbers = #tpu.dot_dimension_numbers<[1], [0], [0], [1], [0, 0, 1, 1], [], []>} : vector<24x32xf32>, vector<32x8xf32>, vector<24x8xf32> -> vector<24x8xf32>
    %c1_50 = arith.constant 1 : index
    %c1_51 = arith.constant 1 : index
    %c0_52 = arith.constant 0 : index
    %c0_53 = arith.constant 0 : index
    %51 = vector.load %arg3[%c1_50, %c1_51, %c0_52, %c0_53] : memref<3x4x1x8xf32, #tpu.memory_space<vmem>>, vector<1x1x1x8xf32>
    %52 = vector.shape_cast %51 : vector<1x1x1x8xf32> to vector<1x8xf32>
    %53 = vector.broadcast %52 : vector<1x8xf32> to vector<24x8xf32>
    %54 = arith.addf %50, %53 : vector<24x8xf32>
    %c2_54 = arith.constant 2 : index
    %c1_55 = arith.constant 1 : index
    %c0_56 = arith.constant 0 : index
    %c0_57 = arith.constant 0 : index
    %55 = vector.load %arg2[%c2_54, %c1_55, %c0_56, %c0_57] : memref<3x4x32x8xf32, #tpu.memory_space<vmem>>, vector<1x1x32x8xf32>
    %56 = vector.shape_cast %55 : vector<1x1x32x8xf32> to vector<32x8xf32>
    %cst_58 = arith.constant dense<0.000000e+00> : vector<24x8xf32>
    %57 = tpu.matmul %0, %56, %cst_58 {dimension_numbers = #tpu.dot_dimension_numbers<[1], [0], [0], [1], [0, 0, 1, 1], [], []>} : vector<24x32xf32>, vector<32x8xf32>, vector<24x8xf32> -> vector<24x8xf32>
    %c2_59 = arith.constant 2 : index
    %c1_60 = arith.constant 1 : index
    %c0_61 = arith.constant 0 : index
    %c0_62 = arith.constant 0 : index
    %58 = vector.load %arg3[%c2_59, %c1_60, %c0_61, %c0_62] : memref<3x4x1x8xf32, #tpu.memory_space<vmem>>, vector<1x1x1x8xf32>
    %59 = vector.shape_cast %58 : vector<1x1x1x8xf32> to vector<1x8xf32>
    %60 = vector.broadcast %59 : vector<1x8xf32> to vector<24x8xf32>
    %61 = arith.addf %57, %60 : vector<24x8xf32>
    %cst_63 = arith.constant dense<0.000000e+00> : vector<24x24xf32>
    %62 = tpu.matmul %47, %54, %cst_63 {dimension_numbers = #tpu.dot_dimension_numbers<[1], [1], [0], [0], [0, 0, 1, 0], [], []>} : vector<24x8xf32>, vector<24x8xf32>, vector<24x24xf32> -> vector<24x24xf32>
    %cst_64 = arith.constant 0.353553385 : f32
    %63 = vector.broadcast %cst_64 : f32 to vector<24x24xf32>
    %64 = arith.mulf %62, %63 : vector<24x24xf32>
    %65 = arith.addf %64, %1 : vector<24x24xf32>
    %cst_65 = arith.constant dense<0xFF800000> : vector<24xf32>
    %66 = vector.multi_reduction <maximumf>, %65, %cst_65 [1] : vector<24x24xf32> to vector<24xf32>
    %67 = vector.shape_cast %66 : vector<24xf32> to vector<24x1xf32>
    %68 = vector.broadcast %67 : vector<24x1xf32> to vector<24x24xf32>
    %69 = arith.subf %65, %68 : vector<24x24xf32>
    %70 = math.exp %69 : vector<24x24xf32>
    %cst_66 = arith.constant dense<0.000000e+00> : vector<24xf32>
    %71 = vector.multi_reduction <add>, %70, %cst_66 [1] : vector<24x24xf32> to vector<24xf32>
    %72 = vector.shape_cast %71 : vector<24xf32> to vector<24x1xf32>
    %73 = tpu.reciprocal %72 {approx = true} : vector<24x1xf32> -> vector<24x1xf32>
    %74 = vector.broadcast %73 : vector<24x1xf32> to vector<24x24xf32>
    %75 = arith.mulf %70, %74 : vector<24x24xf32>
    %cst_67 = arith.constant dense<0.000000e+00> : vector<24x8xf32>
    %76 = tpu.matmul %75, %61, %cst_67 {dimension_numbers = #tpu.dot_dimension_numbers<[1], [0], [0], [1], [0, 0, 1, 1], [], []>} : vector<24x24xf32>, vector<24x8xf32>, vector<24x8xf32> -> vector<24x8xf32>
    %c1_68 = arith.constant 1 : index
    %c0_69 = arith.constant 0 : index
    %c0_70 = arith.constant 0 : index
    %77 = vector.load %arg4[%c1_68, %c0_69, %c0_70] : memref<4x8x32xf32, #tpu.memory_space<vmem>>, vector<1x8x32xf32>
    %78 = vector.shape_cast %77 : vector<1x8x32xf32> to vector<8x32xf32>
    %cst_71 = arith.constant dense<0.000000e+00> : vector<24x32xf32>
    %79 = tpu.matmul %76, %78, %cst_71 {dimension_numbers = #tpu.dot_dimension_numbers<[1], [0], [0], [1], [0, 0, 1, 1], [], []>} : vector<24x8xf32>, vector<8x32xf32>, vector<24x32xf32> -> vector<24x32xf32>
    %80 = arith.addf %40, %79 : vector<24x32xf32>
    %c0_72 = arith.constant 0 : index
    %c2_73 = arith.constant 2 : index
    %c0_74 = arith.constant 0 : index
    %c0_75 = arith.constant 0 : index
    %81 = vector.load %arg2[%c0_72, %c2_73, %c0_74, %c0_75] : memref<3x4x32x8xf32, #tpu.memory_space<vmem>>, vector<1x1x32x8xf32>
    %82 = vector.shape_cast %81 : vector<1x1x32x8xf32> to vector<32x8xf32>
    %cst_76 = arith.constant dense<0.000000e+00> : vector<24x8xf32>
    %83 = tpu.matmul %0, %82, %cst_76 {dimension_numbers = #tpu.dot_dimension_numbers<[1], [0], [0], [1], [0, 0, 1, 1], [], []>} : vector<24x32xf32>, vector<32x8xf32>, vector<24x8xf32> -> vector<24x8xf32>
    %c0_77 = arith.constant 0 : index
    %c2_78 = arith.constant 2 : index
    %c0_79 = arith.constant 0 : index
    %c0_80 = arith.constant 0 : index
    %84 = vector.load %arg3[%c0_77, %c2_78, %c0_79, %c0_80] : memref<3x4x1x8xf32, #tpu.memory_space<vmem>>, vector<1x1x1x8xf32>
    %85 = vector.shape_cast %84 : vector<1x1x1x8xf32> to vector<1x8xf32>
    %86 = vector.broadcast %85 : vector<1x8xf32> to vector<24x8xf32>
    %87 = arith.addf %83, %86 : vector<24x8xf32>
    %c1_81 = arith.constant 1 : index
    %c2_82 = arith.constant 2 : index
    %c0_83 = arith.constant 0 : index
    %c0_84 = arith.constant 0 : index
    %88 = vector.load %arg2[%c1_81, %c2_82, %c0_83, %c0_84] : memref<3x4x32x8xf32, #tpu.memory_space<vmem>>, vector<1x1x32x8xf32>
    %89 = vector.shape_cast %88 : vector<1x1x32x8xf32> to vector<32x8xf32>
    %cst_85 = arith.constant dense<0.000000e+00> : vector<24x8xf32>
    %90 = tpu.matmul %0, %89, %cst_85 {dimension_numbers = #tpu.dot_dimension_numbers<[1], [0], [0], [1], [0, 0, 1, 1], [], []>} : vector<24x32xf32>, vector<32x8xf32>, vector<24x8xf32> -> vector<24x8xf32>
    %c1_86 = arith.constant 1 : index
    %c2_87 = arith.constant 2 : index
    %c0_88 = arith.constant 0 : index
    %c0_89 = arith.constant 0 : index
    %91 = vector.load %arg3[%c1_86, %c2_87, %c0_88, %c0_89] : memref<3x4x1x8xf32, #tpu.memory_space<vmem>>, vector<1x1x1x8xf32>
    %92 = vector.shape_cast %91 : vector<1x1x1x8xf32> to vector<1x8xf32>
    %93 = vector.broadcast %92 : vector<1x8xf32> to vector<24x8xf32>
    %94 = arith.addf %90, %93 : vector<24x8xf32>
    %c2_90 = arith.constant 2 : index
    %c2_91 = arith.constant 2 : index
    %c0_92 = arith.constant 0 : index
    %c0_93 = arith.constant 0 : index
    %95 = vector.load %arg2[%c2_90, %c2_91, %c0_92, %c0_93] : memref<3x4x32x8xf32, #tpu.memory_space<vmem>>, vector<1x1x32x8xf32>
    %96 = vector.shape_cast %95 : vector<1x1x32x8xf32> to vector<32x8xf32>
    %cst_94 = arith.constant dense<0.000000e+00> : vector<24x8xf32>
    %97 = tpu.matmul %0, %96, %cst_94 {dimension_numbers = #tpu.dot_dimension_numbers<[1], [0], [0], [1], [0, 0, 1, 1], [], []>} : vector<24x32xf32>, vector<32x8xf32>, vector<24x8xf32> -> vector<24x8xf32>
    %c2_95 = arith.constant 2 : index
    %c2_96 = arith.constant 2 : index
    %c0_97 = arith.constant 0 : index
    %c0_98 = arith.constant 0 : index
    %98 = vector.load %arg3[%c2_95, %c2_96, %c0_97, %c0_98] : memref<3x4x1x8xf32, #tpu.memory_space<vmem>>, vector<1x1x1x8xf32>
    %99 = vector.shape_cast %98 : vector<1x1x1x8xf32> to vector<1x8xf32>
    %100 = vector.broadcast %99 : vector<1x8xf32> to vector<24x8xf32>
    %101 = arith.addf %97, %100 : vector<24x8xf32>
    %cst_99 = arith.constant dense<0.000000e+00> : vector<24x24xf32>
    %102 = tpu.matmul %87, %94, %cst_99 {dimension_numbers = #tpu.dot_dimension_numbers<[1], [1], [0], [0], [0, 0, 1, 0], [], []>} : vector<24x8xf32>, vector<24x8xf32>, vector<24x24xf32> -> vector<24x24xf32>
    %cst_100 = arith.constant 0.353553385 : f32
    %103 = vector.broadcast %cst_100 : f32 to vector<24x24xf32>
    %104 = arith.mulf %102, %103 : vector<24x24xf32>
    %105 = arith.addf %104, %1 : vector<24x24xf32>
    %cst_101 = arith.constant dense<0xFF800000> : vector<24xf32>
    %106 = vector.multi_reduction <maximumf>, %105, %cst_101 [1] : vector<24x24xf32> to vector<24xf32>
    %107 = vector.shape_cast %106 : vector<24xf32> to vector<24x1xf32>
    %108 = vector.broadcast %107 : vector<24x1xf32> to vector<24x24xf32>
    %109 = arith.subf %105, %108 : vector<24x24xf32>
    %110 = math.exp %109 : vector<24x24xf32>
    %cst_102 = arith.constant dense<0.000000e+00> : vector<24xf32>
    %111 = vector.multi_reduction <add>, %110, %cst_102 [1] : vector<24x24xf32> to vector<24xf32>
    %112 = vector.shape_cast %111 : vector<24xf32> to vector<24x1xf32>
    %113 = tpu.reciprocal %112 {approx = true} : vector<24x1xf32> -> vector<24x1xf32>
    %114 = vector.broadcast %113 : vector<24x1xf32> to vector<24x24xf32>
    %115 = arith.mulf %110, %114 : vector<24x24xf32>
    %cst_103 = arith.constant dense<0.000000e+00> : vector<24x8xf32>
    %116 = tpu.matmul %115, %101, %cst_103 {dimension_numbers = #tpu.dot_dimension_numbers<[1], [0], [0], [1], [0, 0, 1, 1], [], []>} : vector<24x24xf32>, vector<24x8xf32>, vector<24x8xf32> -> vector<24x8xf32>
    %c2_104 = arith.constant 2 : index
    %c0_105 = arith.constant 0 : index
    %c0_106 = arith.constant 0 : index
    %117 = vector.load %arg4[%c2_104, %c0_105, %c0_106] : memref<4x8x32xf32, #tpu.memory_space<vmem>>, vector<1x8x32xf32>
    %118 = vector.shape_cast %117 : vector<1x8x32xf32> to vector<8x32xf32>
    %cst_107 = arith.constant dense<0.000000e+00> : vector<24x32xf32>
    %119 = tpu.matmul %116, %118, %cst_107 {dimension_numbers = #tpu.dot_dimension_numbers<[1], [0], [0], [1], [0, 0, 1, 1], [], []>} : vector<24x8xf32>, vector<8x32xf32>, vector<24x32xf32> -> vector<24x32xf32>
    %120 = arith.addf %80, %119 : vector<24x32xf32>
    %c0_108 = arith.constant 0 : index
    %c3 = arith.constant 3 : index
    %c0_109 = arith.constant 0 : index
    %c0_110 = arith.constant 0 : index
    %121 = vector.load %arg2[%c0_108, %c3, %c0_109, %c0_110] : memref<3x4x32x8xf32, #tpu.memory_space<vmem>>, vector<1x1x32x8xf32>
    %122 = vector.shape_cast %121 : vector<1x1x32x8xf32> to vector<32x8xf32>
    %cst_111 = arith.constant dense<0.000000e+00> : vector<24x8xf32>
    %123 = tpu.matmul %0, %122, %cst_111 {dimension_numbers = #tpu.dot_dimension_numbers<[1], [0], [0], [1], [0, 0, 1, 1], [], []>} : vector<24x32xf32>, vector<32x8xf32>, vector<24x8xf32> -> vector<24x8xf32>
    %c0_112 = arith.constant 0 : index
    %c3_113 = arith.constant 3 : index
    %c0_114 = arith.constant 0 : index
    %c0_115 = arith.constant 0 : index
    %124 = vector.load %arg3[%c0_112, %c3_113, %c0_114, %c0_115] : memref<3x4x1x8xf32, #tpu.memory_space<vmem>>, vector<1x1x1x8xf32>
    %125 = vector.shape_cast %124 : vector<1x1x1x8xf32> to vector<1x8xf32>
    %126 = vector.broadcast %125 : vector<1x8xf32> to vector<24x8xf32>
    %127 = arith.addf %123, %126 : vector<24x8xf32>
    %c1_116 = arith.constant 1 : index
    %c3_117 = arith.constant 3 : index
    %c0_118 = arith.constant 0 : index
    %c0_119 = arith.constant 0 : index
    %128 = vector.load %arg2[%c1_116, %c3_117, %c0_118, %c0_119] : memref<3x4x32x8xf32, #tpu.memory_space<vmem>>, vector<1x1x32x8xf32>
    %129 = vector.shape_cast %128 : vector<1x1x32x8xf32> to vector<32x8xf32>
    %cst_120 = arith.constant dense<0.000000e+00> : vector<24x8xf32>
    %130 = tpu.matmul %0, %129, %cst_120 {dimension_numbers = #tpu.dot_dimension_numbers<[1], [0], [0], [1], [0, 0, 1, 1], [], []>} : vector<24x32xf32>, vector<32x8xf32>, vector<24x8xf32> -> vector<24x8xf32>
    %c1_121 = arith.constant 1 : index
    %c3_122 = arith.constant 3 : index
    %c0_123 = arith.constant 0 : index
    %c0_124 = arith.constant 0 : index
    %131 = vector.load %arg3[%c1_121, %c3_122, %c0_123, %c0_124] : memref<3x4x1x8xf32, #tpu.memory_space<vmem>>, vector<1x1x1x8xf32>
    %132 = vector.shape_cast %131 : vector<1x1x1x8xf32> to vector<1x8xf32>
    %133 = vector.broadcast %132 : vector<1x8xf32> to vector<24x8xf32>
    %134 = arith.addf %130, %133 : vector<24x8xf32>
    %c2_125 = arith.constant 2 : index
    %c3_126 = arith.constant 3 : index
    %c0_127 = arith.constant 0 : index
    %c0_128 = arith.constant 0 : index
    %135 = vector.load %arg2[%c2_125, %c3_126, %c0_127, %c0_128] : memref<3x4x32x8xf32, #tpu.memory_space<vmem>>, vector<1x1x32x8xf32>
    %136 = vector.shape_cast %135 : vector<1x1x32x8xf32> to vector<32x8xf32>
    %cst_129 = arith.constant dense<0.000000e+00> : vector<24x8xf32>
    %137 = tpu.matmul %0, %136, %cst_129 {dimension_numbers = #tpu.dot_dimension_numbers<[1], [0], [0], [1], [0, 0, 1, 1], [], []>} : vector<24x32xf32>, vector<32x8xf32>, vector<24x8xf32> -> vector<24x8xf32>
    %c2_130 = arith.constant 2 : index
    %c3_131 = arith.constant 3 : index
    %c0_132 = arith.constant 0 : index
    %c0_133 = arith.constant 0 : index
    %138 = vector.load %arg3[%c2_130, %c3_131, %c0_132, %c0_133] : memref<3x4x1x8xf32, #tpu.memory_space<vmem>>, vector<1x1x1x8xf32>
    %139 = vector.shape_cast %138 : vector<1x1x1x8xf32> to vector<1x8xf32>
    %140 = vector.broadcast %139 : vector<1x8xf32> to vector<24x8xf32>
    %141 = arith.addf %137, %140 : vector<24x8xf32>
    %cst_134 = arith.constant dense<0.000000e+00> : vector<24x24xf32>
    %142 = tpu.matmul %127, %134, %cst_134 {dimension_numbers = #tpu.dot_dimension_numbers<[1], [1], [0], [0], [0, 0, 1, 0], [], []>} : vector<24x8xf32>, vector<24x8xf32>, vector<24x24xf32> -> vector<24x24xf32>
    %cst_135 = arith.constant 0.353553385 : f32
    %143 = vector.broadcast %cst_135 : f32 to vector<24x24xf32>
    %144 = arith.mulf %142, %143 : vector<24x24xf32>
    %145 = arith.addf %144, %1 : vector<24x24xf32>
    %cst_136 = arith.constant dense<0xFF800000> : vector<24xf32>
    %146 = vector.multi_reduction <maximumf>, %145, %cst_136 [1] : vector<24x24xf32> to vector<24xf32>
    %147 = vector.shape_cast %146 : vector<24xf32> to vector<24x1xf32>
    %148 = vector.broadcast %147 : vector<24x1xf32> to vector<24x24xf32>
    %149 = arith.subf %145, %148 : vector<24x24xf32>
    %150 = math.exp %149 : vector<24x24xf32>
    %cst_137 = arith.constant dense<0.000000e+00> : vector<24xf32>
    %151 = vector.multi_reduction <add>, %150, %cst_137 [1] : vector<24x24xf32> to vector<24xf32>
    %152 = vector.shape_cast %151 : vector<24xf32> to vector<24x1xf32>
    %153 = tpu.reciprocal %152 {approx = true} : vector<24x1xf32> -> vector<24x1xf32>
    %154 = vector.broadcast %153 : vector<24x1xf32> to vector<24x24xf32>
    %155 = arith.mulf %150, %154 : vector<24x24xf32>
    %cst_138 = arith.constant dense<0.000000e+00> : vector<24x8xf32>
    %156 = tpu.matmul %155, %141, %cst_138 {dimension_numbers = #tpu.dot_dimension_numbers<[1], [0], [0], [1], [0, 0, 1, 1], [], []>} : vector<24x24xf32>, vector<24x8xf32>, vector<24x8xf32> -> vector<24x8xf32>
    %c3_139 = arith.constant 3 : index
    %c0_140 = arith.constant 0 : index
    %c0_141 = arith.constant 0 : index
    %157 = vector.load %arg4[%c3_139, %c0_140, %c0_141] : memref<4x8x32xf32, #tpu.memory_space<vmem>>, vector<1x8x32xf32>
    %158 = vector.shape_cast %157 : vector<1x8x32xf32> to vector<8x32xf32>
    %cst_142 = arith.constant dense<0.000000e+00> : vector<24x32xf32>
    %159 = tpu.matmul %156, %158, %cst_142 {dimension_numbers = #tpu.dot_dimension_numbers<[1], [0], [0], [1], [0, 0, 1, 1], [], []>} : vector<24x8xf32>, vector<8x32xf32>, vector<24x32xf32> -> vector<24x32xf32>
    %160 = arith.addf %120, %159 : vector<24x32xf32>
    %c0_143 = arith.constant 0 : index
    %c0_144 = arith.constant 0 : index
    %161 = vector.load %arg5[%c0_143, %c0_144] : memref<1x32xf32, #tpu.memory_space<vmem>>, vector<1x32xf32>
    %162 = vector.broadcast %161 : vector<1x32xf32> to vector<24x32xf32>
    %163 = arith.addf %160, %162 : vector<24x32xf32>
    %164 = arith.addf %0, %163 : vector<24x32xf32>
    %c0_145 = arith.constant 0 : index
    %c0_146 = arith.constant 0 : index
    %165 = vector.load %arg6[%c0_145, %c0_146] : memref<1x32xf32, #tpu.memory_space<vmem>>, vector<1x32xf32>
    %c0_147 = arith.constant 0 : index
    %c0_148 = arith.constant 0 : index
    %166 = vector.load %arg7[%c0_147, %c0_148] : memref<1x32xf32, #tpu.memory_space<vmem>>, vector<1x32xf32>
    %cst_149 = arith.constant dense<0.000000e+00> : vector<24xf32>
    %167 = vector.multi_reduction <add>, %164, %cst_149 [1] : vector<24x32xf32> to vector<24xf32>
    %168 = vector.shape_cast %167 : vector<24xf32> to vector<24x1xf32>
    %cst_150 = arith.constant 3.200000e+01 : f32
    %169 = vector.broadcast %cst_150 : f32 to vector<24x1xf32>
    %170 = arith.divf %168, %169 : vector<24x1xf32>
    %171 = vector.broadcast %170 : vector<24x1xf32> to vector<24x32xf32>
    %172 = arith.subf %164, %171 : vector<24x32xf32>
    %173 = arith.mulf %172, %172 : vector<24x32xf32>
    %cst_151 = arith.constant dense<0.000000e+00> : vector<24xf32>
    %174 = vector.multi_reduction <add>, %173, %cst_151 [1] : vector<24x32xf32> to vector<24xf32>
    %175 = vector.shape_cast %174 : vector<24xf32> to vector<24x1xf32>
    %cst_152 = arith.constant 3.200000e+01 : f32
    %176 = vector.broadcast %cst_152 : f32 to vector<24x1xf32>
    %177 = arith.divf %175, %176 : vector<24x1xf32>
    %178 = vector.broadcast %170 : vector<24x1xf32> to vector<24x32xf32>
    %179 = arith.subf %164, %178 : vector<24x32xf32>
    %cst_153 = arith.constant 9.99999974E-6 : f32
    %180 = vector.broadcast %cst_153 : f32 to vector<24x1xf32>
    %181 = arith.addf %177, %180 : vector<24x1xf32>
    %182 = math.rsqrt %181 : vector<24x1xf32>
    %183 = vector.broadcast %182 : vector<24x1xf32> to vector<24x32xf32>
    %184 = arith.mulf %179, %183 : vector<24x32xf32>
    %185 = vector.broadcast %165 : vector<1x32xf32> to vector<24x32xf32>
    %186 = arith.mulf %184, %185 : vector<24x32xf32>
    %187 = vector.broadcast %166 : vector<1x32xf32> to vector<24x32xf32>
    %188 = arith.addf %186, %187 : vector<24x32xf32>
    %c0_154 = arith.constant 0 : index
    %c0_155 = arith.constant 0 : index
    %189 = vector.load %arg8[%c0_154, %c0_155] : memref<32x64xf32, #tpu.memory_space<vmem>>, vector<32x64xf32>
    %cst_156 = arith.constant dense<0.000000e+00> : vector<24x64xf32>
    %190 = tpu.matmul %188, %189, %cst_156 {dimension_numbers = #tpu.dot_dimension_numbers<[1], [0], [0], [1], [0, 0, 1, 1], [], []>} : vector<24x32xf32>, vector<32x64xf32>, vector<24x64xf32> -> vector<24x64xf32>
    %c0_157 = arith.constant 0 : index
    %c0_158 = arith.constant 0 : index
    %191 = vector.load %arg9[%c0_157, %c0_158] : memref<1x64xf32, #tpu.memory_space<vmem>>, vector<1x64xf32>
    %192 = vector.broadcast %191 : vector<1x64xf32> to vector<24x64xf32>
    %193 = arith.addf %190, %192 : vector<24x64xf32>
    %cst_159 = arith.constant 0.000000e+00 : f32
    %194 = vector.broadcast %cst_159 : f32 to vector<24x64xf32>
    %195 = arith.maximumf %193, %194 : vector<24x64xf32>
    %c0_160 = arith.constant 0 : index
    %c0_161 = arith.constant 0 : index
    %196 = vector.load %arg10[%c0_160, %c0_161] : memref<64x32xf32, #tpu.memory_space<vmem>>, vector<64x32xf32>
    %cst_162 = arith.constant dense<0.000000e+00> : vector<24x32xf32>
    %197 = tpu.matmul %195, %196, %cst_162 {dimension_numbers = #tpu.dot_dimension_numbers<[1], [0], [0], [1], [0, 0, 1, 1], [], []>} : vector<24x64xf32>, vector<64x32xf32>, vector<24x32xf32> -> vector<24x32xf32>
    %c0_163 = arith.constant 0 : index
    %c0_164 = arith.constant 0 : index
    %198 = vector.load %arg11[%c0_163, %c0_164] : memref<1x32xf32, #tpu.memory_space<vmem>>, vector<1x32xf32>
    %199 = vector.broadcast %198 : vector<1x32xf32> to vector<24x32xf32>
    %200 = arith.addf %197, %199 : vector<24x32xf32>
    %201 = arith.addf %188, %200 : vector<24x32xf32>
    %c0_165 = arith.constant 0 : index
    %c0_166 = arith.constant 0 : index
    %202 = vector.load %arg12[%c0_165, %c0_166] : memref<1x32xf32, #tpu.memory_space<vmem>>, vector<1x32xf32>
    %c0_167 = arith.constant 0 : index
    %c0_168 = arith.constant 0 : index
    %203 = vector.load %arg13[%c0_167, %c0_168] : memref<1x32xf32, #tpu.memory_space<vmem>>, vector<1x32xf32>
    %cst_169 = arith.constant dense<0.000000e+00> : vector<24xf32>
    %204 = vector.multi_reduction <add>, %201, %cst_169 [1] : vector<24x32xf32> to vector<24xf32>
    %205 = vector.shape_cast %204 : vector<24xf32> to vector<24x1xf32>
    %cst_170 = arith.constant 3.200000e+01 : f32
    %206 = vector.broadcast %cst_170 : f32 to vector<24x1xf32>
    %207 = arith.divf %205, %206 : vector<24x1xf32>
    %208 = vector.broadcast %207 : vector<24x1xf32> to vector<24x32xf32>
    %209 = arith.subf %201, %208 : vector<24x32xf32>
    %210 = arith.mulf %209, %209 : vector<24x32xf32>
    %cst_171 = arith.constant dense<0.000000e+00> : vector<24xf32>
    %211 = vector.multi_reduction <add>, %210, %cst_171 [1] : vector<24x32xf32> to vector<24xf32>
    %212 = vector.shape_cast %211 : vector<24xf32> to vector<24x1xf32>
    %cst_172 = arith.constant 3.200000e+01 : f32
    %213 = vector.broadcast %cst_172 : f32 to vector<24x1xf32>
    %214 = arith.divf %212, %213 : vector<24x1xf32>
    %215 = vector.broadcast %207 : vector<24x1xf32> to vector<24x32xf32>
    %216 = arith.subf %201, %215 : vector<24x32xf32>
    %cst_173 = arith.constant 9.99999974E-6 : f32
    %217 = vector.broadcast %cst_173 : f32 to vector<24x1xf32>
    %218 = arith.addf %214, %217 : vector<24x1xf32>
    %219 = math.rsqrt %218 : vector<24x1xf32>
    %220 = vector.broadcast %219 : vector<24x1xf32> to vector<24x32xf32>
    %221 = arith.mulf %216, %220 : vector<24x32xf32>
    %222 = vector.broadcast %202 : vector<1x32xf32> to vector<24x32xf32>
    %223 = arith.mulf %221, %222 : vector<24x32xf32>
    %224 = vector.broadcast %203 : vector<1x32xf32> to vector<24x32xf32>
    %225 = arith.addf %223, %224 : vector<24x32xf32>
    %c0_174 = arith.constant 0 : index
    %c0_175 = arith.constant 0 : index
    %226 = vector.load %arg14[%c0_174, %c0_175] : memref<24x32xf32, #tpu.memory_space<vmem>>, vector<24x32xf32>
    tpu.vector_store %arg14[%c0_174, %c0_175], %225 {strides = array<i32>} : memref<24x32xf32, #tpu.memory_space<vmem>>, vector<24x32xf32>,
    return
  }
}

module attributes {stable_mosaic.version = 11 : i64} {
  func.func @kernel(%arg0: memref<24x32xf32, #tpu.memory_space<vmem>>, %arg1: memref<24x32xf32, #tpu.memory_space<vmem>>, %arg2: memref<24x24xf32, #tpu.memory_space<vmem>>, %arg3: memref<24x24xf32, #tpu.memory_space<vmem>>, %arg4: memref<3x4x32x8xf32, #tpu.memory_space<vmem>>, %arg5: memref<3x4x1x8xf32, #tpu.memory_space<vmem>>, %arg6: memref<4x8x32xf32, #tpu.memory_space<vmem>>, %arg7: memref<1x32xf32, #tpu.memory_space<vmem>>, %arg8: memref<3x4x32x8xf32, #tpu.memory_space<vmem>>, %arg9: memref<3x4x1x8xf32, #tpu.memory_space<vmem>>, %arg10: memref<4x8x32xf32, #tpu.memory_space<vmem>>, %arg11: memref<1x32xf32, #tpu.memory_space<vmem>>, %arg12: memref<1x32xf32, #tpu.memory_space<vmem>>, %arg13: memref<1x32xf32, #tpu.memory_space<vmem>>, %arg14: memref<1x32xf32, #tpu.memory_space<vmem>>, %arg15: memref<1x32xf32, #tpu.memory_space<vmem>>, %arg16: memref<1x32xf32, #tpu.memory_space<vmem>>, %arg17: memref<1x32xf32, #tpu.memory_space<vmem>>, %arg18: memref<32x64xf32, #tpu.memory_space<vmem>>, %arg19: memref<1x64xf32, #tpu.memory_space<vmem>>, %arg20: memref<64x32xf32, #tpu.memory_space<vmem>>, %arg21: memref<1x32xf32, #tpu.memory_space<vmem>>, %arg22: memref<24x32xf32, #tpu.memory_space<vmem>>) attributes {dimension_semantics = [], scalar_prefetch = 0 : i64, scratch_operands = 0 : i64, tpu.core_type = #tpu.core_type<tc>} {
    %c0 = arith.constant 0 : index
    %c0_0 = arith.constant 0 : index
    %0 = vector.load %arg0[%c0, %c0_0] : memref<24x32xf32, #tpu.memory_space<vmem>>, vector<24x32xf32>
    %c0_1 = arith.constant 0 : index
    %c0_2 = arith.constant 0 : index
    %1 = vector.load %arg1[%c0_1, %c0_2] : memref<24x32xf32, #tpu.memory_space<vmem>>, vector<24x32xf32>
    %c0_3 = arith.constant 0 : index
    %c0_4 = arith.constant 0 : index
    %2 = vector.load %arg2[%c0_3, %c0_4] : memref<24x24xf32, #tpu.memory_space<vmem>>, vector<24x24xf32>
    %c0_5 = arith.constant 0 : index
    %c0_6 = arith.constant 0 : index
    %c0_7 = arith.constant 0 : index
    %c0_8 = arith.constant 0 : index
    %3 = vector.load %arg4[%c0_5, %c0_6, %c0_7, %c0_8] : memref<3x4x32x8xf32, #tpu.memory_space<vmem>>, vector<1x1x32x8xf32>
    %4 = vector.shape_cast %3 : vector<1x1x32x8xf32> to vector<32x8xf32>
    %cst = arith.constant dense<0.000000e+00> : vector<24x8xf32>
    %5 = tpu.matmul %0, %4, %cst {dimension_numbers = #tpu.dot_dimension_numbers<[1], [0], [0], [1], [0, 0, 1, 1], [], []>} : vector<24x32xf32>, vector<32x8xf32>, vector<24x8xf32> -> vector<24x8xf32>
    %c0_9 = arith.constant 0 : index
    %c0_10 = arith.constant 0 : index
    %c0_11 = arith.constant 0 : index
    %c0_12 = arith.constant 0 : index
    %6 = vector.load %arg5[%c0_9, %c0_10, %c0_11, %c0_12] : memref<3x4x1x8xf32, #tpu.memory_space<vmem>>, vector<1x1x1x8xf32>
    %7 = vector.shape_cast %6 : vector<1x1x1x8xf32> to vector<1x8xf32>
    %8 = vector.broadcast %7 : vector<1x8xf32> to vector<24x8xf32>
    %9 = arith.addf %5, %8 : vector<24x8xf32>
    %c1 = arith.constant 1 : index
    %c0_13 = arith.constant 0 : index
    %c0_14 = arith.constant 0 : index
    %c0_15 = arith.constant 0 : index
    %10 = vector.load %arg4[%c1, %c0_13, %c0_14, %c0_15] : memref<3x4x32x8xf32, #tpu.memory_space<vmem>>, vector<1x1x32x8xf32>
    %11 = vector.shape_cast %10 : vector<1x1x32x8xf32> to vector<32x8xf32>
    %cst_16 = arith.constant dense<0.000000e+00> : vector<24x8xf32>
    %12 = tpu.matmul %0, %11, %cst_16 {dimension_numbers = #tpu.dot_dimension_numbers<[1], [0], [0], [1], [0, 0, 1, 1], [], []>} : vector<24x32xf32>, vector<32x8xf32>, vector<24x8xf32> -> vector<24x8xf32>
    %c1_17 = arith.constant 1 : index
    %c0_18 = arith.constant 0 : index
    %c0_19 = arith.constant 0 : index
    %c0_20 = arith.constant 0 : index
    %13 = vector.load %arg5[%c1_17, %c0_18, %c0_19, %c0_20] : memref<3x4x1x8xf32, #tpu.memory_space<vmem>>, vector<1x1x1x8xf32>
    %14 = vector.shape_cast %13 : vector<1x1x1x8xf32> to vector<1x8xf32>
    %15 = vector.broadcast %14 : vector<1x8xf32> to vector<24x8xf32>
    %16 = arith.addf %12, %15 : vector<24x8xf32>
    %c2 = arith.constant 2 : index
    %c0_21 = arith.constant 0 : index
    %c0_22 = arith.constant 0 : index
    %c0_23 = arith.constant 0 : index
    %17 = vector.load %arg4[%c2, %c0_21, %c0_22, %c0_23] : memref<3x4x32x8xf32, #tpu.memory_space<vmem>>, vector<1x1x32x8xf32>
    %18 = vector.shape_cast %17 : vector<1x1x32x8xf32> to vector<32x8xf32>
    %cst_24 = arith.constant dense<0.000000e+00> : vector<24x8xf32>
    %19 = tpu.matmul %0, %18, %cst_24 {dimension_numbers = #tpu.dot_dimension_numbers<[1], [0], [0], [1], [0, 0, 1, 1], [], []>} : vector<24x32xf32>, vector<32x8xf32>, vector<24x8xf32> -> vector<24x8xf32>
    %c2_25 = arith.constant 2 : index
    %c0_26 = arith.constant 0 : index
    %c0_27 = arith.constant 0 : index
    %c0_28 = arith.constant 0 : index
    %20 = vector.load %arg5[%c2_25, %c0_26, %c0_27, %c0_28] : memref<3x4x1x8xf32, #tpu.memory_space<vmem>>, vector<1x1x1x8xf32>
    %21 = vector.shape_cast %20 : vector<1x1x1x8xf32> to vector<1x8xf32>
    %22 = vector.broadcast %21 : vector<1x8xf32> to vector<24x8xf32>
    %23 = arith.addf %19, %22 : vector<24x8xf32>
    %cst_29 = arith.constant dense<0.000000e+00> : vector<24x24xf32>
    %24 = tpu.matmul %9, %16, %cst_29 {dimension_numbers = #tpu.dot_dimension_numbers<[1], [1], [0], [0], [0, 0, 1, 0], [], []>} : vector<24x8xf32>, vector<24x8xf32>, vector<24x24xf32> -> vector<24x24xf32>
    %cst_30 = arith.constant 0.353553385 : f32
    %25 = vector.broadcast %cst_30 : f32 to vector<24x24xf32>
    %26 = arith.mulf %24, %25 : vector<24x24xf32>
    %27 = arith.addf %26, %2 : vector<24x24xf32>
    %cst_31 = arith.constant dense<0xFF800000> : vector<24xf32>
    %28 = vector.multi_reduction <maximumf>, %27, %cst_31 [1] : vector<24x24xf32> to vector<24xf32>
    %29 = vector.shape_cast %28 : vector<24xf32> to vector<24x1xf32>
    %30 = vector.broadcast %29 : vector<24x1xf32> to vector<24x24xf32>
    %31 = arith.subf %27, %30 : vector<24x24xf32>
    %32 = math.exp %31 : vector<24x24xf32>
    %cst_32 = arith.constant dense<0.000000e+00> : vector<24xf32>
    %33 = vector.multi_reduction <add>, %32, %cst_32 [1] : vector<24x24xf32> to vector<24xf32>
    %34 = vector.shape_cast %33 : vector<24xf32> to vector<24x1xf32>
    %35 = tpu.reciprocal %34 {approx = true} : vector<24x1xf32> -> vector<24x1xf32>
    %36 = vector.broadcast %35 : vector<24x1xf32> to vector<24x24xf32>
    %37 = arith.mulf %32, %36 : vector<24x24xf32>
    %cst_33 = arith.constant dense<0.000000e+00> : vector<24x8xf32>
    %38 = tpu.matmul %37, %23, %cst_33 {dimension_numbers = #tpu.dot_dimension_numbers<[1], [0], [0], [1], [0, 0, 1, 1], [], []>} : vector<24x24xf32>, vector<24x8xf32>, vector<24x8xf32> -> vector<24x8xf32>
    %c0_34 = arith.constant 0 : index
    %c0_35 = arith.constant 0 : index
    %c0_36 = arith.constant 0 : index
    %39 = vector.load %arg6[%c0_34, %c0_35, %c0_36] : memref<4x8x32xf32, #tpu.memory_space<vmem>>, vector<1x8x32xf32>
    %40 = vector.shape_cast %39 : vector<1x8x32xf32> to vector<8x32xf32>
    %cst_37 = arith.constant dense<0.000000e+00> : vector<24x32xf32>
    %41 = tpu.matmul %38, %40, %cst_37 {dimension_numbers = #tpu.dot_dimension_numbers<[1], [0], [0], [1], [0, 0, 1, 1], [], []>} : vector<24x8xf32>, vector<8x32xf32>, vector<24x32xf32> -> vector<24x32xf32>
    %c0_38 = arith.constant 0 : index
    %c1_39 = arith.constant 1 : index
    %c0_40 = arith.constant 0 : index
    %c0_41 = arith.constant 0 : index
    %42 = vector.load %arg4[%c0_38, %c1_39, %c0_40, %c0_41] : memref<3x4x32x8xf32, #tpu.memory_space<vmem>>, vector<1x1x32x8xf32>
    %43 = vector.shape_cast %42 : vector<1x1x32x8xf32> to vector<32x8xf32>
    %cst_42 = arith.constant dense<0.000000e+00> : vector<24x8xf32>
    %44 = tpu.matmul %0, %43, %cst_42 {dimension_numbers = #tpu.dot_dimension_numbers<[1], [0], [0], [1], [0, 0, 1, 1], [], []>} : vector<24x32xf32>, vector<32x8xf32>, vector<24x8xf32> -> vector<24x8xf32>
    %c0_43 = arith.constant 0 : index
    %c1_44 = arith.constant 1 : index
    %c0_45 = arith.constant 0 : index
    %c0_46 = arith.constant 0 : index
    %45 = vector.load %arg5[%c0_43, %c1_44, %c0_45, %c0_46] : memref<3x4x1x8xf32, #tpu.memory_space<vmem>>, vector<1x1x1x8xf32>
    %46 = vector.shape_cast %45 : vector<1x1x1x8xf32> to vector<1x8xf32>
    %47 = vector.broadcast %46 : vector<1x8xf32> to vector<24x8xf32>
    %48 = arith.addf %44, %47 : vector<24x8xf32>
    %c1_47 = arith.constant 1 : index
    %c1_48 = arith.constant 1 : index
    %c0_49 = arith.constant 0 : index
    %c0_50 = arith.constant 0 : index
    %49 = vector.load %arg4[%c1_47, %c1_48, %c0_49, %c0_50] : memref<3x4x32x8xf32, #tpu.memory_space<vmem>>, vector<1x1x32x8xf32>
    %50 = vector.shape_cast %49 : vector<1x1x32x8xf32> to vector<32x8xf32>
    %cst_51 = arith.constant dense<0.000000e+00> : vector<24x8xf32>
    %51 = tpu.matmul %0, %50, %cst_51 {dimension_numbers = #tpu.dot_dimension_numbers<[1], [0], [0], [1], [0, 0, 1, 1], [], []>} : vector<24x32xf32>, vector<32x8xf32>, vector<24x8xf32> -> vector<24x8xf32>
    %c1_52 = arith.constant 1 : index
    %c1_53 = arith.constant 1 : index
    %c0_54 = arith.constant 0 : index
    %c0_55 = arith.constant 0 : index
    %52 = vector.load %arg5[%c1_52, %c1_53, %c0_54, %c0_55] : memref<3x4x1x8xf32, #tpu.memory_space<vmem>>, vector<1x1x1x8xf32>
    %53 = vector.shape_cast %52 : vector<1x1x1x8xf32> to vector<1x8xf32>
    %54 = vector.broadcast %53 : vector<1x8xf32> to vector<24x8xf32>
    %55 = arith.addf %51, %54 : vector<24x8xf32>
    %c2_56 = arith.constant 2 : index
    %c1_57 = arith.constant 1 : index
    %c0_58 = arith.constant 0 : index
    %c0_59 = arith.constant 0 : index
    %56 = vector.load %arg4[%c2_56, %c1_57, %c0_58, %c0_59] : memref<3x4x32x8xf32, #tpu.memory_space<vmem>>, vector<1x1x32x8xf32>
    %57 = vector.shape_cast %56 : vector<1x1x32x8xf32> to vector<32x8xf32>
    %cst_60 = arith.constant dense<0.000000e+00> : vector<24x8xf32>
    %58 = tpu.matmul %0, %57, %cst_60 {dimension_numbers = #tpu.dot_dimension_numbers<[1], [0], [0], [1], [0, 0, 1, 1], [], []>} : vector<24x32xf32>, vector<32x8xf32>, vector<24x8xf32> -> vector<24x8xf32>
    %c2_61 = arith.constant 2 : index
    %c1_62 = arith.constant 1 : index
    %c0_63 = arith.constant 0 : index
    %c0_64 = arith.constant 0 : index
    %59 = vector.load %arg5[%c2_61, %c1_62, %c0_63, %c0_64] : memref<3x4x1x8xf32, #tpu.memory_space<vmem>>, vector<1x1x1x8xf32>
    %60 = vector.shape_cast %59 : vector<1x1x1x8xf32> to vector<1x8xf32>
    %61 = vector.broadcast %60 : vector<1x8xf32> to vector<24x8xf32>
    %62 = arith.addf %58, %61 : vector<24x8xf32>
    %cst_65 = arith.constant dense<0.000000e+00> : vector<24x24xf32>
    %63 = tpu.matmul %48, %55, %cst_65 {dimension_numbers = #tpu.dot_dimension_numbers<[1], [1], [0], [0], [0, 0, 1, 0], [], []>} : vector<24x8xf32>, vector<24x8xf32>, vector<24x24xf32> -> vector<24x24xf32>
    %cst_66 = arith.constant 0.353553385 : f32
    %64 = vector.broadcast %cst_66 : f32 to vector<24x24xf32>
    %65 = arith.mulf %63, %64 : vector<24x24xf32>
    %66 = arith.addf %65, %2 : vector<24x24xf32>
    %cst_67 = arith.constant dense<0xFF800000> : vector<24xf32>
    %67 = vector.multi_reduction <maximumf>, %66, %cst_67 [1] : vector<24x24xf32> to vector<24xf32>
    %68 = vector.shape_cast %67 : vector<24xf32> to vector<24x1xf32>
    %69 = vector.broadcast %68 : vector<24x1xf32> to vector<24x24xf32>
    %70 = arith.subf %66, %69 : vector<24x24xf32>
    %71 = math.exp %70 : vector<24x24xf32>
    %cst_68 = arith.constant dense<0.000000e+00> : vector<24xf32>
    %72 = vector.multi_reduction <add>, %71, %cst_68 [1] : vector<24x24xf32> to vector<24xf32>
    %73 = vector.shape_cast %72 : vector<24xf32> to vector<24x1xf32>
    %74 = tpu.reciprocal %73 {approx = true} : vector<24x1xf32> -> vector<24x1xf32>
    %75 = vector.broadcast %74 : vector<24x1xf32> to vector<24x24xf32>
    %76 = arith.mulf %71, %75 : vector<24x24xf32>
    %cst_69 = arith.constant dense<0.000000e+00> : vector<24x8xf32>
    %77 = tpu.matmul %76, %62, %cst_69 {dimension_numbers = #tpu.dot_dimension_numbers<[1], [0], [0], [1], [0, 0, 1, 1], [], []>} : vector<24x24xf32>, vector<24x8xf32>, vector<24x8xf32> -> vector<24x8xf32>
    %c1_70 = arith.constant 1 : index
    %c0_71 = arith.constant 0 : index
    %c0_72 = arith.constant 0 : index
    %78 = vector.load %arg6[%c1_70, %c0_71, %c0_72] : memref<4x8x32xf32, #tpu.memory_space<vmem>>, vector<1x8x32xf32>
    %79 = vector.shape_cast %78 : vector<1x8x32xf32> to vector<8x32xf32>
    %cst_73 = arith.constant dense<0.000000e+00> : vector<24x32xf32>
    %80 = tpu.matmul %77, %79, %cst_73 {dimension_numbers = #tpu.dot_dimension_numbers<[1], [0], [0], [1], [0, 0, 1, 1], [], []>} : vector<24x8xf32>, vector<8x32xf32>, vector<24x32xf32> -> vector<24x32xf32>
    %81 = arith.addf %41, %80 : vector<24x32xf32>
    %c0_74 = arith.constant 0 : index
    %c2_75 = arith.constant 2 : index
    %c0_76 = arith.constant 0 : index
    %c0_77 = arith.constant 0 : index
    %82 = vector.load %arg4[%c0_74, %c2_75, %c0_76, %c0_77] : memref<3x4x32x8xf32, #tpu.memory_space<vmem>>, vector<1x1x32x8xf32>
    %83 = vector.shape_cast %82 : vector<1x1x32x8xf32> to vector<32x8xf32>
    %cst_78 = arith.constant dense<0.000000e+00> : vector<24x8xf32>
    %84 = tpu.matmul %0, %83, %cst_78 {dimension_numbers = #tpu.dot_dimension_numbers<[1], [0], [0], [1], [0, 0, 1, 1], [], []>} : vector<24x32xf32>, vector<32x8xf32>, vector<24x8xf32> -> vector<24x8xf32>
    %c0_79 = arith.constant 0 : index
    %c2_80 = arith.constant 2 : index
    %c0_81 = arith.constant 0 : index
    %c0_82 = arith.constant 0 : index
    %85 = vector.load %arg5[%c0_79, %c2_80, %c0_81, %c0_82] : memref<3x4x1x8xf32, #tpu.memory_space<vmem>>, vector<1x1x1x8xf32>
    %86 = vector.shape_cast %85 : vector<1x1x1x8xf32> to vector<1x8xf32>
    %87 = vector.broadcast %86 : vector<1x8xf32> to vector<24x8xf32>
    %88 = arith.addf %84, %87 : vector<24x8xf32>
    %c1_83 = arith.constant 1 : index
    %c2_84 = arith.constant 2 : index
    %c0_85 = arith.constant 0 : index
    %c0_86 = arith.constant 0 : index
    %89 = vector.load %arg4[%c1_83, %c2_84, %c0_85, %c0_86] : memref<3x4x32x8xf32, #tpu.memory_space<vmem>>, vector<1x1x32x8xf32>
    %90 = vector.shape_cast %89 : vector<1x1x32x8xf32> to vector<32x8xf32>
    %cst_87 = arith.constant dense<0.000000e+00> : vector<24x8xf32>
    %91 = tpu.matmul %0, %90, %cst_87 {dimension_numbers = #tpu.dot_dimension_numbers<[1], [0], [0], [1], [0, 0, 1, 1], [], []>} : vector<24x32xf32>, vector<32x8xf32>, vector<24x8xf32> -> vector<24x8xf32>
    %c1_88 = arith.constant 1 : index
    %c2_89 = arith.constant 2 : index
    %c0_90 = arith.constant 0 : index
    %c0_91 = arith.constant 0 : index
    %92 = vector.load %arg5[%c1_88, %c2_89, %c0_90, %c0_91] : memref<3x4x1x8xf32, #tpu.memory_space<vmem>>, vector<1x1x1x8xf32>
    %93 = vector.shape_cast %92 : vector<1x1x1x8xf32> to vector<1x8xf32>
    %94 = vector.broadcast %93 : vector<1x8xf32> to vector<24x8xf32>
    %95 = arith.addf %91, %94 : vector<24x8xf32>
    %c2_92 = arith.constant 2 : index
    %c2_93 = arith.constant 2 : index
    %c0_94 = arith.constant 0 : index
    %c0_95 = arith.constant 0 : index
    %96 = vector.load %arg4[%c2_92, %c2_93, %c0_94, %c0_95] : memref<3x4x32x8xf32, #tpu.memory_space<vmem>>, vector<1x1x32x8xf32>
    %97 = vector.shape_cast %96 : vector<1x1x32x8xf32> to vector<32x8xf32>
    %cst_96 = arith.constant dense<0.000000e+00> : vector<24x8xf32>
    %98 = tpu.matmul %0, %97, %cst_96 {dimension_numbers = #tpu.dot_dimension_numbers<[1], [0], [0], [1], [0, 0, 1, 1], [], []>} : vector<24x32xf32>, vector<32x8xf32>, vector<24x8xf32> -> vector<24x8xf32>
    %c2_97 = arith.constant 2 : index
    %c2_98 = arith.constant 2 : index
    %c0_99 = arith.constant 0 : index
    %c0_100 = arith.constant 0 : index
    %99 = vector.load %arg5[%c2_97, %c2_98, %c0_99, %c0_100] : memref<3x4x1x8xf32, #tpu.memory_space<vmem>>, vector<1x1x1x8xf32>
    %100 = vector.shape_cast %99 : vector<1x1x1x8xf32> to vector<1x8xf32>
    %101 = vector.broadcast %100 : vector<1x8xf32> to vector<24x8xf32>
    %102 = arith.addf %98, %101 : vector<24x8xf32>
    %cst_101 = arith.constant dense<0.000000e+00> : vector<24x24xf32>
    %103 = tpu.matmul %88, %95, %cst_101 {dimension_numbers = #tpu.dot_dimension_numbers<[1], [1], [0], [0], [0, 0, 1, 0], [], []>} : vector<24x8xf32>, vector<24x8xf32>, vector<24x24xf32> -> vector<24x24xf32>
    %cst_102 = arith.constant 0.353553385 : f32
    %104 = vector.broadcast %cst_102 : f32 to vector<24x24xf32>
    %105 = arith.mulf %103, %104 : vector<24x24xf32>
    %106 = arith.addf %105, %2 : vector<24x24xf32>
    %cst_103 = arith.constant dense<0xFF800000> : vector<24xf32>
    %107 = vector.multi_reduction <maximumf>, %106, %cst_103 [1] : vector<24x24xf32> to vector<24xf32>
    %108 = vector.shape_cast %107 : vector<24xf32> to vector<24x1xf32>
    %109 = vector.broadcast %108 : vector<24x1xf32> to vector<24x24xf32>
    %110 = arith.subf %106, %109 : vector<24x24xf32>
    %111 = math.exp %110 : vector<24x24xf32>
    %cst_104 = arith.constant dense<0.000000e+00> : vector<24xf32>
    %112 = vector.multi_reduction <add>, %111, %cst_104 [1] : vector<24x24xf32> to vector<24xf32>
    %113 = vector.shape_cast %112 : vector<24xf32> to vector<24x1xf32>
    %114 = tpu.reciprocal %113 {approx = true} : vector<24x1xf32> -> vector<24x1xf32>
    %115 = vector.broadcast %114 : vector<24x1xf32> to vector<24x24xf32>
    %116 = arith.mulf %111, %115 : vector<24x24xf32>
    %cst_105 = arith.constant dense<0.000000e+00> : vector<24x8xf32>
    %117 = tpu.matmul %116, %102, %cst_105 {dimension_numbers = #tpu.dot_dimension_numbers<[1], [0], [0], [1], [0, 0, 1, 1], [], []>} : vector<24x24xf32>, vector<24x8xf32>, vector<24x8xf32> -> vector<24x8xf32>
    %c2_106 = arith.constant 2 : index
    %c0_107 = arith.constant 0 : index
    %c0_108 = arith.constant 0 : index
    %118 = vector.load %arg6[%c2_106, %c0_107, %c0_108] : memref<4x8x32xf32, #tpu.memory_space<vmem>>, vector<1x8x32xf32>
    %119 = vector.shape_cast %118 : vector<1x8x32xf32> to vector<8x32xf32>
    %cst_109 = arith.constant dense<0.000000e+00> : vector<24x32xf32>
    %120 = tpu.matmul %117, %119, %cst_109 {dimension_numbers = #tpu.dot_dimension_numbers<[1], [0], [0], [1], [0, 0, 1, 1], [], []>} : vector<24x8xf32>, vector<8x32xf32>, vector<24x32xf32> -> vector<24x32xf32>
    %121 = arith.addf %81, %120 : vector<24x32xf32>
    %c0_110 = arith.constant 0 : index
    %c3 = arith.constant 3 : index
    %c0_111 = arith.constant 0 : index
    %c0_112 = arith.constant 0 : index
    %122 = vector.load %arg4[%c0_110, %c3, %c0_111, %c0_112] : memref<3x4x32x8xf32, #tpu.memory_space<vmem>>, vector<1x1x32x8xf32>
    %123 = vector.shape_cast %122 : vector<1x1x32x8xf32> to vector<32x8xf32>
    %cst_113 = arith.constant dense<0.000000e+00> : vector<24x8xf32>
    %124 = tpu.matmul %0, %123, %cst_113 {dimension_numbers = #tpu.dot_dimension_numbers<[1], [0], [0], [1], [0, 0, 1, 1], [], []>} : vector<24x32xf32>, vector<32x8xf32>, vector<24x8xf32> -> vector<24x8xf32>
    %c0_114 = arith.constant 0 : index
    %c3_115 = arith.constant 3 : index
    %c0_116 = arith.constant 0 : index
    %c0_117 = arith.constant 0 : index
    %125 = vector.load %arg5[%c0_114, %c3_115, %c0_116, %c0_117] : memref<3x4x1x8xf32, #tpu.memory_space<vmem>>, vector<1x1x1x8xf32>
    %126 = vector.shape_cast %125 : vector<1x1x1x8xf32> to vector<1x8xf32>
    %127 = vector.broadcast %126 : vector<1x8xf32> to vector<24x8xf32>
    %128 = arith.addf %124, %127 : vector<24x8xf32>
    %c1_118 = arith.constant 1 : index
    %c3_119 = arith.constant 3 : index
    %c0_120 = arith.constant 0 : index
    %c0_121 = arith.constant 0 : index
    %129 = vector.load %arg4[%c1_118, %c3_119, %c0_120, %c0_121] : memref<3x4x32x8xf32, #tpu.memory_space<vmem>>, vector<1x1x32x8xf32>
    %130 = vector.shape_cast %129 : vector<1x1x32x8xf32> to vector<32x8xf32>
    %cst_122 = arith.constant dense<0.000000e+00> : vector<24x8xf32>
    %131 = tpu.matmul %0, %130, %cst_122 {dimension_numbers = #tpu.dot_dimension_numbers<[1], [0], [0], [1], [0, 0, 1, 1], [], []>} : vector<24x32xf32>, vector<32x8xf32>, vector<24x8xf32> -> vector<24x8xf32>
    %c1_123 = arith.constant 1 : index
    %c3_124 = arith.constant 3 : index
    %c0_125 = arith.constant 0 : index
    %c0_126 = arith.constant 0 : index
    %132 = vector.load %arg5[%c1_123, %c3_124, %c0_125, %c0_126] : memref<3x4x1x8xf32, #tpu.memory_space<vmem>>, vector<1x1x1x8xf32>
    %133 = vector.shape_cast %132 : vector<1x1x1x8xf32> to vector<1x8xf32>
    %134 = vector.broadcast %133 : vector<1x8xf32> to vector<24x8xf32>
    %135 = arith.addf %131, %134 : vector<24x8xf32>
    %c2_127 = arith.constant 2 : index
    %c3_128 = arith.constant 3 : index
    %c0_129 = arith.constant 0 : index
    %c0_130 = arith.constant 0 : index
    %136 = vector.load %arg4[%c2_127, %c3_128, %c0_129, %c0_130] : memref<3x4x32x8xf32, #tpu.memory_space<vmem>>, vector<1x1x32x8xf32>
    %137 = vector.shape_cast %136 : vector<1x1x32x8xf32> to vector<32x8xf32>
    %cst_131 = arith.constant dense<0.000000e+00> : vector<24x8xf32>
    %138 = tpu.matmul %0, %137, %cst_131 {dimension_numbers = #tpu.dot_dimension_numbers<[1], [0], [0], [1], [0, 0, 1, 1], [], []>} : vector<24x32xf32>, vector<32x8xf32>, vector<24x8xf32> -> vector<24x8xf32>
    %c2_132 = arith.constant 2 : index
    %c3_133 = arith.constant 3 : index
    %c0_134 = arith.constant 0 : index
    %c0_135 = arith.constant 0 : index
    %139 = vector.load %arg5[%c2_132, %c3_133, %c0_134, %c0_135] : memref<3x4x1x8xf32, #tpu.memory_space<vmem>>, vector<1x1x1x8xf32>
    %140 = vector.shape_cast %139 : vector<1x1x1x8xf32> to vector<1x8xf32>
    %141 = vector.broadcast %140 : vector<1x8xf32> to vector<24x8xf32>
    %142 = arith.addf %138, %141 : vector<24x8xf32>
    %cst_136 = arith.constant dense<0.000000e+00> : vector<24x24xf32>
    %143 = tpu.matmul %128, %135, %cst_136 {dimension_numbers = #tpu.dot_dimension_numbers<[1], [1], [0], [0], [0, 0, 1, 0], [], []>} : vector<24x8xf32>, vector<24x8xf32>, vector<24x24xf32> -> vector<24x24xf32>
    %cst_137 = arith.constant 0.353553385 : f32
    %144 = vector.broadcast %cst_137 : f32 to vector<24x24xf32>
    %145 = arith.mulf %143, %144 : vector<24x24xf32>
    %146 = arith.addf %145, %2 : vector<24x24xf32>
    %cst_138 = arith.constant dense<0xFF800000> : vector<24xf32>
    %147 = vector.multi_reduction <maximumf>, %146, %cst_138 [1] : vector<24x24xf32> to vector<24xf32>
    %148 = vector.shape_cast %147 : vector<24xf32> to vector<24x1xf32>
    %149 = vector.broadcast %148 : vector<24x1xf32> to vector<24x24xf32>
    %150 = arith.subf %146, %149 : vector<24x24xf32>
    %151 = math.exp %150 : vector<24x24xf32>
    %cst_139 = arith.constant dense<0.000000e+00> : vector<24xf32>
    %152 = vector.multi_reduction <add>, %151, %cst_139 [1] : vector<24x24xf32> to vector<24xf32>
    %153 = vector.shape_cast %152 : vector<24xf32> to vector<24x1xf32>
    %154 = tpu.reciprocal %153 {approx = true} : vector<24x1xf32> -> vector<24x1xf32>
    %155 = vector.broadcast %154 : vector<24x1xf32> to vector<24x24xf32>
    %156 = arith.mulf %151, %155 : vector<24x24xf32>
    %cst_140 = arith.constant dense<0.000000e+00> : vector<24x8xf32>
    %157 = tpu.matmul %156, %142, %cst_140 {dimension_numbers = #tpu.dot_dimension_numbers<[1], [0], [0], [1], [0, 0, 1, 1], [], []>} : vector<24x24xf32>, vector<24x8xf32>, vector<24x8xf32> -> vector<24x8xf32>
    %c3_141 = arith.constant 3 : index
    %c0_142 = arith.constant 0 : index
    %c0_143 = arith.constant 0 : index
    %158 = vector.load %arg6[%c3_141, %c0_142, %c0_143] : memref<4x8x32xf32, #tpu.memory_space<vmem>>, vector<1x8x32xf32>
    %159 = vector.shape_cast %158 : vector<1x8x32xf32> to vector<8x32xf32>
    %cst_144 = arith.constant dense<0.000000e+00> : vector<24x32xf32>
    %160 = tpu.matmul %157, %159, %cst_144 {dimension_numbers = #tpu.dot_dimension_numbers<[1], [0], [0], [1], [0, 0, 1, 1], [], []>} : vector<24x8xf32>, vector<8x32xf32>, vector<24x32xf32> -> vector<24x32xf32>
    %161 = arith.addf %121, %160 : vector<24x32xf32>
    %c0_145 = arith.constant 0 : index
    %c0_146 = arith.constant 0 : index
    %162 = vector.load %arg7[%c0_145, %c0_146] : memref<1x32xf32, #tpu.memory_space<vmem>>, vector<1x32xf32>
    %163 = vector.broadcast %162 : vector<1x32xf32> to vector<24x32xf32>
    %164 = arith.addf %161, %163 : vector<24x32xf32>
    %165 = arith.addf %0, %164 : vector<24x32xf32>
    %c0_147 = arith.constant 0 : index
    %c0_148 = arith.constant 0 : index
    %166 = vector.load %arg12[%c0_147, %c0_148] : memref<1x32xf32, #tpu.memory_space<vmem>>, vector<1x32xf32>
    %c0_149 = arith.constant 0 : index
    %c0_150 = arith.constant 0 : index
    %167 = vector.load %arg13[%c0_149, %c0_150] : memref<1x32xf32, #tpu.memory_space<vmem>>, vector<1x32xf32>
    %cst_151 = arith.constant dense<0.000000e+00> : vector<24xf32>
    %168 = vector.multi_reduction <add>, %165, %cst_151 [1] : vector<24x32xf32> to vector<24xf32>
    %169 = vector.shape_cast %168 : vector<24xf32> to vector<24x1xf32>
    %cst_152 = arith.constant 3.200000e+01 : f32
    %170 = vector.broadcast %cst_152 : f32 to vector<24x1xf32>
    %171 = arith.divf %169, %170 : vector<24x1xf32>
    %172 = vector.broadcast %171 : vector<24x1xf32> to vector<24x32xf32>
    %173 = arith.subf %165, %172 : vector<24x32xf32>
    %174 = arith.mulf %173, %173 : vector<24x32xf32>
    %cst_153 = arith.constant dense<0.000000e+00> : vector<24xf32>
    %175 = vector.multi_reduction <add>, %174, %cst_153 [1] : vector<24x32xf32> to vector<24xf32>
    %176 = vector.shape_cast %175 : vector<24xf32> to vector<24x1xf32>
    %cst_154 = arith.constant 3.200000e+01 : f32
    %177 = vector.broadcast %cst_154 : f32 to vector<24x1xf32>
    %178 = arith.divf %176, %177 : vector<24x1xf32>
    %179 = vector.broadcast %171 : vector<24x1xf32> to vector<24x32xf32>
    %180 = arith.subf %165, %179 : vector<24x32xf32>
    %cst_155 = arith.constant 9.99999974E-6 : f32
    %181 = vector.broadcast %cst_155 : f32 to vector<24x1xf32>
    %182 = arith.addf %178, %181 : vector<24x1xf32>
    %183 = math.rsqrt %182 : vector<24x1xf32>
    %184 = vector.broadcast %183 : vector<24x1xf32> to vector<24x32xf32>
    %185 = arith.mulf %180, %184 : vector<24x32xf32>
    %186 = vector.broadcast %166 : vector<1x32xf32> to vector<24x32xf32>
    %187 = arith.mulf %185, %186 : vector<24x32xf32>
    %188 = vector.broadcast %167 : vector<1x32xf32> to vector<24x32xf32>
    %189 = arith.addf %187, %188 : vector<24x32xf32>
    %c0_156 = arith.constant 0 : index
    %c0_157 = arith.constant 0 : index
    %190 = vector.load %arg3[%c0_156, %c0_157] : memref<24x24xf32, #tpu.memory_space<vmem>>, vector<24x24xf32>
    %c0_158 = arith.constant 0 : index
    %c0_159 = arith.constant 0 : index
    %c0_160 = arith.constant 0 : index
    %c0_161 = arith.constant 0 : index
    %191 = vector.load %arg8[%c0_158, %c0_159, %c0_160, %c0_161] : memref<3x4x32x8xf32, #tpu.memory_space<vmem>>, vector<1x1x32x8xf32>
    %192 = vector.shape_cast %191 : vector<1x1x32x8xf32> to vector<32x8xf32>
    %cst_162 = arith.constant dense<0.000000e+00> : vector<24x8xf32>
    %193 = tpu.matmul %189, %192, %cst_162 {dimension_numbers = #tpu.dot_dimension_numbers<[1], [0], [0], [1], [0, 0, 1, 1], [], []>} : vector<24x32xf32>, vector<32x8xf32>, vector<24x8xf32> -> vector<24x8xf32>
    %c0_163 = arith.constant 0 : index
    %c0_164 = arith.constant 0 : index
    %c0_165 = arith.constant 0 : index
    %c0_166 = arith.constant 0 : index
    %194 = vector.load %arg9[%c0_163, %c0_164, %c0_165, %c0_166] : memref<3x4x1x8xf32, #tpu.memory_space<vmem>>, vector<1x1x1x8xf32>
    %195 = vector.shape_cast %194 : vector<1x1x1x8xf32> to vector<1x8xf32>
    %196 = vector.broadcast %195 : vector<1x8xf32> to vector<24x8xf32>
    %197 = arith.addf %193, %196 : vector<24x8xf32>
    %c1_167 = arith.constant 1 : index
    %c0_168 = arith.constant 0 : index
    %c0_169 = arith.constant 0 : index
    %c0_170 = arith.constant 0 : index
    %198 = vector.load %arg8[%c1_167, %c0_168, %c0_169, %c0_170] : memref<3x4x32x8xf32, #tpu.memory_space<vmem>>, vector<1x1x32x8xf32>
    %199 = vector.shape_cast %198 : vector<1x1x32x8xf32> to vector<32x8xf32>
    %cst_171 = arith.constant dense<0.000000e+00> : vector<24x8xf32>
    %200 = tpu.matmul %1, %199, %cst_171 {dimension_numbers = #tpu.dot_dimension_numbers<[1], [0], [0], [1], [0, 0, 1, 1], [], []>} : vector<24x32xf32>, vector<32x8xf32>, vector<24x8xf32> -> vector<24x8xf32>
    %c1_172 = arith.constant 1 : index
    %c0_173 = arith.constant 0 : index
    %c0_174 = arith.constant 0 : index
    %c0_175 = arith.constant 0 : index
    %201 = vector.load %arg9[%c1_172, %c0_173, %c0_174, %c0_175] : memref<3x4x1x8xf32, #tpu.memory_space<vmem>>, vector<1x1x1x8xf32>
    %202 = vector.shape_cast %201 : vector<1x1x1x8xf32> to vector<1x8xf32>
    %203 = vector.broadcast %202 : vector<1x8xf32> to vector<24x8xf32>
    %204 = arith.addf %200, %203 : vector<24x8xf32>
    %c2_176 = arith.constant 2 : index
    %c0_177 = arith.constant 0 : index
    %c0_178 = arith.constant 0 : index
    %c0_179 = arith.constant 0 : index
    %205 = vector.load %arg8[%c2_176, %c0_177, %c0_178, %c0_179] : memref<3x4x32x8xf32, #tpu.memory_space<vmem>>, vector<1x1x32x8xf32>
    %206 = vector.shape_cast %205 : vector<1x1x32x8xf32> to vector<32x8xf32>
    %cst_180 = arith.constant dense<0.000000e+00> : vector<24x8xf32>
    %207 = tpu.matmul %1, %206, %cst_180 {dimension_numbers = #tpu.dot_dimension_numbers<[1], [0], [0], [1], [0, 0, 1, 1], [], []>} : vector<24x32xf32>, vector<32x8xf32>, vector<24x8xf32> -> vector<24x8xf32>
    %c2_181 = arith.constant 2 : index
    %c0_182 = arith.constant 0 : index
    %c0_183 = arith.constant 0 : index
    %c0_184 = arith.constant 0 : index
    %208 = vector.load %arg9[%c2_181, %c0_182, %c0_183, %c0_184] : memref<3x4x1x8xf32, #tpu.memory_space<vmem>>, vector<1x1x1x8xf32>
    %209 = vector.shape_cast %208 : vector<1x1x1x8xf32> to vector<1x8xf32>
    %210 = vector.broadcast %209 : vector<1x8xf32> to vector<24x8xf32>
    %211 = arith.addf %207, %210 : vector<24x8xf32>
    %cst_185 = arith.constant dense<0.000000e+00> : vector<24x24xf32>
    %212 = tpu.matmul %197, %204, %cst_185 {dimension_numbers = #tpu.dot_dimension_numbers<[1], [1], [0], [0], [0, 0, 1, 0], [], []>} : vector<24x8xf32>, vector<24x8xf32>, vector<24x24xf32> -> vector<24x24xf32>
    %cst_186 = arith.constant 0.353553385 : f32
    %213 = vector.broadcast %cst_186 : f32 to vector<24x24xf32>
    %214 = arith.mulf %212, %213 : vector<24x24xf32>
    %215 = arith.addf %214, %190 : vector<24x24xf32>
    %cst_187 = arith.constant dense<0xFF800000> : vector<24xf32>
    %216 = vector.multi_reduction <maximumf>, %215, %cst_187 [1] : vector<24x24xf32> to vector<24xf32>
    %217 = vector.shape_cast %216 : vector<24xf32> to vector<24x1xf32>
    %218 = vector.broadcast %217 : vector<24x1xf32> to vector<24x24xf32>
    %219 = arith.subf %215, %218 : vector<24x24xf32>
    %220 = math.exp %219 : vector<24x24xf32>
    %cst_188 = arith.constant dense<0.000000e+00> : vector<24xf32>
    %221 = vector.multi_reduction <add>, %220, %cst_188 [1] : vector<24x24xf32> to vector<24xf32>
    %222 = vector.shape_cast %221 : vector<24xf32> to vector<24x1xf32>
    %223 = tpu.reciprocal %222 {approx = true} : vector<24x1xf32> -> vector<24x1xf32>
    %224 = vector.broadcast %223 : vector<24x1xf32> to vector<24x24xf32>
    %225 = arith.mulf %220, %224 : vector<24x24xf32>
    %cst_189 = arith.constant dense<0.000000e+00> : vector<24x8xf32>
    %226 = tpu.matmul %225, %211, %cst_189 {dimension_numbers = #tpu.dot_dimension_numbers<[1], [0], [0], [1], [0, 0, 1, 1], [], []>} : vector<24x24xf32>, vector<24x8xf32>, vector<24x8xf32> -> vector<24x8xf32>
    %c0_190 = arith.constant 0 : index
    %c0_191 = arith.constant 0 : index
    %c0_192 = arith.constant 0 : index
    %227 = vector.load %arg10[%c0_190, %c0_191, %c0_192] : memref<4x8x32xf32, #tpu.memory_space<vmem>>, vector<1x8x32xf32>
    %228 = vector.shape_cast %227 : vector<1x8x32xf32> to vector<8x32xf32>
    %cst_193 = arith.constant dense<0.000000e+00> : vector<24x32xf32>
    %229 = tpu.matmul %226, %228, %cst_193 {dimension_numbers = #tpu.dot_dimension_numbers<[1], [0], [0], [1], [0, 0, 1, 1], [], []>} : vector<24x8xf32>, vector<8x32xf32>, vector<24x32xf32> -> vector<24x32xf32>
    %c0_194 = arith.constant 0 : index
    %c1_195 = arith.constant 1 : index
    %c0_196 = arith.constant 0 : index
    %c0_197 = arith.constant 0 : index
    %230 = vector.load %arg8[%c0_194, %c1_195, %c0_196, %c0_197] : memref<3x4x32x8xf32, #tpu.memory_space<vmem>>, vector<1x1x32x8xf32>
    %231 = vector.shape_cast %230 : vector<1x1x32x8xf32> to vector<32x8xf32>
    %cst_198 = arith.constant dense<0.000000e+00> : vector<24x8xf32>
    %232 = tpu.matmul %189, %231, %cst_198 {dimension_numbers = #tpu.dot_dimension_numbers<[1], [0], [0], [1], [0, 0, 1, 1], [], []>} : vector<24x32xf32>, vector<32x8xf32>, vector<24x8xf32> -> vector<24x8xf32>
    %c0_199 = arith.constant 0 : index
    %c1_200 = arith.constant 1 : index
    %c0_201 = arith.constant 0 : index
    %c0_202 = arith.constant 0 : index
    %233 = vector.load %arg9[%c0_199, %c1_200, %c0_201, %c0_202] : memref<3x4x1x8xf32, #tpu.memory_space<vmem>>, vector<1x1x1x8xf32>
    %234 = vector.shape_cast %233 : vector<1x1x1x8xf32> to vector<1x8xf32>
    %235 = vector.broadcast %234 : vector<1x8xf32> to vector<24x8xf32>
    %236 = arith.addf %232, %235 : vector<24x8xf32>
    %c1_203 = arith.constant 1 : index
    %c1_204 = arith.constant 1 : index
    %c0_205 = arith.constant 0 : index
    %c0_206 = arith.constant 0 : index
    %237 = vector.load %arg8[%c1_203, %c1_204, %c0_205, %c0_206] : memref<3x4x32x8xf32, #tpu.memory_space<vmem>>, vector<1x1x32x8xf32>
    %238 = vector.shape_cast %237 : vector<1x1x32x8xf32> to vector<32x8xf32>
    %cst_207 = arith.constant dense<0.000000e+00> : vector<24x8xf32>
    %239 = tpu.matmul %1, %238, %cst_207 {dimension_numbers = #tpu.dot_dimension_numbers<[1], [0], [0], [1], [0, 0, 1, 1], [], []>} : vector<24x32xf32>, vector<32x8xf32>, vector<24x8xf32> -> vector<24x8xf32>
    %c1_208 = arith.constant 1 : index
    %c1_209 = arith.constant 1 : index
    %c0_210 = arith.constant 0 : index
    %c0_211 = arith.constant 0 : index
    %240 = vector.load %arg9[%c1_208, %c1_209, %c0_210, %c0_211] : memref<3x4x1x8xf32, #tpu.memory_space<vmem>>, vector<1x1x1x8xf32>
    %241 = vector.shape_cast %240 : vector<1x1x1x8xf32> to vector<1x8xf32>
    %242 = vector.broadcast %241 : vector<1x8xf32> to vector<24x8xf32>
    %243 = arith.addf %239, %242 : vector<24x8xf32>
    %c2_212 = arith.constant 2 : index
    %c1_213 = arith.constant 1 : index
    %c0_214 = arith.constant 0 : index
    %c0_215 = arith.constant 0 : index
    %244 = vector.load %arg8[%c2_212, %c1_213, %c0_214, %c0_215] : memref<3x4x32x8xf32, #tpu.memory_space<vmem>>, vector<1x1x32x8xf32>
    %245 = vector.shape_cast %244 : vector<1x1x32x8xf32> to vector<32x8xf32>
    %cst_216 = arith.constant dense<0.000000e+00> : vector<24x8xf32>
    %246 = tpu.matmul %1, %245, %cst_216 {dimension_numbers = #tpu.dot_dimension_numbers<[1], [0], [0], [1], [0, 0, 1, 1], [], []>} : vector<24x32xf32>, vector<32x8xf32>, vector<24x8xf32> -> vector<24x8xf32>
    %c2_217 = arith.constant 2 : index
    %c1_218 = arith.constant 1 : index
    %c0_219 = arith.constant 0 : index
    %c0_220 = arith.constant 0 : index
    %247 = vector.load %arg9[%c2_217, %c1_218, %c0_219, %c0_220] : memref<3x4x1x8xf32, #tpu.memory_space<vmem>>, vector<1x1x1x8xf32>
    %248 = vector.shape_cast %247 : vector<1x1x1x8xf32> to vector<1x8xf32>
    %249 = vector.broadcast %248 : vector<1x8xf32> to vector<24x8xf32>
    %250 = arith.addf %246, %249 : vector<24x8xf32>
    %cst_221 = arith.constant dense<0.000000e+00> : vector<24x24xf32>
    %251 = tpu.matmul %236, %243, %cst_221 {dimension_numbers = #tpu.dot_dimension_numbers<[1], [1], [0], [0], [0, 0, 1, 0], [], []>} : vector<24x8xf32>, vector<24x8xf32>, vector<24x24xf32> -> vector<24x24xf32>
    %cst_222 = arith.constant 0.353553385 : f32
    %252 = vector.broadcast %cst_222 : f32 to vector<24x24xf32>
    %253 = arith.mulf %251, %252 : vector<24x24xf32>
    %254 = arith.addf %253, %190 : vector<24x24xf32>
    %cst_223 = arith.constant dense<0xFF800000> : vector<24xf32>
    %255 = vector.multi_reduction <maximumf>, %254, %cst_223 [1] : vector<24x24xf32> to vector<24xf32>
    %256 = vector.shape_cast %255 : vector<24xf32> to vector<24x1xf32>
    %257 = vector.broadcast %256 : vector<24x1xf32> to vector<24x24xf32>
    %258 = arith.subf %254, %257 : vector<24x24xf32>
    %259 = math.exp %258 : vector<24x24xf32>
    %cst_224 = arith.constant dense<0.000000e+00> : vector<24xf32>
    %260 = vector.multi_reduction <add>, %259, %cst_224 [1] : vector<24x24xf32> to vector<24xf32>
    %261 = vector.shape_cast %260 : vector<24xf32> to vector<24x1xf32>
    %262 = tpu.reciprocal %261 {approx = true} : vector<24x1xf32> -> vector<24x1xf32>
    %263 = vector.broadcast %262 : vector<24x1xf32> to vector<24x24xf32>
    %264 = arith.mulf %259, %263 : vector<24x24xf32>
    %cst_225 = arith.constant dense<0.000000e+00> : vector<24x8xf32>
    %265 = tpu.matmul %264, %250, %cst_225 {dimension_numbers = #tpu.dot_dimension_numbers<[1], [0], [0], [1], [0, 0, 1, 1], [], []>} : vector<24x24xf32>, vector<24x8xf32>, vector<24x8xf32> -> vector<24x8xf32>
    %c1_226 = arith.constant 1 : index
    %c0_227 = arith.constant 0 : index
    %c0_228 = arith.constant 0 : index
    %266 = vector.load %arg10[%c1_226, %c0_227, %c0_228] : memref<4x8x32xf32, #tpu.memory_space<vmem>>, vector<1x8x32xf32>
    %267 = vector.shape_cast %266 : vector<1x8x32xf32> to vector<8x32xf32>
    %cst_229 = arith.constant dense<0.000000e+00> : vector<24x32xf32>
    %268 = tpu.matmul %265, %267, %cst_229 {dimension_numbers = #tpu.dot_dimension_numbers<[1], [0], [0], [1], [0, 0, 1, 1], [], []>} : vector<24x8xf32>, vector<8x32xf32>, vector<24x32xf32> -> vector<24x32xf32>
    %269 = arith.addf %229, %268 : vector<24x32xf32>
    %c0_230 = arith.constant 0 : index
    %c2_231 = arith.constant 2 : index
    %c0_232 = arith.constant 0 : index
    %c0_233 = arith.constant 0 : index
    %270 = vector.load %arg8[%c0_230, %c2_231, %c0_232, %c0_233] : memref<3x4x32x8xf32, #tpu.memory_space<vmem>>, vector<1x1x32x8xf32>
    %271 = vector.shape_cast %270 : vector<1x1x32x8xf32> to vector<32x8xf32>
    %cst_234 = arith.constant dense<0.000000e+00> : vector<24x8xf32>
    %272 = tpu.matmul %189, %271, %cst_234 {dimension_numbers = #tpu.dot_dimension_numbers<[1], [0], [0], [1], [0, 0, 1, 1], [], []>} : vector<24x32xf32>, vector<32x8xf32>, vector<24x8xf32> -> vector<24x8xf32>
    %c0_235 = arith.constant 0 : index
    %c2_236 = arith.constant 2 : index
    %c0_237 = arith.constant 0 : index
    %c0_238 = arith.constant 0 : index
    %273 = vector.load %arg9[%c0_235, %c2_236, %c0_237, %c0_238] : memref<3x4x1x8xf32, #tpu.memory_space<vmem>>, vector<1x1x1x8xf32>
    %274 = vector.shape_cast %273 : vector<1x1x1x8xf32> to vector<1x8xf32>
    %275 = vector.broadcast %274 : vector<1x8xf32> to vector<24x8xf32>
    %276 = arith.addf %272, %275 : vector<24x8xf32>
    %c1_239 = arith.constant 1 : index
    %c2_240 = arith.constant 2 : index
    %c0_241 = arith.constant 0 : index
    %c0_242 = arith.constant 0 : index
    %277 = vector.load %arg8[%c1_239, %c2_240, %c0_241, %c0_242] : memref<3x4x32x8xf32, #tpu.memory_space<vmem>>, vector<1x1x32x8xf32>
    %278 = vector.shape_cast %277 : vector<1x1x32x8xf32> to vector<32x8xf32>
    %cst_243 = arith.constant dense<0.000000e+00> : vector<24x8xf32>
    %279 = tpu.matmul %1, %278, %cst_243 {dimension_numbers = #tpu.dot_dimension_numbers<[1], [0], [0], [1], [0, 0, 1, 1], [], []>} : vector<24x32xf32>, vector<32x8xf32>, vector<24x8xf32> -> vector<24x8xf32>
    %c1_244 = arith.constant 1 : index
    %c2_245 = arith.constant 2 : index
    %c0_246 = arith.constant 0 : index
    %c0_247 = arith.constant 0 : index
    %280 = vector.load %arg9[%c1_244, %c2_245, %c0_246, %c0_247] : memref<3x4x1x8xf32, #tpu.memory_space<vmem>>, vector<1x1x1x8xf32>
    %281 = vector.shape_cast %280 : vector<1x1x1x8xf32> to vector<1x8xf32>
    %282 = vector.broadcast %281 : vector<1x8xf32> to vector<24x8xf32>
    %283 = arith.addf %279, %282 : vector<24x8xf32>
    %c2_248 = arith.constant 2 : index
    %c2_249 = arith.constant 2 : index
    %c0_250 = arith.constant 0 : index
    %c0_251 = arith.constant 0 : index
    %284 = vector.load %arg8[%c2_248, %c2_249, %c0_250, %c0_251] : memref<3x4x32x8xf32, #tpu.memory_space<vmem>>, vector<1x1x32x8xf32>
    %285 = vector.shape_cast %284 : vector<1x1x32x8xf32> to vector<32x8xf32>
    %cst_252 = arith.constant dense<0.000000e+00> : vector<24x8xf32>
    %286 = tpu.matmul %1, %285, %cst_252 {dimension_numbers = #tpu.dot_dimension_numbers<[1], [0], [0], [1], [0, 0, 1, 1], [], []>} : vector<24x32xf32>, vector<32x8xf32>, vector<24x8xf32> -> vector<24x8xf32>
    %c2_253 = arith.constant 2 : index
    %c2_254 = arith.constant 2 : index
    %c0_255 = arith.constant 0 : index
    %c0_256 = arith.constant 0 : index
    %287 = vector.load %arg9[%c2_253, %c2_254, %c0_255, %c0_256] : memref<3x4x1x8xf32, #tpu.memory_space<vmem>>, vector<1x1x1x8xf32>
    %288 = vector.shape_cast %287 : vector<1x1x1x8xf32> to vector<1x8xf32>
    %289 = vector.broadcast %288 : vector<1x8xf32> to vector<24x8xf32>
    %290 = arith.addf %286, %289 : vector<24x8xf32>
    %cst_257 = arith.constant dense<0.000000e+00> : vector<24x24xf32>
    %291 = tpu.matmul %276, %283, %cst_257 {dimension_numbers = #tpu.dot_dimension_numbers<[1], [1], [0], [0], [0, 0, 1, 0], [], []>} : vector<24x8xf32>, vector<24x8xf32>, vector<24x24xf32> -> vector<24x24xf32>
    %cst_258 = arith.constant 0.353553385 : f32
    %292 = vector.broadcast %cst_258 : f32 to vector<24x24xf32>
    %293 = arith.mulf %291, %292 : vector<24x24xf32>
    %294 = arith.addf %293, %190 : vector<24x24xf32>
    %cst_259 = arith.constant dense<0xFF800000> : vector<24xf32>
    %295 = vector.multi_reduction <maximumf>, %294, %cst_259 [1] : vector<24x24xf32> to vector<24xf32>
    %296 = vector.shape_cast %295 : vector<24xf32> to vector<24x1xf32>
    %297 = vector.broadcast %296 : vector<24x1xf32> to vector<24x24xf32>
    %298 = arith.subf %294, %297 : vector<24x24xf32>
    %299 = math.exp %298 : vector<24x24xf32>
    %cst_260 = arith.constant dense<0.000000e+00> : vector<24xf32>
    %300 = vector.multi_reduction <add>, %299, %cst_260 [1] : vector<24x24xf32> to vector<24xf32>
    %301 = vector.shape_cast %300 : vector<24xf32> to vector<24x1xf32>
    %302 = tpu.reciprocal %301 {approx = true} : vector<24x1xf32> -> vector<24x1xf32>
    %303 = vector.broadcast %302 : vector<24x1xf32> to vector<24x24xf32>
    %304 = arith.mulf %299, %303 : vector<24x24xf32>
    %cst_261 = arith.constant dense<0.000000e+00> : vector<24x8xf32>
    %305 = tpu.matmul %304, %290, %cst_261 {dimension_numbers = #tpu.dot_dimension_numbers<[1], [0], [0], [1], [0, 0, 1, 1], [], []>} : vector<24x24xf32>, vector<24x8xf32>, vector<24x8xf32> -> vector<24x8xf32>
    %c2_262 = arith.constant 2 : index
    %c0_263 = arith.constant 0 : index
    %c0_264 = arith.constant 0 : index
    %306 = vector.load %arg10[%c2_262, %c0_263, %c0_264] : memref<4x8x32xf32, #tpu.memory_space<vmem>>, vector<1x8x32xf32>
    %307 = vector.shape_cast %306 : vector<1x8x32xf32> to vector<8x32xf32>
    %cst_265 = arith.constant dense<0.000000e+00> : vector<24x32xf32>
    %308 = tpu.matmul %305, %307, %cst_265 {dimension_numbers = #tpu.dot_dimension_numbers<[1], [0], [0], [1], [0, 0, 1, 1], [], []>} : vector<24x8xf32>, vector<8x32xf32>, vector<24x32xf32> -> vector<24x32xf32>
    %309 = arith.addf %269, %308 : vector<24x32xf32>
    %c0_266 = arith.constant 0 : index
    %c3_267 = arith.constant 3 : index
    %c0_268 = arith.constant 0 : index
    %c0_269 = arith.constant 0 : index
    %310 = vector.load %arg8[%c0_266, %c3_267, %c0_268, %c0_269] : memref<3x4x32x8xf32, #tpu.memory_space<vmem>>, vector<1x1x32x8xf32>
    %311 = vector.shape_cast %310 : vector<1x1x32x8xf32> to vector<32x8xf32>
    %cst_270 = arith.constant dense<0.000000e+00> : vector<24x8xf32>
    %312 = tpu.matmul %189, %311, %cst_270 {dimension_numbers = #tpu.dot_dimension_numbers<[1], [0], [0], [1], [0, 0, 1, 1], [], []>} : vector<24x32xf32>, vector<32x8xf32>, vector<24x8xf32> -> vector<24x8xf32>
    %c0_271 = arith.constant 0 : index
    %c3_272 = arith.constant 3 : index
    %c0_273 = arith.constant 0 : index
    %c0_274 = arith.constant 0 : index
    %313 = vector.load %arg9[%c0_271, %c3_272, %c0_273, %c0_274] : memref<3x4x1x8xf32, #tpu.memory_space<vmem>>, vector<1x1x1x8xf32>
    %314 = vector.shape_cast %313 : vector<1x1x1x8xf32> to vector<1x8xf32>
    %315 = vector.broadcast %314 : vector<1x8xf32> to vector<24x8xf32>
    %316 = arith.addf %312, %315 : vector<24x8xf32>
    %c1_275 = arith.constant 1 : index
    %c3_276 = arith.constant 3 : index
    %c0_277 = arith.constant 0 : index
    %c0_278 = arith.constant 0 : index
    %317 = vector.load %arg8[%c1_275, %c3_276, %c0_277, %c0_278] : memref<3x4x32x8xf32, #tpu.memory_space<vmem>>, vector<1x1x32x8xf32>
    %318 = vector.shape_cast %317 : vector<1x1x32x8xf32> to vector<32x8xf32>
    %cst_279 = arith.constant dense<0.000000e+00> : vector<24x8xf32>
    %319 = tpu.matmul %1, %318, %cst_279 {dimension_numbers = #tpu.dot_dimension_numbers<[1], [0], [0], [1], [0, 0, 1, 1], [], []>} : vector<24x32xf32>, vector<32x8xf32>, vector<24x8xf32> -> vector<24x8xf32>
    %c1_280 = arith.constant 1 : index
    %c3_281 = arith.constant 3 : index
    %c0_282 = arith.constant 0 : index
    %c0_283 = arith.constant 0 : index
    %320 = vector.load %arg9[%c1_280, %c3_281, %c0_282, %c0_283] : memref<3x4x1x8xf32, #tpu.memory_space<vmem>>, vector<1x1x1x8xf32>
    %321 = vector.shape_cast %320 : vector<1x1x1x8xf32> to vector<1x8xf32>
    %322 = vector.broadcast %321 : vector<1x8xf32> to vector<24x8xf32>
    %323 = arith.addf %319, %322 : vector<24x8xf32>
    %c2_284 = arith.constant 2 : index
    %c3_285 = arith.constant 3 : index
    %c0_286 = arith.constant 0 : index
    %c0_287 = arith.constant 0 : index
    %324 = vector.load %arg8[%c2_284, %c3_285, %c0_286, %c0_287] : memref<3x4x32x8xf32, #tpu.memory_space<vmem>>, vector<1x1x32x8xf32>
    %325 = vector.shape_cast %324 : vector<1x1x32x8xf32> to vector<32x8xf32>
    %cst_288 = arith.constant dense<0.000000e+00> : vector<24x8xf32>
    %326 = tpu.matmul %1, %325, %cst_288 {dimension_numbers = #tpu.dot_dimension_numbers<[1], [0], [0], [1], [0, 0, 1, 1], [], []>} : vector<24x32xf32>, vector<32x8xf32>, vector<24x8xf32> -> vector<24x8xf32>
    %c2_289 = arith.constant 2 : index
    %c3_290 = arith.constant 3 : index
    %c0_291 = arith.constant 0 : index
    %c0_292 = arith.constant 0 : index
    %327 = vector.load %arg9[%c2_289, %c3_290, %c0_291, %c0_292] : memref<3x4x1x8xf32, #tpu.memory_space<vmem>>, vector<1x1x1x8xf32>
    %328 = vector.shape_cast %327 : vector<1x1x1x8xf32> to vector<1x8xf32>
    %329 = vector.broadcast %328 : vector<1x8xf32> to vector<24x8xf32>
    %330 = arith.addf %326, %329 : vector<24x8xf32>
    %cst_293 = arith.constant dense<0.000000e+00> : vector<24x24xf32>
    %331 = tpu.matmul %316, %323, %cst_293 {dimension_numbers = #tpu.dot_dimension_numbers<[1], [1], [0], [0], [0, 0, 1, 0], [], []>} : vector<24x8xf32>, vector<24x8xf32>, vector<24x24xf32> -> vector<24x24xf32>
    %cst_294 = arith.constant 0.353553385 : f32
    %332 = vector.broadcast %cst_294 : f32 to vector<24x24xf32>
    %333 = arith.mulf %331, %332 : vector<24x24xf32>
    %334 = arith.addf %333, %190 : vector<24x24xf32>
    %cst_295 = arith.constant dense<0xFF800000> : vector<24xf32>
    %335 = vector.multi_reduction <maximumf>, %334, %cst_295 [1] : vector<24x24xf32> to vector<24xf32>
    %336 = vector.shape_cast %335 : vector<24xf32> to vector<24x1xf32>
    %337 = vector.broadcast %336 : vector<24x1xf32> to vector<24x24xf32>
    %338 = arith.subf %334, %337 : vector<24x24xf32>
    %339 = math.exp %338 : vector<24x24xf32>
    %cst_296 = arith.constant dense<0.000000e+00> : vector<24xf32>
    %340 = vector.multi_reduction <add>, %339, %cst_296 [1] : vector<24x24xf32> to vector<24xf32>
    %341 = vector.shape_cast %340 : vector<24xf32> to vector<24x1xf32>
    %342 = tpu.reciprocal %341 {approx = true} : vector<24x1xf32> -> vector<24x1xf32>
    %343 = vector.broadcast %342 : vector<24x1xf32> to vector<24x24xf32>
    %344 = arith.mulf %339, %343 : vector<24x24xf32>
    %cst_297 = arith.constant dense<0.000000e+00> : vector<24x8xf32>
    %345 = tpu.matmul %344, %330, %cst_297 {dimension_numbers = #tpu.dot_dimension_numbers<[1], [0], [0], [1], [0, 0, 1, 1], [], []>} : vector<24x24xf32>, vector<24x8xf32>, vector<24x8xf32> -> vector<24x8xf32>
    %c3_298 = arith.constant 3 : index
    %c0_299 = arith.constant 0 : index
    %c0_300 = arith.constant 0 : index
    %346 = vector.load %arg10[%c3_298, %c0_299, %c0_300] : memref<4x8x32xf32, #tpu.memory_space<vmem>>, vector<1x8x32xf32>
    %347 = vector.shape_cast %346 : vector<1x8x32xf32> to vector<8x32xf32>
    %cst_301 = arith.constant dense<0.000000e+00> : vector<24x32xf32>
    %348 = tpu.matmul %345, %347, %cst_301 {dimension_numbers = #tpu.dot_dimension_numbers<[1], [0], [0], [1], [0, 0, 1, 1], [], []>} : vector<24x8xf32>, vector<8x32xf32>, vector<24x32xf32> -> vector<24x32xf32>
    %349 = arith.addf %309, %348 : vector<24x32xf32>
    %c0_302 = arith.constant 0 : index
    %c0_303 = arith.constant 0 : index
    %350 = vector.load %arg11[%c0_302, %c0_303] : memref<1x32xf32, #tpu.memory_space<vmem>>, vector<1x32xf32>
    %351 = vector.broadcast %350 : vector<1x32xf32> to vector<24x32xf32>
    %352 = arith.addf %349, %351 : vector<24x32xf32>
    %353 = arith.addf %189, %352 : vector<24x32xf32>
    %c0_304 = arith.constant 0 : index
    %c0_305 = arith.constant 0 : index
    %354 = vector.load %arg14[%c0_304, %c0_305] : memref<1x32xf32, #tpu.memory_space<vmem>>, vector<1x32xf32>
    %c0_306 = arith.constant 0 : index
    %c0_307 = arith.constant 0 : index
    %355 = vector.load %arg15[%c0_306, %c0_307] : memref<1x32xf32, #tpu.memory_space<vmem>>, vector<1x32xf32>
    %cst_308 = arith.constant dense<0.000000e+00> : vector<24xf32>
    %356 = vector.multi_reduction <add>, %353, %cst_308 [1] : vector<24x32xf32> to vector<24xf32>
    %357 = vector.shape_cast %356 : vector<24xf32> to vector<24x1xf32>
    %cst_309 = arith.constant 3.200000e+01 : f32
    %358 = vector.broadcast %cst_309 : f32 to vector<24x1xf32>
    %359 = arith.divf %357, %358 : vector<24x1xf32>
    %360 = vector.broadcast %359 : vector<24x1xf32> to vector<24x32xf32>
    %361 = arith.subf %353, %360 : vector<24x32xf32>
    %362 = arith.mulf %361, %361 : vector<24x32xf32>
    %cst_310 = arith.constant dense<0.000000e+00> : vector<24xf32>
    %363 = vector.multi_reduction <add>, %362, %cst_310 [1] : vector<24x32xf32> to vector<24xf32>
    %364 = vector.shape_cast %363 : vector<24xf32> to vector<24x1xf32>
    %cst_311 = arith.constant 3.200000e+01 : f32
    %365 = vector.broadcast %cst_311 : f32 to vector<24x1xf32>
    %366 = arith.divf %364, %365 : vector<24x1xf32>
    %367 = vector.broadcast %359 : vector<24x1xf32> to vector<24x32xf32>
    %368 = arith.subf %353, %367 : vector<24x32xf32>
    %cst_312 = arith.constant 9.99999974E-6 : f32
    %369 = vector.broadcast %cst_312 : f32 to vector<24x1xf32>
    %370 = arith.addf %366, %369 : vector<24x1xf32>
    %371 = math.rsqrt %370 : vector<24x1xf32>
    %372 = vector.broadcast %371 : vector<24x1xf32> to vector<24x32xf32>
    %373 = arith.mulf %368, %372 : vector<24x32xf32>
    %374 = vector.broadcast %354 : vector<1x32xf32> to vector<24x32xf32>
    %375 = arith.mulf %373, %374 : vector<24x32xf32>
    %376 = vector.broadcast %355 : vector<1x32xf32> to vector<24x32xf32>
    %377 = arith.addf %375, %376 : vector<24x32xf32>
    %c0_313 = arith.constant 0 : index
    %c0_314 = arith.constant 0 : index
    %378 = vector.load %arg18[%c0_313, %c0_314] : memref<32x64xf32, #tpu.memory_space<vmem>>, vector<32x64xf32>
    %cst_315 = arith.constant dense<0.000000e+00> : vector<24x64xf32>
    %379 = tpu.matmul %377, %378, %cst_315 {dimension_numbers = #tpu.dot_dimension_numbers<[1], [0], [0], [1], [0, 0, 1, 1], [], []>} : vector<24x32xf32>, vector<32x64xf32>, vector<24x64xf32> -> vector<24x64xf32>
    %c0_316 = arith.constant 0 : index
    %c0_317 = arith.constant 0 : index
    %380 = vector.load %arg19[%c0_316, %c0_317] : memref<1x64xf32, #tpu.memory_space<vmem>>, vector<1x64xf32>
    %381 = vector.broadcast %380 : vector<1x64xf32> to vector<24x64xf32>
    %382 = arith.addf %379, %381 : vector<24x64xf32>
    %cst_318 = arith.constant 0.000000e+00 : f32
    %383 = vector.broadcast %cst_318 : f32 to vector<24x64xf32>
    %384 = arith.maximumf %382, %383 : vector<24x64xf32>
    %c0_319 = arith.constant 0 : index
    %c0_320 = arith.constant 0 : index
    %385 = vector.load %arg20[%c0_319, %c0_320] : memref<64x32xf32, #tpu.memory_space<vmem>>, vector<64x32xf32>
    %cst_321 = arith.constant dense<0.000000e+00> : vector<24x32xf32>
    %386 = tpu.matmul %384, %385, %cst_321 {dimension_numbers = #tpu.dot_dimension_numbers<[1], [0], [0], [1], [0, 0, 1, 1], [], []>} : vector<24x64xf32>, vector<64x32xf32>, vector<24x32xf32> -> vector<24x32xf32>
    %c0_322 = arith.constant 0 : index
    %c0_323 = arith.constant 0 : index
    %387 = vector.load %arg21[%c0_322, %c0_323] : memref<1x32xf32, #tpu.memory_space<vmem>>, vector<1x32xf32>
    %388 = vector.broadcast %387 : vector<1x32xf32> to vector<24x32xf32>
    %389 = arith.addf %386, %388 : vector<24x32xf32>
    %390 = arith.addf %377, %389 : vector<24x32xf32>
    %c0_324 = arith.constant 0 : index
    %c0_325 = arith.constant 0 : index
    %391 = vector.load %arg16[%c0_324, %c0_325] : memref<1x32xf32, #tpu.memory_space<vmem>>, vector<1x32xf32>
    %c0_326 = arith.constant 0 : index
    %c0_327 = arith.constant 0 : index
    %392 = vector.load %arg17[%c0_326, %c0_327] : memref<1x32xf32, #tpu.memory_space<vmem>>, vector<1x32xf32>
    %cst_328 = arith.constant dense<0.000000e+00> : vector<24xf32>
    %393 = vector.multi_reduction <add>, %390, %cst_328 [1] : vector<24x32xf32> to vector<24xf32>
    %394 = vector.shape_cast %393 : vector<24xf32> to vector<24x1xf32>
    %cst_329 = arith.constant 3.200000e+01 : f32
    %395 = vector.broadcast %cst_329 : f32 to vector<24x1xf32>
    %396 = arith.divf %394, %395 : vector<24x1xf32>
    %397 = vector.broadcast %396 : vector<24x1xf32> to vector<24x32xf32>
    %398 = arith.subf %390, %397 : vector<24x32xf32>
    %399 = arith.mulf %398, %398 : vector<24x32xf32>
    %cst_330 = arith.constant dense<0.000000e+00> : vector<24xf32>
    %400 = vector.multi_reduction <add>, %399, %cst_330 [1] : vector<24x32xf32> to vector<24xf32>
    %401 = vector.shape_cast %400 : vector<24xf32> to vector<24x1xf32>
    %cst_331 = arith.constant 3.200000e+01 : f32
    %402 = vector.broadcast %cst_331 : f32 to vector<24x1xf32>
    %403 = arith.divf %401, %402 : vector<24x1xf32>
    %404 = vector.broadcast %396 : vector<24x1xf32> to vector<24x32xf32>
    %405 = arith.subf %390, %404 : vector<24x32xf32>
    %cst_332 = arith.constant 9.99999974E-6 : f32
    %406 = vector.broadcast %cst_332 : f32 to vector<24x1xf32>
    %407 = arith.addf %403, %406 : vector<24x1xf32>
    %408 = math.rsqrt %407 : vector<24x1xf32>
    %409 = vector.broadcast %408 : vector<24x1xf32> to vector<24x32xf32>
    %410 = arith.mulf %405, %409 : vector<24x32xf32>
    %411 = vector.broadcast %391 : vector<1x32xf32> to vector<24x32xf32>
    %412 = arith.mulf %410, %411 : vector<24x32xf32>
    %413 = vector.broadcast %392 : vector<1x32xf32> to vector<24x32xf32>
    %414 = arith.addf %412, %413 : vector<24x32xf32>
    %c0_333 = arith.constant 0 : index
    %c0_334 = arith.constant 0 : index
    %415 = vector.load %arg22[%c0_333, %c0_334] : memref<24x32xf32, #tpu.memory_space<vmem>>, vector<24x32xf32>
    tpu.vector_store %arg22[%c0_333, %c0_334], %414 {strides = array<i32>} : memref<24x32xf32, #tpu.memory_space<vmem>>, vector<24x32xf32>,
    return
  }
}

module attributes {stable_mosaic.version = 11 : i64} {
  func.func @_head_kernel(%arg0: memref<24x32xf32, #tpu.memory_space<vmem>>, %arg1: memref<1x32xf32, #tpu.memory_space<vmem>>, %arg2: memref<1x32xf32, #tpu.memory_space<vmem>>, %arg3: memref<32x4xf32, #tpu.memory_space<vmem>>, %arg4: memref<1x4xf32, #tpu.memory_space<vmem>>, %arg5: memref<24x1xf32, #tpu.memory_space<vmem>>, %arg6: memref<24x1xf32, #tpu.memory_space<vmem>>, %arg7: memref<24x4xf32, #tpu.memory_space<vmem>>) attributes {dimension_semantics = [], scalar_prefetch = 0 : i64, scratch_operands = 0 : i64, tpu.core_type = #tpu.core_type<tc>} {
    %c0 = arith.constant 0 : index
    %c0_0 = arith.constant 0 : index
    %0 = vector.load %arg0[%c0, %c0_0] : memref<24x32xf32, #tpu.memory_space<vmem>>, vector<24x32xf32>
    %c0_1 = arith.constant 0 : index
    %c0_2 = arith.constant 0 : index
    %1 = vector.load %arg1[%c0_1, %c0_2] : memref<1x32xf32, #tpu.memory_space<vmem>>, vector<1x32xf32>
    %c0_3 = arith.constant 0 : index
    %c0_4 = arith.constant 0 : index
    %2 = vector.load %arg2[%c0_3, %c0_4] : memref<1x32xf32, #tpu.memory_space<vmem>>, vector<1x32xf32>
    %cst = arith.constant dense<0.000000e+00> : vector<24xf32>
    %3 = vector.multi_reduction <add>, %0, %cst [1] : vector<24x32xf32> to vector<24xf32>
    %4 = vector.shape_cast %3 : vector<24xf32> to vector<24x1xf32>
    %cst_5 = arith.constant 3.200000e+01 : f32
    %5 = vector.broadcast %cst_5 : f32 to vector<24x1xf32>
    %6 = arith.divf %4, %5 : vector<24x1xf32>
    %7 = vector.broadcast %6 : vector<24x1xf32> to vector<24x32xf32>
    %8 = arith.subf %0, %7 : vector<24x32xf32>
    %9 = arith.mulf %8, %8 : vector<24x32xf32>
    %cst_6 = arith.constant dense<0.000000e+00> : vector<24xf32>
    %10 = vector.multi_reduction <add>, %9, %cst_6 [1] : vector<24x32xf32> to vector<24xf32>
    %11 = vector.shape_cast %10 : vector<24xf32> to vector<24x1xf32>
    %cst_7 = arith.constant 3.200000e+01 : f32
    %12 = vector.broadcast %cst_7 : f32 to vector<24x1xf32>
    %13 = arith.divf %11, %12 : vector<24x1xf32>
    %14 = vector.broadcast %6 : vector<24x1xf32> to vector<24x32xf32>
    %15 = arith.subf %0, %14 : vector<24x32xf32>
    %cst_8 = arith.constant 9.99999974E-6 : f32
    %16 = vector.broadcast %cst_8 : f32 to vector<24x1xf32>
    %17 = arith.addf %13, %16 : vector<24x1xf32>
    %18 = math.rsqrt %17 : vector<24x1xf32>
    %19 = vector.broadcast %18 : vector<24x1xf32> to vector<24x32xf32>
    %20 = arith.mulf %15, %19 : vector<24x32xf32>
    %21 = vector.broadcast %1 : vector<1x32xf32> to vector<24x32xf32>
    %22 = arith.mulf %20, %21 : vector<24x32xf32>
    %23 = vector.broadcast %2 : vector<1x32xf32> to vector<24x32xf32>
    %24 = arith.addf %22, %23 : vector<24x32xf32>
    %c0_9 = arith.constant 0 : index
    %c0_10 = arith.constant 0 : index
    %25 = vector.load %arg3[%c0_9, %c0_10] : memref<32x4xf32, #tpu.memory_space<vmem>>, vector<32x4xf32>
    %cst_11 = arith.constant dense<0.000000e+00> : vector<24x4xf32>
    %26 = tpu.matmul %24, %25, %cst_11 {dimension_numbers = #tpu.dot_dimension_numbers<[1], [0], [0], [1], [0, 0, 1, 1], [], []>} : vector<24x32xf32>, vector<32x4xf32>, vector<24x4xf32> -> vector<24x4xf32>
    %c0_12 = arith.constant 0 : index
    %c0_13 = arith.constant 0 : index
    %27 = vector.load %arg4[%c0_12, %c0_13] : memref<1x4xf32, #tpu.memory_space<vmem>>, vector<1x4xf32>
    %28 = vector.broadcast %27 : vector<1x4xf32> to vector<24x4xf32>
    %29 = arith.addf %26, %28 : vector<24x4xf32>
    %c0_14 = arith.constant 0 : index
    %c0_15 = arith.constant 0 : index
    %30 = vector.load %arg6[%c0_14, %c0_15] : memref<24x1xf32, #tpu.memory_space<vmem>>, vector<24x1xf32>
    %31 = vector.broadcast %30 : vector<24x1xf32> to vector<24x4xf32>
    %32 = arith.mulf %29, %31 : vector<24x4xf32>
    %c0_16 = arith.constant 0 : index
    %c0_17 = arith.constant 0 : index
    %33 = vector.load %arg5[%c0_16, %c0_17] : memref<24x1xf32, #tpu.memory_space<vmem>>, vector<24x1xf32>
    %34 = vector.broadcast %33 : vector<24x1xf32> to vector<24x4xf32>
    %35 = arith.addf %32, %34 : vector<24x4xf32>
    %c0_18 = arith.constant 0 : index
    %c0_19 = arith.constant 0 : index
    %36 = vector.load %arg7[%c0_18, %c0_19] : memref<24x4xf32, #tpu.memory_space<vmem>>, vector<24x4xf32>
    tpu.vector_store %arg7[%c0_18, %c0_19], %35 {strides = array<i32>} : memref<24x4xf32, #tpu.memory_space<vmem>>, vector<24x4xf32>,
    return
  }
}

</mosaic_0001>

<llo_original>
// kernel: _lambda_.7
$region0: #{_lambda_.7}
  #allocation0 [shape = 'u32[]', space=smem, size = 0x4, offset = 0x4, fixed_abs, tag = 'smem constant byte address 0x4 - core index']
  #allocation1 [shape = 'u32[144,128]{1,0:T(1,128)}', space=vmem, size = 0x12000, scoped, tag = 'internal scratch']
  %s0 = inlined_call_operand.vmem [shape: f32[24,4], index: 0, kind: input, shape index: {}]
  %s1 = inlined_call_operand.vmem [shape: f32[24,4], index: 1, kind: input, shape index: {}]
  %s2 = inlined_call_operand.vmem [shape: f32[24,1], index: 2, kind: input, shape index: {}]
  %s3 = inlined_call_operand.vmem [shape: f32[24,1], index: 3, kind: input, shape index: {}]
  %s4 = inlined_call_operand.vmem [shape: f32[4,32], index: 4, kind: input, shape index: {}]
  %s5 = inlined_call_operand.vmem [shape: f32[1,32], index: 5, kind: input, shape index: {}]
  %s6 = inlined_call_operand.vmem [shape: f32[24,32], index: 6, kind: input, shape index: {}]
  %s7 = inlined_call_operand.vmem [shape: f32[24,32], index: 7, kind: output, shape index: {}]
  %s8 = sld [smem:[#allocation0]]
  $region38: #{_lambda_.7} parent=0
    _
  %s10 = ssub.s32 1, %s8
  %s11 = scalar_select 0, %s10, %s8
  // Predicated region
  $region2: #{_lambda_.7} parent=0 // pred_check
    _
  $region3: #{_lambda_.7} parent=0 // pred_check_branch
    %13 = sbr.rel (0) target = $region5
  $region4: #{_lambda_.7} parent=0 // pred_region
    _
  $region5: #{_lambda_.7} parent=0 // pred_fallthru
    _
  // Predicated region
  $region6: #{_lambda_.7} parent=0 // pred_check
    _
  $region7: #{_lambda_.7} parent=0 // pred_check_branch
    %15 = sbr.rel (0) target = $region9
  $region8: #{_lambda_.7} parent=0 // pred_region
    _
  $region9: #{_lambda_.7} parent=0 // pred_fallthru
    _
  // Predicated region
  $region10: #{_lambda_.7} parent=0 // pred_check
    _
  $region11: #{_lambda_.7} parent=0 // pred_check_branch
    %17 = sbr.rel (0) target = $region13
  $region12: #{_lambda_.7} parent=0 // pred_region
    _
  $region13: #{_lambda_.7} parent=0 // pred_fallthru
    _
  // Predicated region
  $region14: #{_lambda_.7} parent=0 // pred_check
    _
  $region15: #{_lambda_.7} parent=0 // pred_check_branch
    %19 = sbr.rel (0) target = $region17
  $region16: #{_lambda_.7} parent=0 // pred_region
    _
  $region17: #{_lambda_.7} parent=0 // pred_fallthru
    _
  // Predicated region
  $region18: #{_lambda_.7} parent=0 // pred_check
    _
  $region19: #{_lambda_.7} parent=0 // pred_check_branch
    %21 = sbr.rel (0) target = $region21
  $region20: #{_lambda_.7} parent=0 // pred_region
    _
  $region21: #{_lambda_.7} parent=0 // pred_fallthru
    _
  // Predicated region
  $region22: #{_lambda_.7} parent=0 // pred_check
    _
  $region23: #{_lambda_.7} parent=0 // pred_check_branch
    %23 = sbr.rel (0) target = $region25
  $region24: #{_lambda_.7} parent=0 // pred_region
    _
  $region25: #{_lambda_.7} parent=0 // pred_fallthru
    _
  // Predicated region
  $region26: #{_lambda_.7} parent=0 // pred_check
    _
  $region27: #{_lambda_.7} parent=0 // pred_check_branch
    %25 = sbr.rel (0) target = $region29
  $region28: #{_lambda_.7} parent=0 // pred_region
    _
  $region29: #{_lambda_.7} parent=0 // pred_fallthru
    _
  %v26 = vld [vmem:[%s2] sm:$0xff]
  %v27 = vld [vmem:[%s2 + $0x8] sm:$0xff]
  %v28 = vld [vmem:[%s2 + $0x10] sm:$0xff]
  %v29 = vld [vmem:[%s0] sm:$0xff]
  %v30 = vld [vmem:[%s0 + $0x8] sm:$0xff]
  %v31 = vld [vmem:[%s0 + $0x10] sm:$0xff]
  %33 = vset.pattern.permute.xlu0 0
  %34 = vperm.xlu0 %33, %v26
  %v35 = vpop.permute.xlu0 %34
  %38 = vset.pattern.permute.xlu0 0
  %39 = vperm.xlu0 %38, %v27
  %v40 = vpop.permute.xlu0 %39
  %43 = vset.pattern.permute.xlu0 0
  %44 = vperm.xlu0 %43, %v28
  %v45 = vpop.permute.xlu0 %44
  %v47 = vmul.f32 %v35, %v29
  %v48 = vmul.f32 %v40, %v30
  %v49 = vmul.f32 %v45, %v31
  %v50 = vld [vmem:[%s3] sm:$0xff]
  %v51 = vld [vmem:[%s3 + $0x8] sm:$0xff]
  %v52 = vld [vmem:[%s3 + $0x10] sm:$0xff]
  %v53 = vld [vmem:[%s1] sm:$0xff]
  %v54 = vld [vmem:[%s1 + $0x8] sm:$0xff]
  %v55 = vld [vmem:[%s1 + $0x10] sm:$0xff]
  %57 = vset.pattern.permute.xlu0 0
  %58 = vperm.xlu0 %57, %v50
  %v59 = vpop.permute.xlu0 %58
  %62 = vset.pattern.permute.xlu0 0
  %63 = vperm.xlu0 %62, %v51
  %v64 = vpop.permute.xlu0 %63
  %67 = vset.pattern.permute.xlu0 0
  %68 = vperm.xlu0 %67, %v52
  %v69 = vpop.permute.xlu0 %68
  %v71 = vmul.f32 %v59, %v53
  %v72 = vmul.f32 %v64, %v54
  %v73 = vmul.f32 %v69, %v55
  %v74 = vadd.f32 %v47, %v71
  %v75 = vadd.f32 %v48, %v72
  %v76 = vadd.f32 %v49, %v73
  %v77 = vld [vmem:[%s4] sm:$0xf]
  %v78 = vld [vmem:[%s5] sm:$0x1]
  %v80 = vlaneseq
  %v81 = vshrl.u32 %v80, 7
  %v82 = vsub.s32 0, %v81
  %v83 = vrot.slane %v78, %v82
  %vm85 = vcmask 31744
  %v87 = vsel %vm85, %v74, 0
  %v90 = vsel %vm85, %v75, 0
  %v93 = vsel %vm85, %v76, 0
  %vm95 = vcmask 1043456
  %v97 = vsel %vm95, %v77, 0
  %99 = vmatprep.subr.mxu0 0.0
  %100 = vmatpush1.msra.mxu0 0.0
  %101 = vmatprep.subr.mxu0 0.0
  %102 = vmatpush1.msra.mxu0 0.0
  %103 = vmatprep.subr.mxu0 0.0
  %104 = vmatpush1.msra.mxu0 0.0
  %105 = vmatprep.subr.mxu0 0.0
  %106 = vmatpush1.msra.mxu0 0.0
  %107 = vmatprep.subr.mxu0 0.0
  %108 = vmatpush1.msra.mxu0 0.0
  %109 = vmatprep.subr.mxu0 0.0
  %110 = vmatpush1.msra.mxu0 0.0
  %111 = vmatprep.subr.mxu0 0.0
  %112 = vmatpush1.msra.mxu0 0.0
  %113 = vmatprep.subr.mxu0 0.0
  %114 = vmatpush1.msra.mxu0 0.0
  %115 = vmatprep.subr.mxu0 0.0
  %116 = vmatpush1.msra.mxu0 0.0
  %117 = vmatprep.subr.mxu0 0.0
  %118 = vmatpush1.msra.mxu0 0.0
  %119 = vmatprep.subr.mxu0 0.0
  %120 = vmatpush1.msra.mxu0 0.0
  %121 = vmatprep.subr.mxu0 0.0
  %122 = vmatpush1.msra.mxu0 0.0
  %123 = vmatprep.subr.mxu0 0.0
  %124 = vmatpush1.msra.mxu0 0.0
  %125 = vmatprep.subr.mxu0 0.0
  %126 = vmatpush1.msra.mxu0 0.0
  %127 = vmatprep.subr.mxu0 0.0
  %128 = vmatpush1.msra.mxu0 0.0
  %129 = vmatprep.subr.mxu0 0.0
  %130 = vmatpush1.msra.mxu0 %v97
  %131 = vmatprep.subr.mxu0 0.0
  %132 = vmatpush2.msra.mxu0 0.0
  %133 = vmatprep.subr.mxu0 0.0
  %134 = vmatpush2.msra.mxu0 0.0
  %135 = vmatprep.subr.mxu0 0.0
  %136 = vmatpush2.msra.mxu0 0.0
  %137 = vmatprep.subr.mxu0 0.0
  %138 = vmatpush2.msra.mxu0 0.0
  %139 = vmatprep.subr.mxu0 0.0
  %140 = vmatpush2.msra.mxu0 0.0
  %141 = vmatprep.subr.mxu0 0.0
  %142 = vmatpush2.msra.mxu0 0.0
  %143 = vmatprep.subr.mxu0 0.0
  %144 = vmatpush2.msra.mxu0 0.0
  %145 = vmatprep.subr.mxu0 0.0
  %146 = vmatpush2.msra.mxu0 0.0
  %147 = vmatprep.subr.mxu0 0.0
  %148 = vmatpush2.msra.mxu0 0.0
  %149 = vmatprep.subr.mxu0 0.0
  %150 = vmatpush2.msra.mxu0 0.0
  %151 = vmatprep.subr.mxu0 0.0
  %152 = vmatpush2.msra.mxu0 0.0
  %153 = vmatprep.subr.mxu0 0.0
  %154 = vmatpush2.msra.mxu0 0.0
  %155 = vmatprep.subr.mxu0 0.0
  %156 = vmatpush2.msra.mxu0 0.0
  %157 = vmatprep.subr.mxu0 0.0
  %158 = vmatpush2.msra.mxu0 0.0
  %159 = vmatprep.subr.mxu0 0.0
  %160 = vmatpush2.msra.mxu0 0.0
  %161 = vmatprep.subr.mxu0 0.0
  %162 = vmatpush2.msra.mxu0 0.0
  %163 = vmatprep.mubr.f32.mxu0 0.0
  %164 = vmatmul.mubr.f32.gmra.mxu0 %v87
  %v165 = vpop.f32.mrf.mxu0
  %v166 = vadd.f32 %v83, %v165
  %v167 = vpop.f32.mrf.mxu0
  %168 = vmatprep.mubr.f32.mxu0 0.0
  %169 = vmatmul.mubr.f32.gmra.mxu0 %v90
  %v170 = vpop.f32.mrf.mxu0
  %v171 = vadd.f32 %v83, %v170
  %v172 = vpop.f32.mrf.mxu0
  %173 = vmatprep.mubr.f32.mxu0 0.0
  %174 = vmatmul.mubr.f32.gmra.mxu0 %v93
  %v175 = vpop.f32.mrf.mxu0
  %v176 = vadd.f32 %v83, %v175
  %v177 = vpop.f32.mrf.mxu0
  %178 = vdwg.mxu0
  %v179 = vld [vmem:[%s6] sm:$0xff]
  %v180 = vld [vmem:[%s6 + $0x8] sm:$0xff]
  %v181 = vld [vmem:[%s6 + $0x10] sm:$0xff]
  %v182 = vadd.f32 %v166, %v179
  %v183 = vadd.f32 %v171, %v180
  %v184 = vadd.f32 %v176, %v181
  %vm185 = vcmask 261120
  %186 = vst.msk [vmem:[%s7] sm:$0xff] %vm185, %v182
  %187 = vst.msk [vmem:[%s7 + $0x8] sm:$0xff] %vm185, %v183
  %188 = vst.msk [vmem:[%s7 + $0x10] sm:$0xff] %vm185, %v184
  // Predicated region
  $region30: #{_lambda_.7} parent=0 // pred_check
    _
  $region31: #{_lambda_.7} parent=0 // pred_check_branch
    %190 = sbr.rel (0) target = $region33
  $region32: #{_lambda_.7} parent=0 // pred_region
    _
  $region33: #{_lambda_.7} parent=0 // pred_fallthru
    _
  // Predicated region
  $region34: #{_lambda_.7} parent=0 // pred_check
    _
  $region35: #{_lambda_.7} parent=0 // pred_check_branch
    %192 = sbr.rel (0) target = $region37
  $region36: #{_lambda_.7} parent=0 // pred_region
    _
  $region37: #{_lambda_.7} parent=0 // pred_fallthru
    _

// kernel: _lambda_.6
$region0: #{_lambda_.6}
  #allocation0 [shape = 'u32[]', space=smem, size = 0x4, offset = 0x4, fixed_abs, tag = 'smem constant byte address 0x4 - core index']
  #allocation1 [shape = 'u32[144,128]{1,0:T(1,128)}', space=vmem, size = 0x12000, scoped, tag = 'internal scratch']
  %s0 = inlined_call_operand.vmem [shape: f32[6,16], index: 0, kind: input, shape index: {}]
  %s1 = inlined_call_operand.vmem [shape: f32[24,4], index: 1, kind: input, shape index: {}]
  %s2 = inlined_call_operand.vmem [shape: f32[24,6], index: 2, kind: input, shape index: {}]
  %s3 = inlined_call_operand.vmem [shape: f32[24,24], index: 3, kind: input, shape index: {}]
  %s4 = inlined_call_operand.vmem [shape: f32[24,1], index: 4, kind: input, shape index: {}]
  %s5 = inlined_call_operand.vmem [shape: f32[4,32], index: 5, kind: input, shape index: {}]
  %s6 = inlined_call_operand.vmem [shape: f32[1,32], index: 6, kind: input, shape index: {}]
  %s7 = inlined_call_operand.vmem [shape: f32[1,32], index: 7, kind: input, shape index: {}]
  %s8 = inlined_call_operand.vmem [shape: f32[24,32], index: 8, kind: input, shape index: {}]
  %s9 = inlined_call_operand.vmem [shape: f32[24,32], index: 9, kind: output, shape index: {0}]
  %s10 = inlined_call_operand.vmem [shape: f32[24,4], index: 10, kind: output, shape index: {1}]
  %s11 = inlined_call_operand.vmem [shape: f32[24,1], index: 11, kind: output, shape index: {2}]
  %s12 = inlined_call_operand.vmem [shape: f32[24,1], index: 12, kind: output, shape index: {3}]
  %13 = xla_tuple %s9, %s10, %s11, %s12
  %s14 = sld [smem:[#allocation0]]
  $region70: #{_lambda_.6} parent=0
    _
  %s16 = ssub.s32 1, %s14
  %s17 = scalar_select 0, %s16, %s14
  // Predicated region
  $region2: #{_lambda_.6} parent=0 // pred_check
    _
  $region3: #{_lambda_.6} parent=0 // pred_check_branch
    %19 = sbr.rel (0) target = $region5
  $region4: #{_lambda_.6} parent=0 // pred_region
    _
  $region5: #{_lambda_.6} parent=0 // pred_fallthru
    _
  // Predicated region
  $region6: #{_lambda_.6} parent=0 // pred_check
    _
  $region7: #{_lambda_.6} parent=0 // pred_check_branch
    %21 = sbr.rel (0) target = $region9
  $region8: #{_lambda_.6} parent=0 // pred_region
    _
  $region9: #{_lambda_.6} parent=0 // pred_fallthru
    _
  // Predicated region
  $region10: #{_lambda_.6} parent=0 // pred_check
    _
  $region11: #{_lambda_.6} parent=0 // pred_check_branch
    %23 = sbr.rel (0) target = $region13
  $region12: #{_lambda_.6} parent=0 // pred_region
    _
  $region13: #{_lambda_.6} parent=0 // pred_fallthru
    _
  // Predicated region
  $region14: #{_lambda_.6} parent=0 // pred_check
    _
  $region15: #{_lambda_.6} parent=0 // pred_check_branch
    %25 = sbr.rel (0) target = $region17
  $region16: #{_lambda_.6} parent=0 // pred_region
    _
  $region17: #{_lambda_.6} parent=0 // pred_fallthru
    _
  // Predicated region
  $region18: #{_lambda_.6} parent=0 // pred_check
    _
  $region19: #{_lambda_.6} parent=0 // pred_check_branch
    %27 = sbr.rel (0) target = $region21
  $region20: #{_lambda_.6} parent=0 // pred_region
    _
  $region21: #{_lambda_.6} parent=0 // pred_fallthru
    _
  // Predicated region
  $region22: #{_lambda_.6} parent=0 // pred_check
    _
  $region23: #{_lambda_.6} parent=0 // pred_check_branch
    %29 = sbr.rel (0) target = $region25
  $region24: #{_lambda_.6} parent=0 // pred_region
    _
  $region25: #{_lambda_.6} parent=0 // pred_fallthru
    _
  // Predicated region
  $region26: #{_lambda_.6} parent=0 // pred_check
    _
  $region27: #{_lambda_.6} parent=0 // pred_check_branch
    %31 = sbr.rel (0) target = $region29
  $region28: #{_lambda_.6} parent=0 // pred_region
    _
  $region29: #{_lambda_.6} parent=0 // pred_fallthru
    _
  // Predicated region
  $region30: #{_lambda_.6} parent=0 // pred_check
    _
  $region31: #{_lambda_.6} parent=0 // pred_check_branch
    %33 = sbr.rel (0) target = $region33
  $region32: #{_lambda_.6} parent=0 // pred_region
    _
  $region33: #{_lambda_.6} parent=0 // pred_fallthru
    _
  // Predicated region
  $region34: #{_lambda_.6} parent=0 // pred_check
    _
  $region35: #{_lambda_.6} parent=0 // pred_check_branch
    %35 = sbr.rel (0) target = $region37
  $region36: #{_lambda_.6} parent=0 // pred_region
    _
  $region37: #{_lambda_.6} parent=0 // pred_fallthru
    _
  %v36 = vld [vmem:[%s0] sm:$0x3f]
  %vm37 = vcmask 128000
  %v38 = vsel %vm37, %v36, 0.0
  %39 = vadd.xlane.f32.xlu0 %v38
  %v40 = vpop.xlane.xlu0 %39
  %v41 = vrcp.pop 16.0
  %v42 = vmul.f32 %v40, %v41
  %v43 = vsub.f32 %v36, %v42
  %v44 = vmul.f32 %v43, %v43
  %v45 = vsel %vm37, %v44, 0.0
  %46 = vadd.xlane.f32.xlu0 %v45
  %v47 = vpop.xlane.xlu0 %46
  %v48 = vmul.f32 %v47, %v41
  %v49 = vadd.f32 %v48, 1e-05
  %v50 = vrsqrt.pop %v49
  %v51 = vmul.f32 %v49, %v50
  %vm52 = vcmp.eq.f32.partialorder %v49, inf
  %v53 = vsel %vm52, %v49, %v51
  %vm54 = vcmp.eq.f32.partialorder %v49, 0.0
  %v55 = vand.u32 %v49, 2147483648
  %v56 = vsel %vm54, %v55, %v53
  %v57 = vld [vmem:[%s2] sm:$0xff]
  %v58 = vld [vmem:[%s2 + $0x8] sm:$0xff]
  %v59 = vld [vmem:[%s2 + $0x10] sm:$0xff]
  %vm60 = vcmask 48128
  %v62 = vsel %vm60, %v57, 0
  %v65 = vsel %vm60, %v58, 0
  %v68 = vsel %vm60, %v59, 0
  %vm70 = vcmask 1045504
  %v72 = vsel %vm70, %v42, 0
  %74 = vmatprep.subr.mxu0 0.0
  %75 = vmatpush1.msra.mxu0 0.0
  %76 = vmatprep.subr.mxu0 0.0
  %77 = vmatpush1.msra.mxu0 0.0
  %78 = vmatprep.subr.mxu0 0.0
  %79 = vmatpush1.msra.mxu0 0.0
  %80 = vmatprep.subr.mxu0 0.0
  %81 = vmatpush1.msra.mxu0 0.0
  %82 = vmatprep.subr.mxu0 0.0
  %83 = vmatpush1.msra.mxu0 0.0
  %84 = vmatprep.subr.mxu0 0.0
  %85 = vmatpush1.msra.mxu0 0.0
  %86 = vmatprep.subr.mxu0 0.0
  %87 = vmatpush1.msra.mxu0 0.0
  %88 = vmatprep.subr.mxu0 0.0
  %89 = vmatpush1.msra.mxu0 0.0
  %90 = vmatprep.subr.mxu0 0.0
  %91 = vmatpush1.msra.mxu0 0.0
  %92 = vmatprep.subr.mxu0 0.0
  %93 = vmatpush1.msra.mxu0 0.0
  %94 = vmatprep.subr.mxu0 0.0
  %95 = vmatpush1.msra.mxu0 0.0
  %96 = vmatprep.subr.mxu0 0.0
  %97 = vmatpush1.msra.mxu0 0.0
  %98 = vmatprep.subr.mxu0 0.0
  %99 = vmatpush1.msra.mxu0 0.0
  %100 = vmatprep.subr.mxu0 0.0
  %101 = vmatpush1.msra.mxu0 0.0
  %102 = vmatprep.subr.mxu0 0.0
  %103 = vmatpush1.msra.mxu0 0.0
  %104 = vmatprep.subr.mxu0 0.0
  %105 = vmatpush1.msra.mxu0 %v72
  %106 = vmatprep.subr.mxu0 0.0
  %107 = vmatpush2.msra.mxu0 0.0
  %108 = vmatprep.subr.mxu0 0.0
  %109 = vmatpush2.msra.mxu0 0.0
  %110 = vmatprep.subr.mxu0 0.0
  %111 = vmatpush2.msra.mxu0 0.0
  %112 = vmatprep.subr.mxu0 0.0
  %113 = vmatpush2.msra.mxu0 0.0
  %114 = vmatprep.subr.mxu0 0.0
  %115 = vmatpush2.msra.mxu0 0.0
  %116 = vmatprep.subr.mxu0 0.0
  %117 = vmatpush2.msra.mxu0 0.0
  %118 = vmatprep.subr.mxu0 0.0
  %119 = vmatpush2.msra.mxu0 0.0
  %120 = vmatprep.subr.mxu0 0.0
  %121 = vmatpush2.msra.mxu0 0.0
  %122 = vmatprep.subr.mxu0 0.0
  %123 = vmatpush2.msra.mxu0 0.0
  %124 = vmatprep.subr.mxu0 0.0
  %125 = vmatpush2.msra.mxu0 0.0
  %126 = vmatprep.subr.mxu0 0.0
  %127 = vmatpush2.msra.mxu0 0.0
  %128 = vmatprep.subr.mxu0 0.0
  %129 = vmatpush2.msra.mxu0 0.0
  %130 = vmatprep.subr.mxu0 0.0
  %131 = vmatpush2.msra.mxu0 0.0
  %132 = vmatprep.subr.mxu0 0.0
  %133 = vmatpush2.msra.mxu0 0.0
  %134 = vmatprep.subr.mxu0 0.0
  %135 = vmatpush2.msra.mxu0 0.0
  %136 = vmatprep.subr.mxu0 0.0
  %137 = vmatpush2.msra.mxu0 0.0
  %138 = vmatprep.mubr.f32.mxu0 0.0
  %139 = vmatmul.mubr.f32.gmra.mxu0 %v62
  %v140 = vpop.f32.mrf.mxu0
  %v141 = vadd.f32 0.0, %v140
  %v142 = vpop.f32.mrf.mxu0
  %143 = vmatprep.mubr.f32.mxu0 0.0
  %144 = vmatmul.mubr.f32.gmra.mxu0 %v65
  %v145 = vpop.f32.mrf.mxu0
  %v146 = vadd.f32 0.0, %v145
  %v147 = vpop.f32.mrf.mxu0
  %148 = vmatprep.mubr.f32.mxu0 0.0
  %149 = vmatmul.mubr.f32.gmra.mxu0 %v68
  %v150 = vpop.f32.mrf.mxu0
  %v151 = vadd.f32 0.0, %v150
  %v152 = vpop.f32.mrf.mxu0
  %153 = vdwg.mxu0
  %v155 = vsel %vm70, %v56, 0
  %157 = vmatprep.subr.mxu0 0.0
  %158 = vmatpush1.msra.mxu0 0.0
  %159 = vmatprep.subr.mxu0 0.0
  %160 = vmatpush1.msra.mxu0 0.0
  %161 = vmatprep.subr.mxu0 0.0
  %162 = vmatpush1.msra.mxu0 0.0
  %163 = vmatprep.subr.mxu0 0.0
  %164 = vmatpush1.msra.mxu0 0.0
  %165 = vmatprep.subr.mxu0 0.0
  %166 = vmatpush1.msra.mxu0 0.0
  %167 = vmatprep.subr.mxu0 0.0
  %168 = vmatpush1.msra.mxu0 0.0
  %169 = vmatprep.subr.mxu0 0.0
  %170 = vmatpush1.msra.mxu0 0.0
  %171 = vmatprep.subr.mxu0 0.0
  %172 = vmatpush1.msra.mxu0 0.0
  %173 = vmatprep.subr.mxu0 0.0
  %174 = vmatpush1.msra.mxu0 0.0
  %175 = vmatprep.subr.mxu0 0.0
  %176 = vmatpush1.msra.mxu0 0.0
  %177 = vmatprep.subr.mxu0 0.0
  %178 = vmatpush1.msra.mxu0 0.0
  %179 = vmatprep.subr.mxu0 0.0
  %180 = vmatpush1.msra.mxu0 0.0
  %181 = vmatprep.subr.mxu0 0.0
  %182 = vmatpush1.msra.mxu0 0.0
  %183 = vmatprep.subr.mxu0 0.0
  %184 = vmatpush1.msra.mxu0 0.0
  %185 = vmatprep.subr.mxu0 0.0
  %186 = vmatpush1.msra.mxu0 0.0
  %187 = vmatprep.subr.mxu0 0.0
  %188 = vmatpush1.msra.mxu0 %v155
  %189 = vmatprep.subr.mxu0 0.0
  %190 = vmatpush2.msra.mxu0 0.0
  %191 = vmatprep.subr.mxu0 0.0
  %192 = vmatpush2.msra.mxu0 0.0
  %193 = vmatprep.subr.mxu0 0.0
  %194 = vmatpush2.msra.mxu0 0.0
  %195 = vmatprep.subr.mxu0 0.0
  %196 = vmatpush2.msra.mxu0 0.0
  %197 = vmatprep.subr.mxu0 0.0
  %198 = vmatpush2.msra.mxu0 0.0
  %199 = vmatprep.subr.mxu0 0.0
  %200 = vmatpush2.msra.mxu0 0.0
  %201 = vmatprep.subr.mxu0 0.0
  %202 = vmatpush2.msra.mxu0 0.0
  %203 = vmatprep.subr.mxu0 0.0
  %204 = vmatpush2.msra.mxu0 0.0
  %205 = vmatprep.subr.mxu0 0.0
  %206 = vmatpush2.msra.mxu0 0.0
  %207 = vmatprep.subr.mxu0 0.0
  %208 = vmatpush2.msra.mxu0 0.0
  %209 = vmatprep.subr.mxu0 0.0
  %210 = vmatpush2.msra.mxu0 0.0
  %211 = vmatprep.subr.mxu0 0.0
  %212 = vmatpush2.msra.mxu0 0.0
  %213 = vmatprep.subr.mxu0 0.0
  %214 = vmatpush2.msra.mxu0 0.0
  %215 = vmatprep.subr.mxu0 0.0
  %216 = vmatpush2.msra.mxu0 0.0
  %217 = vmatprep.subr.mxu0 0.0
  %218 = vmatpush2.msra.mxu0 0.0
  %219 = vmatprep.subr.mxu0 0.0
  %220 = vmatpush2.msra.mxu0 0.0
  %221 = vmatprep.mubr.f32.mxu0 0.0
  %222 = vmatmul.mubr.f32.gmra.mxu0 %v62
  %v223 = vpop.f32.mrf.mxu0
  %v224 = vadd.f32 0.0, %v223
  %v225 = vpop.f32.mrf.mxu0
  %226 = vmatprep.mubr.f32.mxu0 0.0
  %227 = vmatmul.mubr.f32.gmra.mxu0 %v65
  %v228 = vpop.f32.mrf.mxu0
  %v229 = vadd.f32 0.0, %v228
  %v230 = vpop.f32.mrf.mxu0
  %231 = vmatprep.mubr.f32.mxu0 0.0
  %232 = vmatmul.mubr.f32.gmra.mxu0 %v68
  %v233 = vpop.f32.mrf.mxu0
  %v234 = vadd.f32 0.0, %v233
  %v235 = vpop.f32.mrf.mxu0
  %236 = vdwg.mxu0
  %vm237 = vcmask 7168
  %238 = vst.msk [vmem:[%s11] sm:$0xff] %vm237, %v141
  %239 = vst.msk [vmem:[%s11 + $0x8] sm:$0xff] %vm237, %v146
  %240 = vst.msk [vmem:[%s11 + $0x10] sm:$0xff] %vm237, %v151
  %241 = vst.msk [vmem:[%s12] sm:$0xff] %vm237, %v224
  %242 = vst.msk [vmem:[%s12 + $0x8] sm:$0xff] %vm237, %v229
  %243 = vst.msk [vmem:[%s12 + $0x10] sm:$0xff] %vm237, %v234
  %v244 = vld [vmem:[%s1] sm:$0xff]
  %v245 = vld [vmem:[%s1 + $0x8] sm:$0xff]
  %v246 = vld [vmem:[%s1 + $0x10] sm:$0xff]
  %248 = vset.pattern.permute.xlu0 0
  %249 = vperm.xlu0 %248, %v141
  %v250 = vpop.permute.xlu0 %249
  %253 = vset.pattern.permute.xlu0 0
  %254 = vperm.xlu0 %253, %v146
  %v255 = vpop.permute.xlu0 %254
  %258 = vset.pattern.permute.xlu0 0
  %259 = vperm.xlu0 %258, %v151
  %v260 = vpop.permute.xlu0 %259
  %v262 = vsub.f32 %v244, %v250
  %v263 = vsub.f32 %v245, %v255
  %v264 = vsub.f32 %v246, %v260
  %266 = vset.pattern.permute.xlu0 0
  %267 = vperm.xlu0 %266, %v224
  %v268 = vpop.permute.xlu0 %267
  %271 = vset.pattern.permute.xlu0 0
  %272 = vperm.xlu0 %271, %v229
  %v273 = vpop.permute.xlu0 %272
  %276 = vset.pattern.permute.xlu0 0
  %277 = vperm.xlu0 %276, %v234
  %v278 = vpop.permute.xlu0 %277
  %v280 = vrcp.pop %v268
  %v281 = vmul.f32 %v262, %v280
  %v282 = vrcp.pop %v273
  %v283 = vmul.f32 %v263, %v282
  %v284 = vrcp.pop %v278
  %v285 = vmul.f32 %v264, %v284
  %vm286 = vcmask 31744
  %287 = vst.msk [vmem:[%s10] sm:$0xff] %vm286, %v281
  %288 = vst.msk [vmem:[%s10 + $0x8] sm:$0xff] %vm286, %v283
  %289 = vst.msk [vmem:[%s10 + $0x10] sm:$0xff] %vm286, %v285
  %v290 = vld [vmem:[%s5] sm:$0xf]
  %v291 = vld [vmem:[%s6] sm:$0x1]
  %v293 = vlaneseq
  %v294 = vshrl.u32 %v293, 7
  %v295 = vsub.s32 0, %v294
  %v296 = vrot.slane %v291, %v295
  %v299 = vsel %vm286, %v281, 0
  %v302 = vsel %vm286, %v283, 0
  %v305 = vsel %vm286, %v285, 0
  %vm307 = vcmask 1043456
  %v309 = vsel %vm307, %v290, 0
  %311 = vmatprep.subr.mxu0 0.0
  %312 = vmatpush1.msra.mxu0 0.0
  %313 = vmatprep.subr.mxu0 0.0
  %314 = vmatpush1.msra.mxu0 0.0
  %315 = vmatprep.subr.mxu0 0.0
  %316 = vmatpush1.msra.mxu0 0.0
  %317 = vmatprep.subr.mxu0 0.0
  %318 = vmatpush1.msra.mxu0 0.0
  %319 = vmatprep.subr.mxu0 0.0
  %320 = vmatpush1.msra.mxu0 0.0
  %321 = vmatprep.subr.mxu0 0.0
  %322 = vmatpush1.msra.mxu0 0.0
  %323 = vmatprep.subr.mxu0 0.0
  %324 = vmatpush1.msra.mxu0 0.0
  %325 = vmatprep.subr.mxu0 0.0
  %326 = vmatpush1.msra.mxu0 0.0
  %327 = vmatprep.subr.mxu0 0.0
  %328 = vmatpush1.msra.mxu0 0.0
  %329 = vmatprep.subr.mxu0 0.0
  %330 = vmatpush1.msra.mxu0 0.0
  %331 = vmatprep.subr.mxu0 0.0
  %332 = vmatpush1.msra.mxu0 0.0
  %333 = vmatprep.subr.mxu0 0.0
  %334 = vmatpush1.msra.mxu0 0.0
  %335 = vmatprep.subr.mxu0 0.0
  %336 = vmatpush1.msra.mxu0 0.0
  %337 = vmatprep.subr.mxu0 0.0
  %338 = vmatpush1.msra.mxu0 0.0
  %339 = vmatprep.subr.mxu0 0.0
  %340 = vmatpush1.msra.mxu0 0.0
  %341 = vmatprep.subr.mxu0 0.0
  %342 = vmatpush1.msra.mxu0 %v309
  %343 = vmatprep.subr.mxu0 0.0
  %344 = vmatpush2.msra.mxu0 0.0
  %345 = vmatprep.subr.mxu0 0.0
  %346 = vmatpush2.msra.mxu0 0.0
  %347 = vmatprep.subr.mxu0 0.0
  %348 = vmatpush2.msra.mxu0 0.0
  %349 = vmatprep.subr.mxu0 0.0
  %350 = vmatpush2.msra.mxu0 0.0
  %351 = vmatprep.subr.mxu0 0.0
  %352 = vmatpush2.msra.mxu0 0.0
  %353 = vmatprep.subr.mxu0 0.0
  %354 = vmatpush2.msra.mxu0 0.0
  %355 = vmatprep.subr.mxu0 0.0
  %356 = vmatpush2.msra.mxu0 0.0
  %357 = vmatprep.subr.mxu0 0.0
  %358 = vmatpush2.msra.mxu0 0.0
  %359 = vmatprep.subr.mxu0 0.0
  %360 = vmatpush2.msra.mxu0 0.0
  %361 = vmatprep.subr.mxu0 0.0
  %362 = vmatpush2.msra.mxu0 0.0
  %363 = vmatprep.subr.mxu0 0.0
  %364 = vmatpush2.msra.mxu0 0.0
  %365 = vmatprep.subr.mxu0 0.0
  %366 = vmatpush2.msra.mxu0 0.0
  %367 = vmatprep.subr.mxu0 0.0
  %368 = vmatpush2.msra.mxu0 0.0
  %369 = vmatprep.subr.mxu0 0.0
  %370 = vmatpush2.msra.mxu0 0.0
  %371 = vmatprep.subr.mxu0 0.0
  %372 = vmatpush2.msra.mxu0 0.0
  %373 = vmatprep.subr.mxu0 0.0
  %374 = vmatpush2.msra.mxu0 0.0
  %375 = vmatprep.mubr.f32.mxu0 0.0
  %376 = vmatmul.mubr.f32.gmra.mxu0 %v299
  %v377 = vpop.f32.mrf.mxu0
  %v378 = vadd.f32 %v296, %v377
  %v379 = vpop.f32.mrf.mxu0
  %380 = vmatprep.mubr.f32.mxu0 0.0
  %381 = vmatmul.mubr.f32.gmra.mxu0 %v302
  %v382 = vpop.f32.mrf.mxu0
  %v383 = vadd.f32 %v296, %v382
  %v384 = vpop.f32.mrf.mxu0
  %385 = vmatprep.mubr.f32.mxu0 0.0
  %386 = vmatmul.mubr.f32.gmra.mxu0 %v305
  %v387 = vpop.f32.mrf.mxu0
  %v388 = vadd.f32 %v296, %v387
  %v389 = vpop.f32.mrf.mxu0
  %390 = vdwg.mxu0
  %v391 = vld [vmem:[%s3] sm:$0xff]
  %v392 = vld [vmem:[%s3 + $0x8] sm:$0xff]
  %v393 = vld [vmem:[%s3 + $0x10] sm:$0xff]
  %v394 = vld [vmem:[%s4] sm:$0xff]
  %v395 = vld [vmem:[%s4 + $0x8] sm:$0xff]
  %v396 = vld [vmem:[%s4 + $0x10] sm:$0xff]
  %v397 = vld [vmem:[%s7] sm:$0x1]
  %399 = vset.pattern.permute.xlu0 0
  %400 = vperm.xlu0 %399, %v394
  %v401 = vpop.permute.xlu0 %400
  %404 = vset.pattern.permute.xlu0 0
  %405 = vperm.xlu0 %404, %v395
  %v406 = vpop.permute.xlu0 %405
  %409 = vset.pattern.permute.xlu0 0
  %410 = vperm.xlu0 %409, %v396
  %v411 = vpop.permute.xlu0 %410
  %v414 = vlaneseq
  %v415 = vshrl.u32 %v414, 7
  %v416 = vsub.s32 0, %v415
  %v417 = vrot.slane %v397, %v416
  %v419 = vmul.f32 %v401, %v417
  %v420 = vmul.f32 %v406, %v417
  %v421 = vmul.f32 %v411, %v417
  %vm422 = vcmask 195584
  %v424 = vsel %vm422, %v391, 0
  %v427 = vsel %vm422, %v392, 0
  %v430 = vsel %vm422, %v393, 0
  %432 = vmatprep.subr.mxu0 0.0
  %433 = vmatpush1.msra.mxu0 0.0
  %434 = vmatprep.subr.mxu0 0.0
  %435 = vmatpush1.msra.mxu0 0.0
  %436 = vmatprep.subr.mxu0 0.0
  %437 = vmatpush1.msra.mxu0 0.0
  %438 = vmatprep.subr.mxu0 0.0
  %439 = vmatpush1.msra.mxu0 0.0
  %440 = vmatprep.subr.mxu0 0.0
  %441 = vmatpush1.msra.mxu0 0.0
  %442 = vmatprep.subr.mxu0 0.0
  %443 = vmatpush1.msra.mxu0 0.0
  %444 = vmatprep.subr.mxu0 0.0
  %445 = vmatpush1.msra.mxu0 0.0
  %446 = vmatprep.subr.mxu0 0.0
  %447 = vmatpush1.msra.mxu0 0.0
  %448 = vmatprep.subr.mxu0 0.0
  %449 = vmatpush1.msra.mxu0 0.0
  %450 = vmatprep.subr.mxu0 0.0
  %451 = vmatpush1.msra.mxu0 0.0
  %452 = vmatprep.subr.mxu0 0.0
  %453 = vmatpush1.msra.mxu0 0.0
  %454 = vmatprep.subr.mxu0 0.0
  %455 = vmatpush1.msra.mxu0 0.0
  %456 = vmatprep.subr.mxu0 0.0
  %457 = vmatpush1.msra.mxu0 0.0
  %458 = vmatprep.subr.mxu0 0.0
  %459 = vmatpush1.msra.mxu0 %v388
  %460 = vmatprep.subr.mxu0 0.0
  %461 = vmatpush1.msra.mxu0 %v383
  %462 = vmatprep.subr.mxu0 0.0
  %463 = vmatpush1.msra.mxu0 %v378
  %464 = vmatprep.subr.mxu0 0.0
  %465 = vmatpush2.msra.mxu0 0.0
  %466 = vmatprep.subr.mxu0 0.0
  %467 = vmatpush2.msra.mxu0 0.0
  %468 = vmatprep.subr.mxu0 0.0
  %469 = vmatpush2.msra.mxu0 0.0
  %470 = vmatprep.subr.mxu0 0.0
  %471 = vmatpush2.msra.mxu0 0.0
  %472 = vmatprep.subr.mxu0 0.0
  %473 = vmatpush2.msra.mxu0 0.0
  %474 = vmatprep.subr.mxu0 0.0
  %475 = vmatpush2.msra.mxu0 0.0
  %476 = vmatprep.subr.mxu0 0.0
  %477 = vmatpush2.msra.mxu0 0.0
  %478 = vmatprep.subr.mxu0 0.0
  %479 = vmatpush2.msra.mxu0 0.0
  %480 = vmatprep.subr.mxu0 0.0
  %481 = vmatpush2.msra.mxu0 0.0
  %482 = vmatprep.subr.mxu0 0.0
  %483 = vmatpush2.msra.mxu0 0.0
  %484 = vmatprep.subr.mxu0 0.0
  %485 = vmatpush2.msra.mxu0 0.0
  %486 = vmatprep.subr.mxu0 0.0
  %487 = vmatpush2.msra.mxu0 0.0
  %488 = vmatprep.subr.mxu0 0.0
  %489 = vmatpush2.msra.mxu0 0.0
  %490 = vmatprep.subr.mxu0 0.0
  %491 = vmatpush2.msra.mxu0 0.0
  %492 = vmatprep.subr.mxu0 0.0
  %493 = vmatpush2.msra.mxu0 0.0
  %494 = vmatprep.subr.mxu0 0.0
  %495 = vmatpush2.msra.mxu0 0.0
  %496 = vmatprep.mubr.f32.mxu0 0.0
  %497 = vmatmul.mubr.f32.gmra.mxu0 %v424
  %v498 = vpop.f32.mrf.mxu0
  %v499 = vadd.f32 %v419, %v498
  %v500 = vpop.f32.mrf.mxu0
  %501 = vmatprep.mubr.f32.mxu0 0.0
  %502 = vmatmul.mubr.f32.gmra.mxu0 %v427
  %v503 = vpop.f32.mrf.mxu0
  %v504 = vadd.f32 %v420, %v503
  %v505 = vpop.f32.mrf.mxu0
  %506 = vmatprep.mubr.f32.mxu0 0.0
  %507 = vmatmul.mubr.f32.gmra.mxu0 %v430
  %v508 = vpop.f32.mrf.mxu0
  %v509 = vadd.f32 %v421, %v508
  %v510 = vpop.f32.mrf.mxu0
  %511 = vdwg.mxu0
  %v512 = vld [vmem:[%s8] sm:$0xff]
  %v513 = vld [vmem:[%s8 + $0x8] sm:$0xff]
  %v514 = vld [vmem:[%s8 + $0x10] sm:$0xff]
  %v515 = vadd.f32 %v499, %v512
  %v516 = vadd.f32 %v504, %v513
  %v517 = vadd.f32 %v509, %v514
  %vm518 = vcmask 261120
  %519 = vst.msk [vmem:[%s9] sm:$0xff] %vm518, %v515
  %520 = vst.msk [vmem:[%s9 + $0x8] sm:$0xff] %vm518, %v516
  %521 = vst.msk [vmem:[%s9 + $0x10] sm:$0xff] %vm518, %v517
  // Predicated region
  $region38: #{_lambda_.6} parent=0 // pred_check
    _
  $region39: #{_lambda_.6} parent=0 // pred_check_branch
    %523 = sbr.rel (0) target = $region41
  $region40: #{_lambda_.6} parent=0 // pred_region
    _
  $region41: #{_lambda_.6} parent=0 // pred_fallthru
    _
  // Predicated region
  $region42: #{_lambda_.6} parent=0 // pred_check
    _
  $region43: #{_lambda_.6} parent=0 // pred_check_branch
    %525 = sbr.rel (0) target = $region45
  $region44: #{_lambda_.6} parent=0 // pred_region
    _
  $region45: #{_lambda_.6} parent=0 // pred_fallthru
    _
  // Predicated region
  $region46: #{_lambda_.6} parent=0 // pred_check
    _
  $region47: #{_lambda_.6} parent=0 // pred_check_branch
    %527 = sbr.rel (0) target = $region49
  $region48: #{_lambda_.6} parent=0 // pred_region
    _
  $region49: #{_lambda_.6} parent=0 // pred_fallthru
    _
  // Predicated region
  $region50: #{_lambda_.6} parent=0 // pred_check
    _
  $region51: #{_lambda_.6} parent=0 // pred_check_branch
    %529 = sbr.rel (0) target = $region53
  $region52: #{_lambda_.6} parent=0 // pred_region
    _
  $region53: #{_lambda_.6} parent=0 // pred_fallthru
    _
  // Predicated region
  $region54: #{_lambda_.6} parent=0 // pred_check
    _
  $region55: #{_lambda_.6} parent=0 // pred_check_branch
    %531 = sbr.rel (0) target = $region57
  $region56: #{_lambda_.6} parent=0 // pred_region
    _
  $region57: #{_lambda_.6} parent=0 // pred_fallthru
    _
  // Predicated region
  $region58: #{_lambda_.6} parent=0 // pred_check
    _
  $region59: #{_lambda_.6} parent=0 // pred_check_branch
    %533 = sbr.rel (0) target = $region61
  $region60: #{_lambda_.6} parent=0 // pred_region
    _
  $region61: #{_lambda_.6} parent=0 // pred_fallthru
    _
  // Predicated region
  $region62: #{_lambda_.6} parent=0 // pred_check
    _
  $region63: #{_lambda_.6} parent=0 // pred_check_branch
    %535 = sbr.rel (0) target = $region65
  $region64: #{_lambda_.6} parent=0 // pred_region
    _
  $region65: #{_lambda_.6} parent=0 // pred_fallthru
    _
  // Predicated region
  $region66: #{_lambda_.6} parent=0 // pred_check
    _
  $region67: #{_lambda_.6} parent=0 // pred_check_branch
    %537 = sbr.rel (0) target = $region69
  $region68: #{_lambda_.6} parent=0 // pred_region
    _
  $region69: #{_lambda_.6} parent=0 // pred_fallthru
    _

// kernel: _lambda_.11
$region0: #{_lambda_.11}
  #allocation0 [shape = 'u32[]', space=smem, size = 0x4, offset = 0x4, fixed_abs, tag = 'smem constant byte address 0x4 - core index']
  #allocation1 [shape = 'u32[144,128]{1,0:T(1,128)}', space=vmem, size = 0x12000, scoped, tag = 'internal scratch']
  %s0 = inlined_call_operand.vmem [shape: f32[24,32], index: 0, kind: input, shape index: {}]
  %s1 = inlined_call_operand.vmem [shape: f32[1,32], index: 1, kind: input, shape index: {}]
  %s2 = inlined_call_operand.vmem [shape: f32[1,32], index: 2, kind: input, shape index: {}]
  %s3 = inlined_call_operand.vmem [shape: f32[32,4], index: 3, kind: input, shape index: {}]
  %s4 = inlined_call_operand.vmem [shape: f32[1,4], index: 4, kind: input, shape index: {}]
  %s5 = inlined_call_operand.vmem [shape: f32[24,1], index: 5, kind: input, shape index: {}]
  %s6 = inlined_call_operand.vmem [shape: f32[24,1], index: 6, kind: input, shape index: {}]
  %s7 = inlined_call_operand.vmem [shape: f32[24,4], index: 7, kind: output, shape index: {}]
  %s8 = sld [smem:[#allocation0]]
  $region38: #{_lambda_.11} parent=0
    _
  %s10 = ssub.s32 1, %s8
  %s11 = scalar_select 0, %s10, %s8
  // Predicated region
  $region2: #{_lambda_.11} parent=0 // pred_check
    _
  $region3: #{_lambda_.11} parent=0 // pred_check_branch
    %13 = sbr.rel (0) target = $region5
  $region4: #{_lambda_.11} parent=0 // pred_region
    _
  $region5: #{_lambda_.11} parent=0 // pred_fallthru
    _
  // Predicated region
  $region6: #{_lambda_.11} parent=0 // pred_check
    _
  $region7: #{_lambda_.11} parent=0 // pred_check_branch
    %15 = sbr.rel (0) target = $region9
  $region8: #{_lambda_.11} parent=0 // pred_region
    _
  $region9: #{_lambda_.11} parent=0 // pred_fallthru
    _
  // Predicated region
  $region10: #{_lambda_.11} parent=0 // pred_check
    _
  $region11: #{_lambda_.11} parent=0 // pred_check_branch
    %17 = sbr.rel (0) target = $region13
  $region12: #{_lambda_.11} parent=0 // pred_region
    _
  $region13: #{_lambda_.11} parent=0 // pred_fallthru
    _
  // Predicated region
  $region14: #{_lambda_.11} parent=0 // pred_check
    _
  $region15: #{_lambda_.11} parent=0 // pred_check_branch
    %19 = sbr.rel (0) target = $region17
  $region16: #{_lambda_.11} parent=0 // pred_region
    _
  $region17: #{_lambda_.11} parent=0 // pred_fallthru
    _
  // Predicated region
  $region18: #{_lambda_.11} parent=0 // pred_check
    _
  $region19: #{_lambda_.11} parent=0 // pred_check_branch
    %21 = sbr.rel (0) target = $region21
  $region20: #{_lambda_.11} parent=0 // pred_region
    _
  $region21: #{_lambda_.11} parent=0 // pred_fallthru
    _
  // Predicated region
  $region22: #{_lambda_.11} parent=0 // pred_check
    _
  $region23: #{_lambda_.11} parent=0 // pred_check_branch
    %23 = sbr.rel (0) target = $region25
  $region24: #{_lambda_.11} parent=0 // pred_region
    _
  $region25: #{_lambda_.11} parent=0 // pred_fallthru
    _
  // Predicated region
  $region26: #{_lambda_.11} parent=0 // pred_check
    _
  $region27: #{_lambda_.11} parent=0 // pred_check_branch
    %25 = sbr.rel (0) target = $region29
  $region28: #{_lambda_.11} parent=0 // pred_region
    _
  $region29: #{_lambda_.11} parent=0 // pred_fallthru
    _
  %v26 = vld [vmem:[%s0] sm:$0xff]
  %v27 = vld [vmem:[%s0 + $0x8] sm:$0xff]
  %v28 = vld [vmem:[%s0 + $0x10] sm:$0xff]
  %v29 = vld [vmem:[%s1] sm:$0x1]
  %v30 = vld [vmem:[%s2] sm:$0x1]
  %vm31 = vcmask 261120
  %v32 = vsel %vm31, %v26, 0.0
  %33 = vadd.xlane.f32.xlu0 %v32
  %v34 = vpop.xlane.xlu0 %33
  %v35 = vsel %vm31, %v27, 0.0
  %36 = vadd.xlane.f32.xlu0 %v35
  %v37 = vpop.xlane.xlu0 %36
  %v38 = vsel %vm31, %v28, 0.0
  %39 = vadd.xlane.f32.xlu0 %v38
  %v40 = vpop.xlane.xlu0 %39
  %v41 = vrcp.pop 32.0
  %v42 = vmul.f32 %v34, %v41
  %v43 = vmul.f32 %v37, %v41
  %v44 = vmul.f32 %v40, %v41
  %v45 = vsub.f32 %v26, %v42
  %v46 = vsub.f32 %v27, %v43
  %v47 = vsub.f32 %v28, %v44
  %v48 = vmul.f32 %v45, %v45
  %v49 = vmul.f32 %v46, %v46
  %v50 = vmul.f32 %v47, %v47
  %v51 = vsel %vm31, %v48, 0.0
  %52 = vadd.xlane.f32.xlu0 %v51
  %v53 = vpop.xlane.xlu0 %52
  %v54 = vsel %vm31, %v49, 0.0
  %55 = vadd.xlane.f32.xlu0 %v54
  %v56 = vpop.xlane.xlu0 %55
  %v57 = vsel %vm31, %v50, 0.0
  %58 = vadd.xlane.f32.xlu0 %v57
  %v59 = vpop.xlane.xlu0 %58
  %v60 = vmul.f32 %v53, %v41
  %v61 = vmul.f32 %v56, %v41
  %v62 = vmul.f32 %v59, %v41
  %v63 = vadd.f32 %v60, 1e-05
  %v64 = vadd.f32 %v61, 1e-05
  %v65 = vadd.f32 %v62, 1e-05
  %v66 = vrsqrt.pop %v63
  %v67 = vrsqrt.pop %v64
  %v68 = vrsqrt.pop %v65
  %v69 = vmul.f32 %v45, %v66
  %v70 = vmul.f32 %v46, %v67
  %v71 = vmul.f32 %v47, %v68
  %v73 = vlaneseq
  %v74 = vshrl.u32 %v73, 7
  %v75 = vsub.s32 0, %v74
  %v76 = vrot.slane %v29, %v75
  %v78 = vmul.f32 %v69, %v76
  %v79 = vmul.f32 %v70, %v76
  %v80 = vmul.f32 %v71, %v76
  %v82 = vlaneseq
  %v83 = vshrl.u32 %v82, 7
  %v84 = vsub.s32 0, %v83
  %v85 = vrot.slane %v30, %v84
  %v87 = vadd.f32 %v78, %v85
  %v88 = vadd.f32 %v79, %v85
  %v89 = vadd.f32 %v80, %v85
  %v90 = vld [vmem:[%s3] sm:$0xff]
  %v91 = vld [vmem:[%s3 + $0x8] sm:$0xff]
  %v92 = vld [vmem:[%s3 + $0x10] sm:$0xff]
  %v93 = vld [vmem:[%s3 + $0x18] sm:$0xff]
  %v94 = vld [vmem:[%s4] sm:$0x1]
  %v96 = vlaneseq
  %v97 = vshrl.u32 %v96, 7
  %v98 = vsub.s32 0, %v97
  %v99 = vrot.slane %v94, %v98
  %v102 = vsel %vm31, %v87, 0
  %v105 = vsel %vm31, %v88, 0
  %v108 = vsel %vm31, %v89, 0
  %110 = vmatprep.subr.mxu0 0.0
  %111 = vmatpush1.msra.mxu0 0.0
  %112 = vmatprep.subr.mxu0 0.0
  %113 = vmatpush1.msra.mxu0 0.0
  %114 = vmatprep.subr.mxu0 0.0
  %115 = vmatpush1.msra.mxu0 0.0
  %116 = vmatprep.subr.mxu0 0.0
  %117 = vmatpush1.msra.mxu0 0.0
  %118 = vmatprep.subr.mxu0 0.0
  %119 = vmatpush1.msra.mxu0 0.0
  %120 = vmatprep.subr.mxu0 0.0
  %121 = vmatpush1.msra.mxu0 0.0
  %122 = vmatprep.subr.mxu0 0.0
  %123 = vmatpush1.msra.mxu0 0.0
  %124 = vmatprep.subr.mxu0 0.0
  %125 = vmatpush1.msra.mxu0 0.0
  %126 = vmatprep.subr.mxu0 0.0
  %127 = vmatpush1.msra.mxu0 0.0
  %128 = vmatprep.subr.mxu0 0.0
  %129 = vmatpush1.msra.mxu0 0.0
  %130 = vmatprep.subr.mxu0 0.0
  %131 = vmatpush1.msra.mxu0 0.0
  %132 = vmatprep.subr.mxu0 0.0
  %133 = vmatpush1.msra.mxu0 0.0
  %134 = vmatprep.subr.mxu0 0.0
  %135 = vmatpush1.msra.mxu0 %v93
  %136 = vmatprep.subr.mxu0 0.0
  %137 = vmatpush1.msra.mxu0 %v92
  %138 = vmatprep.subr.mxu0 0.0
  %139 = vmatpush1.msra.mxu0 %v91
  %140 = vmatprep.subr.mxu0 0.0
  %141 = vmatpush1.msra.mxu0 %v90
  %142 = vmatprep.subr.mxu0 0.0
  %143 = vmatpush2.msra.mxu0 0.0
  %144 = vmatprep.subr.mxu0 0.0
  %145 = vmatpush2.msra.mxu0 0.0
  %146 = vmatprep.subr.mxu0 0.0
  %147 = vmatpush2.msra.mxu0 0.0
  %148 = vmatprep.subr.mxu0 0.0
  %149 = vmatpush2.msra.mxu0 0.0
  %150 = vmatprep.subr.mxu0 0.0
  %151 = vmatpush2.msra.mxu0 0.0
  %152 = vmatprep.subr.mxu0 0.0
  %153 = vmatpush2.msra.mxu0 0.0
  %154 = vmatprep.subr.mxu0 0.0
  %155 = vmatpush2.msra.mxu0 0.0
  %156 = vmatprep.subr.mxu0 0.0
  %157 = vmatpush2.msra.mxu0 0.0
  %158 = vmatprep.subr.mxu0 0.0
  %159 = vmatpush2.msra.mxu0 0.0
  %160 = vmatprep.subr.mxu0 0.0
  %161 = vmatpush2.msra.mxu0 0.0
  %162 = vmatprep.subr.mxu0 0.0
  %163 = vmatpush2.msra.mxu0 0.0
  %164 = vmatprep.subr.mxu0 0.0
  %165 = vmatpush2.msra.mxu0 0.0
  %166 = vmatprep.subr.mxu0 0.0
  %167 = vmatpush2.msra.mxu0 0.0
  %168 = vmatprep.subr.mxu0 0.0
  %169 = vmatpush2.msra.mxu0 0.0
  %170 = vmatprep.subr.mxu0 0.0
  %171 = vmatpush2.msra.mxu0 0.0
  %172 = vmatprep.subr.mxu0 0.0
  %173 = vmatpush2.msra.mxu0 0.0
  %174 = vmatprep.mubr.f32.mxu0 0.0
  %175 = vmatmul.mubr.f32.gmra.mxu0 %v102
  %v176 = vpop.f32.mrf.mxu0
  %v177 = vadd.f32 %v99, %v176
  %v178 = vpop.f32.mrf.mxu0
  %179 = vmatprep.mubr.f32.mxu0 0.0
  %180 = vmatmul.mubr.f32.gmra.mxu0 %v105
  %v181 = vpop.f32.mrf.mxu0
  %v182 = vadd.f32 %v99, %v181
  %v183 = vpop.f32.mrf.mxu0
  %184 = vmatprep.mubr.f32.mxu0 0.0
  %185 = vmatmul.mubr.f32.gmra.mxu0 %v108
  %v186 = vpop.f32.mrf.mxu0
  %v187 = vadd.f32 %v99, %v186
  %v188 = vpop.f32.mrf.mxu0
  %189 = vdwg.mxu0
  %v190 = vld [vmem:[%s6] sm:$0xff]
  %v191 = vld [vmem:[%s6 + $0x8] sm:$0xff]
  %v192 = vld [vmem:[%s6 + $0x10] sm:$0xff]
  %194 = vset.pattern.permute.xlu0 0
  %195 = vperm.xlu0 %194, %v190
  %v196 = vpop.permute.xlu0 %195
  %199 = vset.pattern.permute.xlu0 0
  %200 = vperm.xlu0 %199, %v191
  %v201 = vpop.permute.xlu0 %200
  %204 = vset.pattern.permute.xlu0 0
  %205 = vperm.xlu0 %204, %v192
  %v206 = vpop.permute.xlu0 %205
  %v208 = vmul.f32 %v177, %v196
  %v209 = vmul.f32 %v182, %v201
  %v210 = vmul.f32 %v187, %v206
  %v211 = vld [vmem:[%s5] sm:$0xff]
  %v212 = vld [vmem:[%s5 + $0x8] sm:$0xff]
  %v213 = vld [vmem:[%s5 + $0x10] sm:$0xff]
  %215 = vset.pattern.permute.xlu0 0
  %216 = vperm.xlu0 %215, %v211
  %v217 = vpop.permute.xlu0 %216
  %220 = vset.pattern.permute.xlu0 0
  %221 = vperm.xlu0 %220, %v212
  %v222 = vpop.permute.xlu0 %221
  %225 = vset.pattern.permute.xlu0 0
  %226 = vperm.xlu0 %225, %v213
  %v227 = vpop.permute.xlu0 %226
  %v229 = vadd.f32 %v208, %v217
  %v230 = vadd.f32 %v209, %v222
  %v231 = vadd.f32 %v210, %v227
  %vm232 = vcmask 31744
  %233 = vst.msk [vmem:[%s7] sm:$0xff] %vm232, %v229
  %234 = vst.msk [vmem:[%s7 + $0x8] sm:$0xff] %vm232, %v230
  %235 = vst.msk [vmem:[%s7 + $0x10] sm:$0xff] %vm232, %v231
  // Predicated region
  $region30: #{_lambda_.11} parent=0 // pred_check
    _
  $region31: #{_lambda_.11} parent=0 // pred_check_branch
    %237 = sbr.rel (0) target = $region33
  $region32: #{_lambda_.11} parent=0 // pred_region
    _
  $region33: #{_lambda_.11} parent=0 // pred_fallthru
    _
  // Predicated region
  $region34: #{_lambda_.11} parent=0 // pred_check
    _
  $region35: #{_lambda_.11} parent=0 // pred_check_branch
    %239 = sbr.rel (0) target = $region37
  $region36: #{_lambda_.11} parent=0 // pred_region
    _
  $region37: #{_lambda_.11} parent=0 // pred_fallthru
    _

// kernel: _lambda_.8
$region0: #{_lambda_.8}
  #allocation0 [shape = 'u32[]', space=smem, size = 0x4, offset = 0x4, fixed_abs, tag = 'smem constant byte address 0x4 - core index']
  #allocation1 [shape = 'u32[144,128]{1,0:T(1,128)}', space=vmem, size = 0x12000, scoped, tag = 'internal scratch']
  %s0 = inlined_call_operand.vmem [shape: f32[24,32], index: 0, kind: input, shape index: {}]
  %s1 = inlined_call_operand.vmem [shape: f32[24,24], index: 1, kind: input, shape index: {}]
  %s2 = inlined_call_operand.vmem [shape: f32[3,4,32,8], index: 2, kind: input, shape index: {}]
  %s3 = inlined_call_operand.vmem [shape: f32[3,4,1,8], index: 3, kind: input, shape index: {}]
  %s4 = inlined_call_operand.vmem [shape: f32[4,8,32], index: 4, kind: input, shape index: {}]
  %s5 = inlined_call_operand.vmem [shape: f32[1,32], index: 5, kind: input, shape index: {}]
  %s6 = inlined_call_operand.vmem [shape: f32[1,32], index: 6, kind: input, shape index: {}]
  %s7 = inlined_call_operand.vmem [shape: f32[1,32], index: 7, kind: input, shape index: {}]
  %s8 = inlined_call_operand.vmem [shape: f32[32,64], index: 8, kind: input, shape index: {}]
  %s9 = inlined_call_operand.vmem [shape: f32[1,64], index: 9, kind: input, shape index: {}]
  %s10 = inlined_call_operand.vmem [shape: f32[64,32], index: 10, kind: input, shape index: {}]
  %s11 = inlined_call_operand.vmem [shape: f32[1,32], index: 11, kind: input, shape index: {}]
  %s12 = inlined_call_operand.vmem [shape: f32[1,32], index: 12, kind: input, shape index: {}]
  %s13 = inlined_call_operand.vmem [shape: f32[1,32], index: 13, kind: input, shape index: {}]
  %s14 = inlined_call_operand.vmem [shape: f32[24,32], index: 14, kind: output, shape index: {}]
  %s15 = sld [smem:[#allocation0]]
  $region66: #{_lambda_.8} parent=0
    _
  %s17 = ssub.s32 1, %s15
  %s18 = scalar_select 0, %s17, %s15
  // Predicated region
  $region2: #{_lambda_.8} parent=0 // pred_check
    _
  $region3: #{_lambda_.8} parent=0 // pred_check_branch
    %20 = sbr.rel (0) target = $region5
  $region4: #{_lambda_.8} parent=0 // pred_region
    _
  $region5: #{_lambda_.8} parent=0 // pred_fallthru
    _
  // Predicated region
  $region6: #{_lambda_.8} parent=0 // pred_check
    _
  $region7: #{_lambda_.8} parent=0 // pred_check_branch
    %22 = sbr.rel (0) target = $region9
  $region8: #{_lambda_.8} parent=0 // pred_region
    _
  $region9: #{_lambda_.8} parent=0 // pred_fallthru
    _
  // Predicated region
  $region10: #{_lambda_.8} parent=0 // pred_check
    _
  $region11: #{_lambda_.8} parent=0 // pred_check_branch
    %24 = sbr.rel (0) target = $region13
  $region12: #{_lambda_.8} parent=0 // pred_region
    _
  $region13: #{_lambda_.8} parent=0 // pred_fallthru
    _
  // Predicated region
  $region14: #{_lambda_.8} parent=0 // pred_check
    _
  $region15: #{_lambda_.8} parent=0 // pred_check_branch
    %26 = sbr.rel (0) target = $region17
  $region16: #{_lambda_.8} parent=0 // pred_region
    _
  $region17: #{_lambda_.8} parent=0 // pred_fallthru
    _
  // Predicated region
  $region18: #{_lambda_.8} parent=0 // pred_check
    _
  $region19: #{_lambda_.8} parent=0 // pred_check_branch
    %28 = sbr.rel (0) target = $region21
  $region20: #{_lambda_.8} parent=0 // pred_region
    _
  $region21: #{_lambda_.8} parent=0 // pred_fallthru
    _
  // Predicated region
  $region22: #{_lambda_.8} parent=0 // pred_check
    _
  $region23: #{_lambda_.8} parent=0 // pred_check_branch
    %30 = sbr.rel (0) target = $region25
  $region24: #{_lambda_.8} parent=0 // pred_region
    _
  $region25: #{_lambda_.8} parent=0 // pred_fallthru
    _
  // Predicated region
  $region26: #{_lambda_.8} parent=0 // pred_check
    _
  $region27: #{_lambda_.8} parent=0 // pred_check_branch
    %32 = sbr.rel (0) target = $region29
  $region28: #{_lambda_.8} parent=0 // pred_region
    _
  $region29: #{_lambda_.8} parent=0 // pred_fallthru
    _
  // Predicated region
  $region30: #{_lambda_.8} parent=0 // pred_check
    _
  $region31: #{_lambda_.8} parent=0 // pred_check_branch
    %34 = sbr.rel (0) target = $region33
  $region32: #{_lambda_.8} parent=0 // pred_region
    _
  $region33: #{_lambda_.8} parent=0 // pred_fallthru
    _
  // Predicated region
  $region34: #{_lambda_.8} parent=0 // pred_check
    _
  $region35: #{_lambda_.8} parent=0 // pred_check_branch
    %36 = sbr.rel (0) target = $region37
  $region36: #{_lambda_.8} parent=0 // pred_region
    _
  $region37: #{_lambda_.8} parent=0 // pred_fallthru
    _
  // Predicated region
  $region38: #{_lambda_.8} parent=0 // pred_check
    _
  $region39: #{_lambda_.8} parent=0 // pred_check_branch
    %38 = sbr.rel (0) target = $region41
  $region40: #{_lambda_.8} parent=0 // pred_region
    _
  $region41: #{_lambda_.8} parent=0 // pred_fallthru
    _
  // Predicated region
  $region42: #{_lambda_.8} parent=0 // pred_check
    _
  $region43: #{_lambda_.8} parent=0 // pred_check_branch
    %40 = sbr.rel (0) target = $region45
  $region44: #{_lambda_.8} parent=0 // pred_region
    _
  $region45: #{_lambda_.8} parent=0 // pred_fallthru
    _
  // Predicated region
  $region46: #{_lambda_.8} parent=0 // pred_check
    _
  $region47: #{_lambda_.8} parent=0 // pred_check_branch
    %42 = sbr.rel (0) target = $region49
  $region48: #{_lambda_.8} parent=0 // pred_region
    _
  $region49: #{_lambda_.8} parent=0 // pred_fallthru
    _
  // Predicated region
  $region50: #{_lambda_.8} parent=0 // pred_check
    _
  $region51: #{_lambda_.8} parent=0 // pred_check_branch
    %44 = sbr.rel (0) target = $region53
  $region52: #{_lambda_.8} parent=0 // pred_region
    _
  $region53: #{_lambda_.8} parent=0 // pred_fallthru
    _
  // Predicated region
  $region54: #{_lambda_.8} parent=0 // pred_check
    _
  $region55: #{_lambda_.8} parent=0 // pred_check_branch
    %46 = sbr.rel (0) target = $region57
  $region56: #{_lambda_.8} parent=0 // pred_region
    _
  $region57: #{_lambda_.8} parent=0 // pred_fallthru
    _
  %v47 = vld [vmem:[%s0] sm:$0xff]
  %v48 = vld [vmem:[%s0 + $0x8] sm:$0xff]
  %v49 = vld [vmem:[%s0 + $0x10] sm:$0xff]
  %v50 = vld [vmem:[%s1] sm:$0xff]
  %v51 = vld [vmem:[%s1 + $0x8] sm:$0xff]
  %v52 = vld [vmem:[%s1 + $0x10] sm:$0xff]
  %v53 = vld [vmem:[%s2] sm:$0xff]
  %v54 = vld [vmem:[%s2 + $0x8] sm:$0xff]
  %v55 = vld [vmem:[%s2 + $0x10] sm:$0xff]
  %v56 = vld [vmem:[%s2 + $0x18] sm:$0xff]
  %v57 = vld [vmem:[%s3] sm:$0x1]
  %v59 = vlaneseq
  %v60 = vshrl.u32 %v59, 7
  %v61 = vsub.s32 0, %v60
  %v62 = vrot.slane %v57, %v61
  %vm64 = vcmask 261120
  %v66 = vsel %vm64, %v47, 0
  %v69 = vsel %vm64, %v48, 0
  %v72 = vsel %vm64, %v49, 0
  %74 = vmatprep.subr.mxu0 0.0
  %75 = vmatpush1.msra.mxu0 0.0
  %76 = vmatprep.subr.mxu0 0.0
  %77 = vmatpush1.msra.mxu0 0.0
  %78 = vmatprep.subr.mxu0 0.0
  %79 = vmatpush1.msra.mxu0 0.0
  %80 = vmatprep.subr.mxu0 0.0
  %81 = vmatpush1.msra.mxu0 0.0
  %82 = vmatprep.subr.mxu0 0.0
  %83 = vmatpush1.msra.mxu0 0.0
  %84 = vmatprep.subr.mxu0 0.0
  %85 = vmatpush1.msra.mxu0 0.0
  %86 = vmatprep.subr.mxu0 0.0
  %87 = vmatpush1.msra.mxu0 0.0
  %88 = vmatprep.subr.mxu0 0.0
  %89 = vmatpush1.msra.mxu0 0.0
  %90 = vmatprep.subr.mxu0 0.0
  %91 = vmatpush1.msra.mxu0 0.0
  %92 = vmatprep.subr.mxu0 0.0
  %93 = vmatpush1.msra.mxu0 0.0
  %94 = vmatprep.subr.mxu0 0.0
  %95 = vmatpush1.msra.mxu0 0.0
  %96 = vmatprep.subr.mxu0 0.0
  %97 = vmatpush1.msra.mxu0 0.0
  %98 = vmatprep.subr.mxu0 0.0
  %99 = vmatpush1.msra.mxu0 %v56
  %100 = vmatprep.subr.mxu0 0.0
  %101 = vmatpush1.msra.mxu0 %v55
  %102 = vmatprep.subr.mxu0 0.0
  %103 = vmatpush1.msra.mxu0 %v54
  %104 = vmatprep.subr.mxu0 0.0
  %105 = vmatpush1.msra.mxu0 %v53
  %106 = vmatprep.subr.mxu0 0.0
  %107 = vmatpush2.msra.mxu0 0.0
  %108 = vmatprep.subr.mxu0 0.0
  %109 = vmatpush2.msra.mxu0 0.0
  %110 = vmatprep.subr.mxu0 0.0
  %111 = vmatpush2.msra.mxu0 0.0
  %112 = vmatprep.subr.mxu0 0.0
  %113 = vmatpush2.msra.mxu0 0.0
  %114 = vmatprep.subr.mxu0 0.0
  %115 = vmatpush2.msra.mxu0 0.0
  %116 = vmatprep.subr.mxu0 0.0
  %117 = vmatpush2.msra.mxu0 0.0
  %118 = vmatprep.subr.mxu0 0.0
  %119 = vmatpush2.msra.mxu0 0.0
  %120 = vmatprep.subr.mxu0 0.0
  %121 = vmatpush2.msra.mxu0 0.0
  %122 = vmatprep.subr.mxu0 0.0
  %123 = vmatpush2.msra.mxu0 0.0
  %124 = vmatprep.subr.mxu0 0.0
  %125 = vmatpush2.msra.mxu0 0.0
  %126 = vmatprep.subr.mxu0 0.0
  %127 = vmatpush2.msra.mxu0 0.0
  %128 = vmatprep.subr.mxu0 0.0
  %129 = vmatpush2.msra.mxu0 0.0
  %130 = vmatprep.subr.mxu0 0.0
  %131 = vmatpush2.msra.mxu0 0.0
  %132 = vmatprep.subr.mxu0 0.0
  %133 = vmatpush2.msra.mxu0 0.0
  %134 = vmatprep.subr.mxu0 0.0
  %135 = vmatpush2.msra.mxu0 0.0
  %136 = vmatprep.subr.mxu0 0.0
  %137 = vmatpush2.msra.mxu0 0.0
  %138 = vmatprep.mubr.f32.mxu0 0.0
  %139 = vmatmul.mubr.f32.gmra.mxu0 %v66
  %v140 = vpop.f32.mrf.mxu0
  %v141 = vadd.f32 %v62, %v140
  %v142 = vpop.f32.mrf.mxu0
  %143 = vmatprep.mubr.f32.mxu0 0.0
  %144 = vmatmul.mubr.f32.gmra.mxu0 %v69
  %v145 = vpop.f32.mrf.mxu0
  %v146 = vadd.f32 %v62, %v145
  %v147 = vpop.f32.mrf.mxu0
  %148 = vmatprep.mubr.f32.mxu0 0.0
  %149 = vmatmul.mubr.f32.gmra.mxu0 %v72
  %v150 = vpop.f32.mrf.mxu0
  %v151 = vadd.f32 %v62, %v150
  %v152 = vpop.f32.mrf.mxu0
  %153 = vdwg.mxu0
  %s154 = scalar_lea.vmem %s2, 128
  %v155 = vld [vmem:[%s154] sm:$0xff]
  %v156 = vld [vmem:[%s154 + $0x8] sm:$0xff]
  %v157 = vld [vmem:[%s154 + $0x10] sm:$0xff]
  %v158 = vld [vmem:[%s154 + $0x18] sm:$0xff]
  %s159 = scalar_lea.vmem %s3, 4
  %v160 = vld [vmem:[%s159] sm:$0x1]
  %v162 = vlaneseq
  %v163 = vshrl.u32 %v162, 7
  %v164 = vsub.s32 0, %v163
  %v165 = vrot.slane %v160, %v164
  %167 = vmatprep.subr.mxu0 0.0
  %168 = vmatpush1.msra.mxu0 0.0
  %169 = vmatprep.subr.mxu0 0.0
  %170 = vmatpush1.msra.mxu0 0.0
  %171 = vmatprep.subr.mxu0 0.0
  %172 = vmatpush1.msra.mxu0 0.0
  %173 = vmatprep.subr.mxu0 0.0
  %174 = vmatpush1.msra.mxu0 0.0
  %175 = vmatprep.subr.mxu0 0.0
  %176 = vmatpush1.msra.mxu0 0.0
  %177 = vmatprep.subr.mxu0 0.0
  %178 = vmatpush1.msra.mxu0 0.0
  %179 = vmatprep.subr.mxu0 0.0
  %180 = vmatpush1.msra.mxu0 0.0
  %181 = vmatprep.subr.mxu0 0.0
  %182 = vmatpush1.msra.mxu0 0.0
  %183 = vmatprep.subr.mxu0 0.0
  %184 = vmatpush1.msra.mxu0 0.0
  %185 = vmatprep.subr.mxu0 0.0
  %186 = vmatpush1.msra.mxu0 0.0
  %187 = vmatprep.subr.mxu0 0.0
  %188 = vmatpush1.msra.mxu0 0.0
  %189 = vmatprep.subr.mxu0 0.0
  %190 = vmatpush1.msra.mxu0 0.0
  %191 = vmatprep.subr.mxu0 0.0
  %192 = vmatpush1.msra.mxu0 %v158
  %193 = vmatprep.subr.mxu0 0.0
  %194 = vmatpush1.msra.mxu0 %v157
  %195 = vmatprep.subr.mxu0 0.0
  %196 = vmatpush1.msra.mxu0 %v156
  %197 = vmatprep.subr.mxu0 0.0
  %198 = vmatpush1.msra.mxu0 %v155
  %199 = vmatprep.subr.mxu0 0.0
  %200 = vmatpush2.msra.mxu0 0.0
  %201 = vmatprep.subr.mxu0 0.0
  %202 = vmatpush2.msra.mxu0 0.0
  %203 = vmatprep.subr.mxu0 0.0
  %204 = vmatpush2.msra.mxu0 0.0
  %205 = vmatprep.subr.mxu0 0.0
  %206 = vmatpush2.msra.mxu0 0.0
  %207 = vmatprep.subr.mxu0 0.0
  %208 = vmatpush2.msra.mxu0 0.0
  %209 = vmatprep.subr.mxu0 0.0
  %210 = vmatpush2.msra.mxu0 0.0
  %211 = vmatprep.subr.mxu0 0.0
  %212 = vmatpush2.msra.mxu0 0.0
  %213 = vmatprep.subr.mxu0 0.0
  %214 = vmatpush2.msra.mxu0 0.0
  %215 = vmatprep.subr.mxu0 0.0
  %216 = vmatpush2.msra.mxu0 0.0
  %217 = vmatprep.subr.mxu0 0.0
  %218 = vmatpush2.msra.mxu0 0.0
  %219 = vmatprep.subr.mxu0 0.0
  %220 = vmatpush2.msra.mxu0 0.0
  %221 = vmatprep.subr.mxu0 0.0
  %222 = vmatpush2.msra.mxu0 0.0
  %223 = vmatprep.subr.mxu0 0.0
  %224 = vmatpush2.msra.mxu0 0.0
  %225 = vmatprep.subr.mxu0 0.0
  %226 = vmatpush2.msra.mxu0 0.0
  %227 = vmatprep.subr.mxu0 0.0
  %228 = vmatpush2.msra.mxu0 0.0
  %229 = vmatprep.subr.mxu0 0.0
  %230 = vmatpush2.msra.mxu0 0.0
  %231 = vmatprep.mubr.f32.mxu0 0.0
  %232 = vmatmul.mubr.f32.gmra.mxu0 %v66
  %v233 = vpop.f32.mrf.mxu0
  %v234 = vadd.f32 %v165, %v233
  %v235 = vpop.f32.mrf.mxu0
  %236 = vmatprep.mubr.f32.mxu0 0.0
  %237 = vmatmul.mubr.f32.gmra.mxu0 %v69
  %v238 = vpop.f32.mrf.mxu0
  %v239 = vadd.f32 %v165, %v238
  %v240 = vpop.f32.mrf.mxu0
  %241 = vmatprep.mubr.f32.mxu0 0.0
  %242 = vmatmul.mubr.f32.gmra.mxu0 %v72
  %v243 = vpop.f32.mrf.mxu0
  %v244 = vadd.f32 %v165, %v243
  %v245 = vpop.f32.mrf.mxu0
  %246 = vdwg.mxu0
  %s247 = scalar_lea.vmem %s2, 256
  %v248 = vld [vmem:[%s247] sm:$0xff]
  %v249 = vld [vmem:[%s247 + $0x8] sm:$0xff]
  %v250 = vld [vmem:[%s247 + $0x10] sm:$0xff]
  %v251 = vld [vmem:[%s247 + $0x18] sm:$0xff]
  %s252 = scalar_lea.vmem %s3, 8
  %v253 = vld [vmem:[%s252] sm:$0x1]
  %v255 = vlaneseq
  %v256 = vshrl.u32 %v255, 7
  %v257 = vsub.s32 0, %v256
  %v258 = vrot.slane %v253, %v257
  %260 = vmatprep.subr.mxu0 0.0
  %261 = vmatpush1.msra.mxu0 0.0
  %262 = vmatprep.subr.mxu0 0.0
  %263 = vmatpush1.msra.mxu0 0.0
  %264 = vmatprep.subr.mxu0 0.0
  %265 = vmatpush1.msra.mxu0 0.0
  %266 = vmatprep.subr.mxu0 0.0
  %267 = vmatpush1.msra.mxu0 0.0
  %268 = vmatprep.subr.mxu0 0.0
  %269 = vmatpush1.msra.mxu0 0.0
  %270 = vmatprep.subr.mxu0 0.0
  %271 = vmatpush1.msra.mxu0 0.0
  %272 = vmatprep.subr.mxu0 0.0
  %273 = vmatpush1.msra.mxu0 0.0
  %274 = vmatprep.subr.mxu0 0.0
  %275 = vmatpush1.msra.mxu0 0.0
  %276 = vmatprep.subr.mxu0 0.0
  %277 = vmatpush1.msra.mxu0 0.0
  %278 = vmatprep.subr.mxu0 0.0
  %279 = vmatpush1.msra.mxu0 0.0
  %280 = vmatprep.subr.mxu0 0.0
  %281 = vmatpush1.msra.mxu0 0.0
  %282 = vmatprep.subr.mxu0 0.0
  %283 = vmatpush1.msra.mxu0 0.0
  %284 = vmatprep.subr.mxu0 0.0
  %285 = vmatpush1.msra.mxu0 %v251
  %286 = vmatprep.subr.mxu0 0.0
  %287 = vmatpush1.msra.mxu0 %v250
  %288 = vmatprep.subr.mxu0 0.0
  %289 = vmatpush1.msra.mxu0 %v249
  %290 = vmatprep.subr.mxu0 0.0
  %291 = vmatpush1.msra.mxu0 %v248
  %292 = vmatprep.subr.mxu0 0.0
  %293 = vmatpush2.msra.mxu0 0.0
  %294 = vmatprep.subr.mxu0 0.0
  %295 = vmatpush2.msra.mxu0 0.0
  %296 = vmatprep.subr.mxu0 0.0
  %297 = vmatpush2.msra.mxu0 0.0
  %298 = vmatprep.subr.mxu0 0.0
  %299 = vmatpush2.msra.mxu0 0.0
  %300 = vmatprep.subr.mxu0 0.0
  %301 = vmatpush2.msra.mxu0 0.0
  %302 = vmatprep.subr.mxu0 0.0
  %303 = vmatpush2.msra.mxu0 0.0
  %304 = vmatprep.subr.mxu0 0.0
  %305 = vmatpush2.msra.mxu0 0.0
  %306 = vmatprep.subr.mxu0 0.0
  %307 = vmatpush2.msra.mxu0 0.0
  %308 = vmatprep.subr.mxu0 0.0
  %309 = vmatpush2.msra.mxu0 0.0
  %310 = vmatprep.subr.mxu0 0.0
  %311 = vmatpush2.msra.mxu0 0.0
  %312 = vmatprep.subr.mxu0 0.0
  %313 = vmatpush2.msra.mxu0 0.0
  %314 = vmatprep.subr.mxu0 0.0
  %315 = vmatpush2.msra.mxu0 0.0
  %316 = vmatprep.subr.mxu0 0.0
  %317 = vmatpush2.msra.mxu0 0.0
  %318 = vmatprep.subr.mxu0 0.0
  %319 = vmatpush2.msra.mxu0 0.0
  %320 = vmatprep.subr.mxu0 0.0
  %321 = vmatpush2.msra.mxu0 0.0
  %322 = vmatprep.subr.mxu0 0.0
  %323 = vmatpush2.msra.mxu0 0.0
  %324 = vmatprep.mubr.f32.mxu0 0.0
  %325 = vmatmul.mubr.f32.gmra.mxu0 %v66
  %v326 = vpop.f32.mrf.mxu0
  %v327 = vadd.f32 %v258, %v326
  %v328 = vpop.f32.mrf.mxu0
  %329 = vmatprep.mubr.f32.mxu0 0.0
  %330 = vmatmul.mubr.f32.gmra.mxu0 %v69
  %v331 = vpop.f32.mrf.mxu0
  %v332 = vadd.f32 %v258, %v331
  %v333 = vpop.f32.mrf.mxu0
  %334 = vmatprep.mubr.f32.mxu0 0.0
  %335 = vmatmul.mubr.f32.gmra.mxu0 %v72
  %v336 = vpop.f32.mrf.mxu0
  %v337 = vadd.f32 %v258, %v336
  %v338 = vpop.f32.mrf.mxu0
  %339 = vdwg.mxu0
  %vm340 = vcmask 64512
  %v342 = vsel %vm340, %v141, 0
  %v345 = vsel %vm340, %v146, 0
  %v348 = vsel %vm340, %v151, 0
  %v351 = vsel %vm340, %v234, 0
  %v354 = vsel %vm340, %v239, 0
  %v357 = vsel %vm340, %v244, 0
  %359 = vmatprep.subr.mxu0 0.0
  %360 = vmatpush1.xpose.msra.mxu0 0.0
  %361 = vmatprep.subr.mxu0 0.0
  %362 = vmatpush1.xpose.msra.mxu0 0.0
  %363 = vmatprep.subr.mxu0 0.0
  %364 = vmatpush1.xpose.msra.mxu0 0.0
  %365 = vmatprep.subr.mxu0 0.0
  %366 = vmatpush1.xpose.msra.mxu0 0.0
  %367 = vmatprep.subr.mxu0 0.0
  %368 = vmatpush1.xpose.msra.mxu0 0.0
  %369 = vmatprep.subr.mxu0 0.0
  %370 = vmatpush1.xpose.msra.mxu0 0.0
  %371 = vmatprep.subr.mxu0 0.0
  %372 = vmatpush1.xpose.msra.mxu0 0.0
  %373 = vmatprep.subr.mxu0 0.0
  %374 = vmatpush1.xpose.msra.mxu0 0.0
  %375 = vmatprep.subr.mxu0 0.0
  %376 = vmatpush1.xpose.msra.mxu0 0.0
  %377 = vmatprep.subr.mxu0 0.0
  %378 = vmatpush1.xpose.msra.mxu0 0.0
  %379 = vmatprep.subr.mxu0 0.0
  %380 = vmatpush1.xpose.msra.mxu0 0.0
  %381 = vmatprep.subr.mxu0 0.0
  %382 = vmatpush1.xpose.msra.mxu0 0.0
  %383 = vmatprep.subr.mxu0 0.0
  %384 = vmatpush1.xpose.msra.mxu0 0.0
  %385 = vmatprep.subr.mxu0 0.0
  %386 = vmatpush1.xpose.msra.mxu0 %v357
  %387 = vmatprep.subr.mxu0 0.0
  %388 = vmatpush1.xpose.msra.mxu0 %v354
  %389 = vmatprep.subr.mxu0 0.0
  %390 = vmatpush1.xpose.msra.mxu0 %v351
  %391 = vmatprep.subr.mxu0 0.0
  %392 = vmatpush2.xpose.msra.mxu0 0.0
  %393 = vmatprep.subr.mxu0 0.0
  %394 = vmatpush2.xpose.msra.mxu0 0.0
  %395 = vmatprep.subr.mxu0 0.0
  %396 = vmatpush2.xpose.msra.mxu0 0.0
  %397 = vmatprep.subr.mxu0 0.0
  %398 = vmatpush2.xpose.msra.mxu0 0.0
  %399 = vmatprep.subr.mxu0 0.0
  %400 = vmatpush2.xpose.msra.mxu0 0.0
  %401 = vmatprep.subr.mxu0 0.0
  %402 = vmatpush2.xpose.msra.mxu0 0.0
  %403 = vmatprep.subr.mxu0 0.0
  %404 = vmatpush2.xpose.msra.mxu0 0.0
  %405 = vmatprep.subr.mxu0 0.0
  %406 = vmatpush2.xpose.msra.mxu0 0.0
  %407 = vmatprep.subr.mxu0 0.0
  %408 = vmatpush2.xpose.msra.mxu0 0.0
  %409 = vmatprep.subr.mxu0 0.0
  %410 = vmatpush2.xpose.msra.mxu0 0.0
  %411 = vmatprep.subr.mxu0 0.0
  %412 = vmatpush2.xpose.msra.mxu0 0.0
  %413 = vmatprep.subr.mxu0 0.0
  %414 = vmatpush2.xpose.msra.mxu0 0.0
  %415 = vmatprep.subr.mxu0 0.0
  %416 = vmatpush2.xpose.msra.mxu0 0.0
  %417 = vmatprep.subr.mxu0 0.0
  %418 = vmatpush2.xpose.msra.mxu0 0.0
  %419 = vmatprep.subr.mxu0 0.0
  %420 = vmatpush2.xpose.msra.mxu0 0.0
  %421 = vmatprep.subr.mxu0 0.0
  %422 = vmatpush2.xpose.msra.mxu0 0.0
  %423 = vmatprep.mubr.f32.mxu0 0.0
  %424 = vmatmul.mubr.f32.gmra.mxu0 %v342
  %v425 = vpop.f32.mrf.mxu0
  %v426 = vadd.f32 0.0, %v425
  %v427 = vpop.f32.mrf.mxu0
  %428 = vmatprep.mubr.f32.mxu0 0.0
  %429 = vmatmul.mubr.f32.gmra.mxu0 %v345
  %v430 = vpop.f32.mrf.mxu0
  %v431 = vadd.f32 0.0, %v430
  %v432 = vpop.f32.mrf.mxu0
  %433 = vmatprep.mubr.f32.mxu0 0.0
  %434 = vmatmul.mubr.f32.gmra.mxu0 %v348
  %v435 = vpop.f32.mrf.mxu0
  %v436 = vadd.f32 0.0, %v435
  %v437 = vpop.f32.mrf.mxu0
  %438 = vdwg.mxu0
  %v439 = vmul.f32 %v426, 0.35355338
  %v440 = vmul.f32 %v431, 0.35355338
  %v441 = vmul.f32 %v436, 0.35355338
  %v442 = vadd.f32 %v439, %v50
  %v443 = vadd.f32 %v440, %v51
  %v444 = vadd.f32 %v441, %v52
  %vm445 = vcmask 195584
  %v446 = vsel %vm445, %v442, -inf
  %447 = vmax.xlane.f32.xlu0 %v446
  %v448 = vpop.xlane.xlu0 %447
  %v449 = vsel %vm445, %v443, -inf
  %450 = vmax.xlane.f32.xlu0 %v449
  %v451 = vpop.xlane.xlu0 %450
  %v452 = vsel %vm445, %v444, -inf
  %453 = vmax.xlane.f32.xlu0 %v452
  %v454 = vpop.xlane.xlu0 %453
  %v455 = vsub.f32 %v442, %v448
  %v456 = vsub.f32 %v443, %v451
  %v457 = vsub.f32 %v444, %v454
  %v458 = vmul.f32 %v455, 1.442695
  %v459 = vpow.pop %v458
  %v460 = vmul.f32 %v456, 1.442695
  %v461 = vpow.pop %v460
  %v462 = vmul.f32 %v457, 1.442695
  %v463 = vpow.pop %v462
  %v464 = vsel %vm445, %v459, 0.0
  %465 = vadd.xlane.f32.xlu0 %v464
  %v466 = vpop.xlane.xlu0 %465
  %v467 = vsel %vm445, %v461, 0.0
  %468 = vadd.xlane.f32.xlu0 %v467
  %v469 = vpop.xlane.xlu0 %468
  %v470 = vsel %vm445, %v463, 0.0
  %471 = vadd.xlane.f32.xlu0 %v470
  %v472 = vpop.xlane.xlu0 %471
  %v473 = vrcp.pop %v466
  %v474 = vrcp.pop %v469
  %v475 = vrcp.pop %v472
  %v476 = vmul.f32 %v459, %v473
  %v477 = vmul.f32 %v461, %v474
  %v478 = vmul.f32 %v463, %v475
  %v480 = vsel %vm445, %v476, 0
  %v483 = vsel %vm445, %v477, 0
  %v486 = vsel %vm445, %v478, 0
  %488 = vmatprep.subr.mxu0 0.0
  %489 = vmatpush1.msra.mxu0 0.0
  %490 = vmatprep.subr.mxu0 0.0
  %491 = vmatpush1.msra.mxu0 0.0
  %492 = vmatprep.subr.mxu0 0.0
  %493 = vmatpush1.msra.mxu0 0.0
  %494 = vmatprep.subr.mxu0 0.0
  %495 = vmatpush1.msra.mxu0 0.0
  %496 = vmatprep.subr.mxu0 0.0
  %497 = vmatpush1.msra.mxu0 0.0
  %498 = vmatprep.subr.mxu0 0.0
  %499 = vmatpush1.msra.mxu0 0.0
  %500 = vmatprep.subr.mxu0 0.0
  %501 = vmatpush1.msra.mxu0 0.0
  %502 = vmatprep.subr.mxu0 0.0
  %503 = vmatpush1.msra.mxu0 0.0
  %504 = vmatprep.subr.mxu0 0.0
  %505 = vmatpush1.msra.mxu0 0.0
  %506 = vmatprep.subr.mxu0 0.0
  %507 = vmatpush1.msra.mxu0 0.0
  %508 = vmatprep.subr.mxu0 0.0
  %509 = vmatpush1.msra.mxu0 0.0
  %510 = vmatprep.subr.mxu0 0.0
  %511 = vmatpush1.msra.mxu0 0.0
  %512 = vmatprep.subr.mxu0 0.0
  %513 = vmatpush1.msra.mxu0 0.0
  %514 = vmatprep.subr.mxu0 0.0
  %515 = vmatpush1.msra.mxu0 %v337
  %516 = vmatprep.subr.mxu0 0.0
  %517 = vmatpush1.msra.mxu0 %v332
  %518 = vmatprep.subr.mxu0 0.0
  %519 = vmatpush1.msra.mxu0 %v327
  %520 = vmatprep.subr.mxu0 0.0
  %521 = vmatpush2.msra.mxu0 0.0
  %522 = vmatprep.subr.mxu0 0.0
  %523 = vmatpush2.msra.mxu0 0.0
  %524 = vmatprep.subr.mxu0 0.0
  %525 = vmatpush2.msra.mxu0 0.0
  %526 = vmatprep.subr.mxu0 0.0
  %527 = vmatpush2.msra.mxu0 0.0
  %528 = vmatprep.subr.mxu0 0.0
  %529 = vmatpush2.msra.mxu0 0.0
  %530 = vmatprep.subr.mxu0 0.0
  %531 = vmatpush2.msra.mxu0 0.0
  %532 = vmatprep.subr.mxu0 0.0
  %533 = vmatpush2.msra.mxu0 0.0
  %534 = vmatprep.subr.mxu0 0.0
  %535 = vmatpush2.msra.mxu0 0.0
  %536 = vmatprep.subr.mxu0 0.0
  %537 = vmatpush2.msra.mxu0 0.0
  %538 = vmatprep.subr.mxu0 0.0
  %539 = vmatpush2.msra.mxu0 0.0
  %540 = vmatprep.subr.mxu0 0.0
  %541 = vmatpush2.msra.mxu0 0.0
  %542 = vmatprep.subr.mxu0 0.0
  %543 = vmatpush2.msra.mxu0 0.0
  %544 = vmatprep.subr.mxu0 0.0
  %545 = vmatpush2.msra.mxu0 0.0
  %546 = vmatprep.subr.mxu0 0.0
  %547 = vmatpush2.msra.mxu0 0.0
  %548 = vmatprep.subr.mxu0 0.0
  %549 = vmatpush2.msra.mxu0 0.0
  %550 = vmatprep.subr.mxu0 0.0
  %551 = vmatpush2.msra.mxu0 0.0
  %552 = vmatprep.mubr.f32.mxu0 0.0
  %553 = vmatmul.mubr.f32.gmra.mxu0 %v480
  %v554 = vpop.f32.mrf.mxu0
  %v555 = vadd.f32 0.0, %v554
  %v556 = vpop.f32.mrf.mxu0
  %557 = vmatprep.mubr.f32.mxu0 0.0
  %558 = vmatmul.mubr.f32.gmra.mxu0 %v483
  %v559 = vpop.f32.mrf.mxu0
  %v560 = vadd.f32 0.0, %v559
  %v561 = vpop.f32.mrf.mxu0
  %562 = vmatprep.mubr.f32.mxu0 0.0
  %563 = vmatmul.mubr.f32.gmra.mxu0 %v486
  %v564 = vpop.f32.mrf.mxu0
  %v565 = vadd.f32 0.0, %v564
  %v566 = vpop.f32.mrf.mxu0
  %567 = vdwg.mxu0
  %v568 = vld [vmem:[%s4] sm:$0xff]
  %s569 = scalar_lea.vmem %s2, 32
  %v570 = vld [vmem:[%s569] sm:$0xff]
  %v571 = vld [vmem:[%s569 + $0x8] sm:$0xff]
  %v572 = vld [vmem:[%s569 + $0x10] sm:$0xff]
  %v573 = vld [vmem:[%s569 + $0x18] sm:$0xff]
  %s574 = scalar_lea.vmem %s3, 1
  %v575 = vld [vmem:[%s574] sm:$0x1]
  %v577 = vlaneseq
  %v578 = vshrl.u32 %v577, 7
  %v579 = vsub.s32 0, %v578
  %v580 = vrot.slane %v575, %v579
  %582 = vmatprep.subr.mxu0 0.0
  %583 = vmatpush1.msra.mxu0 0.0
  %584 = vmatprep.subr.mxu0 0.0
  %585 = vmatpush1.msra.mxu0 0.0
  %586 = vmatprep.subr.mxu0 0.0
  %587 = vmatpush1.msra.mxu0 0.0
  %588 = vmatprep.subr.mxu0 0.0
  %589 = vmatpush1.msra.mxu0 0.0
  %590 = vmatprep.subr.mxu0 0.0
  %591 = vmatpush1.msra.mxu0 0.0
  %592 = vmatprep.subr.mxu0 0.0
  %593 = vmatpush1.msra.mxu0 0.0
  %594 = vmatprep.subr.mxu0 0.0
  %595 = vmatpush1.msra.mxu0 0.0
  %596 = vmatprep.subr.mxu0 0.0
  %597 = vmatpush1.msra.mxu0 0.0
  %598 = vmatprep.subr.mxu0 0.0
  %599 = vmatpush1.msra.mxu0 0.0
  %600 = vmatprep.subr.mxu0 0.0
  %601 = vmatpush1.msra.mxu0 0.0
  %602 = vmatprep.subr.mxu0 0.0
  %603 = vmatpush1.msra.mxu0 0.0
  %604 = vmatprep.subr.mxu0 0.0
  %605 = vmatpush1.msra.mxu0 0.0
  %606 = vmatprep.subr.mxu0 0.0
  %607 = vmatpush1.msra.mxu0 %v573
  %608 = vmatprep.subr.mxu0 0.0
  %609 = vmatpush1.msra.mxu0 %v572
  %610 = vmatprep.subr.mxu0 0.0
  %611 = vmatpush1.msra.mxu0 %v571
  %612 = vmatprep.subr.mxu0 0.0
  %613 = vmatpush1.msra.mxu0 %v570
  %614 = vmatprep.subr.mxu0 0.0
  %615 = vmatpush2.msra.mxu0 0.0
  %616 = vmatprep.subr.mxu0 0.0
  %617 = vmatpush2.msra.mxu0 0.0
  %618 = vmatprep.subr.mxu0 0.0
  %619 = vmatpush2.msra.mxu0 0.0
  %620 = vmatprep.subr.mxu0 0.0
  %621 = vmatpush2.msra.mxu0 0.0
  %622 = vmatprep.subr.mxu0 0.0
  %623 = vmatpush2.msra.mxu0 0.0
  %624 = vmatprep.subr.mxu0 0.0
  %625 = vmatpush2.msra.mxu0 0.0
  %626 = vmatprep.subr.mxu0 0.0
  %627 = vmatpush2.msra.mxu0 0.0
  %628 = vmatprep.subr.mxu0 0.0
  %629 = vmatpush2.msra.mxu0 0.0
  %630 = vmatprep.subr.mxu0 0.0
  %631 = vmatpush2.msra.mxu0 0.0
  %632 = vmatprep.subr.mxu0 0.0
  %633 = vmatpush2.msra.mxu0 0.0
  %634 = vmatprep.subr.mxu0 0.0
  %635 = vmatpush2.msra.mxu0 0.0
  %636 = vmatprep.subr.mxu0 0.0
  %637 = vmatpush2.msra.mxu0 0.0
  %638 = vmatprep.subr.mxu0 0.0
  %639 = vmatpush2.msra.mxu0 0.0
  %640 = vmatprep.subr.mxu0 0.0
  %641 = vmatpush2.msra.mxu0 0.0
  %642 = vmatprep.subr.mxu0 0.0
  %643 = vmatpush2.msra.mxu0 0.0
  %644 = vmatprep.subr.mxu0 0.0
  %645 = vmatpush2.msra.mxu0 0.0
  %646 = vmatprep.mubr.f32.mxu0 0.0
  %647 = vmatmul.mubr.f32.gmra.mxu0 %v66
  %v648 = vpop.f32.mrf.mxu0
  %v649 = vadd.f32 %v580, %v648
  %v650 = vpop.f32.mrf.mxu0
  %651 = vmatprep.mubr.f32.mxu0 0.0
  %652 = vmatmul.mubr.f32.gmra.mxu0 %v69
  %v653 = vpop.f32.mrf.mxu0
  %v654 = vadd.f32 %v580, %v653
  %v655 = vpop.f32.mrf.mxu0
  %656 = vmatprep.mubr.f32.mxu0 0.0
  %657 = vmatmul.mubr.f32.gmra.mxu0 %v72
  %v658 = vpop.f32.mrf.mxu0
  %v659 = vadd.f32 %v580, %v658
  %v660 = vpop.f32.mrf.mxu0
  %661 = vdwg.mxu0
  %s662 = scalar_lea.vmem %s2, 160
  %v663 = vld [vmem:[%s662] sm:$0xff]
  %v664 = vld [vmem:[%s662 + $0x8] sm:$0xff]
  %v665 = vld [vmem:[%s662 + $0x10] sm:$0xff]
  %v666 = vld [vmem:[%s662 + $0x18] sm:$0xff]
  %s667 = scalar_lea.vmem %s3, 5
  %v668 = vld [vmem:[%s667] sm:$0x1]
  %v670 = vlaneseq
  %v671 = vshrl.u32 %v670, 7
  %v672 = vsub.s32 0, %v671
  %v673 = vrot.slane %v668, %v672
  %675 = vmatprep.subr.mxu0 0.0
  %676 = vmatpush1.msra.mxu0 0.0
  %677 = vmatprep.subr.mxu0 0.0
  %678 = vmatpush1.msra.mxu0 0.0
  %679 = vmatprep.subr.mxu0 0.0
  %680 = vmatpush1.msra.mxu0 0.0
  %681 = vmatprep.subr.mxu0 0.0
  %682 = vmatpush1.msra.mxu0 0.0
  %683 = vmatprep.subr.mxu0 0.0
  %684 = vmatpush1.msra.mxu0 0.0
  %685 = vmatprep.subr.mxu0 0.0
  %686 = vmatpush1.msra.mxu0 0.0
  %687 = vmatprep.subr.mxu0 0.0
  %688 = vmatpush1.msra.mxu0 0.0
  %689 = vmatprep.subr.mxu0 0.0
  %690 = vmatpush1.msra.mxu0 0.0
  %691 = vmatprep.subr.mxu0 0.0
  %692 = vmatpush1.msra.mxu0 0.0
  %693 = vmatprep.subr.mxu0 0.0
  %694 = vmatpush1.msra.mxu0 0.0
  %695 = vmatprep.subr.mxu0 0.0
  %696 = vmatpush1.msra.mxu0 0.0
  %697 = vmatprep.subr.mxu0 0.0
  %698 = vmatpush1.msra.mxu0 0.0
  %699 = vmatprep.subr.mxu0 0.0
  %700 = vmatpush1.msra.mxu0 %v666
  %701 = vmatprep.subr.mxu0 0.0
  %702 = vmatpush1.msra.mxu0 %v665
  %703 = vmatprep.subr.mxu0 0.0
  %704 = vmatpush1.msra.mxu0 %v664
  %705 = vmatprep.subr.mxu0 0.0
  %706 = vmatpush1.msra.mxu0 %v663
  %707 = vmatprep.subr.mxu0 0.0
  %708 = vmatpush2.msra.mxu0 0.0
  %709 = vmatprep.subr.mxu0 0.0
  %710 = vmatpush2.msra.mxu0 0.0
  %711 = vmatprep.subr.mxu0 0.0
  %712 = vmatpush2.msra.mxu0 0.0
  %713 = vmatprep.subr.mxu0 0.0
  %714 = vmatpush2.msra.mxu0 0.0
  %715 = vmatprep.subr.mxu0 0.0
  %716 = vmatpush2.msra.mxu0 0.0
  %717 = vmatprep.subr.mxu0 0.0
  %718 = vmatpush2.msra.mxu0 0.0
  %719 = vmatprep.subr.mxu0 0.0
  %720 = vmatpush2.msra.mxu0 0.0
  %721 = vmatprep.subr.mxu0 0.0
  %722 = vmatpush2.msra.mxu0 0.0
  %723 = vmatprep.subr.mxu0 0.0
  %724 = vmatpush2.msra.mxu0 0.0
  %725 = vmatprep.subr.mxu0 0.0
  %726 = vmatpush2.msra.mxu0 0.0
  %727 = vmatprep.subr.mxu0 0.0
  %728 = vmatpush2.msra.mxu0 0.0
  %729 = vmatprep.subr.mxu0 0.0
  %730 = vmatpush2.msra.mxu0 0.0
  %731 = vmatprep.subr.mxu0 0.0
  %732 = vmatpush2.msra.mxu0 0.0
  %733 = vmatprep.subr.mxu0 0.0
  %734 = vmatpush2.msra.mxu0 0.0
  %735 = vmatprep.subr.mxu0 0.0
  %736 = vmatpush2.msra.mxu0 0.0
  %737 = vmatprep.subr.mxu0 0.0
  %738 = vmatpush2.msra.mxu0 0.0
  %739 = vmatprep.mubr.f32.mxu0 0.0
  %740 = vmatmul.mubr.f32.gmra.mxu0 %v66
  %v741 = vpop.f32.mrf.mxu0
  %v742 = vadd.f32 %v673, %v741
  %v743 = vpop.f32.mrf.mxu0
  %744 = vmatprep.mubr.f32.mxu0 0.0
  %745 = vmatmul.mubr.f32.gmra.mxu0 %v69
  %v746 = vpop.f32.mrf.mxu0
  %v747 = vadd.f32 %v673, %v746
  %v748 = vpop.f32.mrf.mxu0
  %749 = vmatprep.mubr.f32.mxu0 0.0
  %750 = vmatmul.mubr.f32.gmra.mxu0 %v72
  %v751 = vpop.f32.mrf.mxu0
  %v752 = vadd.f32 %v673, %v751
  %v753 = vpop.f32.mrf.mxu0
  %754 = vdwg.mxu0
  %s755 = scalar_lea.vmem %s2, 288
  %v756 = vld [vmem:[%s755] sm:$0xff]
  %v757 = vld [vmem:[%s755 + $0x8] sm:$0xff]
  %v758 = vld [vmem:[%s755 + $0x10] sm:$0xff]
  %v759 = vld [vmem:[%s755 + $0x18] sm:$0xff]
  %s760 = scalar_lea.vmem %s3, 9
  %v761 = vld [vmem:[%s760] sm:$0x1]
  %v763 = vlaneseq
  %v764 = vshrl.u32 %v763, 7
  %v765 = vsub.s32 0, %v764
  %v766 = vrot.slane %v761, %v765
  %768 = vmatprep.subr.mxu0 0.0
  %769 = vmatpush1.msra.mxu0 0.0
  %770 = vmatprep.subr.mxu0 0.0
  %771 = vmatpush1.msra.mxu0 0.0
  %772 = vmatprep.subr.mxu0 0.0
  %773 = vmatpush1.msra.mxu0 0.0
  %774 = vmatprep.subr.mxu0 0.0
  %775 = vmatpush1.msra.mxu0 0.0
  %776 = vmatprep.subr.mxu0 0.0
  %777 = vmatpush1.msra.mxu0 0.0
  %778 = vmatprep.subr.mxu0 0.0
  %779 = vmatpush1.msra.mxu0 0.0
  %780 = vmatprep.subr.mxu0 0.0
  %781 = vmatpush1.msra.mxu0 0.0
  %782 = vmatprep.subr.mxu0 0.0
  %783 = vmatpush1.msra.mxu0 0.0
  %784 = vmatprep.subr.mxu0 0.0
  %785 = vmatpush1.msra.mxu0 0.0
  %786 = vmatprep.subr.mxu0 0.0
  %787 = vmatpush1.msra.mxu0 0.0
  %788 = vmatprep.subr.mxu0 0.0
  %789 = vmatpush1.msra.mxu0 0.0
  %790 = vmatprep.subr.mxu0 0.0
  %791 = vmatpush1.msra.mxu0 0.0
  %792 = vmatprep.subr.mxu0 0.0
  %793 = vmatpush1.msra.mxu0 %v759
  %794 = vmatprep.subr.mxu0 0.0
  %795 = vmatpush1.msra.mxu0 %v758
  %796 = vmatprep.subr.mxu0 0.0
  %797 = vmatpush1.msra.mxu0 %v757
  %798 = vmatprep.subr.mxu0 0.0
  %799 = vmatpush1.msra.mxu0 %v756
  %800 = vmatprep.subr.mxu0 0.0
  %801 = vmatpush2.msra.mxu0 0.0
  %802 = vmatprep.subr.mxu0 0.0
  %803 = vmatpush2.msra.mxu0 0.0
  %804 = vmatprep.subr.mxu0 0.0
  %805 = vmatpush2.msra.mxu0 0.0
  %806 = vmatprep.subr.mxu0 0.0
  %807 = vmatpush2.msra.mxu0 0.0
  %808 = vmatprep.subr.mxu0 0.0
  %809 = vmatpush2.msra.mxu0 0.0
  %810 = vmatprep.subr.mxu0 0.0
  %811 = vmatpush2.msra.mxu0 0.0
  %812 = vmatprep.subr.mxu0 0.0
  %813 = vmatpush2.msra.mxu0 0.0
  %814 = vmatprep.subr.mxu0 0.0
  %815 = vmatpush2.msra.mxu0 0.0
  %816 = vmatprep.subr.mxu0 0.0
  %817 = vmatpush2.msra.mxu0 0.0
  %818 = vmatprep.subr.mxu0 0.0
  %819 = vmatpush2.msra.mxu0 0.0
  %820 = vmatprep.subr.mxu0 0.0
  %821 = vmatpush2.msra.mxu0 0.0
  %822 = vmatprep.subr.mxu0 0.0
  %823 = vmatpush2.msra.mxu0 0.0
  %824 = vmatprep.subr.mxu0 0.0
  %825 = vmatpush2.msra.mxu0 0.0
  %826 = vmatprep.subr.mxu0 0.0
  %827 = vmatpush2.msra.mxu0 0.0
  %828 = vmatprep.subr.mxu0 0.0
  %829 = vmatpush2.msra.mxu0 0.0
  %830 = vmatprep.subr.mxu0 0.0
  %831 = vmatpush2.msra.mxu0 0.0
  %832 = vmatprep.mubr.f32.mxu0 0.0
  %833 = vmatmul.mubr.f32.gmra.mxu0 %v66
  %v834 = vpop.f32.mrf.mxu0
  %v835 = vadd.f32 %v766, %v834
  %v836 = vpop.f32.mrf.mxu0
  %837 = vmatprep.mubr.f32.mxu0 0.0
  %838 = vmatmul.mubr.f32.gmra.mxu0 %v69
  %v839 = vpop.f32.mrf.mxu0
  %v840 = vadd.f32 %v766, %v839
  %v841 = vpop.f32.mrf.mxu0
  %842 = vmatprep.mubr.f32.mxu0 0.0
  %843 = vmatmul.mubr.f32.gmra.mxu0 %v72
  %v844 = vpop.f32.mrf.mxu0
  %v845 = vadd.f32 %v766, %v844
  %v846 = vpop.f32.mrf.mxu0
  %847 = vdwg.mxu0
  %v849 = vsel %vm340, %v649, 0
  %v852 = vsel %vm340, %v654, 0
  %v855 = vsel %vm340, %v659, 0
  %v858 = vsel %vm340, %v742, 0
  %v861 = vsel %vm340, %v747, 0
  %v864 = vsel %vm340, %v752, 0
  %866 = vmatprep.subr.mxu0 0.0
  %867 = vmatpush1.xpose.msra.mxu0 0.0
  %868 = vmatprep.subr.mxu0 0.0
  %869 = vmatpush1.xpose.msra.mxu0 0.0
  %870 = vmatprep.subr.mxu0 0.0
  %871 = vmatpush1.xpose.msra.mxu0 0.0
  %872 = vmatprep.subr.mxu0 0.0
  %873 = vmatpush1.xpose.msra.mxu0 0.0
  %874 = vmatprep.subr.mxu0 0.0
  %875 = vmatpush1.xpose.msra.mxu0 0.0
  %876 = vmatprep.subr.mxu0 0.0
  %877 = vmatpush1.xpose.msra.mxu0 0.0
  %878 = vmatprep.subr.mxu0 0.0
  %879 = vmatpush1.xpose.msra.mxu0 0.0
  %880 = vmatprep.subr.mxu0 0.0
  %881 = vmatpush1.xpose.msra.mxu0 0.0
  %882 = vmatprep.subr.mxu0 0.0
  %883 = vmatpush1.xpose.msra.mxu0 0.0
  %884 = vmatprep.subr.mxu0 0.0
  %885 = vmatpush1.xpose.msra.mxu0 0.0
  %886 = vmatprep.subr.mxu0 0.0
  %887 = vmatpush1.xpose.msra.mxu0 0.0
  %888 = vmatprep.subr.mxu0 0.0
  %889 = vmatpush1.xpose.msra.mxu0 0.0
  %890 = vmatprep.subr.mxu0 0.0
  %891 = vmatpush1.xpose.msra.mxu0 0.0
  %892 = vmatprep.subr.mxu0 0.0
  %893 = vmatpush1.xpose.msra.mxu0 %v864
  %894 = vmatprep.subr.mxu0 0.0
  %895 = vmatpush1.xpose.msra.mxu0 %v861
  %896 = vmatprep.subr.mxu0 0.0
  %897 = vmatpush1.xpose.msra.mxu0 %v858
  %898 = vmatprep.subr.mxu0 0.0
  %899 = vmatpush2.xpose.msra.mxu0 0.0
  %900 = vmatprep.subr.mxu0 0.0
  %901 = vmatpush2.xpose.msra.mxu0 0.0
  %902 = vmatprep.subr.mxu0 0.0
  %903 = vmatpush2.xpose.msra.mxu0 0.0
  %904 = vmatprep.subr.mxu0 0.0
  %905 = vmatpush2.xpose.msra.mxu0 0.0
  %906 = vmatprep.subr.mxu0 0.0
  %907 = vmatpush2.xpose.msra.mxu0 0.0
  %908 = vmatprep.subr.mxu0 0.0
  %909 = vmatpush2.xpose.msra.mxu0 0.0
  %910 = vmatprep.subr.mxu0 0.0
  %911 = vmatpush2.xpose.msra.mxu0 0.0
  %912 = vmatprep.subr.mxu0 0.0
  %913 = vmatpush2.xpose.msra.mxu0 0.0
  %914 = vmatprep.subr.mxu0 0.0
  %915 = vmatpush2.xpose.msra.mxu0 0.0
  %916 = vmatprep.subr.mxu0 0.0
  %917 = vmatpush2.xpose.msra.mxu0 0.0
  %918 = vmatprep.subr.mxu0 0.0
  %919 = vmatpush2.xpose.msra.mxu0 0.0
  %920 = vmatprep.subr.mxu0 0.0
  %921 = vmatpush2.xpose.msra.mxu0 0.0
  %922 = vmatprep.subr.mxu0 0.0
  %923 = vmatpush2.xpose.msra.mxu0 0.0
  %924 = vmatprep.subr.mxu0 0.0
  %925 = vmatpush2.xpose.msra.mxu0 0.0
  %926 = vmatprep.subr.mxu0 0.0
  %927 = vmatpush2.xpose.msra.mxu0 0.0
  %928 = vmatprep.subr.mxu0 0.0
  %929 = vmatpush2.xpose.msra.mxu0 0.0
  %930 = vmatprep.mubr.f32.mxu0 0.0
  %931 = vmatmul.mubr.f32.gmra.mxu0 %v849
  %v932 = vpop.f32.mrf.mxu0
  %v933 = vadd.f32 0.0, %v932
  %v934 = vpop.f32.mrf.mxu0
  %935 = vmatprep.mubr.f32.mxu0 0.0
  %936 = vmatmul.mubr.f32.gmra.mxu0 %v852
  %v937 = vpop.f32.mrf.mxu0
  %v938 = vadd.f32 0.0, %v937
  %v939 = vpop.f32.mrf.mxu0
  %940 = vmatprep.mubr.f32.mxu0 0.0
  %941 = vmatmul.mubr.f32.gmra.mxu0 %v855
  %v942 = vpop.f32.mrf.mxu0
  %v943 = vadd.f32 0.0, %v942
  %v944 = vpop.f32.mrf.mxu0
  %945 = vdwg.mxu0
  %v946 = vmul.f32 %v933, 0.35355338
  %v947 = vmul.f32 %v938, 0.35355338
  %v948 = vmul.f32 %v943, 0.35355338
  %v949 = vadd.f32 %v946, %v50
  %v950 = vadd.f32 %v947, %v51
  %v951 = vadd.f32 %v948, %v52
  %v952 = vsel %vm445, %v949, -inf
  %953 = vmax.xlane.f32.xlu0 %v952
  %v954 = vpop.xlane.xlu0 %953
  %v955 = vsel %vm445, %v950, -inf
  %956 = vmax.xlane.f32.xlu0 %v955
  %v957 = vpop.xlane.xlu0 %956
  %v958 = vsel %vm445, %v951, -inf
  %959 = vmax.xlane.f32.xlu0 %v958
  %v960 = vpop.xlane.xlu0 %959
  %v961 = vsub.f32 %v949, %v954
  %v962 = vsub.f32 %v950, %v957
  %v963 = vsub.f32 %v951, %v960
  %v964 = vmul.f32 %v961, 1.442695
  %v965 = vpow.pop %v964
  %v966 = vmul.f32 %v962, 1.442695
  %v967 = vpow.pop %v966
  %v968 = vmul.f32 %v963, 1.442695
  %v969 = vpow.pop %v968
  %v970 = vsel %vm445, %v965, 0.0
  %971 = vadd.xlane.f32.xlu0 %v970
  %v972 = vpop.xlane.xlu0 %971
  %v973 = vsel %vm445, %v967, 0.0
  %974 = vadd.xlane.f32.xlu0 %v973
  %v975 = vpop.xlane.xlu0 %974
  %v976 = vsel %vm445, %v969, 0.0
  %977 = vadd.xlane.f32.xlu0 %v976
  %v978 = vpop.xlane.xlu0 %977
  %v979 = vrcp.pop %v972
  %v980 = vrcp.pop %v975
  %v981 = vrcp.pop %v978
  %v982 = vmul.f32 %v965, %v979
  %v983 = vmul.f32 %v967, %v980
  %v984 = vmul.f32 %v969, %v981
  %v986 = vsel %vm445, %v982, 0
  %v989 = vsel %vm445, %v983, 0
  %v992 = vsel %vm445, %v984, 0
  %994 = vmatprep.subr.mxu0 0.0
  %995 = vmatpush1.msra.mxu0 0.0
  %996 = vmatprep.subr.mxu0 0.0
  %997 = vmatpush1.msra.mxu0 0.0
  %998 = vmatprep.subr.mxu0 0.0
  %999 = vmatpush1.msra.mxu0 0.0
  %1000 = vmatprep.subr.mxu0 0.0
  %1001 = vmatpush1.msra.mxu0 0.0
  %1002 = vmatprep.subr.mxu0 0.0
  %1003 = vmatpush1.msra.mxu0 0.0
  %1004 = vmatprep.subr.mxu0 0.0
  %1005 = vmatpush1.msra.mxu0 0.0
  %1006 = vmatprep.subr.mxu0 0.0
  %1007 = vmatpush1.msra.mxu0 0.0
  %1008 = vmatprep.subr.mxu0 0.0
  %1009 = vmatpush1.msra.mxu0 0.0
  %1010 = vmatprep.subr.mxu0 0.0
  %1011 = vmatpush1.msra.mxu0 0.0
  %1012 = vmatprep.subr.mxu0 0.0
  %1013 = vmatpush1.msra.mxu0 0.0
  %1014 = vmatprep.subr.mxu0 0.0
  %1015 = vmatpush1.msra.mxu0 0.0
  %1016 = vmatprep.subr.mxu0 0.0
  %1017 = vmatpush1.msra.mxu0 0.0
  %1018 = vmatprep.subr.mxu0 0.0
  %1019 = vmatpush1.msra.mxu0 0.0
  %1020 = vmatprep.subr.mxu0 0.0
  %1021 = vmatpush1.msra.mxu0 %v845
  %1022 = vmatprep.subr.mxu0 0.0
  %1023 = vmatpush1.msra.mxu0 %v840
  %1024 = vmatprep.subr.mxu0 0.0
  %1025 = vmatpush1.msra.mxu0 %v835
  %1026 = vmatprep.subr.mxu0 0.0
  %1027 = vmatpush2.msra.mxu0 0.0
  %1028 = vmatprep.subr.mxu0 0.0
  %1029 = vmatpush2.msra.mxu0 0.0
  %1030 = vmatprep.subr.mxu0 0.0
  %1031 = vmatpush2.msra.mxu0 0.0
  %1032 = vmatprep.subr.mxu0 0.0
  %1033 = vmatpush2.msra.mxu0 0.0
  %1034 = vmatprep.subr.mxu0 0.0
  %1035 = vmatpush2.msra.mxu0 0.0
  %1036 = vmatprep.subr.mxu0 0.0
  %1037 = vmatpush2.msra.mxu0 0.0
  %1038 = vmatprep.subr.mxu0 0.0
  %1039 = vmatpush2.msra.mxu0 0.0
  %1040 = vmatprep.subr.mxu0 0.0
  %1041 = vmatpush2.msra.mxu0 0.0
  %1042 = vmatprep.subr.mxu0 0.0
  %1043 = vmatpush2.msra.mxu0 0.0
  %1044 = vmatprep.subr.mxu0 0.0
  %1045 = vmatpush2.msra.mxu0 0.0
  %1046 = vmatprep.subr.mxu0 0.0
  %1047 = vmatpush2.msra.mxu0 0.0
  %1048 = vmatprep.subr.mxu0 0.0
  %1049 = vmatpush2.msra.mxu0 0.0
  %1050 = vmatprep.subr.mxu0 0.0
  %1051 = vmatpush2.msra.mxu0 0.0
  %1052 = vmatprep.subr.mxu0 0.0
  %1053 = vmatpush2.msra.mxu0 0.0
  %1054 = vmatprep.subr.mxu0 0.0
  %1055 = vmatpush2.msra.mxu0 0.0
  %1056 = vmatprep.subr.mxu0 0.0
  %1057 = vmatpush2.msra.mxu0 0.0
  %1058 = vmatprep.mubr.f32.mxu0 0.0
  %1059 = vmatmul.mubr.f32.gmra.mxu0 %v986
  %v1060 = vpop.f32.mrf.mxu0
  %v1061 = vadd.f32 0.0, %v1060
  %v1062 = vpop.f32.mrf.mxu0
  %1063 = vmatprep.mubr.f32.mxu0 0.0
  %1064 = vmatmul.mubr.f32.gmra.mxu0 %v989
  %v1065 = vpop.f32.mrf.mxu0
  %v1066 = vadd.f32 0.0, %v1065
  %v1067 = vpop.f32.mrf.mxu0
  %1068 = vmatprep.mubr.f32.mxu0 0.0
  %1069 = vmatmul.mubr.f32.gmra.mxu0 %v992
  %v1070 = vpop.f32.mrf.mxu0
  %v1071 = vadd.f32 0.0, %v1070
  %v1072 = vpop.f32.mrf.mxu0
  %1073 = vdwg.mxu0
  %s1074 = scalar_lea.vmem %s4, 8
  %v1075 = vld [vmem:[%s1074] sm:$0xff]
  %v1077 = vsel %vm340, %v1061, 0
  %v1080 = vsel %vm340, %v1066, 0
  %v1083 = vsel %vm340, %v1071, 0
  %1085 = vmatprep.subr.mxu0 0.0
  %1086 = vmatpush1.msra.mxu0 0.0
  %1087 = vmatprep.subr.mxu0 0.0
  %1088 = vmatpush1.msra.mxu0 0.0
  %1089 = vmatprep.subr.mxu0 0.0
  %1090 = vmatpush1.msra.mxu0 0.0
  %1091 = vmatprep.subr.mxu0 0.0
  %1092 = vmatpush1.msra.mxu0 0.0
  %1093 = vmatprep.subr.mxu0 0.0
  %1094 = vmatpush1.msra.mxu0 0.0
  %1095 = vmatprep.subr.mxu0 0.0
  %1096 = vmatpush1.msra.mxu0 0.0
  %1097 = vmatprep.subr.mxu0 0.0
  %1098 = vmatpush1.msra.mxu0 0.0
  %1099 = vmatprep.subr.mxu0 0.0
  %1100 = vmatpush1.msra.mxu0 0.0
  %1101 = vmatprep.subr.mxu0 0.0
  %1102 = vmatpush1.msra.mxu0 0.0
  %1103 = vmatprep.subr.mxu0 0.0
  %1104 = vmatpush1.msra.mxu0 0.0
  %1105 = vmatprep.subr.mxu0 0.0
  %1106 = vmatpush1.msra.mxu0 0.0
  %1107 = vmatprep.subr.mxu0 0.0
  %1108 = vmatpush1.msra.mxu0 0.0
  %1109 = vmatprep.subr.mxu0 0.0
  %1110 = vmatpush1.msra.mxu0 0.0
  %1111 = vmatprep.subr.mxu0 0.0
  %1112 = vmatpush1.msra.mxu0 0.0
  %1113 = vmatprep.subr.mxu0 0.0
  %1114 = vmatpush1.msra.mxu0 0.0
  %1115 = vmatprep.subr.mxu0 0.0
  %1116 = vmatpush1.msra.mxu0 %v1075
  %1117 = vmatprep.subr.mxu0 0.0
  %1118 = vmatpush2.msra.mxu0 0.0
  %1119 = vmatprep.subr.mxu0 0.0
  %1120 = vmatpush2.msra.mxu0 0.0
  %1121 = vmatprep.subr.mxu0 0.0
  %1122 = vmatpush2.msra.mxu0 0.0
  %1123 = vmatprep.subr.mxu0 0.0
  %1124 = vmatpush2.msra.mxu0 0.0
  %1125 = vmatprep.subr.mxu0 0.0
  %1126 = vmatpush2.msra.mxu0 0.0
  %1127 = vmatprep.subr.mxu0 0.0
  %1128 = vmatpush2.msra.mxu0 0.0
  %1129 = vmatprep.subr.mxu0 0.0
  %1130 = vmatpush2.msra.mxu0 0.0
  %1131 = vmatprep.subr.mxu0 0.0
  %1132 = vmatpush2.msra.mxu0 0.0
  %1133 = vmatprep.subr.mxu0 0.0
  %1134 = vmatpush2.msra.mxu0 0.0
  %1135 = vmatprep.subr.mxu0 0.0
  %1136 = vmatpush2.msra.mxu0 0.0
  %1137 = vmatprep.subr.mxu0 0.0
  %1138 = vmatpush2.msra.mxu0 0.0
  %1139 = vmatprep.subr.mxu0 0.0
  %1140 = vmatpush2.msra.mxu0 0.0
  %1141 = vmatprep.subr.mxu0 0.0
  %1142 = vmatpush2.msra.mxu0 0.0
  %1143 = vmatprep.subr.mxu0 0.0
  %1144 = vmatpush2.msra.mxu0 0.0
  %1145 = vmatprep.subr.mxu0 0.0
  %1146 = vmatpush2.msra.mxu0 0.0
  %1147 = vmatprep.subr.mxu0 0.0
  %1148 = vmatpush2.msra.mxu0 0.0
  %1149 = vmatprep.mubr.f32.mxu0 0.0
  %1150 = vmatmul.mubr.f32.gmra.mxu0 %v1077
  %v1151 = vpop.f32.mrf.mxu0
  %v1152 = vadd.f32 0.0, %v1151
  %v1153 = vpop.f32.mrf.mxu0
  %1154 = vmatprep.mubr.f32.mxu0 0.0
  %1155 = vmatmul.mubr.f32.gmra.mxu0 %v1080
  %v1156 = vpop.f32.mrf.mxu0
  %v1157 = vadd.f32 0.0, %v1156
  %v1158 = vpop.f32.mrf.mxu0
  %1159 = vmatprep.mubr.f32.mxu0 0.0
  %1160 = vmatmul.mubr.f32.gmra.mxu0 %v1083
  %v1161 = vpop.f32.mrf.mxu0
  %v1162 = vadd.f32 0.0, %v1161
  %v1163 = vpop.f32.mrf.mxu0
  %1164 = vdwg.mxu0
  %v1166 = vsel %vm340, %v555, 0
  %v1169 = vsel %vm340, %v560, 0
  %v1172 = vsel %vm340, %v565, 0
  %1174 = vmatprep.subr.mxu0 0.0
  %1175 = vmatpush1.msra.mxu0 0.0
  %1176 = vmatprep.subr.mxu0 0.0
  %1177 = vmatpush1.msra.mxu0 0.0
  %1178 = vmatprep.subr.mxu0 0.0
  %1179 = vmatpush1.msra.mxu0 0.0
  %1180 = vmatprep.subr.mxu0 0.0
  %1181 = vmatpush1.msra.mxu0 0.0
  %1182 = vmatprep.subr.mxu0 0.0
  %1183 = vmatpush1.msra.mxu0 0.0
  %1184 = vmatprep.subr.mxu0 0.0
  %1185 = vmatpush1.msra.mxu0 0.0
  %1186 = vmatprep.subr.mxu0 0.0
  %1187 = vmatpush1.msra.mxu0 0.0
  %1188 = vmatprep.subr.mxu0 0.0
  %1189 = vmatpush1.msra.mxu0 0.0
  %1190 = vmatprep.subr.mxu0 0.0
  %1191 = vmatpush1.msra.mxu0 0.0
  %1192 = vmatprep.subr.mxu0 0.0
  %1193 = vmatpush1.msra.mxu0 0.0
  %1194 = vmatprep.subr.mxu0 0.0
  %1195 = vmatpush1.msra.mxu0 0.0
  %1196 = vmatprep.subr.mxu0 0.0
  %1197 = vmatpush1.msra.mxu0 0.0
  %1198 = vmatprep.subr.mxu0 0.0
  %1199 = vmatpush1.msra.mxu0 0.0
  %1200 = vmatprep.subr.mxu0 0.0
  %1201 = vmatpush1.msra.mxu0 0.0
  %1202 = vmatprep.subr.mxu0 0.0
  %1203 = vmatpush1.msra.mxu0 0.0
  %1204 = vmatprep.subr.mxu0 0.0
  %1205 = vmatpush1.msra.mxu0 %v568
  %1206 = vmatprep.subr.mxu0 0.0
  %1207 = vmatpush2.msra.mxu0 0.0
  %1208 = vmatprep.subr.mxu0 0.0
  %1209 = vmatpush2.msra.mxu0 0.0
  %1210 = vmatprep.subr.mxu0 0.0
  %1211 = vmatpush2.msra.mxu0 0.0
  %1212 = vmatprep.subr.mxu0 0.0
  %1213 = vmatpush2.msra.mxu0 0.0
  %1214 = vmatprep.subr.mxu0 0.0
  %1215 = vmatpush2.msra.mxu0 0.0
  %1216 = vmatprep.subr.mxu0 0.0
  %1217 = vmatpush2.msra.mxu0 0.0
  %1218 = vmatprep.subr.mxu0 0.0
  %1219 = vmatpush2.msra.mxu0 0.0
  %1220 = vmatprep.subr.mxu0 0.0
  %1221 = vmatpush2.msra.mxu0 0.0
  %1222 = vmatprep.subr.mxu0 0.0
  %1223 = vmatpush2.msra.mxu0 0.0
  %1224 = vmatprep.subr.mxu0 0.0
  %1225 = vmatpush2.msra.mxu0 0.0
  %1226 = vmatprep.subr.mxu0 0.0
  %1227 = vmatpush2.msra.mxu0 0.0
  %1228 = vmatprep.subr.mxu0 0.0
  %1229 = vmatpush2.msra.mxu0 0.0
  %1230 = vmatprep.subr.mxu0 0.0
  %1231 = vmatpush2.msra.mxu0 0.0
  %1232 = vmatprep.subr.mxu0 0.0
  %1233 = vmatpush2.msra.mxu0 0.0
  %1234 = vmatprep.subr.mxu0 0.0
  %1235 = vmatpush2.msra.mxu0 0.0
  %1236 = vmatprep.subr.mxu0 0.0
  %1237 = vmatpush2.msra.mxu0 0.0
  %1238 = vmatprep.mubr.f32.mxu0 0.0
  %1239 = vmatmul.mubr.f32.gmra.mxu0 %v1166
  %v1240 = vpop.f32.mrf.mxu0
  %v1241 = vadd.f32 %v1152, %v1240
  %v1242 = vpop.f32.mrf.mxu0
  %1243 = vmatprep.mubr.f32.mxu0 0.0
  %1244 = vmatmul.mubr.f32.gmra.mxu0 %v1169
  %v1245 = vpop.f32.mrf.mxu0
  %v1246 = vadd.f32 %v1157, %v1245
  %v1247 = vpop.f32.mrf.mxu0
  %1248 = vmatprep.mubr.f32.mxu0 0.0
  %1249 = vmatmul.mubr.f32.gmra.mxu0 %v1172
  %v1250 = vpop.f32.mrf.mxu0
  %v1251 = vadd.f32 %v1162, %v1250
  %v1252 = vpop.f32.mrf.mxu0
  %1253 = vdwg.mxu0
  %s1254 = scalar_lea.vmem %s2, 64
  %v1255 = vld [vmem:[%s1254] sm:$0xff]
  %v1256 = vld [vmem:[%s1254 + $0x8] sm:$0xff]
  %v1257 = vld [vmem:[%s1254 + $0x10] sm:$0xff]
  %v1258 = vld [vmem:[%s1254 + $0x18] sm:$0xff]
  %s1259 = scalar_lea.vmem %s3, 2
  %v1260 = vld [vmem:[%s1259] sm:$0x1]
  %v1262 = vlaneseq
  %v1263 = vshrl.u32 %v1262, 7
  %v1264 = vsub.s32 0, %v1263
  %v1265 = vrot.slane %v1260, %v1264
  %1267 = vmatprep.subr.mxu0 0.0
  %1268 = vmatpush1.msra.mxu0 0.0
  %1269 = vmatprep.subr.mxu0 0.0
  %1270 = vmatpush1.msra.mxu0 0.0
  %1271 = vmatprep.subr.mxu0 0.0
  %1272 = vmatpush1.msra.mxu0 0.0
  %1273 = vmatprep.subr.mxu0 0.0
  %1274 = vmatpush1.msra.mxu0 0.0
  %1275 = vmatprep.subr.mxu0 0.0
  %1276 = vmatpush1.msra.mxu0 0.0
  %1277 = vmatprep.subr.mxu0 0.0
  %1278 = vmatpush1.msra.mxu0 0.0
  %1279 = vmatprep.subr.mxu0 0.0
  %1280 = vmatpush1.msra.mxu0 0.0
  %1281 = vmatprep.subr.mxu0 0.0
  %1282 = vmatpush1.msra.mxu0 0.0
  %1283 = vmatprep.subr.mxu0 0.0
  %1284 = vmatpush1.msra.mxu0 0.0
  %1285 = vmatprep.subr.mxu0 0.0
  %1286 = vmatpush1.msra.mxu0 0.0
  %1287 = vmatprep.subr.mxu0 0.0
  %1288 = vmatpush1.msra.mxu0 0.0
  %1289 = vmatprep.subr.mxu0 0.0
  %1290 = vmatpush1.msra.mxu0 0.0
  %1291 = vmatprep.subr.mxu0 0.0
  %1292 = vmatpush1.msra.mxu0 %v1258
  %1293 = vmatprep.subr.mxu0 0.0
  %1294 = vmatpush1.msra.mxu0 %v1257
  %1295 = vmatprep.subr.mxu0 0.0
  %1296 = vmatpush1.msra.mxu0 %v1256
  %1297 = vmatprep.subr.mxu0 0.0
  %1298 = vmatpush1.msra.mxu0 %v1255
  %1299 = vmatprep.subr.mxu0 0.0
  %1300 = vmatpush2.msra.mxu0 0.0
  %1301 = vmatprep.subr.mxu0 0.0
  %1302 = vmatpush2.msra.mxu0 0.0
  %1303 = vmatprep.subr.mxu0 0.0
  %1304 = vmatpush2.msra.mxu0 0.0
  %1305 = vmatprep.subr.mxu0 0.0
  %1306 = vmatpush2.msra.mxu0 0.0
  %1307 = vmatprep.subr.mxu0 0.0
  %1308 = vmatpush2.msra.mxu0 0.0
  %1309 = vmatprep.subr.mxu0 0.0
  %1310 = vmatpush2.msra.mxu0 0.0
  %1311 = vmatprep.subr.mxu0 0.0
  %1312 = vmatpush2.msra.mxu0 0.0
  %1313 = vmatprep.subr.mxu0 0.0
  %1314 = vmatpush2.msra.mxu0 0.0
  %1315 = vmatprep.subr.mxu0 0.0
  %1316 = vmatpush2.msra.mxu0 0.0
  %1317 = vmatprep.subr.mxu0 0.0
  %1318 = vmatpush2.msra.mxu0 0.0
  %1319 = vmatprep.subr.mxu0 0.0
  %1320 = vmatpush2.msra.mxu0 0.0
  %1321 = vmatprep.subr.mxu0 0.0
  %1322 = vmatpush2.msra.mxu0 0.0
  %1323 = vmatprep.subr.mxu0 0.0
  %1324 = vmatpush2.msra.mxu0 0.0
  %1325 = vmatprep.subr.mxu0 0.0
  %1326 = vmatpush2.msra.mxu0 0.0
  %1327 = vmatprep.subr.mxu0 0.0
  %1328 = vmatpush2.msra.mxu0 0.0
  %1329 = vmatprep.subr.mxu0 0.0
  %1330 = vmatpush2.msra.mxu0 0.0
  %1331 = vmatprep.mubr.f32.mxu0 0.0
  %1332 = vmatmul.mubr.f32.gmra.mxu0 %v66
  %v1333 = vpop.f32.mrf.mxu0
  %v1334 = vadd.f32 %v1265, %v1333
  %v1335 = vpop.f32.mrf.mxu0
  %1336 = vmatprep.mubr.f32.mxu0 0.0
  %1337 = vmatmul.mubr.f32.gmra.mxu0 %v69
  %v1338 = vpop.f32.mrf.mxu0
  %v1339 = vadd.f32 %v1265, %v1338
  %v1340 = vpop.f32.mrf.mxu0
  %1341 = vmatprep.mubr.f32.mxu0 0.0
  %1342 = vmatmul.mubr.f32.gmra.mxu0 %v72
  %v1343 = vpop.f32.mrf.mxu0
  %v1344 = vadd.f32 %v1265, %v1343
  %v1345 = vpop.f32.mrf.mxu0
  %1346 = vdwg.mxu0
  %s1347 = scalar_lea.vmem %s2, 192
  %v1348 = vld [vmem:[%s1347] sm:$0xff]
  %v1349 = vld [vmem:[%s1347 + $0x8] sm:$0xff]
  %v1350 = vld [vmem:[%s1347 + $0x10] sm:$0xff]
  %v1351 = vld [vmem:[%s1347 + $0x18] sm:$0xff]
  %s1352 = scalar_lea.vmem %s3, 6
  %v1353 = vld [vmem:[%s1352] sm:$0x1]
  %v1355 = vlaneseq
  %v1356 = vshrl.u32 %v1355, 7
  %v1357 = vsub.s32 0, %v1356
  %v1358 = vrot.slane %v1353, %v1357
  %1360 = vmatprep.subr.mxu0 0.0
  %1361 = vmatpush1.msra.mxu0 0.0
  %1362 = vmatprep.subr.mxu0 0.0
  %1363 = vmatpush1.msra.mxu0 0.0
  %1364 = vmatprep.subr.mxu0 0.0
  %1365 = vmatpush1.msra.mxu0 0.0
  %1366 = vmatprep.subr.mxu0 0.0
  %1367 = vmatpush1.msra.mxu0 0.0
  %1368 = vmatprep.subr.mxu0 0.0
  %1369 = vmatpush1.msra.mxu0 0.0
  %1370 = vmatprep.subr.mxu0 0.0
  %1371 = vmatpush1.msra.mxu0 0.0
  %1372 = vmatprep.subr.mxu0 0.0
  %1373 = vmatpush1.msra.mxu0 0.0
  %1374 = vmatprep.subr.mxu0 0.0
  %1375 = vmatpush1.msra.mxu0 0.0
  %1376 = vmatprep.subr.mxu0 0.0
  %1377 = vmatpush1.msra.mxu0 0.0
  %1378 = vmatprep.subr.mxu0 0.0
  %1379 = vmatpush1.msra.mxu0 0.0
  %1380 = vmatprep.subr.mxu0 0.0
  %1381 = vmatpush1.msra.mxu0 0.0
  %1382 = vmatprep.subr.mxu0 0.0
  %1383 = vmatpush1.msra.mxu0 0.0
  %1384 = vmatprep.subr.mxu0 0.0
  %1385 = vmatpush1.msra.mxu0 %v1351
  %1386 = vmatprep.subr.mxu0 0.0
  %1387 = vmatpush1.msra.mxu0 %v1350
  %1388 = vmatprep.subr.mxu0 0.0
  %1389 = vmatpush1.msra.mxu0 %v1349
  %1390 = vmatprep.subr.mxu0 0.0
  %1391 = vmatpush1.msra.mxu0 %v1348
  %1392 = vmatprep.subr.mxu0 0.0
  %1393 = vmatpush2.msra.mxu0 0.0
  %1394 = vmatprep.subr.mxu0 0.0
  %1395 = vmatpush2.msra.mxu0 0.0
  %1396 = vmatprep.subr.mxu0 0.0
  %1397 = vmatpush2.msra.mxu0 0.0
  %1398 = vmatprep.subr.mxu0 0.0
  %1399 = vmatpush2.msra.mxu0 0.0
  %1400 = vmatprep.subr.mxu0 0.0
  %1401 = vmatpush2.msra.mxu0 0.0
  %1402 = vmatprep.subr.mxu0 0.0
  %1403 = vmatpush2.msra.mxu0 0.0
  %1404 = vmatprep.subr.mxu0 0.0
  %1405 = vmatpush2.msra.mxu0 0.0
  %1406 = vmatprep.subr.mxu0 0.0
  %1407 = vmatpush2.msra.mxu0 0.0
  %1408 = vmatprep.subr.mxu0 0.0
  %1409 = vmatpush2.msra.mxu0 0.0
  %1410 = vmatprep.subr.mxu0 0.0
  %1411 = vmatpush2.msra.mxu0 0.0
  %1412 = vmatprep.subr.mxu0 0.0
  %1413 = vmatpush2.msra.mxu0 0.0
  %1414 = vmatprep.subr.mxu0 0.0
  %1415 = vmatpush2.msra.mxu0 0.0
  %1416 = vmatprep.subr.mxu0 0.0
  %1417 = vmatpush2.msra.mxu0 0.0
  %1418 = vmatprep.subr.mxu0 0.0
  %1419 = vmatpush2.msra.mxu0 0.0
  %1420 = vmatprep.subr.mxu0 0.0
  %1421 = vmatpush2.msra.mxu0 0.0
  %1422 = vmatprep.subr.mxu0 0.0
  %1423 = vmatpush2.msra.mxu0 0.0
  %1424 = vmatprep.mubr.f32.mxu0 0.0
  %1425 = vmatmul.mubr.f32.gmra.mxu0 %v66
  %v1426 = vpop.f32.mrf.mxu0
  %v1427 = vadd.f32 %v1358, %v1426
  %v1428 = vpop.f32.mrf.mxu0
  %1429 = vmatprep.mubr.f32.mxu0 0.0
  %1430 = vmatmul.mubr.f32.gmra.mxu0 %v69
  %v1431 = vpop.f32.mrf.mxu0
  %v1432 = vadd.f32 %v1358, %v1431
  %v1433 = vpop.f32.mrf.mxu0
  %1434 = vmatprep.mubr.f32.mxu0 0.0
  %1435 = vmatmul.mubr.f32.gmra.mxu0 %v72
  %v1436 = vpop.f32.mrf.mxu0
  %v1437 = vadd.f32 %v1358, %v1436
  %v1438 = vpop.f32.mrf.mxu0
  %1439 = vdwg.mxu0
  %s1440 = scalar_lea.vmem %s2, 320
  %v1441 = vld [vmem:[%s1440] sm:$0xff]
  %v1442 = vld [vmem:[%s1440 + $0x8] sm:$0xff]
  %v1443 = vld [vmem:[%s1440 + $0x10] sm:$0xff]
  %v1444 = vld [vmem:[%s1440 + $0x18] sm:$0xff]
  %s1445 = scalar_lea.vmem %s3, 10
  %v1446 = vld [vmem:[%s1445] sm:$0x1]
  %v1448 = vlaneseq
  %v1449 = vshrl.u32 %v1448, 7
  %v1450 = vsub.s32 0, %v1449
  %v1451 = vrot.slane %v1446, %v1450
  %1453 = vmatprep.subr.mxu0 0.0
  %1454 = vmatpush1.msra.mxu0 0.0
  %1455 = vmatprep.subr.mxu0 0.0
  %1456 = vmatpush1.msra.mxu0 0.0
  %1457 = vmatprep.subr.mxu0 0.0
  %1458 = vmatpush1.msra.mxu0 0.0
  %1459 = vmatprep.subr.mxu0 0.0
  %1460 = vmatpush1.msra.mxu0 0.0
  %1461 = vmatprep.subr.mxu0 0.0
  %1462 = vmatpush1.msra.mxu0 0.0
  %1463 = vmatprep.subr.mxu0 0.0
  %1464 = vmatpush1.msra.mxu0 0.0
  %1465 = vmatprep.subr.mxu0 0.0
  %1466 = vmatpush1.msra.mxu0 0.0
  %1467 = vmatprep.subr.mxu0 0.0
  %1468 = vmatpush1.msra.mxu0 0.0
  %1469 = vmatprep.subr.mxu0 0.0
  %1470 = vmatpush1.msra.mxu0 0.0
  %1471 = vmatprep.subr.mxu0 0.0
  %1472 = vmatpush1.msra.mxu0 0.0
  %1473 = vmatprep.subr.mxu0 0.0
  %1474 = vmatpush1.msra.mxu0 0.0
  %1475 = vmatprep.subr.mxu0 0.0
  %1476 = vmatpush1.msra.mxu0 0.0
  %1477 = vmatprep.subr.mxu0 0.0
  %1478 = vmatpush1.msra.mxu0 %v1444
  %1479 = vmatprep.subr.mxu0 0.0
  %1480 = vmatpush1.msra.mxu0 %v1443
  %1481 = vmatprep.subr.mxu0 0.0
  %1482 = vmatpush1.msra.mxu0 %v1442
  %1483 = vmatprep.subr.mxu0 0.0
  %1484 = vmatpush1.msra.mxu0 %v1441
  %1485 = vmatprep.subr.mxu0 0.0
  %1486 = vmatpush2.msra.mxu0 0.0
  %1487 = vmatprep.subr.mxu0 0.0
  %1488 = vmatpush2.msra.mxu0 0.0
  %1489 = vmatprep.subr.mxu0 0.0
  %1490 = vmatpush2.msra.mxu0 0.0
  %1491 = vmatprep.subr.mxu0 0.0
  %1492 = vmatpush2.msra.mxu0 0.0
  %1493 = vmatprep.subr.mxu0 0.0
  %1494 = vmatpush2.msra.mxu0 0.0
  %1495 = vmatprep.subr.mxu0 0.0
  %1496 = vmatpush2.msra.mxu0 0.0
  %1497 = vmatprep.subr.mxu0 0.0
  %1498 = vmatpush2.msra.mxu0 0.0
  %1499 = vmatprep.subr.mxu0 0.0
  %1500 = vmatpush2.msra.mxu0 0.0
  %1501 = vmatprep.subr.mxu0 0.0
  %1502 = vmatpush2.msra.mxu0 0.0
  %1503 = vmatprep.subr.mxu0 0.0
  %1504 = vmatpush2.msra.mxu0 0.0
  %1505 = vmatprep.subr.mxu0 0.0
  %1506 = vmatpush2.msra.mxu0 0.0
  %1507 = vmatprep.subr.mxu0 0.0
  %1508 = vmatpush2.msra.mxu0 0.0
  %1509 = vmatprep.subr.mxu0 0.0
  %1510 = vmatpush2.msra.mxu0 0.0
  %1511 = vmatprep.subr.mxu0 0.0
  %1512 = vmatpush2.msra.mxu0 0.0
  %1513 = vmatprep.subr.mxu0 0.0
  %1514 = vmatpush2.msra.mxu0 0.0
  %1515 = vmatprep.subr.mxu0 0.0
  %1516 = vmatpush2.msra.mxu0 0.0
  %1517 = vmatprep.mubr.f32.mxu0 0.0
  %1518 = vmatmul.mubr.f32.gmra.mxu0 %v66
  %v1519 = vpop.f32.mrf.mxu0
  %v1520 = vadd.f32 %v1451, %v1519
  %v1521 = vpop.f32.mrf.mxu0
  %1522 = vmatprep.mubr.f32.mxu0 0.0
  %1523 = vmatmul.mubr.f32.gmra.mxu0 %v69
  %v1524 = vpop.f32.mrf.mxu0
  %v1525 = vadd.f32 %v1451, %v1524
  %v1526 = vpop.f32.mrf.mxu0
  %1527 = vmatprep.mubr.f32.mxu0 0.0
  %1528 = vmatmul.mubr.f32.gmra.mxu0 %v72
  %v1529 = vpop.f32.mrf.mxu0
  %v1530 = vadd.f32 %v1451, %v1529
  %v1531 = vpop.f32.mrf.mxu0
  %1532 = vdwg.mxu0
  %v1534 = vsel %vm340, %v1334, 0
  %v1537 = vsel %vm340, %v1339, 0
  %v1540 = vsel %vm340, %v1344, 0
  %v1543 = vsel %vm340, %v1427, 0
  %v1546 = vsel %vm340, %v1432, 0
  %v1549 = vsel %vm340, %v1437, 0
  %1551 = vmatprep.subr.mxu0 0.0
  %1552 = vmatpush1.xpose.msra.mxu0 0.0
  %1553 = vmatprep.subr.mxu0 0.0
  %1554 = vmatpush1.xpose.msra.mxu0 0.0
  %1555 = vmatprep.subr.mxu0 0.0
  %1556 = vmatpush1.xpose.msra.mxu0 0.0
  %1557 = vmatprep.subr.mxu0 0.0
  %1558 = vmatpush1.xpose.msra.mxu0 0.0
  %1559 = vmatprep.subr.mxu0 0.0
  %1560 = vmatpush1.xpose.msra.mxu0 0.0
  %1561 = vmatprep.subr.mxu0 0.0
  %1562 = vmatpush1.xpose.msra.mxu0 0.0
  %1563 = vmatprep.subr.mxu0 0.0
  %1564 = vmatpush1.xpose.msra.mxu0 0.0
  %1565 = vmatprep.subr.mxu0 0.0
  %1566 = vmatpush1.xpose.msra.mxu0 0.0
  %1567 = vmatprep.subr.mxu0 0.0
  %1568 = vmatpush1.xpose.msra.mxu0 0.0
  %1569 = vmatprep.subr.mxu0 0.0
  %1570 = vmatpush1.xpose.msra.mxu0 0.0
  %1571 = vmatprep.subr.mxu0 0.0
  %1572 = vmatpush1.xpose.msra.mxu0 0.0
  %1573 = vmatprep.subr.mxu0 0.0
  %1574 = vmatpush1.xpose.msra.mxu0 0.0
  %1575 = vmatprep.subr.mxu0 0.0
  %1576 = vmatpush1.xpose.msra.mxu0 0.0
  %1577 = vmatprep.subr.mxu0 0.0
  %1578 = vmatpush1.xpose.msra.mxu0 %v1549
  %1579 = vmatprep.subr.mxu0 0.0
  %1580 = vmatpush1.xpose.msra.mxu0 %v1546
  %1581 = vmatprep.subr.mxu0 0.0
  %1582 = vmatpush1.xpose.msra.mxu0 %v1543
  %1583 = vmatprep.subr.mxu0 0.0
  %1584 = vmatpush2.xpose.msra.mxu0 0.0
  %1585 = vmatprep.subr.mxu0 0.0
  %1586 = vmatpush2.xpose.msra.mxu0 0.0
  %1587 = vmatprep.subr.mxu0 0.0
  %1588 = vmatpush2.xpose.msra.mxu0 0.0
  %1589 = vmatprep.subr.mxu0 0.0
  %1590 = vmatpush2.xpose.msra.mxu0 0.0
  %1591 = vmatprep.subr.mxu0 0.0
  %1592 = vmatpush2.xpose.msra.mxu0 0.0
  %1593 = vmatprep.subr.mxu0 0.0
  %1594 = vmatpush2.xpose.msra.mxu0 0.0
  %1595 = vmatprep.subr.mxu0 0.0
  %1596 = vmatpush2.xpose.msra.mxu0 0.0
  %1597 = vmatprep.subr.mxu0 0.0
  %1598 = vmatpush2.xpose.msra.mxu0 0.0
  %1599 = vmatprep.subr.mxu0 0.0
  %1600 = vmatpush2.xpose.msra.mxu0 0.0
  %1601 = vmatprep.subr.mxu0 0.0
  %1602 = vmatpush2.xpose.msra.mxu0 0.0
  %1603 = vmatprep.subr.mxu0 0.0
  %1604 = vmatpush2.xpose.msra.mxu0 0.0
  %1605 = vmatprep.subr.mxu0 0.0
  %1606 = vmatpush2.xpose.msra.mxu0 0.0
  %1607 = vmatprep.subr.mxu0 0.0
  %1608 = vmatpush2.xpose.msra.mxu0 0.0
  %1609 = vmatprep.subr.mxu0 0.0
  %1610 = vmatpush2.xpose.msra.mxu0 0.0
  %1611 = vmatprep.subr.mxu0 0.0
  %1612 = vmatpush2.xpose.msra.mxu0 0.0
  %1613 = vmatprep.subr.mxu0 0.0
  %1614 = vmatpush2.xpose.msra.mxu0 0.0
  %1615 = vmatprep.mubr.f32.mxu0 0.0
  %1616 = vmatmul.mubr.f32.gmra.mxu0 %v1534
  %v1617 = vpop.f32.mrf.mxu0
  %v1618 = vadd.f32 0.0, %v1617
  %v1619 = vpop.f32.mrf.mxu0
  %1620 = vmatprep.mubr.f32.mxu0 0.0
  %1621 = vmatmul.mubr.f32.gmra.mxu0 %v1537
  %v1622 = vpop.f32.mrf.mxu0
  %v1623 = vadd.f32 0.0, %v1622
  %v1624 = vpop.f32.mrf.mxu0
  %1625 = vmatprep.mubr.f32.mxu0 0.0
  %1626 = vmatmul.mubr.f32.gmra.mxu0 %v1540
  %v1627 = vpop.f32.mrf.mxu0
  %v1628 = vadd.f32 0.0, %v1627
  %v1629 = vpop.f32.mrf.mxu0
  %1630 = vdwg.mxu0
  %v1631 = vmul.f32 %v1618, 0.35355338
  %v1632 = vmul.f32 %v1623, 0.35355338
  %v1633 = vmul.f32 %v1628, 0.35355338
  %v1634 = vadd.f32 %v1631, %v50
  %v1635 = vadd.f32 %v1632, %v51
  %v1636 = vadd.f32 %v1633, %v52
  %v1637 = vsel %vm445, %v1634, -inf
  %1638 = vmax.xlane.f32.xlu0 %v1637
  %v1639 = vpop.xlane.xlu0 %1638
  %v1640 = vsel %vm445, %v1635, -inf
  %1641 = vmax.xlane.f32.xlu0 %v1640
  %v1642 = vpop.xlane.xlu0 %1641
  %v1643 = vsel %vm445, %v1636, -inf
  %1644 = vmax.xlane.f32.xlu0 %v1643
  %v1645 = vpop.xlane.xlu0 %1644
  %v1646 = vsub.f32 %v1634, %v1639
  %v1647 = vsub.f32 %v1635, %v1642
  %v1648 = vsub.f32 %v1636, %v1645
  %v1649 = vmul.f32 %v1646, 1.442695
  %v1650 = vpow.pop %v1649
  %v1651 = vmul.f32 %v1647, 1.442695
  %v1652 = vpow.pop %v1651
  %v1653 = vmul.f32 %v1648, 1.442695
  %v1654 = vpow.pop %v1653
  %v1655 = vsel %vm445, %v1650, 0.0
  %1656 = vadd.xlane.f32.xlu0 %v1655
  %v1657 = vpop.xlane.xlu0 %1656
  %v1658 = vsel %vm445, %v1652, 0.0
  %1659 = vadd.xlane.f32.xlu0 %v1658
  %v1660 = vpop.xlane.xlu0 %1659
  %v1661 = vsel %vm445, %v1654, 0.0
  %1662 = vadd.xlane.f32.xlu0 %v1661
  %v1663 = vpop.xlane.xlu0 %1662
  %v1664 = vrcp.pop %v1657
  %v1665 = vrcp.pop %v1660
  %v1666 = vrcp.pop %v1663
  %v1667 = vmul.f32 %v1650, %v1664
  %v1668 = vmul.f32 %v1652, %v1665
  %v1669 = vmul.f32 %v1654, %v1666
  %v1671 = vsel %vm445, %v1667, 0
  %v1674 = vsel %vm445, %v1668, 0
  %v1677 = vsel %vm445, %v1669, 0
  %1679 = vmatprep.subr.mxu0 0.0
  %1680 = vmatpush1.msra.mxu0 0.0
  %1681 = vmatprep.subr.mxu0 0.0
  %1682 = vmatpush1.msra.mxu0 0.0
  %1683 = vmatprep.subr.mxu0 0.0
  %1684 = vmatpush1.msra.mxu0 0.0
  %1685 = vmatprep.subr.mxu0 0.0
  %1686 = vmatpush1.msra.mxu0 0.0
  %1687 = vmatprep.subr.mxu0 0.0
  %1688 = vmatpush1.msra.mxu0 0.0
  %1689 = vmatprep.subr.mxu0 0.0
  %1690 = vmatpush1.msra.mxu0 0.0
  %1691 = vmatprep.subr.mxu0 0.0
  %1692 = vmatpush1.msra.mxu0 0.0
  %1693 = vmatprep.subr.mxu0 0.0
  %1694 = vmatpush1.msra.mxu0 0.0
  %1695 = vmatprep.subr.mxu0 0.0
  %1696 = vmatpush1.msra.mxu0 0.0
  %1697 = vmatprep.subr.mxu0 0.0
  %1698 = vmatpush1.msra.mxu0 0.0
  %1699 = vmatprep.subr.mxu0 0.0
  %1700 = vmatpush1.msra.mxu0 0.0
  %1701 = vmatprep.subr.mxu0 0.0
  %1702 = vmatpush1.msra.mxu0 0.0
  %1703 = vmatprep.subr.mxu0 0.0
  %1704 = vmatpush1.msra.mxu0 0.0
  %1705 = vmatprep.subr.mxu0 0.0
  %1706 = vmatpush1.msra.mxu0 %v1530
  %1707 = vmatprep.subr.mxu0 0.0
  %1708 = vmatpush1.msra.mxu0 %v1525
  %1709 = vmatprep.subr.mxu0 0.0
  %1710 = vmatpush1.msra.mxu0 %v1520
  %1711 = vmatprep.subr.mxu0 0.0
  %1712 = vmatpush2.msra.mxu0 0.0
  %1713 = vmatprep.subr.mxu0 0.0
  %1714 = vmatpush2.msra.mxu0 0.0
  %1715 = vmatprep.subr.mxu0 0.0
  %1716 = vmatpush2.msra.mxu0 0.0
  %1717 = vmatprep.subr.mxu0 0.0
  %1718 = vmatpush2.msra.mxu0 0.0
  %1719 = vmatprep.subr.mxu0 0.0
  %1720 = vmatpush2.msra.mxu0 0.0
  %1721 = vmatprep.subr.mxu0 0.0
  %1722 = vmatpush2.msra.mxu0 0.0
  %1723 = vmatprep.subr.mxu0 0.0
  %1724 = vmatpush2.msra.mxu0 0.0
  %1725 = vmatprep.subr.mxu0 0.0
  %1726 = vmatpush2.msra.mxu0 0.0
  %1727 = vmatprep.subr.mxu0 0.0
  %1728 = vmatpush2.msra.mxu0 0.0
  %1729 = vmatprep.subr.mxu0 0.0
  %1730 = vmatpush2.msra.mxu0 0.0
  %1731 = vmatprep.subr.mxu0 0.0
  %1732 = vmatpush2.msra.mxu0 0.0
  %1733 = vmatprep.subr.mxu0 0.0
  %1734 = vmatpush2.msra.mxu0 0.0
  %1735 = vmatprep.subr.mxu0 0.0
  %1736 = vmatpush2.msra.mxu0 0.0
  %1737 = vmatprep.subr.mxu0 0.0
  %1738 = vmatpush2.msra.mxu0 0.0
  %1739 = vmatprep.subr.mxu0 0.0
  %1740 = vmatpush2.msra.mxu0 0.0
  %1741 = vmatprep.subr.mxu0 0.0
  %1742 = vmatpush2.msra.mxu0 0.0
  %1743 = vmatprep.mubr.f32.mxu0 0.0
  %1744 = vmatmul.mubr.f32.gmra.mxu0 %v1671
  %v1745 = vpop.f32.mrf.mxu0
  %v1746 = vadd.f32 0.0, %v1745
  %v1747 = vpop.f32.mrf.mxu0
  %1748 = vmatprep.mubr.f32.mxu0 0.0
  %1749 = vmatmul.mubr.f32.gmra.mxu0 %v1674
  %v1750 = vpop.f32.mrf.mxu0
  %v1751 = vadd.f32 0.0, %v1750
  %v1752 = vpop.f32.mrf.mxu0
  %1753 = vmatprep.mubr.f32.mxu0 0.0
  %1754 = vmatmul.mubr.f32.gmra.mxu0 %v1677
  %v1755 = vpop.f32.mrf.mxu0
  %v1756 = vadd.f32 0.0, %v1755
  %v1757 = vpop.f32.mrf.mxu0
  %1758 = vdwg.mxu0
  %s1759 = scalar_lea.vmem %s4, 16
  %v1760 = vld [vmem:[%s1759] sm:$0xff]
  %v1762 = vsel %vm340, %v1746, 0
  %v1765 = vsel %vm340, %v1751, 0
  %v1768 = vsel %vm340, %v1756, 0
  %1770 = vmatprep.subr.mxu0 0.0
  %1771 = vmatpush1.msra.mxu0 0.0
  %1772 = vmatprep.subr.mxu0 0.0
  %1773 = vmatpush1.msra.mxu0 0.0
  %1774 = vmatprep.subr.mxu0 0.0
  %1775 = vmatpush1.msra.mxu0 0.0
  %1776 = vmatprep.subr.mxu0 0.0
  %1777 = vmatpush1.msra.mxu0 0.0
  %1778 = vmatprep.subr.mxu0 0.0
  %1779 = vmatpush1.msra.mxu0 0.0
  %1780 = vmatprep.subr.mxu0 0.0
  %1781 = vmatpush1.msra.mxu0 0.0
  %1782 = vmatprep.subr.mxu0 0.0
  %1783 = vmatpush1.msra.mxu0 0.0
  %1784 = vmatprep.subr.mxu0 0.0
  %1785 = vmatpush1.msra.mxu0 0.0
  %1786 = vmatprep.subr.mxu0 0.0
  %1787 = vmatpush1.msra.mxu0 0.0
  %1788 = vmatprep.subr.mxu0 0.0
  %1789 = vmatpush1.msra.mxu0 0.0
  %1790 = vmatprep.subr.mxu0 0.0
  %1791 = vmatpush1.msra.mxu0 0.0
  %1792 = vmatprep.subr.mxu0 0.0
  %1793 = vmatpush1.msra.mxu0 0.0
  %1794 = vmatprep.subr.mxu0 0.0
  %1795 = vmatpush1.msra.mxu0 0.0
  %1796 = vmatprep.subr.mxu0 0.0
  %1797 = vmatpush1.msra.mxu0 0.0
  %1798 = vmatprep.subr.mxu0 0.0
  %1799 = vmatpush1.msra.mxu0 0.0
  %1800 = vmatprep.subr.mxu0 0.0
  %1801 = vmatpush1.msra.mxu0 %v1760
  %1802 = vmatprep.subr.mxu0 0.0
  %1803 = vmatpush2.msra.mxu0 0.0
  %1804 = vmatprep.subr.mxu0 0.0
  %1805 = vmatpush2.msra.mxu0 0.0
  %1806 = vmatprep.subr.mxu0 0.0
  %1807 = vmatpush2.msra.mxu0 0.0
  %1808 = vmatprep.subr.mxu0 0.0
  %1809 = vmatpush2.msra.mxu0 0.0
  %1810 = vmatprep.subr.mxu0 0.0
  %1811 = vmatpush2.msra.mxu0 0.0
  %1812 = vmatprep.subr.mxu0 0.0
  %1813 = vmatpush2.msra.mxu0 0.0
  %1814 = vmatprep.subr.mxu0 0.0
  %1815 = vmatpush2.msra.mxu0 0.0
  %1816 = vmatprep.subr.mxu0 0.0
  %1817 = vmatpush2.msra.mxu0 0.0
  %1818 = vmatprep.subr.mxu0 0.0
  %1819 = vmatpush2.msra.mxu0 0.0
  %1820 = vmatprep.subr.mxu0 0.0
  %1821 = vmatpush2.msra.mxu0 0.0
  %1822 = vmatprep.subr.mxu0 0.0
  %1823 = vmatpush2.msra.mxu0 0.0
  %1824 = vmatprep.subr.mxu0 0.0
  %1825 = vmatpush2.msra.mxu0 0.0
  %1826 = vmatprep.subr.mxu0 0.0
  %1827 = vmatpush2.msra.mxu0 0.0
  %1828 = vmatprep.subr.mxu0 0.0
  %1829 = vmatpush2.msra.mxu0 0.0
  %1830 = vmatprep.subr.mxu0 0.0
  %1831 = vmatpush2.msra.mxu0 0.0
  %1832 = vmatprep.subr.mxu0 0.0
  %1833 = vmatpush2.msra.mxu0 0.0
  %1834 = vmatprep.mubr.f32.mxu0 0.0
  %1835 = vmatmul.mubr.f32.gmra.mxu0 %v1762
  %v1836 = vpop.f32.mrf.mxu0
  %v1837 = vadd.f32 0.0, %v1836
  %v1838 = vpop.f32.mrf.mxu0
  %1839 = vmatprep.mubr.f32.mxu0 0.0
  %1840 = vmatmul.mubr.f32.gmra.mxu0 %v1765
  %v1841 = vpop.f32.mrf.mxu0
  %v1842 = vadd.f32 0.0, %v1841
  %v1843 = vpop.f32.mrf.mxu0
  %1844 = vmatprep.mubr.f32.mxu0 0.0
  %1845 = vmatmul.mubr.f32.gmra.mxu0 %v1768
  %v1846 = vpop.f32.mrf.mxu0
  %v1847 = vadd.f32 0.0, %v1846
  %v1848 = vpop.f32.mrf.mxu0
  %1849 = vdwg.mxu0
  %v1850 = vadd.f32 %v1241, %v1837
  %v1851 = vadd.f32 %v1246, %v1842
  %v1852 = vadd.f32 %v1251, %v1847
  %s1853 = scalar_lea.vmem %s2, 96
  %v1854 = vld [vmem:[%s1853] sm:$0xff]
  %v1855 = vld [vmem:[%s1853 + $0x8] sm:$0xff]
  %v1856 = vld [vmem:[%s1853 + $0x10] sm:$0xff]
  %v1857 = vld [vmem:[%s1853 + $0x18] sm:$0xff]
  %s1858 = scalar_lea.vmem %s3, 3
  %v1859 = vld [vmem:[%s1858] sm:$0x1]
  %v1861 = vlaneseq
  %v1862 = vshrl.u32 %v1861, 7
  %v1863 = vsub.s32 0, %v1862
  %v1864 = vrot.slane %v1859, %v1863
  %1866 = vmatprep.subr.mxu0 0.0
  %1867 = vmatpush1.msra.mxu0 0.0
  %1868 = vmatprep.subr.mxu0 0.0
  %1869 = vmatpush1.msra.mxu0 0.0
  %1870 = vmatprep.subr.mxu0 0.0
  %1871 = vmatpush1.msra.mxu0 0.0
  %1872 = vmatprep.subr.mxu0 0.0
  %1873 = vmatpush1.msra.mxu0 0.0
  %1874 = vmatprep.subr.mxu0 0.0
  %1875 = vmatpush1.msra.mxu0 0.0
  %1876 = vmatprep.subr.mxu0 0.0
  %1877 = vmatpush1.msra.mxu0 0.0
  %1878 = vmatprep.subr.mxu0 0.0
  %1879 = vmatpush1.msra.mxu0 0.0
  %1880 = vmatprep.subr.mxu0 0.0
  %1881 = vmatpush1.msra.mxu0 0.0
  %1882 = vmatprep.subr.mxu0 0.0
  %1883 = vmatpush1.msra.mxu0 0.0
  %1884 = vmatprep.subr.mxu0 0.0
  %1885 = vmatpush1.msra.mxu0 0.0
  %1886 = vmatprep.subr.mxu0 0.0
  %1887 = vmatpush1.msra.mxu0 0.0
  %1888 = vmatprep.subr.mxu0 0.0
  %1889 = vmatpush1.msra.mxu0 0.0
  %1890 = vmatprep.subr.mxu0 0.0
  %1891 = vmatpush1.msra.mxu0 %v1857
  %1892 = vmatprep.subr.mxu0 0.0
  %1893 = vmatpush1.msra.mxu0 %v1856
  %1894 = vmatprep.subr.mxu0 0.0
  %1895 = vmatpush1.msra.mxu0 %v1855
  %1896 = vmatprep.subr.mxu0 0.0
  %1897 = vmatpush1.msra.mxu0 %v1854
  %1898 = vmatprep.subr.mxu0 0.0
  %1899 = vmatpush2.msra.mxu0 0.0
  %1900 = vmatprep.subr.mxu0 0.0
  %1901 = vmatpush2.msra.mxu0 0.0
  %1902 = vmatprep.subr.mxu0 0.0
  %1903 = vmatpush2.msra.mxu0 0.0
  %1904 = vmatprep.subr.mxu0 0.0
  %1905 = vmatpush2.msra.mxu0 0.0
  %1906 = vmatprep.subr.mxu0 0.0
  %1907 = vmatpush2.msra.mxu0 0.0
  %1908 = vmatprep.subr.mxu0 0.0
  %1909 = vmatpush2.msra.mxu0 0.0
  %1910 = vmatprep.subr.mxu0 0.0
  %1911 = vmatpush2.msra.mxu0 0.0
  %1912 = vmatprep.subr.mxu0 0.0
  %1913 = vmatpush2.msra.mxu0 0.0
  %1914 = vmatprep.subr.mxu0 0.0
  %1915 = vmatpush2.msra.mxu0 0.0
  %1916 = vmatprep.subr.mxu0 0.0
  %1917 = vmatpush2.msra.mxu0 0.0
  %1918 = vmatprep.subr.mxu0 0.0
  %1919 = vmatpush2.msra.mxu0 0.0
  %1920 = vmatprep.subr.mxu0 0.0
  %1921 = vmatpush2.msra.mxu0 0.0
  %1922 = vmatprep.subr.mxu0 0.0
  %1923 = vmatpush2.msra.mxu0 0.0
  %1924 = vmatprep.subr.mxu0 0.0
  %1925 = vmatpush2.msra.mxu0 0.0
  %1926 = vmatprep.subr.mxu0 0.0
  %1927 = vmatpush2.msra.mxu0 0.0
  %1928 = vmatprep.subr.mxu0 0.0
  %1929 = vmatpush2.msra.mxu0 0.0
  %1930 = vmatprep.mubr.f32.mxu0 0.0
  %1931 = vmatmul.mubr.f32.gmra.mxu0 %v66
  %v1932 = vpop.f32.mrf.mxu0
  %v1933 = vadd.f32 %v1864, %v1932
  %v1934 = vpop.f32.mrf.mxu0
  %1935 = vmatprep.mubr.f32.mxu0 0.0
  %1936 = vmatmul.mubr.f32.gmra.mxu0 %v69
  %v1937 = vpop.f32.mrf.mxu0
  %v1938 = vadd.f32 %v1864, %v1937
  %v1939 = vpop.f32.mrf.mxu0
  %1940 = vmatprep.mubr.f32.mxu0 0.0
  %1941 = vmatmul.mubr.f32.gmra.mxu0 %v72
  %v1942 = vpop.f32.mrf.mxu0
  %v1943 = vadd.f32 %v1864, %v1942
  %v1944 = vpop.f32.mrf.mxu0
  %1945 = vdwg.mxu0
  %s1946 = scalar_lea.vmem %s2, 224
  %v1947 = vld [vmem:[%s1946] sm:$0xff]
  %v1948 = vld [vmem:[%s1946 + $0x8] sm:$0xff]
  %v1949 = vld [vmem:[%s1946 + $0x10] sm:$0xff]
  %v1950 = vld [vmem:[%s1946 + $0x18] sm:$0xff]
  %s1951 = scalar_lea.vmem %s3, 7
  %v1952 = vld [vmem:[%s1951] sm:$0x1]
  %v1954 = vlaneseq
  %v1955 = vshrl.u32 %v1954, 7
  %v1956 = vsub.s32 0, %v1955
  %v1957 = vrot.slane %v1952, %v1956
  %1959 = vmatprep.subr.mxu0 0.0
  %1960 = vmatpush1.msra.mxu0 0.0
  %1961 = vmatprep.subr.mxu0 0.0
  %1962 = vmatpush1.msra.mxu0 0.0
  %1963 = vmatprep.subr.mxu0 0.0
  %1964 = vmatpush1.msra.mxu0 0.0
  %1965 = vmatprep.subr.mxu0 0.0
  %1966 = vmatpush1.msra.mxu0 0.0
  %1967 = vmatprep.subr.mxu0 0.0
  %1968 = vmatpush1.msra.mxu0 0.0
  %1969 = vmatprep.subr.mxu0 0.0
  %1970 = vmatpush1.msra.mxu0 0.0
  %1971 = vmatprep.subr.mxu0 0.0
  %1972 = vmatpush1.msra.mxu0 0.0
  %1973 = vmatprep.subr.mxu0 0.0
  %1974 = vmatpush1.msra.mxu0 0.0
  %1975 = vmatprep.subr.mxu0 0.0
  %1976 = vmatpush1.msra.mxu0 0.0
  %1977 = vmatprep.subr.mxu0 0.0
  %1978 = vmatpush1.msra.mxu0 0.0
  %1979 = vmatprep.subr.mxu0 0.0
  %1980 = vmatpush1.msra.mxu0 0.0
  %1981 = vmatprep.subr.mxu0 0.0
  %1982 = vmatpush1.msra.mxu0 0.0
  %1983 = vmatprep.subr.mxu0 0.0
  %1984 = vmatpush1.msra.mxu0 %v1950
  %1985 = vmatprep.subr.mxu0 0.0
  %1986 = vmatpush1.msra.mxu0 %v1949
  %1987 = vmatprep.subr.mxu0 0.0
  %1988 = vmatpush1.msra.mxu0 %v1948
  %1989 = vmatprep.subr.mxu0 0.0
  %1990 = vmatpush1.msra.mxu0 %v1947
  %1991 = vmatprep.subr.mxu0 0.0
  %1992 = vmatpush2.msra.mxu0 0.0
  %1993 = vmatprep.subr.mxu0 0.0
  %1994 = vmatpush2.msra.mxu0 0.0
  %1995 = vmatprep.subr.mxu0 0.0
  %1996 = vmatpush2.msra.mxu0 0.0
  %1997 = vmatprep.subr.mxu0 0.0
  %1998 = vmatpush2.msra.mxu0 0.0
  %1999 = vmatprep.subr.mxu0 0.0
  %2000 = vmatpush2.msra.mxu0 0.0
  %2001 = vmatprep.subr.mxu0 0.0
  %2002 = vmatpush2.msra.mxu0 0.0
  %2003 = vmatprep.subr.mxu0 0.0
  %2004 = vmatpush2.msra.mxu0 0.0
  %2005 = vmatprep.subr.mxu0 0.0
  %2006 = vmatpush2.msra.mxu0 0.0
  %2007 = vmatprep.subr.mxu0 0.0
  %2008 = vmatpush2.msra.mxu0 0.0
  %2009 = vmatprep.subr.mxu0 0.0
  %2010 = vmatpush2.msra.mxu0 0.0
  %2011 = vmatprep.subr.mxu0 0.0
  %2012 = vmatpush2.msra.mxu0 0.0
  %2013 = vmatprep.subr.mxu0 0.0
  %2014 = vmatpush2.msra.mxu0 0.0
  %2015 = vmatprep.subr.mxu0 0.0
  %2016 = vmatpush2.msra.mxu0 0.0
  %2017 = vmatprep.subr.mxu0 0.0
  %2018 = vmatpush2.msra.mxu0 0.0
  %2019 = vmatprep.subr.mxu0 0.0
  %2020 = vmatpush2.msra.mxu0 0.0
  %2021 = vmatprep.subr.mxu0 0.0
  %2022 = vmatpush2.msra.mxu0 0.0
  %2023 = vmatprep.mubr.f32.mxu0 0.0
  %2024 = vmatmul.mubr.f32.gmra.mxu0 %v66
  %v2025 = vpop.f32.mrf.mxu0
  %v2026 = vadd.f32 %v1957, %v2025
  %v2027 = vpop.f32.mrf.mxu0
  %2028 = vmatprep.mubr.f32.mxu0 0.0
  %2029 = vmatmul.mubr.f32.gmra.mxu0 %v69
  %v2030 = vpop.f32.mrf.mxu0
  %v2031 = vadd.f32 %v1957, %v2030
  %v2032 = vpop.f32.mrf.mxu0
  %2033 = vmatprep.mubr.f32.mxu0 0.0
  %2034 = vmatmul.mubr.f32.gmra.mxu0 %v72
  %v2035 = vpop.f32.mrf.mxu0
  %v2036 = vadd.f32 %v1957, %v2035
  %v2037 = vpop.f32.mrf.mxu0
  %2038 = vdwg.mxu0
  %s2039 = scalar_lea.vmem %s2, 352
  %v2040 = vld [vmem:[%s2039] sm:$0xff]
  %v2041 = vld [vmem:[%s2039 + $0x8] sm:$0xff]
  %v2042 = vld [vmem:[%s2039 + $0x10] sm:$0xff]
  %v2043 = vld [vmem:[%s2039 + $0x18] sm:$0xff]
  %s2044 = scalar_lea.vmem %s3, 11
  %v2045 = vld [vmem:[%s2044] sm:$0x1]
  %v2047 = vlaneseq
  %v2048 = vshrl.u32 %v2047, 7
  %v2049 = vsub.s32 0, %v2048
  %v2050 = vrot.slane %v2045, %v2049
  %2052 = vmatprep.subr.mxu0 0.0
  %2053 = vmatpush1.msra.mxu0 0.0
  %2054 = vmatprep.subr.mxu0 0.0
  %2055 = vmatpush1.msra.mxu0 0.0
  %2056 = vmatprep.subr.mxu0 0.0
  %2057 = vmatpush1.msra.mxu0 0.0
  %2058 = vmatprep.subr.mxu0 0.0
  %2059 = vmatpush1.msra.mxu0 0.0
  %2060 = vmatprep.subr.mxu0 0.0
  %2061 = vmatpush1.msra.mxu0 0.0
  %2062 = vmatprep.subr.mxu0 0.0
  %2063 = vmatpush1.msra.mxu0 0.0
  %2064 = vmatprep.subr.mxu0 0.0
  %2065 = vmatpush1.msra.mxu0 0.0
  %2066 = vmatprep.subr.mxu0 0.0
  %2067 = vmatpush1.msra.mxu0 0.0
  %2068 = vmatprep.subr.mxu0 0.0
  %2069 = vmatpush1.msra.mxu0 0.0
  %2070 = vmatprep.subr.mxu0 0.0
  %2071 = vmatpush1.msra.mxu0 0.0
  %2072 = vmatprep.subr.mxu0 0.0
  %2073 = vmatpush1.msra.mxu0 0.0
  %2074 = vmatprep.subr.mxu0 0.0
  %2075 = vmatpush1.msra.mxu0 0.0
  %2076 = vmatprep.subr.mxu0 0.0
  %2077 = vmatpush1.msra.mxu0 %v2043
  %2078 = vmatprep.subr.mxu0 0.0
  %2079 = vmatpush1.msra.mxu0 %v2042
  %2080 = vmatprep.subr.mxu0 0.0
  %2081 = vmatpush1.msra.mxu0 %v2041
  %2082 = vmatprep.subr.mxu0 0.0
  %2083 = vmatpush1.msra.mxu0 %v2040
  %2084 = vmatprep.subr.mxu0 0.0
  %2085 = vmatpush2.msra.mxu0 0.0
  %2086 = vmatprep.subr.mxu0 0.0
  %2087 = vmatpush2.msra.mxu0 0.0
  %2088 = vmatprep.subr.mxu0 0.0
  %2089 = vmatpush2.msra.mxu0 0.0
  %2090 = vmatprep.subr.mxu0 0.0
  %2091 = vmatpush2.msra.mxu0 0.0
  %2092 = vmatprep.subr.mxu0 0.0
  %2093 = vmatpush2.msra.mxu0 0.0
  %2094 = vmatprep.subr.mxu0 0.0
  %2095 = vmatpush2.msra.mxu0 0.0
  %2096 = vmatprep.subr.mxu0 0.0
  %2097 = vmatpush2.msra.mxu0 0.0
  %2098 = vmatprep.subr.mxu0 0.0
  %2099 = vmatpush2.msra.mxu0 0.0
  %2100 = vmatprep.subr.mxu0 0.0
  %2101 = vmatpush2.msra.mxu0 0.0
  %2102 = vmatprep.subr.mxu0 0.0
  %2103 = vmatpush2.msra.mxu0 0.0
  %2104 = vmatprep.subr.mxu0 0.0
  %2105 = vmatpush2.msra.mxu0 0.0
  %2106 = vmatprep.subr.mxu0 0.0
  %2107 = vmatpush2.msra.mxu0 0.0
  %2108 = vmatprep.subr.mxu0 0.0
  %2109 = vmatpush2.msra.mxu0 0.0
  %2110 = vmatprep.subr.mxu0 0.0
  %2111 = vmatpush2.msra.mxu0 0.0
  %2112 = vmatprep.subr.mxu0 0.0
  %2113 = vmatpush2.msra.mxu0 0.0
  %2114 = vmatprep.subr.mxu0 0.0
  %2115 = vmatpush2.msra.mxu0 0.0
  %2116 = vmatprep.mubr.f32.mxu0 0.0
  %2117 = vmatmul.mubr.f32.gmra.mxu0 %v66
  %v2118 = vpop.f32.mrf.mxu0
  %v2119 = vadd.f32 %v2050, %v2118
  %v2120 = vpop.f32.mrf.mxu0
  %2121 = vmatprep.mubr.f32.mxu0 0.0
  %2122 = vmatmul.mubr.f32.gmra.mxu0 %v69
  %v2123 = vpop.f32.mrf.mxu0
  %v2124 = vadd.f32 %v2050, %v2123
  %v2125 = vpop.f32.mrf.mxu0
  %2126 = vmatprep.mubr.f32.mxu0 0.0
  %2127 = vmatmul.mubr.f32.gmra.mxu0 %v72
  %v2128 = vpop.f32.mrf.mxu0
  %v2129 = vadd.f32 %v2050, %v2128
  %v2130 = vpop.f32.mrf.mxu0
  %2131 = vdwg.mxu0
  %v2133 = vsel %vm340, %v1933, 0
  %v2136 = vsel %vm340, %v1938, 0
  %v2139 = vsel %vm340, %v1943, 0
  %v2142 = vsel %vm340, %v2026, 0
  %v2145 = vsel %vm340, %v2031, 0
  %v2148 = vsel %vm340, %v2036, 0
  %2150 = vmatprep.subr.mxu0 0.0
  %2151 = vmatpush1.xpose.msra.mxu0 0.0
  %2152 = vmatprep.subr.mxu0 0.0
  %2153 = vmatpush1.xpose.msra.mxu0 0.0
  %2154 = vmatprep.subr.mxu0 0.0
  %2155 = vmatpush1.xpose.msra.mxu0 0.0
  %2156 = vmatprep.subr.mxu0 0.0
  %2157 = vmatpush1.xpose.msra.mxu0 0.0
  %2158 = vmatprep.subr.mxu0 0.0
  %2159 = vmatpush1.xpose.msra.mxu0 0.0
  %2160 = vmatprep.subr.mxu0 0.0
  %2161 = vmatpush1.xpose.msra.mxu0 0.0
  %2162 = vmatprep.subr.mxu0 0.0
  %2163 = vmatpush1.xpose.msra.mxu0 0.0
  %2164 = vmatprep.subr.mxu0 0.0
  %2165 = vmatpush1.xpose.msra.mxu0 0.0
  %2166 = vmatprep.subr.mxu0 0.0
  %2167 = vmatpush1.xpose.msra.mxu0 0.0
  %2168 = vmatprep.subr.mxu0 0.0
  %2169 = vmatpush1.xpose.msra.mxu0 0.0
  %2170 = vmatprep.subr.mxu0 0.0
  %2171 = vmatpush1.xpose.msra.mxu0 0.0
  %2172 = vmatprep.subr.mxu0 0.0
  %2173 = vmatpush1.xpose.msra.mxu0 0.0
  %2174 = vmatprep.subr.mxu0 0.0
  %2175 = vmatpush1.xpose.msra.mxu0 0.0
  %2176 = vmatprep.subr.mxu0 0.0
  %2177 = vmatpush1.xpose.msra.mxu0 %v2148
  %2178 = vmatprep.subr.mxu0 0.0
  %2179 = vmatpush1.xpose.msra.mxu0 %v2145
  %2180 = vmatprep.subr.mxu0 0.0
  %2181 = vmatpush1.xpose.msra.mxu0 %v2142
  %2182 = vmatprep.subr.mxu0 0.0
  %2183 = vmatpush2.xpose.msra.mxu0 0.0
  %2184 = vmatprep.subr.mxu0 0.0
  %2185 = vmatpush2.xpose.msra.mxu0 0.0
  %2186 = vmatprep.subr.mxu0 0.0
  %2187 = vmatpush2.xpose.msra.mxu0 0.0
  %2188 = vmatprep.subr.mxu0 0.0
  %2189 = vmatpush2.xpose.msra.mxu0 0.0
  %2190 = vmatprep.subr.mxu0 0.0
  %2191 = vmatpush2.xpose.msra.mxu0 0.0
  %2192 = vmatprep.subr.mxu0 0.0
  %2193 = vmatpush2.xpose.msra.mxu0 0.0
  %2194 = vmatprep.subr.mxu0 0.0
  %2195 = vmatpush2.xpose.msra.mxu0 0.0
  %2196 = vmatprep.subr.mxu0 0.0
  %2197 = vmatpush2.xpose.msra.mxu0 0.0
  %2198 = vmatprep.subr.mxu0 0.0
  %2199 = vmatpush2.xpose.msra.mxu0 0.0
  %2200 = vmatprep.subr.mxu0 0.0
  %2201 = vmatpush2.xpose.msra.mxu0 0.0
  %2202 = vmatprep.subr.mxu0 0.0
  %2203 = vmatpush2.xpose.msra.mxu0 0.0
  %2204 = vmatprep.subr.mxu0 0.0
  %2205 = vmatpush2.xpose.msra.mxu0 0.0
  %2206 = vmatprep.subr.mxu0 0.0
  %2207 = vmatpush2.xpose.msra.mxu0 0.0
  %2208 = vmatprep.subr.mxu0 0.0
  %2209 = vmatpush2.xpose.msra.mxu0 0.0
  %2210 = vmatprep.subr.mxu0 0.0
  %2211 = vmatpush2.xpose.msra.mxu0 0.0
  %2212 = vmatprep.subr.mxu0 0.0
  %2213 = vmatpush2.xpose.msra.mxu0 0.0
  %2214 = vmatprep.mubr.f32.mxu0 0.0
  %2215 = vmatmul.mubr.f32.gmra.mxu0 %v2133
  %v2216 = vpop.f32.mrf.mxu0
  %v2217 = vadd.f32 0.0, %v2216
  %v2218 = vpop.f32.mrf.mxu0
  %2219 = vmatprep.mubr.f32.mxu0 0.0
  %2220 = vmatmul.mubr.f32.gmra.mxu0 %v2136
  %v2221 = vpop.f32.mrf.mxu0
  %v2222 = vadd.f32 0.0, %v2221
  %v2223 = vpop.f32.mrf.mxu0
  %2224 = vmatprep.mubr.f32.mxu0 0.0
  %2225 = vmatmul.mubr.f32.gmra.mxu0 %v2139
  %v2226 = vpop.f32.mrf.mxu0
  %v2227 = vadd.f32 0.0, %v2226
  %v2228 = vpop.f32.mrf.mxu0
  %2229 = vdwg.mxu0
  %v2230 = vmul.f32 %v2217, 0.35355338
  %v2231 = vmul.f32 %v2222, 0.35355338
  %v2232 = vmul.f32 %v2227, 0.35355338
  %v2233 = vadd.f32 %v2230, %v50
  %v2234 = vadd.f32 %v2231, %v51
  %v2235 = vadd.f32 %v2232, %v52
  %v2236 = vsel %vm445, %v2233, -inf
  %2237 = vmax.xlane.f32.xlu0 %v2236
  %v2238 = vpop.xlane.xlu0 %2237
  %v2239 = vsel %vm445, %v2234, -inf
  %2240 = vmax.xlane.f32.xlu0 %v2239
  %v2241 = vpop.xlane.xlu0 %2240
  %v2242 = vsel %vm445, %v2235, -inf
  %2243 = vmax.xlane.f32.xlu0 %v2242
  %v2244 = vpop.xlane.xlu0 %2243
  %v2245 = vsub.f32 %v2233, %v2238
  %v2246 = vsub.f32 %v2234, %v2241
  %v2247 = vsub.f32 %v2235, %v2244
  %v2248 = vmul.f32 %v2245, 1.442695
  %v2249 = vpow.pop %v2248
  %v2250 = vmul.f32 %v2246, 1.442695
  %v2251 = vpow.pop %v2250
  %v2252 = vmul.f32 %v2247, 1.442695
  %v2253 = vpow.pop %v2252
  %v2254 = vsel %vm445, %v2249, 0.0
  %2255 = vadd.xlane.f32.xlu0 %v2254
  %v2256 = vpop.xlane.xlu0 %2255
  %v2257 = vsel %vm445, %v2251, 0.0
  %2258 = vadd.xlane.f32.xlu0 %v2257
  %v2259 = vpop.xlane.xlu0 %2258
  %v2260 = vsel %vm445, %v2253, 0.0
  %2261 = vadd.xlane.f32.xlu0 %v2260
  %v2262 = vpop.xlane.xlu0 %2261
  %v2263 = vrcp.pop %v2256
  %v2264 = vrcp.pop %v2259
  %v2265 = vrcp.pop %v2262
  %v2266 = vmul.f32 %v2249, %v2263
  %v2267 = vmul.f32 %v2251, %v2264
  %v2268 = vmul.f32 %v2253, %v2265
  %v2270 = vsel %vm445, %v2266, 0
  %v2273 = vsel %vm445, %v2267, 0
  %v2276 = vsel %vm445, %v2268, 0
  %2278 = vmatprep.subr.mxu0 0.0
  %2279 = vmatpush1.msra.mxu0 0.0
  %2280 = vmatprep.subr.mxu0 0.0
  %2281 = vmatpush1.msra.mxu0 0.0
  %2282 = vmatprep.subr.mxu0 0.0
  %2283 = vmatpush1.msra.mxu0 0.0
  %2284 = vmatprep.subr.mxu0 0.0
  %2285 = vmatpush1.msra.mxu0 0.0
  %2286 = vmatprep.subr.mxu0 0.0
  %2287 = vmatpush1.msra.mxu0 0.0
  %2288 = vmatprep.subr.mxu0 0.0
  %2289 = vmatpush1.msra.mxu0 0.0
  %2290 = vmatprep.subr.mxu0 0.0
  %2291 = vmatpush1.msra.mxu0 0.0
  %2292 = vmatprep.subr.mxu0 0.0
  %2293 = vmatpush1.msra.mxu0 0.0
  %2294 = vmatprep.subr.mxu0 0.0
  %2295 = vmatpush1.msra.mxu0 0.0
  %2296 = vmatprep.subr.mxu0 0.0
  %2297 = vmatpush1.msra.mxu0 0.0
  %2298 = vmatprep.subr.mxu0 0.0
  %2299 = vmatpush1.msra.mxu0 0.0
  %2300 = vmatprep.subr.mxu0 0.0
  %2301 = vmatpush1.msra.mxu0 0.0
  %2302 = vmatprep.subr.mxu0 0.0
  %2303 = vmatpush1.msra.mxu0 0.0
  %2304 = vmatprep.subr.mxu0 0.0
  %2305 = vmatpush1.msra.mxu0 %v2129
  %2306 = vmatprep.subr.mxu0 0.0
  %2307 = vmatpush1.msra.mxu0 %v2124
  %2308 = vmatprep.subr.mxu0 0.0
  %2309 = vmatpush1.msra.mxu0 %v2119
  %2310 = vmatprep.subr.mxu0 0.0
  %2311 = vmatpush2.msra.mxu0 0.0
  %2312 = vmatprep.subr.mxu0 0.0
  %2313 = vmatpush2.msra.mxu0 0.0
  %2314 = vmatprep.subr.mxu0 0.0
  %2315 = vmatpush2.msra.mxu0 0.0
  %2316 = vmatprep.subr.mxu0 0.0
  %2317 = vmatpush2.msra.mxu0 0.0
  %2318 = vmatprep.subr.mxu0 0.0
  %2319 = vmatpush2.msra.mxu0 0.0
  %2320 = vmatprep.subr.mxu0 0.0
  %2321 = vmatpush2.msra.mxu0 0.0
  %2322 = vmatprep.subr.mxu0 0.0
  %2323 = vmatpush2.msra.mxu0 0.0
  %2324 = vmatprep.subr.mxu0 0.0
  %2325 = vmatpush2.msra.mxu0 0.0
  %2326 = vmatprep.subr.mxu0 0.0
  %2327 = vmatpush2.msra.mxu0 0.0
  %2328 = vmatprep.subr.mxu0 0.0
  %2329 = vmatpush2.msra.mxu0 0.0
  %2330 = vmatprep.subr.mxu0 0.0
  %2331 = vmatpush2.msra.mxu0 0.0
  %2332 = vmatprep.subr.mxu0 0.0
  %2333 = vmatpush2.msra.mxu0 0.0
  %2334 = vmatprep.subr.mxu0 0.0
  %2335 = vmatpush2.msra.mxu0 0.0
  %2336 = vmatprep.subr.mxu0 0.0
  %2337 = vmatpush2.msra.mxu0 0.0
  %2338 = vmatprep.subr.mxu0 0.0
  %2339 = vmatpush2.msra.mxu0 0.0
  %2340 = vmatprep.subr.mxu0 0.0
  %2341 = vmatpush2.msra.mxu0 0.0
  %2342 = vmatprep.mubr.f32.mxu0 0.0
  %2343 = vmatmul.mubr.f32.gmra.mxu0 %v2270
  %v2344 = vpop.f32.mrf.mxu0
  %v2345 = vadd.f32 0.0, %v2344
  %v2346 = vpop.f32.mrf.mxu0
  %2347 = vmatprep.mubr.f32.mxu0 0.0
  %2348 = vmatmul.mubr.f32.gmra.mxu0 %v2273
  %v2349 = vpop.f32.mrf.mxu0
  %v2350 = vadd.f32 0.0, %v2349
  %v2351 = vpop.f32.mrf.mxu0
  %2352 = vmatprep.mubr.f32.mxu0 0.0
  %2353 = vmatmul.mubr.f32.gmra.mxu0 %v2276
  %v2354 = vpop.f32.mrf.mxu0
  %v2355 = vadd.f32 0.0, %v2354
  %v2356 = vpop.f32.mrf.mxu0
  %2357 = vdwg.mxu0
  %s2358 = scalar_lea.vmem %s4, 24
  %v2359 = vld [vmem:[%s2358] sm:$0xff]
  %v2361 = vsel %vm340, %v2345, 0
  %v2364 = vsel %vm340, %v2350, 0
  %v2367 = vsel %vm340, %v2355, 0
  %2369 = vmatprep.subr.mxu0 0.0
  %2370 = vmatpush1.msra.mxu0 0.0
  %2371 = vmatprep.subr.mxu0 0.0
  %2372 = vmatpush1.msra.mxu0 0.0
  %2373 = vmatprep.subr.mxu0 0.0
  %2374 = vmatpush1.msra.mxu0 0.0
  %2375 = vmatprep.subr.mxu0 0.0
  %2376 = vmatpush1.msra.mxu0 0.0
  %2377 = vmatprep.subr.mxu0 0.0
  %2378 = vmatpush1.msra.mxu0 0.0
  %2379 = vmatprep.subr.mxu0 0.0
  %2380 = vmatpush1.msra.mxu0 0.0
  %2381 = vmatprep.subr.mxu0 0.0
  %2382 = vmatpush1.msra.mxu0 0.0
  %2383 = vmatprep.subr.mxu0 0.0
  %2384 = vmatpush1.msra.mxu0 0.0
  %2385 = vmatprep.subr.mxu0 0.0
  %2386 = vmatpush1.msra.mxu0 0.0
  %2387 = vmatprep.subr.mxu0 0.0
  %2388 = vmatpush1.msra.mxu0 0.0
  %2389 = vmatprep.subr.mxu0 0.0
  %2390 = vmatpush1.msra.mxu0 0.0
  %2391 = vmatprep.subr.mxu0 0.0
  %2392 = vmatpush1.msra.mxu0 0.0
  %2393 = vmatprep.subr.mxu0 0.0
  %2394 = vmatpush1.msra.mxu0 0.0
  %2395 = vmatprep.subr.mxu0 0.0
  %2396 = vmatpush1.msra.mxu0 0.0
  %2397 = vmatprep.subr.mxu0 0.0
  %2398 = vmatpush1.msra.mxu0 0.0
  %2399 = vmatprep.subr.mxu0 0.0
  %2400 = vmatpush1.msra.mxu0 %v2359
  %2401 = vmatprep.subr.mxu0 0.0
  %2402 = vmatpush2.msra.mxu0 0.0
  %2403 = vmatprep.subr.mxu0 0.0
  %2404 = vmatpush2.msra.mxu0 0.0
  %2405 = vmatprep.subr.mxu0 0.0
  %2406 = vmatpush2.msra.mxu0 0.0
  %2407 = vmatprep.subr.mxu0 0.0
  %2408 = vmatpush2.msra.mxu0 0.0
  %2409 = vmatprep.subr.mxu0 0.0
  %2410 = vmatpush2.msra.mxu0 0.0
  %2411 = vmatprep.subr.mxu0 0.0
  %2412 = vmatpush2.msra.mxu0 0.0
  %2413 = vmatprep.subr.mxu0 0.0
  %2414 = vmatpush2.msra.mxu0 0.0
  %2415 = vmatprep.subr.mxu0 0.0
  %2416 = vmatpush2.msra.mxu0 0.0
  %2417 = vmatprep.subr.mxu0 0.0
  %2418 = vmatpush2.msra.mxu0 0.0
  %2419 = vmatprep.subr.mxu0 0.0
  %2420 = vmatpush2.msra.mxu0 0.0
  %2421 = vmatprep.subr.mxu0 0.0
  %2422 = vmatpush2.msra.mxu0 0.0
  %2423 = vmatprep.subr.mxu0 0.0
  %2424 = vmatpush2.msra.mxu0 0.0
  %2425 = vmatprep.subr.mxu0 0.0
  %2426 = vmatpush2.msra.mxu0 0.0
  %2427 = vmatprep.subr.mxu0 0.0
  %2428 = vmatpush2.msra.mxu0 0.0
  %2429 = vmatprep.subr.mxu0 0.0
  %2430 = vmatpush2.msra.mxu0 0.0
  %2431 = vmatprep.subr.mxu0 0.0
  %2432 = vmatpush2.msra.mxu0 0.0
  %2433 = vmatprep.mubr.f32.mxu0 0.0
  %2434 = vmatmul.mubr.f32.gmra.mxu0 %v2361
  %v2435 = vpop.f32.mrf.mxu0
  %v2436 = vadd.f32 0.0, %v2435
  %v2437 = vpop.f32.mrf.mxu0
  %2438 = vmatprep.mubr.f32.mxu0 0.0
  %2439 = vmatmul.mubr.f32.gmra.mxu0 %v2364
  %v2440 = vpop.f32.mrf.mxu0
  %v2441 = vadd.f32 0.0, %v2440
  %v2442 = vpop.f32.mrf.mxu0
  %2443 = vmatprep.mubr.f32.mxu0 0.0
  %2444 = vmatmul.mubr.f32.gmra.mxu0 %v2367
  %v2445 = vpop.f32.mrf.mxu0
  %v2446 = vadd.f32 0.0, %v2445
  %v2447 = vpop.f32.mrf.mxu0
  %2448 = vdwg.mxu0
  %v2449 = vadd.f32 %v1850, %v2436
  %v2450 = vadd.f32 %v1851, %v2441
  %v2451 = vadd.f32 %v1852, %v2446
  %v2452 = vld [vmem:[%s5] sm:$0x1]
  %v2454 = vlaneseq
  %v2455 = vshrl.u32 %v2454, 7
  %v2456 = vsub.s32 0, %v2455
  %v2457 = vrot.slane %v2452, %v2456
  %v2459 = vadd.f32 %v2449, %v2457
  %v2460 = vadd.f32 %v2450, %v2457
  %v2461 = vadd.f32 %v2451, %v2457
  %v2462 = vadd.f32 %v47, %v2459
  %v2463 = vadd.f32 %v48, %v2460
  %v2464 = vadd.f32 %v49, %v2461
  %v2465 = vld [vmem:[%s6] sm:$0x1]
  %v2466 = vld [vmem:[%s7] sm:$0x1]
  %v2467 = vsel %vm64, %v2462, 0.0
  %2468 = vadd.xlane.f32.xlu0 %v2467
  %v2469 = vpop.xlane.xlu0 %2468
  %v2470 = vsel %vm64, %v2463, 0.0
  %2471 = vadd.xlane.f32.xlu0 %v2470
  %v2472 = vpop.xlane.xlu0 %2471
  %v2473 = vsel %vm64, %v2464, 0.0
  %2474 = vadd.xlane.f32.xlu0 %v2473
  %v2475 = vpop.xlane.xlu0 %2474
  %v2476 = vrcp.pop 32.0
  %v2477 = vmul.f32 %v2469, %v2476
  %v2478 = vmul.f32 %v2472, %v2476
  %v2479 = vmul.f32 %v2475, %v2476
  %v2480 = vsub.f32 %v2462, %v2477
  %v2481 = vsub.f32 %v2463, %v2478
  %v2482 = vsub.f32 %v2464, %v2479
  %v2483 = vmul.f32 %v2480, %v2480
  %v2484 = vmul.f32 %v2481, %v2481
  %v2485 = vmul.f32 %v2482, %v2482
  %v2486 = vsel %vm64, %v2483, 0.0
  %2487 = vadd.xlane.f32.xlu0 %v2486
  %v2488 = vpop.xlane.xlu0 %2487
  %v2489 = vsel %vm64, %v2484, 0.0
  %2490 = vadd.xlane.f32.xlu0 %v2489
  %v2491 = vpop.xlane.xlu0 %2490
  %v2492 = vsel %vm64, %v2485, 0.0
  %2493 = vadd.xlane.f32.xlu0 %v2492
  %v2494 = vpop.xlane.xlu0 %2493
  %v2495 = vmul.f32 %v2488, %v2476
  %v2496 = vmul.f32 %v2491, %v2476
  %v2497 = vmul.f32 %v2494, %v2476
  %v2498 = vadd.f32 %v2495, 1e-05
  %v2499 = vadd.f32 %v2496, 1e-05
  %v2500 = vadd.f32 %v2497, 1e-05
  %v2501 = vrsqrt.pop %v2498
  %v2502 = vrsqrt.pop %v2499
  %v2503 = vrsqrt.pop %v2500
  %v2504 = vmul.f32 %v2480, %v2501
  %v2505 = vmul.f32 %v2481, %v2502
  %v2506 = vmul.f32 %v2482, %v2503
  %v2508 = vlaneseq
  %v2509 = vshrl.u32 %v2508, 7
  %v2510 = vsub.s32 0, %v2509
  %v2511 = vrot.slane %v2465, %v2510
  %v2513 = vmul.f32 %v2504, %v2511
  %v2514 = vmul.f32 %v2505, %v2511
  %v2515 = vmul.f32 %v2506, %v2511
  %v2517 = vlaneseq
  %v2518 = vshrl.u32 %v2517, 7
  %v2519 = vsub.s32 0, %v2518
  %v2520 = vrot.slane %v2466, %v2519
  %v2522 = vadd.f32 %v2513, %v2520
  %v2523 = vadd.f32 %v2514, %v2520
  %v2524 = vadd.f32 %v2515, %v2520
  %v2525 = vld [vmem:[%s8] sm:$0xff]
  %v2526 = vld [vmem:[%s8 + $0x8] sm:$0xff]
  %v2527 = vld [vmem:[%s8 + $0x10] sm:$0xff]
  %v2528 = vld [vmem:[%s8 + $0x18] sm:$0xff]
  %v2529 = vld [vmem:[%s9] sm:$0x1]
  %v2531 = vlaneseq
  %v2532 = vshrl.u32 %v2531, 7
  %v2533 = vsub.s32 0, %v2532
  %v2534 = vrot.slane %v2529, %v2533
  %v2537 = vsel %vm64, %v2522, 0
  %v2540 = vsel %vm64, %v2523, 0
  %v2543 = vsel %vm64, %v2524, 0
  %2545 = vmatprep.subr.mxu0 0.0
  %2546 = vmatpush1.msra.mxu0 0.0
  %2547 = vmatprep.subr.mxu0 0.0
  %2548 = vmatpush1.msra.mxu0 0.0
  %2549 = vmatprep.subr.mxu0 0.0
  %2550 = vmatpush1.msra.mxu0 0.0
  %2551 = vmatprep.subr.mxu0 0.0
  %2552 = vmatpush1.msra.mxu0 0.0
  %2553 = vmatprep.subr.mxu0 0.0
  %2554 = vmatpush1.msra.mxu0 0.0
  %2555 = vmatprep.subr.mxu0 0.0
  %2556 = vmatpush1.msra.mxu0 0.0
  %2557 = vmatprep.subr.mxu0 0.0
  %2558 = vmatpush1.msra.mxu0 0.0
  %2559 = vmatprep.subr.mxu0 0.0
  %2560 = vmatpush1.msra.mxu0 0.0
  %2561 = vmatprep.subr.mxu0 0.0
  %2562 = vmatpush1.msra.mxu0 0.0
  %2563 = vmatprep.subr.mxu0 0.0
  %2564 = vmatpush1.msra.mxu0 0.0
  %2565 = vmatprep.subr.mxu0 0.0
  %2566 = vmatpush1.msra.mxu0 0.0
  %2567 = vmatprep.subr.mxu0 0.0
  %2568 = vmatpush1.msra.mxu0 0.0
  %2569 = vmatprep.subr.mxu0 0.0
  %2570 = vmatpush1.msra.mxu0 %v2528
  %2571 = vmatprep.subr.mxu0 0.0
  %2572 = vmatpush1.msra.mxu0 %v2527
  %2573 = vmatprep.subr.mxu0 0.0
  %2574 = vmatpush1.msra.mxu0 %v2526
  %2575 = vmatprep.subr.mxu0 0.0
  %2576 = vmatpush1.msra.mxu0 %v2525
  %2577 = vmatprep.subr.mxu0 0.0
  %2578 = vmatpush2.msra.mxu0 0.0
  %2579 = vmatprep.subr.mxu0 0.0
  %2580 = vmatpush2.msra.mxu0 0.0
  %2581 = vmatprep.subr.mxu0 0.0
  %2582 = vmatpush2.msra.mxu0 0.0
  %2583 = vmatprep.subr.mxu0 0.0
  %2584 = vmatpush2.msra.mxu0 0.0
  %2585 = vmatprep.subr.mxu0 0.0
  %2586 = vmatpush2.msra.mxu0 0.0
  %2587 = vmatprep.subr.mxu0 0.0
  %2588 = vmatpush2.msra.mxu0 0.0
  %2589 = vmatprep.subr.mxu0 0.0
  %2590 = vmatpush2.msra.mxu0 0.0
  %2591 = vmatprep.subr.mxu0 0.0
  %2592 = vmatpush2.msra.mxu0 0.0
  %2593 = vmatprep.subr.mxu0 0.0
  %2594 = vmatpush2.msra.mxu0 0.0
  %2595 = vmatprep.subr.mxu0 0.0
  %2596 = vmatpush2.msra.mxu0 0.0
  %2597 = vmatprep.subr.mxu0 0.0
  %2598 = vmatpush2.msra.mxu0 0.0
  %2599 = vmatprep.subr.mxu0 0.0
  %2600 = vmatpush2.msra.mxu0 0.0
  %2601 = vmatprep.subr.mxu0 0.0
  %2602 = vmatpush2.msra.mxu0 0.0
  %2603 = vmatprep.subr.mxu0 0.0
  %2604 = vmatpush2.msra.mxu0 0.0
  %2605 = vmatprep.subr.mxu0 0.0
  %2606 = vmatpush2.msra.mxu0 0.0
  %2607 = vmatprep.subr.mxu0 0.0
  %2608 = vmatpush2.msra.mxu0 0.0
  %2609 = vmatprep.mubr.f32.mxu0 0.0
  %2610 = vmatmul.mubr.f32.gmra.mxu0 %v2537
  %v2611 = vpop.f32.mrf.mxu0
  %v2612 = vadd.f32 %v2534, %v2611
  %v2613 = vpop.f32.mrf.mxu0
  %2614 = vmatprep.mubr.f32.mxu0 0.0
  %2615 = vmatmul.mubr.f32.gmra.mxu0 %v2540
  %v2616 = vpop.f32.mrf.mxu0
  %v2617 = vadd.f32 %v2534, %v2616
  %v2618 = vpop.f32.mrf.mxu0
  %2619 = vmatprep.mubr.f32.mxu0 0.0
  %2620 = vmatmul.mubr.f32.gmra.mxu0 %v2543
  %v2621 = vpop.f32.mrf.mxu0
  %v2622 = vadd.f32 %v2534, %v2621
  %v2623 = vpop.f32.mrf.mxu0
  %2624 = vdwg.mxu0
  %v2625 = vmax.f32 %v2612, 0.0
  %v2626 = vmax.f32 %v2617, 0.0
  %v2627 = vmax.f32 %v2622, 0.0
  %v2628 = vld [vmem:[%s10] sm:$0xff]
  %v2629 = vld [vmem:[%s10 + $0x8] sm:$0xff]
  %v2630 = vld [vmem:[%s10 + $0x10] sm:$0xff]
  %v2631 = vld [vmem:[%s10 + $0x18] sm:$0xff]
  %v2632 = vld [vmem:[%s10 + $0x20] sm:$0xff]
  %v2633 = vld [vmem:[%s10 + $0x28] sm:$0xff]
  %v2634 = vld [vmem:[%s10 + $0x30] sm:$0xff]
  %v2635 = vld [vmem:[%s10 + $0x38] sm:$0xff]
  %v2636 = vld [vmem:[%s11] sm:$0x1]
  %v2638 = vlaneseq
  %v2639 = vshrl.u32 %v2638, 7
  %v2640 = vsub.s32 0, %v2639
  %v2641 = vrot.slane %v2636, %v2640
  %vm2643 = vcmask 523264
  %v2645 = vsel %vm2643, %v2625, 0
  %v2648 = vsel %vm2643, %v2626, 0
  %v2651 = vsel %vm2643, %v2627, 0
  %2653 = vmatprep.subr.mxu0 0.0
  %2654 = vmatpush1.msra.mxu0 0.0
  %2655 = vmatprep.subr.mxu0 0.0
  %2656 = vmatpush1.msra.mxu0 0.0
  %2657 = vmatprep.subr.mxu0 0.0
  %2658 = vmatpush1.msra.mxu0 0.0
  %2659 = vmatprep.subr.mxu0 0.0
  %2660 = vmatpush1.msra.mxu0 0.0
  %2661 = vmatprep.subr.mxu0 0.0
  %2662 = vmatpush1.msra.mxu0 0.0
  %2663 = vmatprep.subr.mxu0 0.0
  %2664 = vmatpush1.msra.mxu0 0.0
  %2665 = vmatprep.subr.mxu0 0.0
  %2666 = vmatpush1.msra.mxu0 0.0
  %2667 = vmatprep.subr.mxu0 0.0
  %2668 = vmatpush1.msra.mxu0 0.0
  %2669 = vmatprep.subr.mxu0 0.0
  %2670 = vmatpush1.msra.mxu0 %v2635
  %2671 = vmatprep.subr.mxu0 0.0
  %2672 = vmatpush1.msra.mxu0 %v2634
  %2673 = vmatprep.subr.mxu0 0.0
  %2674 = vmatpush1.msra.mxu0 %v2633
  %2675 = vmatprep.subr.mxu0 0.0
  %2676 = vmatpush1.msra.mxu0 %v2632
  %2677 = vmatprep.subr.mxu0 0.0
  %2678 = vmatpush1.msra.mxu0 %v2631
  %2679 = vmatprep.subr.mxu0 0.0
  %2680 = vmatpush1.msra.mxu0 %v2630
  %2681 = vmatprep.subr.mxu0 0.0
  %2682 = vmatpush1.msra.mxu0 %v2629
  %2683 = vmatprep.subr.mxu0 0.0
  %2684 = vmatpush1.msra.mxu0 %v2628
  %2685 = vmatprep.subr.mxu0 0.0
  %2686 = vmatpush2.msra.mxu0 0.0
  %2687 = vmatprep.subr.mxu0 0.0
  %2688 = vmatpush2.msra.mxu0 0.0
  %2689 = vmatprep.subr.mxu0 0.0
  %2690 = vmatpush2.msra.mxu0 0.0
  %2691 = vmatprep.subr.mxu0 0.0
  %2692 = vmatpush2.msra.mxu0 0.0
  %2693 = vmatprep.subr.mxu0 0.0
  %2694 = vmatpush2.msra.mxu0 0.0
  %2695 = vmatprep.subr.mxu0 0.0
  %2696 = vmatpush2.msra.mxu0 0.0
  %2697 = vmatprep.subr.mxu0 0.0
  %2698 = vmatpush2.msra.mxu0 0.0
  %2699 = vmatprep.subr.mxu0 0.0
  %2700 = vmatpush2.msra.mxu0 0.0
  %2701 = vmatprep.subr.mxu0 0.0
  %2702 = vmatpush2.msra.mxu0 0.0
  %2703 = vmatprep.subr.mxu0 0.0
  %2704 = vmatpush2.msra.mxu0 0.0
  %2705 = vmatprep.subr.mxu0 0.0
  %2706 = vmatpush2.msra.mxu0 0.0
  %2707 = vmatprep.subr.mxu0 0.0
  %2708 = vmatpush2.msra.mxu0 0.0
  %2709 = vmatprep.subr.mxu0 0.0
  %2710 = vmatpush2.msra.mxu0 0.0
  %2711 = vmatprep.subr.mxu0 0.0
  %2712 = vmatpush2.msra.mxu0 0.0
  %2713 = vmatprep.subr.mxu0 0.0
  %2714 = vmatpush2.msra.mxu0 0.0
  %2715 = vmatprep.subr.mxu0 0.0
  %2716 = vmatpush2.msra.mxu0 0.0
  %2717 = vmatprep.mubr.f32.mxu0 0.0
  %2718 = vmatmul.mubr.f32.gmra.mxu0 %v2645
  %v2719 = vpop.f32.mrf.mxu0
  %v2720 = vadd.f32 %v2641, %v2719
  %v2721 = vpop.f32.mrf.mxu0
  %2722 = vmatprep.mubr.f32.mxu0 0.0
  %2723 = vmatmul.mubr.f32.gmra.mxu0 %v2648
  %v2724 = vpop.f32.mrf.mxu0
  %v2725 = vadd.f32 %v2641, %v2724
  %v2726 = vpop.f32.mrf.mxu0
  %2727 = vmatprep.mubr.f32.mxu0 0.0
  %2728 = vmatmul.mubr.f32.gmra.mxu0 %v2651
  %v2729 = vpop.f32.mrf.mxu0
  %v2730 = vadd.f32 %v2641, %v2729
  %v2731 = vpop.f32.mrf.mxu0
  %2732 = vdwg.mxu0
  %v2733 = vadd.f32 %v2522, %v2720
  %v2734 = vadd.f32 %v2523, %v2725
  %v2735 = vadd.f32 %v2524, %v2730
  %v2736 = vld [vmem:[%s12] sm:$0x1]
  %v2737 = vld [vmem:[%s13] sm:$0x1]
  %v2738 = vsel %vm64, %v2733, 0.0
  %2739 = vadd.xlane.f32.xlu0 %v2738
  %v2740 = vpop.xlane.xlu0 %2739
  %v2741 = vsel %vm64, %v2734, 0.0
  %2742 = vadd.xlane.f32.xlu0 %v2741
  %v2743 = vpop.xlane.xlu0 %2742
  %v2744 = vsel %vm64, %v2735, 0.0
  %2745 = vadd.xlane.f32.xlu0 %v2744
  %v2746 = vpop.xlane.xlu0 %2745
  %v2747 = vmul.f32 %v2740, %v2476
  %v2748 = vmul.f32 %v2743, %v2476
  %v2749 = vmul.f32 %v2746, %v2476
  %v2750 = vsub.f32 %v2733, %v2747
  %v2751 = vsub.f32 %v2734, %v2748
  %v2752 = vsub.f32 %v2735, %v2749
  %v2753 = vmul.f32 %v2750, %v2750
  %v2754 = vmul.f32 %v2751, %v2751
  %v2755 = vmul.f32 %v2752, %v2752
  %v2756 = vsel %vm64, %v2753, 0.0
  %2757 = vadd.xlane.f32.xlu0 %v2756
  %v2758 = vpop.xlane.xlu0 %2757
  %v2759 = vsel %vm64, %v2754, 0.0
  %2760 = vadd.xlane.f32.xlu0 %v2759
  %v2761 = vpop.xlane.xlu0 %2760
  %v2762 = vsel %vm64, %v2755, 0.0
  %2763 = vadd.xlane.f32.xlu0 %v2762
  %v2764 = vpop.xlane.xlu0 %2763
  %v2765 = vmul.f32 %v2758, %v2476
  %v2766 = vmul.f32 %v2761, %v2476
  %v2767 = vmul.f32 %v2764, %v2476
  %v2768 = vadd.f32 %v2765, 1e-05
  %v2769 = vadd.f32 %v2766, 1e-05
  %v2770 = vadd.f32 %v2767, 1e-05
  %v2771 = vrsqrt.pop %v2768
  %v2772 = vrsqrt.pop %v2769
  %v2773 = vrsqrt.pop %v2770
  %v2774 = vmul.f32 %v2750, %v2771
  %v2775 = vmul.f32 %v2751, %v2772
  %v2776 = vmul.f32 %v2752, %v2773
  %v2778 = vlaneseq
  %v2779 = vshrl.u32 %v2778, 7
  %v2780 = vsub.s32 0, %v2779
  %v2781 = vrot.slane %v2736, %v2780
  %v2783 = vmul.f32 %v2774, %v2781
  %v2784 = vmul.f32 %v2775, %v2781
  %v2785 = vmul.f32 %v2776, %v2781
  %v2787 = vlaneseq
  %v2788 = vshrl.u32 %v2787, 7
  %v2789 = vsub.s32 0, %v2788
  %v2790 = vrot.slane %v2737, %v2789
  %v2792 = vadd.f32 %v2783, %v2790
  %v2793 = vadd.f32 %v2784, %v2790
  %v2794 = vadd.f32 %v2785, %v2790
  %2795 = vst.msk [vmem:[%s14] sm:$0xff] %vm64, %v2792
  %2796 = vst.msk [vmem:[%s14 + $0x8] sm:$0xff] %vm64, %v2793
  %2797 = vst.msk [vmem:[%s14 + $0x10] sm:$0xff] %vm64, %v2794
  // Predicated region
  $region58: #{_lambda_.8} parent=0 // pred_check
    _
  $region59: #{_lambda_.8} parent=0 // pred_check_branch
    %2799 = sbr.rel (0) target = $region61
  $region60: #{_lambda_.8} parent=0 // pred_region
    _
  $region61: #{_lambda_.8} parent=0 // pred_fallthru
    _
  // Predicated region
  $region62: #{_lambda_.8} parent=0 // pred_check
    _
  $region63: #{_lambda_.8} parent=0 // pred_check_branch
    %2801 = sbr.rel (0) target = $region65
  $region64: #{_lambda_.8} parent=0 // pred_region
    _
  $region65: #{_lambda_.8} parent=0 // pred_fallthru
    _

// kernel: _lambda_.10
$region0: #{_lambda_.10}
  #allocation0 [shape = 'u32[]', space=smem, size = 0x4, offset = 0x4, fixed_abs, tag = 'smem constant byte address 0x4 - core index']
  #allocation1 [shape = 'u32[144,128]{1,0:T(1,128)}', space=vmem, size = 0x12000, scoped, tag = 'internal scratch']
  %s0 = inlined_call_operand.vmem [shape: f32[24,32], index: 0, kind: input, shape index: {}]
  %s1 = inlined_call_operand.vmem [shape: f32[24,32], index: 1, kind: input, shape index: {}]
  %s2 = inlined_call_operand.vmem [shape: f32[24,24], index: 2, kind: input, shape index: {}]
  %s3 = inlined_call_operand.vmem [shape: f32[24,24], index: 3, kind: input, shape index: {}]
  %s4 = inlined_call_operand.vmem [shape: f32[3,4,32,8], index: 4, kind: input, shape index: {}]
  %s5 = inlined_call_operand.vmem [shape: f32[3,4,1,8], index: 5, kind: input, shape index: {}]
  %s6 = inlined_call_operand.vmem [shape: f32[4,8,32], index: 6, kind: input, shape index: {}]
  %s7 = inlined_call_operand.vmem [shape: f32[1,32], index: 7, kind: input, shape index: {}]
  %s8 = inlined_call_operand.vmem [shape: f32[3,4,32,8], index: 8, kind: input, shape index: {}]
  %s9 = inlined_call_operand.vmem [shape: f32[3,4,1,8], index: 9, kind: input, shape index: {}]
  %s10 = inlined_call_operand.vmem [shape: f32[4,8,32], index: 10, kind: input, shape index: {}]
  %s11 = inlined_call_operand.vmem [shape: f32[1,32], index: 11, kind: input, shape index: {}]
  %s12 = inlined_call_operand.vmem [shape: f32[1,32], index: 12, kind: input, shape index: {}]
  %s13 = inlined_call_operand.vmem [shape: f32[1,32], index: 13, kind: input, shape index: {}]
  %s14 = inlined_call_operand.vmem [shape: f32[1,32], index: 14, kind: input, shape index: {}]
  %s15 = inlined_call_operand.vmem [shape: f32[1,32], index: 15, kind: input, shape index: {}]
  %s16 = inlined_call_operand.vmem [shape: f32[1,32], index: 16, kind: input, shape index: {}]
  %s17 = inlined_call_operand.vmem [shape: f32[1,32], index: 17, kind: input, shape index: {}]
  %s18 = inlined_call_operand.vmem [shape: f32[32,64], index: 18, kind: input, shape index: {}]
  %s19 = inlined_call_operand.vmem [shape: f32[1,64], index: 19, kind: input, shape index: {}]
  %s20 = inlined_call_operand.vmem [shape: f32[64,32], index: 20, kind: input, shape index: {}]
  %s21 = inlined_call_operand.vmem [shape: f32[1,32], index: 21, kind: input, shape index: {}]
  %s22 = inlined_call_operand.vmem [shape: f32[24,32], index: 22, kind: output, shape index: {}]
  %s23 = sld [smem:[#allocation0]]
  $region98: #{_lambda_.10} parent=0
    _
  %s25 = ssub.s32 1, %s23
  %s26 = scalar_select 0, %s25, %s23
  // Predicated region
  $region2: #{_lambda_.10} parent=0 // pred_check
    _
  $region3: #{_lambda_.10} parent=0 // pred_check_branch
    %28 = sbr.rel (0) target = $region5
  $region4: #{_lambda_.10} parent=0 // pred_region
    _
  $region5: #{_lambda_.10} parent=0 // pred_fallthru
    _
  // Predicated region
  $region6: #{_lambda_.10} parent=0 // pred_check
    _
  $region7: #{_lambda_.10} parent=0 // pred_check_branch
    %30 = sbr.rel (0) target = $region9
  $region8: #{_lambda_.10} parent=0 // pred_region
    _
  $region9: #{_lambda_.10} parent=0 // pred_fallthru
    _
  // Predicated region
  $region10: #{_lambda_.10} parent=0 // pred_check
    _
  $region11: #{_lambda_.10} parent=0 // pred_check_branch
    %32 = sbr.rel (0) target = $region13
  $region12: #{_lambda_.10} parent=0 // pred_region
    _
  $region13: #{_lambda_.10} parent=0 // pred_fallthru
    _
  // Predicated region
  $region14: #{_lambda_.10} parent=0 // pred_check
    _
  $region15: #{_lambda_.10} parent=0 // pred_check_branch
    %34 = sbr.rel (0) target = $region17
  $region16: #{_lambda_.10} parent=0 // pred_region
    _
  $region17: #{_lambda_.10} parent=0 // pred_fallthru
    _
  // Predicated region
  $region18: #{_lambda_.10} parent=0 // pred_check
    _
  $region19: #{_lambda_.10} parent=0 // pred_check_branch
    %36 = sbr.rel (0) target = $region21
  $region20: #{_lambda_.10} parent=0 // pred_region
    _
  $region21: #{_lambda_.10} parent=0 // pred_fallthru
    _
  // Predicated region
  $region22: #{_lambda_.10} parent=0 // pred_check
    _
  $region23: #{_lambda_.10} parent=0 // pred_check_branch
    %38 = sbr.rel (0) target = $region25
  $region24: #{_lambda_.10} parent=0 // pred_region
    _
  $region25: #{_lambda_.10} parent=0 // pred_fallthru
    _
  // Predicated region
  $region26: #{_lambda_.10} parent=0 // pred_check
    _
  $region27: #{_lambda_.10} parent=0 // pred_check_branch
    %40 = sbr.rel (0) target = $region29
  $region28: #{_lambda_.10} parent=0 // pred_region
    _
  $region29: #{_lambda_.10} parent=0 // pred_fallthru
    _
  // Predicated region
  $region30: #{_lambda_.10} parent=0 // pred_check
    _
  $region31: #{_lambda_.10} parent=0 // pred_check_branch
    %42 = sbr.rel (0) target = $region33
  $region32: #{_lambda_.10} parent=0 // pred_region
    _
  $region33: #{_lambda_.10} parent=0 // pred_fallthru
    _
  // Predicated region
  $region34: #{_lambda_.10} parent=0 // pred_check
    _
  $region35: #{_lambda_.10} parent=0 // pred_check_branch
    %44 = sbr.rel (0) target = $region37
  $region36: #{_lambda_.10} parent=0 // pred_region
    _
  $region37: #{_lambda_.10} parent=0 // pred_fallthru
    _
  // Predicated region
  $region38: #{_lambda_.10} parent=0 // pred_check
    _
  $region39: #{_lambda_.10} parent=0 // pred_check_branch
    %46 = sbr.rel (0) target = $region41
  $region40: #{_lambda_.10} parent=0 // pred_region
    _
  $region41: #{_lambda_.10} parent=0 // pred_fallthru
    _
  // Predicated region
  $region42: #{_lambda_.10} parent=0 // pred_check
    _
  $region43: #{_lambda_.10} parent=0 // pred_check_branch
    %48 = sbr.rel (0) target = $region45
  $region44: #{_lambda_.10} parent=0 // pred_region
    _
  $region45: #{_lambda_.10} parent=0 // pred_fallthru
    _
  // Predicated region
  $region46: #{_lambda_.10} parent=0 // pred_check
    _
  $region47: #{_lambda_.10} parent=0 // pred_check_branch
    %50 = sbr.rel (0) target = $region49
  $region48: #{_lambda_.10} parent=0 // pred_region
    _
  $region49: #{_lambda_.10} parent=0 // pred_fallthru
    _
  // Predicated region
  $region50: #{_lambda_.10} parent=0 // pred_check
    _
  $region51: #{_lambda_.10} parent=0 // pred_check_branch
    %52 = sbr.rel (0) target = $region53
  $region52: #{_lambda_.10} parent=0 // pred_region
    _
  $region53: #{_lambda_.10} parent=0 // pred_fallthru
    _
  // Predicated region
  $region54: #{_lambda_.10} parent=0 // pred_check
    _
  $region55: #{_lambda_.10} parent=0 // pred_check_branch
    %54 = sbr.rel (0) target = $region57
  $region56: #{_lambda_.10} parent=0 // pred_region
    _
  $region57: #{_lambda_.10} parent=0 // pred_fallthru
    _
  // Predicated region
  $region58: #{_lambda_.10} parent=0 // pred_check
    _
  $region59: #{_lambda_.10} parent=0 // pred_check_branch
    %56 = sbr.rel (0) target = $region61
  $region60: #{_lambda_.10} parent=0 // pred_region
    _
  $region61: #{_lambda_.10} parent=0 // pred_fallthru
    _
  // Predicated region
  $region62: #{_lambda_.10} parent=0 // pred_check
    _
  $region63: #{_lambda_.10} parent=0 // pred_check_branch
    %58 = sbr.rel (0) target = $region65
  $region64: #{_lambda_.10} parent=0 // pred_region
    _
  $region65: #{_lambda_.10} parent=0 // pred_fallthru
    _
  // Predicated region
  $region66: #{_lambda_.10} parent=0 // pred_check
    _
  $region67: #{_lambda_.10} parent=0 // pred_check_branch
    %60 = sbr.rel (0) target = $region69
  $region68: #{_lambda_.10} parent=0 // pred_region
    _
  $region69: #{_lambda_.10} parent=0 // pred_fallthru
    _
  // Predicated region
  $region70: #{_lambda_.10} parent=0 // pred_check
    _
  $region71: #{_lambda_.10} parent=0 // pred_check_branch
    %62 = sbr.rel (0) target = $region73
  $region72: #{_lambda_.10} parent=0 // pred_region
    _
  $region73: #{_lambda_.10} parent=0 // pred_fallthru
    _
  // Predicated region
  $region74: #{_lambda_.10} parent=0 // pred_check
    _
  $region75: #{_lambda_.10} parent=0 // pred_check_branch
    %64 = sbr.rel (0) target = $region77
  $region76: #{_lambda_.10} parent=0 // pred_region
    _
  $region77: #{_lambda_.10} parent=0 // pred_fallthru
    _
  // Predicated region
  $region78: #{_lambda_.10} parent=0 // pred_check
    _
  $region79: #{_lambda_.10} parent=0 // pred_check_branch
    %66 = sbr.rel (0) target = $region81
  $region80: #{_lambda_.10} parent=0 // pred_region
    _
  $region81: #{_lambda_.10} parent=0 // pred_fallthru
    _
  // Predicated region
  $region82: #{_lambda_.10} parent=0 // pred_check
    _
  $region83: #{_lambda_.10} parent=0 // pred_check_branch
    %68 = sbr.rel (0) target = $region85
  $region84: #{_lambda_.10} parent=0 // pred_region
    _
  $region85: #{_lambda_.10} parent=0 // pred_fallthru
    _
  // Predicated region
  $region86: #{_lambda_.10} parent=0 // pred_check
    _
  $region87: #{_lambda_.10} parent=0 // pred_check_branch
    %70 = sbr.rel (0) target = $region89
  $region88: #{_lambda_.10} parent=0 // pred_region
    _
  $region89: #{_lambda_.10} parent=0 // pred_fallthru
    _
  %v71 = vld [vmem:[%s0] sm:$0xff]
  %v72 = vld [vmem:[%s0 + $0x8] sm:$0xff]
  %v73 = vld [vmem:[%s0 + $0x10] sm:$0xff]
  %v74 = vld [vmem:[%s1] sm:$0xff]
  %v75 = vld [vmem:[%s1 + $0x8] sm:$0xff]
  %v76 = vld [vmem:[%s1 + $0x10] sm:$0xff]
  %v77 = vld [vmem:[%s2] sm:$0xff]
  %v78 = vld [vmem:[%s2 + $0x8] sm:$0xff]
  %v79 = vld [vmem:[%s2 + $0x10] sm:$0xff]
  %v80 = vld [vmem:[%s4] sm:$0xff]
  %v81 = vld [vmem:[%s4 + $0x8] sm:$0xff]
  %v82 = vld [vmem:[%s4 + $0x10] sm:$0xff]
  %v83 = vld [vmem:[%s4 + $0x18] sm:$0xff]
  %v84 = vld [vmem:[%s5] sm:$0x1]
  %v86 = vlaneseq
  %v87 = vshrl.u32 %v86, 7
  %v88 = vsub.s32 0, %v87
  %v89 = vrot.slane %v84, %v88
  %vm91 = vcmask 261120
  %v93 = vsel %vm91, %v71, 0
  %v96 = vsel %vm91, %v72, 0
  %v99 = vsel %vm91, %v73, 0
  %101 = vmatprep.subr.mxu0 0.0
  %102 = vmatpush1.msra.mxu0 0.0
  %103 = vmatprep.subr.mxu0 0.0
  %104 = vmatpush1.msra.mxu0 0.0
  %105 = vmatprep.subr.mxu0 0.0
  %106 = vmatpush1.msra.mxu0 0.0
  %107 = vmatprep.subr.mxu0 0.0
  %108 = vmatpush1.msra.mxu0 0.0
  %109 = vmatprep.subr.mxu0 0.0
  %110 = vmatpush1.msra.mxu0 0.0
  %111 = vmatprep.subr.mxu0 0.0
  %112 = vmatpush1.msra.mxu0 0.0
  %113 = vmatprep.subr.mxu0 0.0
  %114 = vmatpush1.msra.mxu0 0.0
  %115 = vmatprep.subr.mxu0 0.0
  %116 = vmatpush1.msra.mxu0 0.0
  %117 = vmatprep.subr.mxu0 0.0
  %118 = vmatpush1.msra.mxu0 0.0
  %119 = vmatprep.subr.mxu0 0.0
  %120 = vmatpush1.msra.mxu0 0.0
  %121 = vmatprep.subr.mxu0 0.0
  %122 = vmatpush1.msra.mxu0 0.0
  %123 = vmatprep.subr.mxu0 0.0
  %124 = vmatpush1.msra.mxu0 0.0
  %125 = vmatprep.subr.mxu0 0.0
  %126 = vmatpush1.msra.mxu0 %v83
  %127 = vmatprep.subr.mxu0 0.0
  %128 = vmatpush1.msra.mxu0 %v82
  %129 = vmatprep.subr.mxu0 0.0
  %130 = vmatpush1.msra.mxu0 %v81
  %131 = vmatprep.subr.mxu0 0.0
  %132 = vmatpush1.msra.mxu0 %v80
  %133 = vmatprep.subr.mxu0 0.0
  %134 = vmatpush2.msra.mxu0 0.0
  %135 = vmatprep.subr.mxu0 0.0
  %136 = vmatpush2.msra.mxu0 0.0
  %137 = vmatprep.subr.mxu0 0.0
  %138 = vmatpush2.msra.mxu0 0.0
  %139 = vmatprep.subr.mxu0 0.0
  %140 = vmatpush2.msra.mxu0 0.0
  %141 = vmatprep.subr.mxu0 0.0
  %142 = vmatpush2.msra.mxu0 0.0
  %143 = vmatprep.subr.mxu0 0.0
  %144 = vmatpush2.msra.mxu0 0.0
  %145 = vmatprep.subr.mxu0 0.0
  %146 = vmatpush2.msra.mxu0 0.0
  %147 = vmatprep.subr.mxu0 0.0
  %148 = vmatpush2.msra.mxu0 0.0
  %149 = vmatprep.subr.mxu0 0.0
  %150 = vmatpush2.msra.mxu0 0.0
  %151 = vmatprep.subr.mxu0 0.0
  %152 = vmatpush2.msra.mxu0 0.0
  %153 = vmatprep.subr.mxu0 0.0
  %154 = vmatpush2.msra.mxu0 0.0
  %155 = vmatprep.subr.mxu0 0.0
  %156 = vmatpush2.msra.mxu0 0.0
  %157 = vmatprep.subr.mxu0 0.0
  %158 = vmatpush2.msra.mxu0 0.0
  %159 = vmatprep.subr.mxu0 0.0
  %160 = vmatpush2.msra.mxu0 0.0
  %161 = vmatprep.subr.mxu0 0.0
  %162 = vmatpush2.msra.mxu0 0.0
  %163 = vmatprep.subr.mxu0 0.0
  %164 = vmatpush2.msra.mxu0 0.0
  %165 = vmatprep.mubr.f32.mxu0 0.0
  %166 = vmatmul.mubr.f32.gmra.mxu0 %v93
  %v167 = vpop.f32.mrf.mxu0
  %v168 = vadd.f32 %v89, %v167
  %v169 = vpop.f32.mrf.mxu0
  %170 = vmatprep.mubr.f32.mxu0 0.0
  %171 = vmatmul.mubr.f32.gmra.mxu0 %v96
  %v172 = vpop.f32.mrf.mxu0
  %v173 = vadd.f32 %v89, %v172
  %v174 = vpop.f32.mrf.mxu0
  %175 = vmatprep.mubr.f32.mxu0 0.0
  %176 = vmatmul.mubr.f32.gmra.mxu0 %v99
  %v177 = vpop.f32.mrf.mxu0
  %v178 = vadd.f32 %v89, %v177
  %v179 = vpop.f32.mrf.mxu0
  %180 = vdwg.mxu0
  %s181 = scalar_lea.vmem %s4, 128
  %v182 = vld [vmem:[%s181] sm:$0xff]
  %v183 = vld [vmem:[%s181 + $0x8] sm:$0xff]
  %v184 = vld [vmem:[%s181 + $0x10] sm:$0xff]
  %v185 = vld [vmem:[%s181 + $0x18] sm:$0xff]
  %s186 = scalar_lea.vmem %s5, 4
  %v187 = vld [vmem:[%s186] sm:$0x1]
  %v189 = vlaneseq
  %v190 = vshrl.u32 %v189, 7
  %v191 = vsub.s32 0, %v190
  %v192 = vrot.slane %v187, %v191
  %194 = vmatprep.subr.mxu0 0.0
  %195 = vmatpush1.msra.mxu0 0.0
  %196 = vmatprep.subr.mxu0 0.0
  %197 = vmatpush1.msra.mxu0 0.0
  %198 = vmatprep.subr.mxu0 0.0
  %199 = vmatpush1.msra.mxu0 0.0
  %200 = vmatprep.subr.mxu0 0.0
  %201 = vmatpush1.msra.mxu0 0.0
  %202 = vmatprep.subr.mxu0 0.0
  %203 = vmatpush1.msra.mxu0 0.0
  %204 = vmatprep.subr.mxu0 0.0
  %205 = vmatpush1.msra.mxu0 0.0
  %206 = vmatprep.subr.mxu0 0.0
  %207 = vmatpush1.msra.mxu0 0.0
  %208 = vmatprep.subr.mxu0 0.0
  %209 = vmatpush1.msra.mxu0 0.0
  %210 = vmatprep.subr.mxu0 0.0
  %211 = vmatpush1.msra.mxu0 0.0
  %212 = vmatprep.subr.mxu0 0.0
  %213 = vmatpush1.msra.mxu0 0.0
  %214 = vmatprep.subr.mxu0 0.0
  %215 = vmatpush1.msra.mxu0 0.0
  %216 = vmatprep.subr.mxu0 0.0
  %217 = vmatpush1.msra.mxu0 0.0
  %218 = vmatprep.subr.mxu0 0.0
  %219 = vmatpush1.msra.mxu0 %v185
  %220 = vmatprep.subr.mxu0 0.0
  %221 = vmatpush1.msra.mxu0 %v184
  %222 = vmatprep.subr.mxu0 0.0
  %223 = vmatpush1.msra.mxu0 %v183
  %224 = vmatprep.subr.mxu0 0.0
  %225 = vmatpush1.msra.mxu0 %v182
  %226 = vmatprep.subr.mxu0 0.0
  %227 = vmatpush2.msra.mxu0 0.0
  %228 = vmatprep.subr.mxu0 0.0
  %229 = vmatpush2.msra.mxu0 0.0
  %230 = vmatprep.subr.mxu0 0.0
  %231 = vmatpush2.msra.mxu0 0.0
  %232 = vmatprep.subr.mxu0 0.0
  %233 = vmatpush2.msra.mxu0 0.0
  %234 = vmatprep.subr.mxu0 0.0
  %235 = vmatpush2.msra.mxu0 0.0
  %236 = vmatprep.subr.mxu0 0.0
  %237 = vmatpush2.msra.mxu0 0.0
  %238 = vmatprep.subr.mxu0 0.0
  %239 = vmatpush2.msra.mxu0 0.0
  %240 = vmatprep.subr.mxu0 0.0
  %241 = vmatpush2.msra.mxu0 0.0
  %242 = vmatprep.subr.mxu0 0.0
  %243 = vmatpush2.msra.mxu0 0.0
  %244 = vmatprep.subr.mxu0 0.0
  %245 = vmatpush2.msra.mxu0 0.0
  %246 = vmatprep.subr.mxu0 0.0
  %247 = vmatpush2.msra.mxu0 0.0
  %248 = vmatprep.subr.mxu0 0.0
  %249 = vmatpush2.msra.mxu0 0.0
  %250 = vmatprep.subr.mxu0 0.0
  %251 = vmatpush2.msra.mxu0 0.0
  %252 = vmatprep.subr.mxu0 0.0
  %253 = vmatpush2.msra.mxu0 0.0
  %254 = vmatprep.subr.mxu0 0.0
  %255 = vmatpush2.msra.mxu0 0.0
  %256 = vmatprep.subr.mxu0 0.0
  %257 = vmatpush2.msra.mxu0 0.0
  %258 = vmatprep.mubr.f32.mxu0 0.0
  %259 = vmatmul.mubr.f32.gmra.mxu0 %v93
  %v260 = vpop.f32.mrf.mxu0
  %v261 = vadd.f32 %v192, %v260
  %v262 = vpop.f32.mrf.mxu0
  %263 = vmatprep.mubr.f32.mxu0 0.0
  %264 = vmatmul.mubr.f32.gmra.mxu0 %v96
  %v265 = vpop.f32.mrf.mxu0
  %v266 = vadd.f32 %v192, %v265
  %v267 = vpop.f32.mrf.mxu0
  %268 = vmatprep.mubr.f32.mxu0 0.0
  %269 = vmatmul.mubr.f32.gmra.mxu0 %v99
  %v270 = vpop.f32.mrf.mxu0
  %v271 = vadd.f32 %v192, %v270
  %v272 = vpop.f32.mrf.mxu0
  %273 = vdwg.mxu0
  %s274 = scalar_lea.vmem %s4, 256
  %v275 = vld [vmem:[%s274] sm:$0xff]
  %v276 = vld [vmem:[%s274 + $0x8] sm:$0xff]
  %v277 = vld [vmem:[%s274 + $0x10] sm:$0xff]
  %v278 = vld [vmem:[%s274 + $0x18] sm:$0xff]
  %s279 = scalar_lea.vmem %s5, 8
  %v280 = vld [vmem:[%s279] sm:$0x1]
  %v282 = vlaneseq
  %v283 = vshrl.u32 %v282, 7
  %v284 = vsub.s32 0, %v283
  %v285 = vrot.slane %v280, %v284
  %287 = vmatprep.subr.mxu0 0.0
  %288 = vmatpush1.msra.mxu0 0.0
  %289 = vmatprep.subr.mxu0 0.0
  %290 = vmatpush1.msra.mxu0 0.0
  %291 = vmatprep.subr.mxu0 0.0
  %292 = vmatpush1.msra.mxu0 0.0
  %293 = vmatprep.subr.mxu0 0.0
  %294 = vmatpush1.msra.mxu0 0.0
  %295 = vmatprep.subr.mxu0 0.0
  %296 = vmatpush1.msra.mxu0 0.0
  %297 = vmatprep.subr.mxu0 0.0
  %298 = vmatpush1.msra.mxu0 0.0
  %299 = vmatprep.subr.mxu0 0.0
  %300 = vmatpush1.msra.mxu0 0.0
  %301 = vmatprep.subr.mxu0 0.0
  %302 = vmatpush1.msra.mxu0 0.0
  %303 = vmatprep.subr.mxu0 0.0
  %304 = vmatpush1.msra.mxu0 0.0
  %305 = vmatprep.subr.mxu0 0.0
  %306 = vmatpush1.msra.mxu0 0.0
  %307 = vmatprep.subr.mxu0 0.0
  %308 = vmatpush1.msra.mxu0 0.0
  %309 = vmatprep.subr.mxu0 0.0
  %310 = vmatpush1.msra.mxu0 0.0
  %311 = vmatprep.subr.mxu0 0.0
  %312 = vmatpush1.msra.mxu0 %v278
  %313 = vmatprep.subr.mxu0 0.0
  %314 = vmatpush1.msra.mxu0 %v277
  %315 = vmatprep.subr.mxu0 0.0
  %316 = vmatpush1.msra.mxu0 %v276
  %317 = vmatprep.subr.mxu0 0.0
  %318 = vmatpush1.msra.mxu0 %v275
  %319 = vmatprep.subr.mxu0 0.0
  %320 = vmatpush2.msra.mxu0 0.0
  %321 = vmatprep.subr.mxu0 0.0
  %322 = vmatpush2.msra.mxu0 0.0
  %323 = vmatprep.subr.mxu0 0.0
  %324 = vmatpush2.msra.mxu0 0.0
  %325 = vmatprep.subr.mxu0 0.0
  %326 = vmatpush2.msra.mxu0 0.0
  %327 = vmatprep.subr.mxu0 0.0
  %328 = vmatpush2.msra.mxu0 0.0
  %329 = vmatprep.subr.mxu0 0.0
  %330 = vmatpush2.msra.mxu0 0.0
  %331 = vmatprep.subr.mxu0 0.0
  %332 = vmatpush2.msra.mxu0 0.0
  %333 = vmatprep.subr.mxu0 0.0
  %334 = vmatpush2.msra.mxu0 0.0
  %335 = vmatprep.subr.mxu0 0.0
  %336 = vmatpush2.msra.mxu0 0.0
  %337 = vmatprep.subr.mxu0 0.0
  %338 = vmatpush2.msra.mxu0 0.0
  %339 = vmatprep.subr.mxu0 0.0
  %340 = vmatpush2.msra.mxu0 0.0
  %341 = vmatprep.subr.mxu0 0.0
  %342 = vmatpush2.msra.mxu0 0.0
  %343 = vmatprep.subr.mxu0 0.0
  %344 = vmatpush2.msra.mxu0 0.0
  %345 = vmatprep.subr.mxu0 0.0
  %346 = vmatpush2.msra.mxu0 0.0
  %347 = vmatprep.subr.mxu0 0.0
  %348 = vmatpush2.msra.mxu0 0.0
  %349 = vmatprep.subr.mxu0 0.0
  %350 = vmatpush2.msra.mxu0 0.0
  %351 = vmatprep.mubr.f32.mxu0 0.0
  %352 = vmatmul.mubr.f32.gmra.mxu0 %v93
  %v353 = vpop.f32.mrf.mxu0
  %v354 = vadd.f32 %v285, %v353
  %v355 = vpop.f32.mrf.mxu0
  %356 = vmatprep.mubr.f32.mxu0 0.0
  %357 = vmatmul.mubr.f32.gmra.mxu0 %v96
  %v358 = vpop.f32.mrf.mxu0
  %v359 = vadd.f32 %v285, %v358
  %v360 = vpop.f32.mrf.mxu0
  %361 = vmatprep.mubr.f32.mxu0 0.0
  %362 = vmatmul.mubr.f32.gmra.mxu0 %v99
  %v363 = vpop.f32.mrf.mxu0
  %v364 = vadd.f32 %v285, %v363
  %v365 = vpop.f32.mrf.mxu0
  %366 = vdwg.mxu0
  %vm367 = vcmask 64512
  %v369 = vsel %vm367, %v168, 0
  %v372 = vsel %vm367, %v173, 0
  %v375 = vsel %vm367, %v178, 0
  %v378 = vsel %vm367, %v261, 0
  %v381 = vsel %vm367, %v266, 0
  %v384 = vsel %vm367, %v271, 0
  %386 = vmatprep.subr.mxu0 0.0
  %387 = vmatpush1.xpose.msra.mxu0 0.0
  %388 = vmatprep.subr.mxu0 0.0
  %389 = vmatpush1.xpose.msra.mxu0 0.0
  %390 = vmatprep.subr.mxu0 0.0
  %391 = vmatpush1.xpose.msra.mxu0 0.0
  %392 = vmatprep.subr.mxu0 0.0
  %393 = vmatpush1.xpose.msra.mxu0 0.0
  %394 = vmatprep.subr.mxu0 0.0
  %395 = vmatpush1.xpose.msra.mxu0 0.0
  %396 = vmatprep.subr.mxu0 0.0
  %397 = vmatpush1.xpose.msra.mxu0 0.0
  %398 = vmatprep.subr.mxu0 0.0
  %399 = vmatpush1.xpose.msra.mxu0 0.0
  %400 = vmatprep.subr.mxu0 0.0
  %401 = vmatpush1.xpose.msra.mxu0 0.0
  %402 = vmatprep.subr.mxu0 0.0
  %403 = vmatpush1.xpose.msra.mxu0 0.0
  %404 = vmatprep.subr.mxu0 0.0
  %405 = vmatpush1.xpose.msra.mxu0 0.0
  %406 = vmatprep.subr.mxu0 0.0
  %407 = vmatpush1.xpose.msra.mxu0 0.0
  %408 = vmatprep.subr.mxu0 0.0
  %409 = vmatpush1.xpose.msra.mxu0 0.0
  %410 = vmatprep.subr.mxu0 0.0
  %411 = vmatpush1.xpose.msra.mxu0 0.0
  %412 = vmatprep.subr.mxu0 0.0
  %413 = vmatpush1.xpose.msra.mxu0 %v384
  %414 = vmatprep.subr.mxu0 0.0
  %415 = vmatpush1.xpose.msra.mxu0 %v381
  %416 = vmatprep.subr.mxu0 0.0
  %417 = vmatpush1.xpose.msra.mxu0 %v378
  %418 = vmatprep.subr.mxu0 0.0
  %419 = vmatpush2.xpose.msra.mxu0 0.0
  %420 = vmatprep.subr.mxu0 0.0
  %421 = vmatpush2.xpose.msra.mxu0 0.0
  %422 = vmatprep.subr.mxu0 0.0
  %423 = vmatpush2.xpose.msra.mxu0 0.0
  %424 = vmatprep.subr.mxu0 0.0
  %425 = vmatpush2.xpose.msra.mxu0 0.0
  %426 = vmatprep.subr.mxu0 0.0
  %427 = vmatpush2.xpose.msra.mxu0 0.0
  %428 = vmatprep.subr.mxu0 0.0
  %429 = vmatpush2.xpose.msra.mxu0 0.0
  %430 = vmatprep.subr.mxu0 0.0
  %431 = vmatpush2.xpose.msra.mxu0 0.0
  %432 = vmatprep.subr.mxu0 0.0
  %433 = vmatpush2.xpose.msra.mxu0 0.0
  %434 = vmatprep.subr.mxu0 0.0
  %435 = vmatpush2.xpose.msra.mxu0 0.0
  %436 = vmatprep.subr.mxu0 0.0
  %437 = vmatpush2.xpose.msra.mxu0 0.0
  %438 = vmatprep.subr.mxu0 0.0
  %439 = vmatpush2.xpose.msra.mxu0 0.0
  %440 = vmatprep.subr.mxu0 0.0
  %441 = vmatpush2.xpose.msra.mxu0 0.0
  %442 = vmatprep.subr.mxu0 0.0
  %443 = vmatpush2.xpose.msra.mxu0 0.0
  %444 = vmatprep.subr.mxu0 0.0
  %445 = vmatpush2.xpose.msra.mxu0 0.0
  %446 = vmatprep.subr.mxu0 0.0
  %447 = vmatpush2.xpose.msra.mxu0 0.0
  %448 = vmatprep.subr.mxu0 0.0
  %449 = vmatpush2.xpose.msra.mxu0 0.0
  %450 = vmatprep.mubr.f32.mxu0 0.0
  %451 = vmatmul.mubr.f32.gmra.mxu0 %v369
  %v452 = vpop.f32.mrf.mxu0
  %v453 = vadd.f32 0.0, %v452
  %v454 = vpop.f32.mrf.mxu0
  %455 = vmatprep.mubr.f32.mxu0 0.0
  %456 = vmatmul.mubr.f32.gmra.mxu0 %v372
  %v457 = vpop.f32.mrf.mxu0
  %v458 = vadd.f32 0.0, %v457
  %v459 = vpop.f32.mrf.mxu0
  %460 = vmatprep.mubr.f32.mxu0 0.0
  %461 = vmatmul.mubr.f32.gmra.mxu0 %v375
  %v462 = vpop.f32.mrf.mxu0
  %v463 = vadd.f32 0.0, %v462
  %v464 = vpop.f32.mrf.mxu0
  %465 = vdwg.mxu0
  %v466 = vmul.f32 %v453, 0.35355338
  %v467 = vmul.f32 %v458, 0.35355338
  %v468 = vmul.f32 %v463, 0.35355338
  %v469 = vadd.f32 %v466, %v77
  %v470 = vadd.f32 %v467, %v78
  %v471 = vadd.f32 %v468, %v79
  %vm472 = vcmask 195584
  %v473 = vsel %vm472, %v469, -inf
  %474 = vmax.xlane.f32.xlu0 %v473
  %v475 = vpop.xlane.xlu0 %474
  %v476 = vsel %vm472, %v470, -inf
  %477 = vmax.xlane.f32.xlu0 %v476
  %v478 = vpop.xlane.xlu0 %477
  %v479 = vsel %vm472, %v471, -inf
  %480 = vmax.xlane.f32.xlu0 %v479
  %v481 = vpop.xlane.xlu0 %480
  %v482 = vsub.f32 %v469, %v475
  %v483 = vsub.f32 %v470, %v478
  %v484 = vsub.f32 %v471, %v481
  %v485 = vmul.f32 %v482, 1.442695
  %v486 = vpow.pop %v485
  %v487 = vmul.f32 %v483, 1.442695
  %v488 = vpow.pop %v487
  %v489 = vmul.f32 %v484, 1.442695
  %v490 = vpow.pop %v489
  %v491 = vsel %vm472, %v486, 0.0
  %492 = vadd.xlane.f32.xlu0 %v491
  %v493 = vpop.xlane.xlu0 %492
  %v494 = vsel %vm472, %v488, 0.0
  %495 = vadd.xlane.f32.xlu0 %v494
  %v496 = vpop.xlane.xlu0 %495
  %v497 = vsel %vm472, %v490, 0.0
  %498 = vadd.xlane.f32.xlu0 %v497
  %v499 = vpop.xlane.xlu0 %498
  %v500 = vrcp.pop %v493
  %v501 = vrcp.pop %v496
  %v502 = vrcp.pop %v499
  %v503 = vmul.f32 %v486, %v500
  %v504 = vmul.f32 %v488, %v501
  %v505 = vmul.f32 %v490, %v502
  %v507 = vsel %vm472, %v503, 0
  %v510 = vsel %vm472, %v504, 0
  %v513 = vsel %vm472, %v505, 0
  %515 = vmatprep.subr.mxu0 0.0
  %516 = vmatpush1.msra.mxu0 0.0
  %517 = vmatprep.subr.mxu0 0.0
  %518 = vmatpush1.msra.mxu0 0.0
  %519 = vmatprep.subr.mxu0 0.0
  %520 = vmatpush1.msra.mxu0 0.0
  %521 = vmatprep.subr.mxu0 0.0
  %522 = vmatpush1.msra.mxu0 0.0
  %523 = vmatprep.subr.mxu0 0.0
  %524 = vmatpush1.msra.mxu0 0.0
  %525 = vmatprep.subr.mxu0 0.0
  %526 = vmatpush1.msra.mxu0 0.0
  %527 = vmatprep.subr.mxu0 0.0
  %528 = vmatpush1.msra.mxu0 0.0
  %529 = vmatprep.subr.mxu0 0.0
  %530 = vmatpush1.msra.mxu0 0.0
  %531 = vmatprep.subr.mxu0 0.0
  %532 = vmatpush1.msra.mxu0 0.0
  %533 = vmatprep.subr.mxu0 0.0
  %534 = vmatpush1.msra.mxu0 0.0
  %535 = vmatprep.subr.mxu0 0.0
  %536 = vmatpush1.msra.mxu0 0.0
  %537 = vmatprep.subr.mxu0 0.0
  %538 = vmatpush1.msra.mxu0 0.0
  %539 = vmatprep.subr.mxu0 0.0
  %540 = vmatpush1.msra.mxu0 0.0
  %541 = vmatprep.subr.mxu0 0.0
  %542 = vmatpush1.msra.mxu0 %v364
  %543 = vmatprep.subr.mxu0 0.0
  %544 = vmatpush1.msra.mxu0 %v359
  %545 = vmatprep.subr.mxu0 0.0
  %546 = vmatpush1.msra.mxu0 %v354
  %547 = vmatprep.subr.mxu0 0.0
  %548 = vmatpush2.msra.mxu0 0.0
  %549 = vmatprep.subr.mxu0 0.0
  %550 = vmatpush2.msra.mxu0 0.0
  %551 = vmatprep.subr.mxu0 0.0
  %552 = vmatpush2.msra.mxu0 0.0
  %553 = vmatprep.subr.mxu0 0.0
  %554 = vmatpush2.msra.mxu0 0.0
  %555 = vmatprep.subr.mxu0 0.0
  %556 = vmatpush2.msra.mxu0 0.0
  %557 = vmatprep.subr.mxu0 0.0
  %558 = vmatpush2.msra.mxu0 0.0
  %559 = vmatprep.subr.mxu0 0.0
  %560 = vmatpush2.msra.mxu0 0.0
  %561 = vmatprep.subr.mxu0 0.0
  %562 = vmatpush2.msra.mxu0 0.0
  %563 = vmatprep.subr.mxu0 0.0
  %564 = vmatpush2.msra.mxu0 0.0
  %565 = vmatprep.subr.mxu0 0.0
  %566 = vmatpush2.msra.mxu0 0.0
  %567 = vmatprep.subr.mxu0 0.0
  %568 = vmatpush2.msra.mxu0 0.0
  %569 = vmatprep.subr.mxu0 0.0
  %570 = vmatpush2.msra.mxu0 0.0
  %571 = vmatprep.subr.mxu0 0.0
  %572 = vmatpush2.msra.mxu0 0.0
  %573 = vmatprep.subr.mxu0 0.0
  %574 = vmatpush2.msra.mxu0 0.0
  %575 = vmatprep.subr.mxu0 0.0
  %576 = vmatpush2.msra.mxu0 0.0
  %577 = vmatprep.subr.mxu0 0.0
  %578 = vmatpush2.msra.mxu0 0.0
  %579 = vmatprep.mubr.f32.mxu0 0.0
  %580 = vmatmul.mubr.f32.gmra.mxu0 %v507
  %v581 = vpop.f32.mrf.mxu0
  %v582 = vadd.f32 0.0, %v581
  %v583 = vpop.f32.mrf.mxu0
  %584 = vmatprep.mubr.f32.mxu0 0.0
  %585 = vmatmul.mubr.f32.gmra.mxu0 %v510
  %v586 = vpop.f32.mrf.mxu0
  %v587 = vadd.f32 0.0, %v586
  %v588 = vpop.f32.mrf.mxu0
  %589 = vmatprep.mubr.f32.mxu0 0.0
  %590 = vmatmul.mubr.f32.gmra.mxu0 %v513
  %v591 = vpop.f32.mrf.mxu0
  %v592 = vadd.f32 0.0, %v591
  %v593 = vpop.f32.mrf.mxu0
  %594 = vdwg.mxu0
  %v595 = vld [vmem:[%s6] sm:$0xff]
  %s596 = scalar_lea.vmem %s4, 32
  %v597 = vld [vmem:[%s596] sm:$0xff]
  %v598 = vld [vmem:[%s596 + $0x8] sm:$0xff]
  %v599 = vld [vmem:[%s596 + $0x10] sm:$0xff]
  %v600 = vld [vmem:[%s596 + $0x18] sm:$0xff]
  %s601 = scalar_lea.vmem %s5, 1
  %v602 = vld [vmem:[%s601] sm:$0x1]
  %v604 = vlaneseq
  %v605 = vshrl.u32 %v604, 7
  %v606 = vsub.s32 0, %v605
  %v607 = vrot.slane %v602, %v606
  %609 = vmatprep.subr.mxu0 0.0
  %610 = vmatpush1.msra.mxu0 0.0
  %611 = vmatprep.subr.mxu0 0.0
  %612 = vmatpush1.msra.mxu0 0.0
  %613 = vmatprep.subr.mxu0 0.0
  %614 = vmatpush1.msra.mxu0 0.0
  %615 = vmatprep.subr.mxu0 0.0
  %616 = vmatpush1.msra.mxu0 0.0
  %617 = vmatprep.subr.mxu0 0.0
  %618 = vmatpush1.msra.mxu0 0.0
  %619 = vmatprep.subr.mxu0 0.0
  %620 = vmatpush1.msra.mxu0 0.0
  %621 = vmatprep.subr.mxu0 0.0
  %622 = vmatpush1.msra.mxu0 0.0
  %623 = vmatprep.subr.mxu0 0.0
  %624 = vmatpush1.msra.mxu0 0.0
  %625 = vmatprep.subr.mxu0 0.0
  %626 = vmatpush1.msra.mxu0 0.0
  %627 = vmatprep.subr.mxu0 0.0
  %628 = vmatpush1.msra.mxu0 0.0
  %629 = vmatprep.subr.mxu0 0.0
  %630 = vmatpush1.msra.mxu0 0.0
  %631 = vmatprep.subr.mxu0 0.0
  %632 = vmatpush1.msra.mxu0 0.0
  %633 = vmatprep.subr.mxu0 0.0
  %634 = vmatpush1.msra.mxu0 %v600
  %635 = vmatprep.subr.mxu0 0.0
  %636 = vmatpush1.msra.mxu0 %v599
  %637 = vmatprep.subr.mxu0 0.0
  %638 = vmatpush1.msra.mxu0 %v598
  %639 = vmatprep.subr.mxu0 0.0
  %640 = vmatpush1.msra.mxu0 %v597
  %641 = vmatprep.subr.mxu0 0.0
  %642 = vmatpush2.msra.mxu0 0.0
  %643 = vmatprep.subr.mxu0 0.0
  %644 = vmatpush2.msra.mxu0 0.0
  %645 = vmatprep.subr.mxu0 0.0
  %646 = vmatpush2.msra.mxu0 0.0
  %647 = vmatprep.subr.mxu0 0.0
  %648 = vmatpush2.msra.mxu0 0.0
  %649 = vmatprep.subr.mxu0 0.0
  %650 = vmatpush2.msra.mxu0 0.0
  %651 = vmatprep.subr.mxu0 0.0
  %652 = vmatpush2.msra.mxu0 0.0
  %653 = vmatprep.subr.mxu0 0.0
  %654 = vmatpush2.msra.mxu0 0.0
  %655 = vmatprep.subr.mxu0 0.0
  %656 = vmatpush2.msra.mxu0 0.0
  %657 = vmatprep.subr.mxu0 0.0
  %658 = vmatpush2.msra.mxu0 0.0
  %659 = vmatprep.subr.mxu0 0.0
  %660 = vmatpush2.msra.mxu0 0.0
  %661 = vmatprep.subr.mxu0 0.0
  %662 = vmatpush2.msra.mxu0 0.0
  %663 = vmatprep.subr.mxu0 0.0
  %664 = vmatpush2.msra.mxu0 0.0
  %665 = vmatprep.subr.mxu0 0.0
  %666 = vmatpush2.msra.mxu0 0.0
  %667 = vmatprep.subr.mxu0 0.0
  %668 = vmatpush2.msra.mxu0 0.0
  %669 = vmatprep.subr.mxu0 0.0
  %670 = vmatpush2.msra.mxu0 0.0
  %671 = vmatprep.subr.mxu0 0.0
  %672 = vmatpush2.msra.mxu0 0.0
  %673 = vmatprep.mubr.f32.mxu0 0.0
  %674 = vmatmul.mubr.f32.gmra.mxu0 %v93
  %v675 = vpop.f32.mrf.mxu0
  %v676 = vadd.f32 %v607, %v675
  %v677 = vpop.f32.mrf.mxu0
  %678 = vmatprep.mubr.f32.mxu0 0.0
  %679 = vmatmul.mubr.f32.gmra.mxu0 %v96
  %v680 = vpop.f32.mrf.mxu0
  %v681 = vadd.f32 %v607, %v680
  %v682 = vpop.f32.mrf.mxu0
  %683 = vmatprep.mubr.f32.mxu0 0.0
  %684 = vmatmul.mubr.f32.gmra.mxu0 %v99
  %v685 = vpop.f32.mrf.mxu0
  %v686 = vadd.f32 %v607, %v685
  %v687 = vpop.f32.mrf.mxu0
  %688 = vdwg.mxu0
  %s689 = scalar_lea.vmem %s4, 160
  %v690 = vld [vmem:[%s689] sm:$0xff]
  %v691 = vld [vmem:[%s689 + $0x8] sm:$0xff]
  %v692 = vld [vmem:[%s689 + $0x10] sm:$0xff]
  %v693 = vld [vmem:[%s689 + $0x18] sm:$0xff]
  %s694 = scalar_lea.vmem %s5, 5
  %v695 = vld [vmem:[%s694] sm:$0x1]
  %v697 = vlaneseq
  %v698 = vshrl.u32 %v697, 7
  %v699 = vsub.s32 0, %v698
  %v700 = vrot.slane %v695, %v699
  %702 = vmatprep.subr.mxu0 0.0
  %703 = vmatpush1.msra.mxu0 0.0
  %704 = vmatprep.subr.mxu0 0.0
  %705 = vmatpush1.msra.mxu0 0.0
  %706 = vmatprep.subr.mxu0 0.0
  %707 = vmatpush1.msra.mxu0 0.0
  %708 = vmatprep.subr.mxu0 0.0
  %709 = vmatpush1.msra.mxu0 0.0
  %710 = vmatprep.subr.mxu0 0.0
  %711 = vmatpush1.msra.mxu0 0.0
  %712 = vmatprep.subr.mxu0 0.0
  %713 = vmatpush1.msra.mxu0 0.0
  %714 = vmatprep.subr.mxu0 0.0
  %715 = vmatpush1.msra.mxu0 0.0
  %716 = vmatprep.subr.mxu0 0.0
  %717 = vmatpush1.msra.mxu0 0.0
  %718 = vmatprep.subr.mxu0 0.0
  %719 = vmatpush1.msra.mxu0 0.0
  %720 = vmatprep.subr.mxu0 0.0
  %721 = vmatpush1.msra.mxu0 0.0
  %722 = vmatprep.subr.mxu0 0.0
  %723 = vmatpush1.msra.mxu0 0.0
  %724 = vmatprep.subr.mxu0 0.0
  %725 = vmatpush1.msra.mxu0 0.0
  %726 = vmatprep.subr.mxu0 0.0
  %727 = vmatpush1.msra.mxu0 %v693
  %728 = vmatprep.subr.mxu0 0.0
  %729 = vmatpush1.msra.mxu0 %v692
  %730 = vmatprep.subr.mxu0 0.0
  %731 = vmatpush1.msra.mxu0 %v691
  %732 = vmatprep.subr.mxu0 0.0
  %733 = vmatpush1.msra.mxu0 %v690
  %734 = vmatprep.subr.mxu0 0.0
  %735 = vmatpush2.msra.mxu0 0.0
  %736 = vmatprep.subr.mxu0 0.0
  %737 = vmatpush2.msra.mxu0 0.0
  %738 = vmatprep.subr.mxu0 0.0
  %739 = vmatpush2.msra.mxu0 0.0
  %740 = vmatprep.subr.mxu0 0.0
  %741 = vmatpush2.msra.mxu0 0.0
  %742 = vmatprep.subr.mxu0 0.0
  %743 = vmatpush2.msra.mxu0 0.0
  %744 = vmatprep.subr.mxu0 0.0
  %745 = vmatpush2.msra.mxu0 0.0
  %746 = vmatprep.subr.mxu0 0.0
  %747 = vmatpush2.msra.mxu0 0.0
  %748 = vmatprep.subr.mxu0 0.0
  %749 = vmatpush2.msra.mxu0 0.0
  %750 = vmatprep.subr.mxu0 0.0
  %751 = vmatpush2.msra.mxu0 0.0
  %752 = vmatprep.subr.mxu0 0.0
  %753 = vmatpush2.msra.mxu0 0.0
  %754 = vmatprep.subr.mxu0 0.0
  %755 = vmatpush2.msra.mxu0 0.0
  %756 = vmatprep.subr.mxu0 0.0
  %757 = vmatpush2.msra.mxu0 0.0
  %758 = vmatprep.subr.mxu0 0.0
  %759 = vmatpush2.msra.mxu0 0.0
  %760 = vmatprep.subr.mxu0 0.0
  %761 = vmatpush2.msra.mxu0 0.0
  %762 = vmatprep.subr.mxu0 0.0
  %763 = vmatpush2.msra.mxu0 0.0
  %764 = vmatprep.subr.mxu0 0.0
  %765 = vmatpush2.msra.mxu0 0.0
  %766 = vmatprep.mubr.f32.mxu0 0.0
  %767 = vmatmul.mubr.f32.gmra.mxu0 %v93
  %v768 = vpop.f32.mrf.mxu0
  %v769 = vadd.f32 %v700, %v768
  %v770 = vpop.f32.mrf.mxu0
  %771 = vmatprep.mubr.f32.mxu0 0.0
  %772 = vmatmul.mubr.f32.gmra.mxu0 %v96
  %v773 = vpop.f32.mrf.mxu0
  %v774 = vadd.f32 %v700, %v773
  %v775 = vpop.f32.mrf.mxu0
  %776 = vmatprep.mubr.f32.mxu0 0.0
  %777 = vmatmul.mubr.f32.gmra.mxu0 %v99
  %v778 = vpop.f32.mrf.mxu0
  %v779 = vadd.f32 %v700, %v778
  %v780 = vpop.f32.mrf.mxu0
  %781 = vdwg.mxu0
  %s782 = scalar_lea.vmem %s4, 288
  %v783 = vld [vmem:[%s782] sm:$0xff]
  %v784 = vld [vmem:[%s782 + $0x8] sm:$0xff]
  %v785 = vld [vmem:[%s782 + $0x10] sm:$0xff]
  %v786 = vld [vmem:[%s782 + $0x18] sm:$0xff]
  %s787 = scalar_lea.vmem %s5, 9
  %v788 = vld [vmem:[%s787] sm:$0x1]
  %v790 = vlaneseq
  %v791 = vshrl.u32 %v790, 7
  %v792 = vsub.s32 0, %v791
  %v793 = vrot.slane %v788, %v792
  %795 = vmatprep.subr.mxu0 0.0
  %796 = vmatpush1.msra.mxu0 0.0
  %797 = vmatprep.subr.mxu0 0.0
  %798 = vmatpush1.msra.mxu0 0.0
  %799 = vmatprep.subr.mxu0 0.0
  %800 = vmatpush1.msra.mxu0 0.0
  %801 = vmatprep.subr.mxu0 0.0
  %802 = vmatpush1.msra.mxu0 0.0
  %803 = vmatprep.subr.mxu0 0.0
  %804 = vmatpush1.msra.mxu0 0.0
  %805 = vmatprep.subr.mxu0 0.0
  %806 = vmatpush1.msra.mxu0 0.0
  %807 = vmatprep.subr.mxu0 0.0
  %808 = vmatpush1.msra.mxu0 0.0
  %809 = vmatprep.subr.mxu0 0.0
  %810 = vmatpush1.msra.mxu0 0.0
  %811 = vmatprep.subr.mxu0 0.0
  %812 = vmatpush1.msra.mxu0 0.0
  %813 = vmatprep.subr.mxu0 0.0
  %814 = vmatpush1.msra.mxu0 0.0
  %815 = vmatprep.subr.mxu0 0.0
  %816 = vmatpush1.msra.mxu0 0.0
  %817 = vmatprep.subr.mxu0 0.0
  %818 = vmatpush1.msra.mxu0 0.0
  %819 = vmatprep.subr.mxu0 0.0
  %820 = vmatpush1.msra.mxu0 %v786
  %821 = vmatprep.subr.mxu0 0.0
  %822 = vmatpush1.msra.mxu0 %v785
  %823 = vmatprep.subr.mxu0 0.0
  %824 = vmatpush1.msra.mxu0 %v784
  %825 = vmatprep.subr.mxu0 0.0
  %826 = vmatpush1.msra.mxu0 %v783
  %827 = vmatprep.subr.mxu0 0.0
  %828 = vmatpush2.msra.mxu0 0.0
  %829 = vmatprep.subr.mxu0 0.0
  %830 = vmatpush2.msra.mxu0 0.0
  %831 = vmatprep.subr.mxu0 0.0
  %832 = vmatpush2.msra.mxu0 0.0
  %833 = vmatprep.subr.mxu0 0.0
  %834 = vmatpush2.msra.mxu0 0.0
  %835 = vmatprep.subr.mxu0 0.0
  %836 = vmatpush2.msra.mxu0 0.0
  %837 = vmatprep.subr.mxu0 0.0
  %838 = vmatpush2.msra.mxu0 0.0
  %839 = vmatprep.subr.mxu0 0.0
  %840 = vmatpush2.msra.mxu0 0.0
  %841 = vmatprep.subr.mxu0 0.0
  %842 = vmatpush2.msra.mxu0 0.0
  %843 = vmatprep.subr.mxu0 0.0
  %844 = vmatpush2.msra.mxu0 0.0
  %845 = vmatprep.subr.mxu0 0.0
  %846 = vmatpush2.msra.mxu0 0.0
  %847 = vmatprep.subr.mxu0 0.0
  %848 = vmatpush2.msra.mxu0 0.0
  %849 = vmatprep.subr.mxu0 0.0
  %850 = vmatpush2.msra.mxu0 0.0
  %851 = vmatprep.subr.mxu0 0.0
  %852 = vmatpush2.msra.mxu0 0.0
  %853 = vmatprep.subr.mxu0 0.0
  %854 = vmatpush2.msra.mxu0 0.0
  %855 = vmatprep.subr.mxu0 0.0
  %856 = vmatpush2.msra.mxu0 0.0
  %857 = vmatprep.subr.mxu0 0.0
  %858 = vmatpush2.msra.mxu0 0.0
  %859 = vmatprep.mubr.f32.mxu0 0.0
  %860 = vmatmul.mubr.f32.gmra.mxu0 %v93
  %v861 = vpop.f32.mrf.mxu0
  %v862 = vadd.f32 %v793, %v861
  %v863 = vpop.f32.mrf.mxu0
  %864 = vmatprep.mubr.f32.mxu0 0.0
  %865 = vmatmul.mubr.f32.gmra.mxu0 %v96
  %v866 = vpop.f32.mrf.mxu0
  %v867 = vadd.f32 %v793, %v866
  %v868 = vpop.f32.mrf.mxu0
  %869 = vmatprep.mubr.f32.mxu0 0.0
  %870 = vmatmul.mubr.f32.gmra.mxu0 %v99
  %v871 = vpop.f32.mrf.mxu0
  %v872 = vadd.f32 %v793, %v871
  %v873 = vpop.f32.mrf.mxu0
  %874 = vdwg.mxu0
  %v876 = vsel %vm367, %v676, 0
  %v879 = vsel %vm367, %v681, 0
  %v882 = vsel %vm367, %v686, 0
  %v885 = vsel %vm367, %v769, 0
  %v888 = vsel %vm367, %v774, 0
  %v891 = vsel %vm367, %v779, 0
  %893 = vmatprep.subr.mxu0 0.0
  %894 = vmatpush1.xpose.msra.mxu0 0.0
  %895 = vmatprep.subr.mxu0 0.0
  %896 = vmatpush1.xpose.msra.mxu0 0.0
  %897 = vmatprep.subr.mxu0 0.0
  %898 = vmatpush1.xpose.msra.mxu0 0.0
  %899 = vmatprep.subr.mxu0 0.0
  %900 = vmatpush1.xpose.msra.mxu0 0.0
  %901 = vmatprep.subr.mxu0 0.0
  %902 = vmatpush1.xpose.msra.mxu0 0.0
  %903 = vmatprep.subr.mxu0 0.0
  %904 = vmatpush1.xpose.msra.mxu0 0.0
  %905 = vmatprep.subr.mxu0 0.0
  %906 = vmatpush1.xpose.msra.mxu0 0.0
  %907 = vmatprep.subr.mxu0 0.0
  %908 = vmatpush1.xpose.msra.mxu0 0.0
  %909 = vmatprep.subr.mxu0 0.0
  %910 = vmatpush1.xpose.msra.mxu0 0.0
  %911 = vmatprep.subr.mxu0 0.0
  %912 = vmatpush1.xpose.msra.mxu0 0.0
  %913 = vmatprep.subr.mxu0 0.0
  %914 = vmatpush1.xpose.msra.mxu0 0.0
  %915 = vmatprep.subr.mxu0 0.0
  %916 = vmatpush1.xpose.msra.mxu0 0.0
  %917 = vmatprep.subr.mxu0 0.0
  %918 = vmatpush1.xpose.msra.mxu0 0.0
  %919 = vmatprep.subr.mxu0 0.0
  %920 = vmatpush1.xpose.msra.mxu0 %v891
  %921 = vmatprep.subr.mxu0 0.0
  %922 = vmatpush1.xpose.msra.mxu0 %v888
  %923 = vmatprep.subr.mxu0 0.0
  %924 = vmatpush1.xpose.msra.mxu0 %v885
  %925 = vmatprep.subr.mxu0 0.0
  %926 = vmatpush2.xpose.msra.mxu0 0.0
  %927 = vmatprep.subr.mxu0 0.0
  %928 = vmatpush2.xpose.msra.mxu0 0.0
  %929 = vmatprep.subr.mxu0 0.0
  %930 = vmatpush2.xpose.msra.mxu0 0.0
  %931 = vmatprep.subr.mxu0 0.0
  %932 = vmatpush2.xpose.msra.mxu0 0.0
  %933 = vmatprep.subr.mxu0 0.0
  %934 = vmatpush2.xpose.msra.mxu0 0.0
  %935 = vmatprep.subr.mxu0 0.0
  %936 = vmatpush2.xpose.msra.mxu0 0.0
  %937 = vmatprep.subr.mxu0 0.0
  %938 = vmatpush2.xpose.msra.mxu0 0.0
  %939 = vmatprep.subr.mxu0 0.0
  %940 = vmatpush2.xpose.msra.mxu0 0.0
  %941 = vmatprep.subr.mxu0 0.0
  %942 = vmatpush2.xpose.msra.mxu0 0.0
  %943 = vmatprep.subr.mxu0 0.0
  %944 = vmatpush2.xpose.msra.mxu0 0.0
  %945 = vmatprep.subr.mxu0 0.0
  %946 = vmatpush2.xpose.msra.mxu0 0.0
  %947 = vmatprep.subr.mxu0 0.0
  %948 = vmatpush2.xpose.msra.mxu0 0.0
  %949 = vmatprep.subr.mxu0 0.0
  %950 = vmatpush2.xpose.msra.mxu0 0.0
  %951 = vmatprep.subr.mxu0 0.0
  %952 = vmatpush2.xpose.msra.mxu0 0.0
  %953 = vmatprep.subr.mxu0 0.0
  %954 = vmatpush2.xpose.msra.mxu0 0.0
  %955 = vmatprep.subr.mxu0 0.0
  %956 = vmatpush2.xpose.msra.mxu0 0.0
  %957 = vmatprep.mubr.f32.mxu0 0.0
  %958 = vmatmul.mubr.f32.gmra.mxu0 %v876
  %v959 = vpop.f32.mrf.mxu0
  %v960 = vadd.f32 0.0, %v959
  %v961 = vpop.f32.mrf.mxu0
  %962 = vmatprep.mubr.f32.mxu0 0.0
  %963 = vmatmul.mubr.f32.gmra.mxu0 %v879
  %v964 = vpop.f32.mrf.mxu0
  %v965 = vadd.f32 0.0, %v964
  %v966 = vpop.f32.mrf.mxu0
  %967 = vmatprep.mubr.f32.mxu0 0.0
  %968 = vmatmul.mubr.f32.gmra.mxu0 %v882
  %v969 = vpop.f32.mrf.mxu0
  %v970 = vadd.f32 0.0, %v969
  %v971 = vpop.f32.mrf.mxu0
  %972 = vdwg.mxu0
  %v973 = vmul.f32 %v960, 0.35355338
  %v974 = vmul.f32 %v965, 0.35355338
  %v975 = vmul.f32 %v970, 0.35355338
  %v976 = vadd.f32 %v973, %v77
  %v977 = vadd.f32 %v974, %v78
  %v978 = vadd.f32 %v975, %v79
  %v979 = vsel %vm472, %v976, -inf
  %980 = vmax.xlane.f32.xlu0 %v979
  %v981 = vpop.xlane.xlu0 %980
  %v982 = vsel %vm472, %v977, -inf
  %983 = vmax.xlane.f32.xlu0 %v982
  %v984 = vpop.xlane.xlu0 %983
  %v985 = vsel %vm472, %v978, -inf
  %986 = vmax.xlane.f32.xlu0 %v985
  %v987 = vpop.xlane.xlu0 %986
  %v988 = vsub.f32 %v976, %v981
  %v989 = vsub.f32 %v977, %v984
  %v990 = vsub.f32 %v978, %v987
  %v991 = vmul.f32 %v988, 1.442695
  %v992 = vpow.pop %v991
  %v993 = vmul.f32 %v989, 1.442695
  %v994 = vpow.pop %v993
  %v995 = vmul.f32 %v990, 1.442695
  %v996 = vpow.pop %v995
  %v997 = vsel %vm472, %v992, 0.0
  %998 = vadd.xlane.f32.xlu0 %v997
  %v999 = vpop.xlane.xlu0 %998
  %v1000 = vsel %vm472, %v994, 0.0
  %1001 = vadd.xlane.f32.xlu0 %v1000
  %v1002 = vpop.xlane.xlu0 %1001
  %v1003 = vsel %vm472, %v996, 0.0
  %1004 = vadd.xlane.f32.xlu0 %v1003
  %v1005 = vpop.xlane.xlu0 %1004
  %v1006 = vrcp.pop %v999
  %v1007 = vrcp.pop %v1002
  %v1008 = vrcp.pop %v1005
  %v1009 = vmul.f32 %v992, %v1006
  %v1010 = vmul.f32 %v994, %v1007
  %v1011 = vmul.f32 %v996, %v1008
  %v1013 = vsel %vm472, %v1009, 0
  %v1016 = vsel %vm472, %v1010, 0
  %v1019 = vsel %vm472, %v1011, 0
  %1021 = vmatprep.subr.mxu0 0.0
  %1022 = vmatpush1.msra.mxu0 0.0
  %1023 = vmatprep.subr.mxu0 0.0
  %1024 = vmatpush1.msra.mxu0 0.0
  %1025 = vmatprep.subr.mxu0 0.0
  %1026 = vmatpush1.msra.mxu0 0.0
  %1027 = vmatprep.subr.mxu0 0.0
  %1028 = vmatpush1.msra.mxu0 0.0
  %1029 = vmatprep.subr.mxu0 0.0
  %1030 = vmatpush1.msra.mxu0 0.0
  %1031 = vmatprep.subr.mxu0 0.0
  %1032 = vmatpush1.msra.mxu0 0.0
  %1033 = vmatprep.subr.mxu0 0.0
  %1034 = vmatpush1.msra.mxu0 0.0
  %1035 = vmatprep.subr.mxu0 0.0
  %1036 = vmatpush1.msra.mxu0 0.0
  %1037 = vmatprep.subr.mxu0 0.0
  %1038 = vmatpush1.msra.mxu0 0.0
  %1039 = vmatprep.subr.mxu0 0.0
  %1040 = vmatpush1.msra.mxu0 0.0
  %1041 = vmatprep.subr.mxu0 0.0
  %1042 = vmatpush1.msra.mxu0 0.0
  %1043 = vmatprep.subr.mxu0 0.0
  %1044 = vmatpush1.msra.mxu0 0.0
  %1045 = vmatprep.subr.mxu0 0.0
  %1046 = vmatpush1.msra.mxu0 0.0
  %1047 = vmatprep.subr.mxu0 0.0
  %1048 = vmatpush1.msra.mxu0 %v872
  %1049 = vmatprep.subr.mxu0 0.0
  %1050 = vmatpush1.msra.mxu0 %v867
  %1051 = vmatprep.subr.mxu0 0.0
  %1052 = vmatpush1.msra.mxu0 %v862
  %1053 = vmatprep.subr.mxu0 0.0
  %1054 = vmatpush2.msra.mxu0 0.0
  %1055 = vmatprep.subr.mxu0 0.0
  %1056 = vmatpush2.msra.mxu0 0.0
  %1057 = vmatprep.subr.mxu0 0.0
  %1058 = vmatpush2.msra.mxu0 0.0
  %1059 = vmatprep.subr.mxu0 0.0
  %1060 = vmatpush2.msra.mxu0 0.0
  %1061 = vmatprep.subr.mxu0 0.0
  %1062 = vmatpush2.msra.mxu0 0.0
  %1063 = vmatprep.subr.mxu0 0.0
  %1064 = vmatpush2.msra.mxu0 0.0
  %1065 = vmatprep.subr.mxu0 0.0
  %1066 = vmatpush2.msra.mxu0 0.0
  %1067 = vmatprep.subr.mxu0 0.0
  %1068 = vmatpush2.msra.mxu0 0.0
  %1069 = vmatprep.subr.mxu0 0.0
  %1070 = vmatpush2.msra.mxu0 0.0
  %1071 = vmatprep.subr.mxu0 0.0
  %1072 = vmatpush2.msra.mxu0 0.0
  %1073 = vmatprep.subr.mxu0 0.0
  %1074 = vmatpush2.msra.mxu0 0.0
  %1075 = vmatprep.subr.mxu0 0.0
  %1076 = vmatpush2.msra.mxu0 0.0
  %1077 = vmatprep.subr.mxu0 0.0
  %1078 = vmatpush2.msra.mxu0 0.0
  %1079 = vmatprep.subr.mxu0 0.0
  %1080 = vmatpush2.msra.mxu0 0.0
  %1081 = vmatprep.subr.mxu0 0.0
  %1082 = vmatpush2.msra.mxu0 0.0
  %1083 = vmatprep.subr.mxu0 0.0
  %1084 = vmatpush2.msra.mxu0 0.0
  %1085 = vmatprep.mubr.f32.mxu0 0.0
  %1086 = vmatmul.mubr.f32.gmra.mxu0 %v1013
  %v1087 = vpop.f32.mrf.mxu0
  %v1088 = vadd.f32 0.0, %v1087
  %v1089 = vpop.f32.mrf.mxu0
  %1090 = vmatprep.mubr.f32.mxu0 0.0
  %1091 = vmatmul.mubr.f32.gmra.mxu0 %v1016
  %v1092 = vpop.f32.mrf.mxu0
  %v1093 = vadd.f32 0.0, %v1092
  %v1094 = vpop.f32.mrf.mxu0
  %1095 = vmatprep.mubr.f32.mxu0 0.0
  %1096 = vmatmul.mubr.f32.gmra.mxu0 %v1019
  %v1097 = vpop.f32.mrf.mxu0
  %v1098 = vadd.f32 0.0, %v1097
  %v1099 = vpop.f32.mrf.mxu0
  %1100 = vdwg.mxu0
  %s1101 = scalar_lea.vmem %s6, 8
  %v1102 = vld [vmem:[%s1101] sm:$0xff]
  %v1104 = vsel %vm367, %v1088, 0
  %v1107 = vsel %vm367, %v1093, 0
  %v1110 = vsel %vm367, %v1098, 0
  %1112 = vmatprep.subr.mxu0 0.0
  %1113 = vmatpush1.msra.mxu0 0.0
  %1114 = vmatprep.subr.mxu0 0.0
  %1115 = vmatpush1.msra.mxu0 0.0
  %1116 = vmatprep.subr.mxu0 0.0
  %1117 = vmatpush1.msra.mxu0 0.0
  %1118 = vmatprep.subr.mxu0 0.0
  %1119 = vmatpush1.msra.mxu0 0.0
  %1120 = vmatprep.subr.mxu0 0.0
  %1121 = vmatpush1.msra.mxu0 0.0
  %1122 = vmatprep.subr.mxu0 0.0
  %1123 = vmatpush1.msra.mxu0 0.0
  %1124 = vmatprep.subr.mxu0 0.0
  %1125 = vmatpush1.msra.mxu0 0.0
  %1126 = vmatprep.subr.mxu0 0.0
  %1127 = vmatpush1.msra.mxu0 0.0
  %1128 = vmatprep.subr.mxu0 0.0
  %1129 = vmatpush1.msra.mxu0 0.0
  %1130 = vmatprep.subr.mxu0 0.0
  %1131 = vmatpush1.msra.mxu0 0.0
  %1132 = vmatprep.subr.mxu0 0.0
  %1133 = vmatpush1.msra.mxu0 0.0
  %1134 = vmatprep.subr.mxu0 0.0
  %1135 = vmatpush1.msra.mxu0 0.0
  %1136 = vmatprep.subr.mxu0 0.0
  %1137 = vmatpush1.msra.mxu0 0.0
  %1138 = vmatprep.subr.mxu0 0.0
  %1139 = vmatpush1.msra.mxu0 0.0
  %1140 = vmatprep.subr.mxu0 0.0
  %1141 = vmatpush1.msra.mxu0 0.0
  %1142 = vmatprep.subr.mxu0 0.0
  %1143 = vmatpush1.msra.mxu0 %v1102
  %1144 = vmatprep.subr.mxu0 0.0
  %1145 = vmatpush2.msra.mxu0 0.0
  %1146 = vmatprep.subr.mxu0 0.0
  %1147 = vmatpush2.msra.mxu0 0.0
  %1148 = vmatprep.subr.mxu0 0.0
  %1149 = vmatpush2.msra.mxu0 0.0
  %1150 = vmatprep.subr.mxu0 0.0
  %1151 = vmatpush2.msra.mxu0 0.0
  %1152 = vmatprep.subr.mxu0 0.0
  %1153 = vmatpush2.msra.mxu0 0.0
  %1154 = vmatprep.subr.mxu0 0.0
  %1155 = vmatpush2.msra.mxu0 0.0
  %1156 = vmatprep.subr.mxu0 0.0
  %1157 = vmatpush2.msra.mxu0 0.0
  %1158 = vmatprep.subr.mxu0 0.0
  %1159 = vmatpush2.msra.mxu0 0.0
  %1160 = vmatprep.subr.mxu0 0.0
  %1161 = vmatpush2.msra.mxu0 0.0
  %1162 = vmatprep.subr.mxu0 0.0
  %1163 = vmatpush2.msra.mxu0 0.0
  %1164 = vmatprep.subr.mxu0 0.0
  %1165 = vmatpush2.msra.mxu0 0.0
  %1166 = vmatprep.subr.mxu0 0.0
  %1167 = vmatpush2.msra.mxu0 0.0
  %1168 = vmatprep.subr.mxu0 0.0
  %1169 = vmatpush2.msra.mxu0 0.0
  %1170 = vmatprep.subr.mxu0 0.0
  %1171 = vmatpush2.msra.mxu0 0.0
  %1172 = vmatprep.subr.mxu0 0.0
  %1173 = vmatpush2.msra.mxu0 0.0
  %1174 = vmatprep.subr.mxu0 0.0
  %1175 = vmatpush2.msra.mxu0 0.0
  %1176 = vmatprep.mubr.f32.mxu0 0.0
  %1177 = vmatmul.mubr.f32.gmra.mxu0 %v1104
  %v1178 = vpop.f32.mrf.mxu0
  %v1179 = vadd.f32 0.0, %v1178
  %v1180 = vpop.f32.mrf.mxu0
  %1181 = vmatprep.mubr.f32.mxu0 0.0
  %1182 = vmatmul.mubr.f32.gmra.mxu0 %v1107
  %v1183 = vpop.f32.mrf.mxu0
  %v1184 = vadd.f32 0.0, %v1183
  %v1185 = vpop.f32.mrf.mxu0
  %1186 = vmatprep.mubr.f32.mxu0 0.0
  %1187 = vmatmul.mubr.f32.gmra.mxu0 %v1110
  %v1188 = vpop.f32.mrf.mxu0
  %v1189 = vadd.f32 0.0, %v1188
  %v1190 = vpop.f32.mrf.mxu0
  %1191 = vdwg.mxu0
  %v1193 = vsel %vm367, %v582, 0
  %v1196 = vsel %vm367, %v587, 0
  %v1199 = vsel %vm367, %v592, 0
  %1201 = vmatprep.subr.mxu0 0.0
  %1202 = vmatpush1.msra.mxu0 0.0
  %1203 = vmatprep.subr.mxu0 0.0
  %1204 = vmatpush1.msra.mxu0 0.0
  %1205 = vmatprep.subr.mxu0 0.0
  %1206 = vmatpush1.msra.mxu0 0.0
  %1207 = vmatprep.subr.mxu0 0.0
  %1208 = vmatpush1.msra.mxu0 0.0
  %1209 = vmatprep.subr.mxu0 0.0
  %1210 = vmatpush1.msra.mxu0 0.0
  %1211 = vmatprep.subr.mxu0 0.0
  %1212 = vmatpush1.msra.mxu0 0.0
  %1213 = vmatprep.subr.mxu0 0.0
  %1214 = vmatpush1.msra.mxu0 0.0
  %1215 = vmatprep.subr.mxu0 0.0
  %1216 = vmatpush1.msra.mxu0 0.0
  %1217 = vmatprep.subr.mxu0 0.0
  %1218 = vmatpush1.msra.mxu0 0.0
  %1219 = vmatprep.subr.mxu0 0.0
  %1220 = vmatpush1.msra.mxu0 0.0
  %1221 = vmatprep.subr.mxu0 0.0
  %1222 = vmatpush1.msra.mxu0 0.0
  %1223 = vmatprep.subr.mxu0 0.0
  %1224 = vmatpush1.msra.mxu0 0.0
  %1225 = vmatprep.subr.mxu0 0.0
  %1226 = vmatpush1.msra.mxu0 0.0
  %1227 = vmatprep.subr.mxu0 0.0
  %1228 = vmatpush1.msra.mxu0 0.0
  %1229 = vmatprep.subr.mxu0 0.0
  %1230 = vmatpush1.msra.mxu0 0.0
  %1231 = vmatprep.subr.mxu0 0.0
  %1232 = vmatpush1.msra.mxu0 %v595
  %1233 = vmatprep.subr.mxu0 0.0
  %1234 = vmatpush2.msra.mxu0 0.0
  %1235 = vmatprep.subr.mxu0 0.0
  %1236 = vmatpush2.msra.mxu0 0.0
  %1237 = vmatprep.subr.mxu0 0.0
  %1238 = vmatpush2.msra.mxu0 0.0
  %1239 = vmatprep.subr.mxu0 0.0
  %1240 = vmatpush2.msra.mxu0 0.0
  %1241 = vmatprep.subr.mxu0 0.0
  %1242 = vmatpush2.msra.mxu0 0.0
  %1243 = vmatprep.subr.mxu0 0.0
  %1244 = vmatpush2.msra.mxu0 0.0
  %1245 = vmatprep.subr.mxu0 0.0
  %1246 = vmatpush2.msra.mxu0 0.0
  %1247 = vmatprep.subr.mxu0 0.0
  %1248 = vmatpush2.msra.mxu0 0.0
  %1249 = vmatprep.subr.mxu0 0.0
  %1250 = vmatpush2.msra.mxu0 0.0
  %1251 = vmatprep.subr.mxu0 0.0
  %1252 = vmatpush2.msra.mxu0 0.0
  %1253 = vmatprep.subr.mxu0 0.0
  %1254 = vmatpush2.msra.mxu0 0.0
  %1255 = vmatprep.subr.mxu0 0.0
  %1256 = vmatpush2.msra.mxu0 0.0
  %1257 = vmatprep.subr.mxu0 0.0
  %1258 = vmatpush2.msra.mxu0 0.0
  %1259 = vmatprep.subr.mxu0 0.0
  %1260 = vmatpush2.msra.mxu0 0.0
  %1261 = vmatprep.subr.mxu0 0.0
  %1262 = vmatpush2.msra.mxu0 0.0
  %1263 = vmatprep.subr.mxu0 0.0
  %1264 = vmatpush2.msra.mxu0 0.0
  %1265 = vmatprep.mubr.f32.mxu0 0.0
  %1266 = vmatmul.mubr.f32.gmra.mxu0 %v1193
  %v1267 = vpop.f32.mrf.mxu0
  %v1268 = vadd.f32 %v1179, %v1267
  %v1269 = vpop.f32.mrf.mxu0
  %1270 = vmatprep.mubr.f32.mxu0 0.0
  %1271 = vmatmul.mubr.f32.gmra.mxu0 %v1196
  %v1272 = vpop.f32.mrf.mxu0
  %v1273 = vadd.f32 %v1184, %v1272
  %v1274 = vpop.f32.mrf.mxu0
  %1275 = vmatprep.mubr.f32.mxu0 0.0
  %1276 = vmatmul.mubr.f32.gmra.mxu0 %v1199
  %v1277 = vpop.f32.mrf.mxu0
  %v1278 = vadd.f32 %v1189, %v1277
  %v1279 = vpop.f32.mrf.mxu0
  %1280 = vdwg.mxu0
  %s1281 = scalar_lea.vmem %s4, 64
  %v1282 = vld [vmem:[%s1281] sm:$0xff]
  %v1283 = vld [vmem:[%s1281 + $0x8] sm:$0xff]
  %v1284 = vld [vmem:[%s1281 + $0x10] sm:$0xff]
  %v1285 = vld [vmem:[%s1281 + $0x18] sm:$0xff]
  %s1286 = scalar_lea.vmem %s5, 2
  %v1287 = vld [vmem:[%s1286] sm:$0x1]
  %v1289 = vlaneseq
  %v1290 = vshrl.u32 %v1289, 7
  %v1291 = vsub.s32 0, %v1290
  %v1292 = vrot.slane %v1287, %v1291
  %1294 = vmatprep.subr.mxu0 0.0
  %1295 = vmatpush1.msra.mxu0 0.0
  %1296 = vmatprep.subr.mxu0 0.0
  %1297 = vmatpush1.msra.mxu0 0.0
  %1298 = vmatprep.subr.mxu0 0.0
  %1299 = vmatpush1.msra.mxu0 0.0
  %1300 = vmatprep.subr.mxu0 0.0
  %1301 = vmatpush1.msra.mxu0 0.0
  %1302 = vmatprep.subr.mxu0 0.0
  %1303 = vmatpush1.msra.mxu0 0.0
  %1304 = vmatprep.subr.mxu0 0.0
  %1305 = vmatpush1.msra.mxu0 0.0
  %1306 = vmatprep.subr.mxu0 0.0
  %1307 = vmatpush1.msra.mxu0 0.0
  %1308 = vmatprep.subr.mxu0 0.0
  %1309 = vmatpush1.msra.mxu0 0.0
  %1310 = vmatprep.subr.mxu0 0.0
  %1311 = vmatpush1.msra.mxu0 0.0
  %1312 = vmatprep.subr.mxu0 0.0
  %1313 = vmatpush1.msra.mxu0 0.0
  %1314 = vmatprep.subr.mxu0 0.0
  %1315 = vmatpush1.msra.mxu0 0.0
  %1316 = vmatprep.subr.mxu0 0.0
  %1317 = vmatpush1.msra.mxu0 0.0
  %1318 = vmatprep.subr.mxu0 0.0
  %1319 = vmatpush1.msra.mxu0 %v1285
  %1320 = vmatprep.subr.mxu0 0.0
  %1321 = vmatpush1.msra.mxu0 %v1284
  %1322 = vmatprep.subr.mxu0 0.0
  %1323 = vmatpush1.msra.mxu0 %v1283
  %1324 = vmatprep.subr.mxu0 0.0
  %1325 = vmatpush1.msra.mxu0 %v1282
  %1326 = vmatprep.subr.mxu0 0.0
  %1327 = vmatpush2.msra.mxu0 0.0
  %1328 = vmatprep.subr.mxu0 0.0
  %1329 = vmatpush2.msra.mxu0 0.0
  %1330 = vmatprep.subr.mxu0 0.0
  %1331 = vmatpush2.msra.mxu0 0.0
  %1332 = vmatprep.subr.mxu0 0.0
  %1333 = vmatpush2.msra.mxu0 0.0
  %1334 = vmatprep.subr.mxu0 0.0
  %1335 = vmatpush2.msra.mxu0 0.0
  %1336 = vmatprep.subr.mxu0 0.0
  %1337 = vmatpush2.msra.mxu0 0.0
  %1338 = vmatprep.subr.mxu0 0.0
  %1339 = vmatpush2.msra.mxu0 0.0
  %1340 = vmatprep.subr.mxu0 0.0
  %1341 = vmatpush2.msra.mxu0 0.0
  %1342 = vmatprep.subr.mxu0 0.0
  %1343 = vmatpush2.msra.mxu0 0.0
  %1344 = vmatprep.subr.mxu0 0.0
  %1345 = vmatpush2.msra.mxu0 0.0
  %1346 = vmatprep.subr.mxu0 0.0
  %1347 = vmatpush2.msra.mxu0 0.0
  %1348 = vmatprep.subr.mxu0 0.0
  %1349 = vmatpush2.msra.mxu0 0.0
  %1350 = vmatprep.subr.mxu0 0.0
  %1351 = vmatpush2.msra.mxu0 0.0
  %1352 = vmatprep.subr.mxu0 0.0
  %1353 = vmatpush2.msra.mxu0 0.0
  %1354 = vmatprep.subr.mxu0 0.0
  %1355 = vmatpush2.msra.mxu0 0.0
  %1356 = vmatprep.subr.mxu0 0.0
  %1357 = vmatpush2.msra.mxu0 0.0
  %1358 = vmatprep.mubr.f32.mxu0 0.0
  %1359 = vmatmul.mubr.f32.gmra.mxu0 %v93
  %v1360 = vpop.f32.mrf.mxu0
  %v1361 = vadd.f32 %v1292, %v1360
  %v1362 = vpop.f32.mrf.mxu0
  %1363 = vmatprep.mubr.f32.mxu0 0.0
  %1364 = vmatmul.mubr.f32.gmra.mxu0 %v96
  %v1365 = vpop.f32.mrf.mxu0
  %v1366 = vadd.f32 %v1292, %v1365
  %v1367 = vpop.f32.mrf.mxu0
  %1368 = vmatprep.mubr.f32.mxu0 0.0
  %1369 = vmatmul.mubr.f32.gmra.mxu0 %v99
  %v1370 = vpop.f32.mrf.mxu0
  %v1371 = vadd.f32 %v1292, %v1370
  %v1372 = vpop.f32.mrf.mxu0
  %1373 = vdwg.mxu0
  %s1374 = scalar_lea.vmem %s4, 192
  %v1375 = vld [vmem:[%s1374] sm:$0xff]
  %v1376 = vld [vmem:[%s1374 + $0x8] sm:$0xff]
  %v1377 = vld [vmem:[%s1374 + $0x10] sm:$0xff]
  %v1378 = vld [vmem:[%s1374 + $0x18] sm:$0xff]
  %s1379 = scalar_lea.vmem %s5, 6
  %v1380 = vld [vmem:[%s1379] sm:$0x1]
  %v1382 = vlaneseq
  %v1383 = vshrl.u32 %v1382, 7
  %v1384 = vsub.s32 0, %v1383
  %v1385 = vrot.slane %v1380, %v1384
  %1387 = vmatprep.subr.mxu0 0.0
  %1388 = vmatpush1.msra.mxu0 0.0
  %1389 = vmatprep.subr.mxu0 0.0
  %1390 = vmatpush1.msra.mxu0 0.0
  %1391 = vmatprep.subr.mxu0 0.0
  %1392 = vmatpush1.msra.mxu0 0.0
  %1393 = vmatprep.subr.mxu0 0.0
  %1394 = vmatpush1.msra.mxu0 0.0
  %1395 = vmatprep.subr.mxu0 0.0
  %1396 = vmatpush1.msra.mxu0 0.0
  %1397 = vmatprep.subr.mxu0 0.0
  %1398 = vmatpush1.msra.mxu0 0.0
  %1399 = vmatprep.subr.mxu0 0.0
  %1400 = vmatpush1.msra.mxu0 0.0
  %1401 = vmatprep.subr.mxu0 0.0
  %1402 = vmatpush1.msra.mxu0 0.0
  %1403 = vmatprep.subr.mxu0 0.0
  %1404 = vmatpush1.msra.mxu0 0.0
  %1405 = vmatprep.subr.mxu0 0.0
  %1406 = vmatpush1.msra.mxu0 0.0
  %1407 = vmatprep.subr.mxu0 0.0
  %1408 = vmatpush1.msra.mxu0 0.0
  %1409 = vmatprep.subr.mxu0 0.0
  %1410 = vmatpush1.msra.mxu0 0.0
  %1411 = vmatprep.subr.mxu0 0.0
  %1412 = vmatpush1.msra.mxu0 %v1378
  %1413 = vmatprep.subr.mxu0 0.0
  %1414 = vmatpush1.msra.mxu0 %v1377
  %1415 = vmatprep.subr.mxu0 0.0
  %1416 = vmatpush1.msra.mxu0 %v1376
  %1417 = vmatprep.subr.mxu0 0.0
  %1418 = vmatpush1.msra.mxu0 %v1375
  %1419 = vmatprep.subr.mxu0 0.0
  %1420 = vmatpush2.msra.mxu0 0.0
  %1421 = vmatprep.subr.mxu0 0.0
  %1422 = vmatpush2.msra.mxu0 0.0
  %1423 = vmatprep.subr.mxu0 0.0
  %1424 = vmatpush2.msra.mxu0 0.0
  %1425 = vmatprep.subr.mxu0 0.0
  %1426 = vmatpush2.msra.mxu0 0.0
  %1427 = vmatprep.subr.mxu0 0.0
  %1428 = vmatpush2.msra.mxu0 0.0
  %1429 = vmatprep.subr.mxu0 0.0
  %1430 = vmatpush2.msra.mxu0 0.0
  %1431 = vmatprep.subr.mxu0 0.0
  %1432 = vmatpush2.msra.mxu0 0.0
  %1433 = vmatprep.subr.mxu0 0.0
  %1434 = vmatpush2.msra.mxu0 0.0
  %1435 = vmatprep.subr.mxu0 0.0
  %1436 = vmatpush2.msra.mxu0 0.0
  %1437 = vmatprep.subr.mxu0 0.0
  %1438 = vmatpush2.msra.mxu0 0.0
  %1439 = vmatprep.subr.mxu0 0.0
  %1440 = vmatpush2.msra.mxu0 0.0
  %1441 = vmatprep.subr.mxu0 0.0
  %1442 = vmatpush2.msra.mxu0 0.0
  %1443 = vmatprep.subr.mxu0 0.0
  %1444 = vmatpush2.msra.mxu0 0.0
  %1445 = vmatprep.subr.mxu0 0.0
  %1446 = vmatpush2.msra.mxu0 0.0
  %1447 = vmatprep.subr.mxu0 0.0
  %1448 = vmatpush2.msra.mxu0 0.0
  %1449 = vmatprep.subr.mxu0 0.0
  %1450 = vmatpush2.msra.mxu0 0.0
  %1451 = vmatprep.mubr.f32.mxu0 0.0
  %1452 = vmatmul.mubr.f32.gmra.mxu0 %v93
  %v1453 = vpop.f32.mrf.mxu0
  %v1454 = vadd.f32 %v1385, %v1453
  %v1455 = vpop.f32.mrf.mxu0
  %1456 = vmatprep.mubr.f32.mxu0 0.0
  %1457 = vmatmul.mubr.f32.gmra.mxu0 %v96
  %v1458 = vpop.f32.mrf.mxu0
  %v1459 = vadd.f32 %v1385, %v1458
  %v1460 = vpop.f32.mrf.mxu0
  %1461 = vmatprep.mubr.f32.mxu0 0.0
  %1462 = vmatmul.mubr.f32.gmra.mxu0 %v99
  %v1463 = vpop.f32.mrf.mxu0
  %v1464 = vadd.f32 %v1385, %v1463
  %v1465 = vpop.f32.mrf.mxu0
  %1466 = vdwg.mxu0
  %s1467 = scalar_lea.vmem %s4, 320
  %v1468 = vld [vmem:[%s1467] sm:$0xff]
  %v1469 = vld [vmem:[%s1467 + $0x8] sm:$0xff]
  %v1470 = vld [vmem:[%s1467 + $0x10] sm:$0xff]
  %v1471 = vld [vmem:[%s1467 + $0x18] sm:$0xff]
  %s1472 = scalar_lea.vmem %s5, 10
  %v1473 = vld [vmem:[%s1472] sm:$0x1]
  %v1475 = vlaneseq
  %v1476 = vshrl.u32 %v1475, 7
  %v1477 = vsub.s32 0, %v1476
  %v1478 = vrot.slane %v1473, %v1477
  %1480 = vmatprep.subr.mxu0 0.0
  %1481 = vmatpush1.msra.mxu0 0.0
  %1482 = vmatprep.subr.mxu0 0.0
  %1483 = vmatpush1.msra.mxu0 0.0
  %1484 = vmatprep.subr.mxu0 0.0
  %1485 = vmatpush1.msra.mxu0 0.0
  %1486 = vmatprep.subr.mxu0 0.0
  %1487 = vmatpush1.msra.mxu0 0.0
  %1488 = vmatprep.subr.mxu0 0.0
  %1489 = vmatpush1.msra.mxu0 0.0
  %1490 = vmatprep.subr.mxu0 0.0
  %1491 = vmatpush1.msra.mxu0 0.0
  %1492 = vmatprep.subr.mxu0 0.0
  %1493 = vmatpush1.msra.mxu0 0.0
  %1494 = vmatprep.subr.mxu0 0.0
  %1495 = vmatpush1.msra.mxu0 0.0
  %1496 = vmatprep.subr.mxu0 0.0
  %1497 = vmatpush1.msra.mxu0 0.0
  %1498 = vmatprep.subr.mxu0 0.0
  %1499 = vmatpush1.msra.mxu0 0.0
  %1500 = vmatprep.subr.mxu0 0.0
  %1501 = vmatpush1.msra.mxu0 0.0
  %1502 = vmatprep.subr.mxu0 0.0
  %1503 = vmatpush1.msra.mxu0 0.0
  %1504 = vmatprep.subr.mxu0 0.0
  %1505 = vmatpush1.msra.mxu0 %v1471
  %1506 = vmatprep.subr.mxu0 0.0
  %1507 = vmatpush1.msra.mxu0 %v1470
  %1508 = vmatprep.subr.mxu0 0.0
  %1509 = vmatpush1.msra.mxu0 %v1469
  %1510 = vmatprep.subr.mxu0 0.0
  %1511 = vmatpush1.msra.mxu0 %v1468
  %1512 = vmatprep.subr.mxu0 0.0
  %1513 = vmatpush2.msra.mxu0 0.0
  %1514 = vmatprep.subr.mxu0 0.0
  %1515 = vmatpush2.msra.mxu0 0.0
  %1516 = vmatprep.subr.mxu0 0.0
  %1517 = vmatpush2.msra.mxu0 0.0
  %1518 = vmatprep.subr.mxu0 0.0
  %1519 = vmatpush2.msra.mxu0 0.0
  %1520 = vmatprep.subr.mxu0 0.0
  %1521 = vmatpush2.msra.mxu0 0.0
  %1522 = vmatprep.subr.mxu0 0.0
  %1523 = vmatpush2.msra.mxu0 0.0
  %1524 = vmatprep.subr.mxu0 0.0
  %1525 = vmatpush2.msra.mxu0 0.0
  %1526 = vmatprep.subr.mxu0 0.0
  %1527 = vmatpush2.msra.mxu0 0.0
  %1528 = vmatprep.subr.mxu0 0.0
  %1529 = vmatpush2.msra.mxu0 0.0
  %1530 = vmatprep.subr.mxu0 0.0
  %1531 = vmatpush2.msra.mxu0 0.0
  %1532 = vmatprep.subr.mxu0 0.0
  %1533 = vmatpush2.msra.mxu0 0.0
  %1534 = vmatprep.subr.mxu0 0.0
  %1535 = vmatpush2.msra.mxu0 0.0
  %1536 = vmatprep.subr.mxu0 0.0
  %1537 = vmatpush2.msra.mxu0 0.0
  %1538 = vmatprep.subr.mxu0 0.0
  %1539 = vmatpush2.msra.mxu0 0.0
  %1540 = vmatprep.subr.mxu0 0.0
  %1541 = vmatpush2.msra.mxu0 0.0
  %1542 = vmatprep.subr.mxu0 0.0
  %1543 = vmatpush2.msra.mxu0 0.0
  %1544 = vmatprep.mubr.f32.mxu0 0.0
  %1545 = vmatmul.mubr.f32.gmra.mxu0 %v93
  %v1546 = vpop.f32.mrf.mxu0
  %v1547 = vadd.f32 %v1478, %v1546
  %v1548 = vpop.f32.mrf.mxu0
  %1549 = vmatprep.mubr.f32.mxu0 0.0
  %1550 = vmatmul.mubr.f32.gmra.mxu0 %v96
  %v1551 = vpop.f32.mrf.mxu0
  %v1552 = vadd.f32 %v1478, %v1551
  %v1553 = vpop.f32.mrf.mxu0
  %1554 = vmatprep.mubr.f32.mxu0 0.0
  %1555 = vmatmul.mubr.f32.gmra.mxu0 %v99
  %v1556 = vpop.f32.mrf.mxu0
  %v1557 = vadd.f32 %v1478, %v1556
  %v1558 = vpop.f32.mrf.mxu0
  %1559 = vdwg.mxu0
  %v1561 = vsel %vm367, %v1361, 0
  %v1564 = vsel %vm367, %v1366, 0
  %v1567 = vsel %vm367, %v1371, 0
  %v1570 = vsel %vm367, %v1454, 0
  %v1573 = vsel %vm367, %v1459, 0
  %v1576 = vsel %vm367, %v1464, 0
  %1578 = vmatprep.subr.mxu0 0.0
  %1579 = vmatpush1.xpose.msra.mxu0 0.0
  %1580 = vmatprep.subr.mxu0 0.0
  %1581 = vmatpush1.xpose.msra.mxu0 0.0
  %1582 = vmatprep.subr.mxu0 0.0
  %1583 = vmatpush1.xpose.msra.mxu0 0.0
  %1584 = vmatprep.subr.mxu0 0.0
  %1585 = vmatpush1.xpose.msra.mxu0 0.0
  %1586 = vmatprep.subr.mxu0 0.0
  %1587 = vmatpush1.xpose.msra.mxu0 0.0
  %1588 = vmatprep.subr.mxu0 0.0
  %1589 = vmatpush1.xpose.msra.mxu0 0.0
  %1590 = vmatprep.subr.mxu0 0.0
  %1591 = vmatpush1.xpose.msra.mxu0 0.0
  %1592 = vmatprep.subr.mxu0 0.0
  %1593 = vmatpush1.xpose.msra.mxu0 0.0
  %1594 = vmatprep.subr.mxu0 0.0
  %1595 = vmatpush1.xpose.msra.mxu0 0.0
  %1596 = vmatprep.subr.mxu0 0.0
  %1597 = vmatpush1.xpose.msra.mxu0 0.0
  %1598 = vmatprep.subr.mxu0 0.0
  %1599 = vmatpush1.xpose.msra.mxu0 0.0
  %1600 = vmatprep.subr.mxu0 0.0
  %1601 = vmatpush1.xpose.msra.mxu0 0.0
  %1602 = vmatprep.subr.mxu0 0.0
  %1603 = vmatpush1.xpose.msra.mxu0 0.0
  %1604 = vmatprep.subr.mxu0 0.0
  %1605 = vmatpush1.xpose.msra.mxu0 %v1576
  %1606 = vmatprep.subr.mxu0 0.0
  %1607 = vmatpush1.xpose.msra.mxu0 %v1573
  %1608 = vmatprep.subr.mxu0 0.0
  %1609 = vmatpush1.xpose.msra.mxu0 %v1570
  %1610 = vmatprep.subr.mxu0 0.0
  %1611 = vmatpush2.xpose.msra.mxu0 0.0
  %1612 = vmatprep.subr.mxu0 0.0
  %1613 = vmatpush2.xpose.msra.mxu0 0.0
  %1614 = vmatprep.subr.mxu0 0.0
  %1615 = vmatpush2.xpose.msra.mxu0 0.0
  %1616 = vmatprep.subr.mxu0 0.0
  %1617 = vmatpush2.xpose.msra.mxu0 0.0
  %1618 = vmatprep.subr.mxu0 0.0
  %1619 = vmatpush2.xpose.msra.mxu0 0.0
  %1620 = vmatprep.subr.mxu0 0.0
  %1621 = vmatpush2.xpose.msra.mxu0 0.0
  %1622 = vmatprep.subr.mxu0 0.0
  %1623 = vmatpush2.xpose.msra.mxu0 0.0
  %1624 = vmatprep.subr.mxu0 0.0
  %1625 = vmatpush2.xpose.msra.mxu0 0.0
  %1626 = vmatprep.subr.mxu0 0.0
  %1627 = vmatpush2.xpose.msra.mxu0 0.0
  %1628 = vmatprep.subr.mxu0 0.0
  %1629 = vmatpush2.xpose.msra.mxu0 0.0
  %1630 = vmatprep.subr.mxu0 0.0
  %1631 = vmatpush2.xpose.msra.mxu0 0.0
  %1632 = vmatprep.subr.mxu0 0.0
  %1633 = vmatpush2.xpose.msra.mxu0 0.0
  %1634 = vmatprep.subr.mxu0 0.0
  %1635 = vmatpush2.xpose.msra.mxu0 0.0
  %1636 = vmatprep.subr.mxu0 0.0
  %1637 = vmatpush2.xpose.msra.mxu0 0.0
  %1638 = vmatprep.subr.mxu0 0.0
  %1639 = vmatpush2.xpose.msra.mxu0 0.0
  %1640 = vmatprep.subr.mxu0 0.0
  %1641 = vmatpush2.xpose.msra.mxu0 0.0
  %1642 = vmatprep.mubr.f32.mxu0 0.0
  %1643 = vmatmul.mubr.f32.gmra.mxu0 %v1561
  %v1644 = vpop.f32.mrf.mxu0
  %v1645 = vadd.f32 0.0, %v1644
  %v1646 = vpop.f32.mrf.mxu0
  %1647 = vmatprep.mubr.f32.mxu0 0.0
  %1648 = vmatmul.mubr.f32.gmra.mxu0 %v1564
  %v1649 = vpop.f32.mrf.mxu0
  %v1650 = vadd.f32 0.0, %v1649
  %v1651 = vpop.f32.mrf.mxu0
  %1652 = vmatprep.mubr.f32.mxu0 0.0
  %1653 = vmatmul.mubr.f32.gmra.mxu0 %v1567
  %v1654 = vpop.f32.mrf.mxu0
  %v1655 = vadd.f32 0.0, %v1654
  %v1656 = vpop.f32.mrf.mxu0
  %1657 = vdwg.mxu0
  %v1658 = vmul.f32 %v1645, 0.35355338
  %v1659 = vmul.f32 %v1650, 0.35355338
  %v1660 = vmul.f32 %v1655, 0.35355338
  %v1661 = vadd.f32 %v1658, %v77
  %v1662 = vadd.f32 %v1659, %v78
  %v1663 = vadd.f32 %v1660, %v79
  %v1664 = vsel %vm472, %v1661, -inf
  %1665 = vmax.xlane.f32.xlu0 %v1664
  %v1666 = vpop.xlane.xlu0 %1665
  %v1667 = vsel %vm472, %v1662, -inf
  %1668 = vmax.xlane.f32.xlu0 %v1667
  %v1669 = vpop.xlane.xlu0 %1668
  %v1670 = vsel %vm472, %v1663, -inf
  %1671 = vmax.xlane.f32.xlu0 %v1670
  %v1672 = vpop.xlane.xlu0 %1671
  %v1673 = vsub.f32 %v1661, %v1666
  %v1674 = vsub.f32 %v1662, %v1669
  %v1675 = vsub.f32 %v1663, %v1672
  %v1676 = vmul.f32 %v1673, 1.442695
  %v1677 = vpow.pop %v1676
  %v1678 = vmul.f32 %v1674, 1.442695
  %v1679 = vpow.pop %v1678
  %v1680 = vmul.f32 %v1675, 1.442695
  %v1681 = vpow.pop %v1680
  %v1682 = vsel %vm472, %v1677, 0.0
  %1683 = vadd.xlane.f32.xlu0 %v1682
  %v1684 = vpop.xlane.xlu0 %1683
  %v1685 = vsel %vm472, %v1679, 0.0
  %1686 = vadd.xlane.f32.xlu0 %v1685
  %v1687 = vpop.xlane.xlu0 %1686
  %v1688 = vsel %vm472, %v1681, 0.0
  %1689 = vadd.xlane.f32.xlu0 %v1688
  %v1690 = vpop.xlane.xlu0 %1689
  %v1691 = vrcp.pop %v1684
  %v1692 = vrcp.pop %v1687
  %v1693 = vrcp.pop %v1690
  %v1694 = vmul.f32 %v1677, %v1691
  %v1695 = vmul.f32 %v1679, %v1692
  %v1696 = vmul.f32 %v1681, %v1693
  %v1698 = vsel %vm472, %v1694, 0
  %v1701 = vsel %vm472, %v1695, 0
  %v1704 = vsel %vm472, %v1696, 0
  %1706 = vmatprep.subr.mxu0 0.0
  %1707 = vmatpush1.msra.mxu0 0.0
  %1708 = vmatprep.subr.mxu0 0.0
  %1709 = vmatpush1.msra.mxu0 0.0
  %1710 = vmatprep.subr.mxu0 0.0
  %1711 = vmatpush1.msra.mxu0 0.0
  %1712 = vmatprep.subr.mxu0 0.0
  %1713 = vmatpush1.msra.mxu0 0.0
  %1714 = vmatprep.subr.mxu0 0.0
  %1715 = vmatpush1.msra.mxu0 0.0
  %1716 = vmatprep.subr.mxu0 0.0
  %1717 = vmatpush1.msra.mxu0 0.0
  %1718 = vmatprep.subr.mxu0 0.0
  %1719 = vmatpush1.msra.mxu0 0.0
  %1720 = vmatprep.subr.mxu0 0.0
  %1721 = vmatpush1.msra.mxu0 0.0
  %1722 = vmatprep.subr.mxu0 0.0
  %1723 = vmatpush1.msra.mxu0 0.0
  %1724 = vmatprep.subr.mxu0 0.0
  %1725 = vmatpush1.msra.mxu0 0.0
  %1726 = vmatprep.subr.mxu0 0.0
  %1727 = vmatpush1.msra.mxu0 0.0
  %1728 = vmatprep.subr.mxu0 0.0
  %1729 = vmatpush1.msra.mxu0 0.0
  %1730 = vmatprep.subr.mxu0 0.0
  %1731 = vmatpush1.msra.mxu0 0.0
  %1732 = vmatprep.subr.mxu0 0.0
  %1733 = vmatpush1.msra.mxu0 %v1557
  %1734 = vmatprep.subr.mxu0 0.0
  %1735 = vmatpush1.msra.mxu0 %v1552
  %1736 = vmatprep.subr.mxu0 0.0
  %1737 = vmatpush1.msra.mxu0 %v1547
  %1738 = vmatprep.subr.mxu0 0.0
  %1739 = vmatpush2.msra.mxu0 0.0
  %1740 = vmatprep.subr.mxu0 0.0
  %1741 = vmatpush2.msra.mxu0 0.0
  %1742 = vmatprep.subr.mxu0 0.0
  %1743 = vmatpush2.msra.mxu0 0.0
  %1744 = vmatprep.subr.mxu0 0.0
  %1745 = vmatpush2.msra.mxu0 0.0
  %1746 = vmatprep.subr.mxu0 0.0
  %1747 = vmatpush2.msra.mxu0 0.0
  %1748 = vmatprep.subr.mxu0 0.0
  %1749 = vmatpush2.msra.mxu0 0.0
  %1750 = vmatprep.subr.mxu0 0.0
  %1751 = vmatpush2.msra.mxu0 0.0
  %1752 = vmatprep.subr.mxu0 0.0
  %1753 = vmatpush2.msra.mxu0 0.0
  %1754 = vmatprep.subr.mxu0 0.0
  %1755 = vmatpush2.msra.mxu0 0.0
  %1756 = vmatprep.subr.mxu0 0.0
  %1757 = vmatpush2.msra.mxu0 0.0
  %1758 = vmatprep.subr.mxu0 0.0
  %1759 = vmatpush2.msra.mxu0 0.0
  %1760 = vmatprep.subr.mxu0 0.0
  %1761 = vmatpush2.msra.mxu0 0.0
  %1762 = vmatprep.subr.mxu0 0.0
  %1763 = vmatpush2.msra.mxu0 0.0
  %1764 = vmatprep.subr.mxu0 0.0
  %1765 = vmatpush2.msra.mxu0 0.0
  %1766 = vmatprep.subr.mxu0 0.0
  %1767 = vmatpush2.msra.mxu0 0.0
  %1768 = vmatprep.subr.mxu0 0.0
  %1769 = vmatpush2.msra.mxu0 0.0
  %1770 = vmatprep.mubr.f32.mxu0 0.0
  %1771 = vmatmul.mubr.f32.gmra.mxu0 %v1698
  %v1772 = vpop.f32.mrf.mxu0
  %v1773 = vadd.f32 0.0, %v1772
  %v1774 = vpop.f32.mrf.mxu0
  %1775 = vmatprep.mubr.f32.mxu0 0.0
  %1776 = vmatmul.mubr.f32.gmra.mxu0 %v1701
  %v1777 = vpop.f32.mrf.mxu0
  %v1778 = vadd.f32 0.0, %v1777
  %v1779 = vpop.f32.mrf.mxu0
  %1780 = vmatprep.mubr.f32.mxu0 0.0
  %1781 = vmatmul.mubr.f32.gmra.mxu0 %v1704
  %v1782 = vpop.f32.mrf.mxu0
  %v1783 = vadd.f32 0.0, %v1782
  %v1784 = vpop.f32.mrf.mxu0
  %1785 = vdwg.mxu0
  %s1786 = scalar_lea.vmem %s6, 16
  %v1787 = vld [vmem:[%s1786] sm:$0xff]
  %v1789 = vsel %vm367, %v1773, 0
  %v1792 = vsel %vm367, %v1778, 0
  %v1795 = vsel %vm367, %v1783, 0
  %1797 = vmatprep.subr.mxu0 0.0
  %1798 = vmatpush1.msra.mxu0 0.0
  %1799 = vmatprep.subr.mxu0 0.0
  %1800 = vmatpush1.msra.mxu0 0.0
  %1801 = vmatprep.subr.mxu0 0.0
  %1802 = vmatpush1.msra.mxu0 0.0
  %1803 = vmatprep.subr.mxu0 0.0
  %1804 = vmatpush1.msra.mxu0 0.0
  %1805 = vmatprep.subr.mxu0 0.0
  %1806 = vmatpush1.msra.mxu0 0.0
  %1807 = vmatprep.subr.mxu0 0.0
  %1808 = vmatpush1.msra.mxu0 0.0
  %1809 = vmatprep.subr.mxu0 0.0
  %1810 = vmatpush1.msra.mxu0 0.0
  %1811 = vmatprep.subr.mxu0 0.0
  %1812 = vmatpush1.msra.mxu0 0.0
  %1813 = vmatprep.subr.mxu0 0.0
  %1814 = vmatpush1.msra.mxu0 0.0
  %1815 = vmatprep.subr.mxu0 0.0
  %1816 = vmatpush1.msra.mxu0 0.0
  %1817 = vmatprep.subr.mxu0 0.0
  %1818 = vmatpush1.msra.mxu0 0.0
  %1819 = vmatprep.subr.mxu0 0.0
  %1820 = vmatpush1.msra.mxu0 0.0
  %1821 = vmatprep.subr.mxu0 0.0
  %1822 = vmatpush1.msra.mxu0 0.0
  %1823 = vmatprep.subr.mxu0 0.0
  %1824 = vmatpush1.msra.mxu0 0.0
  %1825 = vmatprep.subr.mxu0 0.0
  %1826 = vmatpush1.msra.mxu0 0.0
  %1827 = vmatprep.subr.mxu0 0.0
  %1828 = vmatpush1.msra.mxu0 %v1787
  %1829 = vmatprep.subr.mxu0 0.0
  %1830 = vmatpush2.msra.mxu0 0.0
  %1831 = vmatprep.subr.mxu0 0.0
  %1832 = vmatpush2.msra.mxu0 0.0
  %1833 = vmatprep.subr.mxu0 0.0
  %1834 = vmatpush2.msra.mxu0 0.0
  %1835 = vmatprep.subr.mxu0 0.0
  %1836 = vmatpush2.msra.mxu0 0.0
  %1837 = vmatprep.subr.mxu0 0.0
  %1838 = vmatpush2.msra.mxu0 0.0
  %1839 = vmatprep.subr.mxu0 0.0
  %1840 = vmatpush2.msra.mxu0 0.0
  %1841 = vmatprep.subr.mxu0 0.0
  %1842 = vmatpush2.msra.mxu0 0.0
  %1843 = vmatprep.subr.mxu0 0.0
  %1844 = vmatpush2.msra.mxu0 0.0
  %1845 = vmatprep.subr.mxu0 0.0
  %1846 = vmatpush2.msra.mxu0 0.0
  %1847 = vmatprep.subr.mxu0 0.0
  %1848 = vmatpush2.msra.mxu0 0.0
  %1849 = vmatprep.subr.mxu0 0.0
  %1850 = vmatpush2.msra.mxu0 0.0
  %1851 = vmatprep.subr.mxu0 0.0
  %1852 = vmatpush2.msra.mxu0 0.0
  %1853 = vmatprep.subr.mxu0 0.0
  %1854 = vmatpush2.msra.mxu0 0.0
  %1855 = vmatprep.subr.mxu0 0.0
  %1856 = vmatpush2.msra.mxu0 0.0
  %1857 = vmatprep.subr.mxu0 0.0
  %1858 = vmatpush2.msra.mxu0 0.0
  %1859 = vmatprep.subr.mxu0 0.0
  %1860 = vmatpush2.msra.mxu0 0.0
  %1861 = vmatprep.mubr.f32.mxu0 0.0
  %1862 = vmatmul.mubr.f32.gmra.mxu0 %v1789
  %v1863 = vpop.f32.mrf.mxu0
  %v1864 = vadd.f32 0.0, %v1863
  %v1865 = vpop.f32.mrf.mxu0
  %1866 = vmatprep.mubr.f32.mxu0 0.0
  %1867 = vmatmul.mubr.f32.gmra.mxu0 %v1792
  %v1868 = vpop.f32.mrf.mxu0
  %v1869 = vadd.f32 0.0, %v1868
  %v1870 = vpop.f32.mrf.mxu0
  %1871 = vmatprep.mubr.f32.mxu0 0.0
  %1872 = vmatmul.mubr.f32.gmra.mxu0 %v1795
  %v1873 = vpop.f32.mrf.mxu0
  %v1874 = vadd.f32 0.0, %v1873
  %v1875 = vpop.f32.mrf.mxu0
  %1876 = vdwg.mxu0
  %v1877 = vadd.f32 %v1268, %v1864
  %v1878 = vadd.f32 %v1273, %v1869
  %v1879 = vadd.f32 %v1278, %v1874
  %s1880 = scalar_lea.vmem %s4, 96
  %v1881 = vld [vmem:[%s1880] sm:$0xff]
  %v1882 = vld [vmem:[%s1880 + $0x8] sm:$0xff]
  %v1883 = vld [vmem:[%s1880 + $0x10] sm:$0xff]
  %v1884 = vld [vmem:[%s1880 + $0x18] sm:$0xff]
  %s1885 = scalar_lea.vmem %s5, 3
  %v1886 = vld [vmem:[%s1885] sm:$0x1]
  %v1888 = vlaneseq
  %v1889 = vshrl.u32 %v1888, 7
  %v1890 = vsub.s32 0, %v1889
  %v1891 = vrot.slane %v1886, %v1890
  %1893 = vmatprep.subr.mxu0 0.0
  %1894 = vmatpush1.msra.mxu0 0.0
  %1895 = vmatprep.subr.mxu0 0.0
  %1896 = vmatpush1.msra.mxu0 0.0
  %1897 = vmatprep.subr.mxu0 0.0
  %1898 = vmatpush1.msra.mxu0 0.0
  %1899 = vmatprep.subr.mxu0 0.0
  %1900 = vmatpush1.msra.mxu0 0.0
  %1901 = vmatprep.subr.mxu0 0.0
  %1902 = vmatpush1.msra.mxu0 0.0
  %1903 = vmatprep.subr.mxu0 0.0
  %1904 = vmatpush1.msra.mxu0 0.0
  %1905 = vmatprep.subr.mxu0 0.0
  %1906 = vmatpush1.msra.mxu0 0.0
  %1907 = vmatprep.subr.mxu0 0.0
  %1908 = vmatpush1.msra.mxu0 0.0
  %1909 = vmatprep.subr.mxu0 0.0
  %1910 = vmatpush1.msra.mxu0 0.0
  %1911 = vmatprep.subr.mxu0 0.0
  %1912 = vmatpush1.msra.mxu0 0.0
  %1913 = vmatprep.subr.mxu0 0.0
  %1914 = vmatpush1.msra.mxu0 0.0
  %1915 = vmatprep.subr.mxu0 0.0
  %1916 = vmatpush1.msra.mxu0 0.0
  %1917 = vmatprep.subr.mxu0 0.0
  %1918 = vmatpush1.msra.mxu0 %v1884
  %1919 = vmatprep.subr.mxu0 0.0
  %1920 = vmatpush1.msra.mxu0 %v1883
  %1921 = vmatprep.subr.mxu0 0.0
  %1922 = vmatpush1.msra.mxu0 %v1882
  %1923 = vmatprep.subr.mxu0 0.0
  %1924 = vmatpush1.msra.mxu0 %v1881
  %1925 = vmatprep.subr.mxu0 0.0
  %1926 = vmatpush2.msra.mxu0 0.0
  %1927 = vmatprep.subr.mxu0 0.0
  %1928 = vmatpush2.msra.mxu0 0.0
  %1929 = vmatprep.subr.mxu0 0.0
  %1930 = vmatpush2.msra.mxu0 0.0
  %1931 = vmatprep.subr.mxu0 0.0
  %1932 = vmatpush2.msra.mxu0 0.0
  %1933 = vmatprep.subr.mxu0 0.0
  %1934 = vmatpush2.msra.mxu0 0.0
  %1935 = vmatprep.subr.mxu0 0.0
  %1936 = vmatpush2.msra.mxu0 0.0
  %1937 = vmatprep.subr.mxu0 0.0
  %1938 = vmatpush2.msra.mxu0 0.0
  %1939 = vmatprep.subr.mxu0 0.0
  %1940 = vmatpush2.msra.mxu0 0.0
  %1941 = vmatprep.subr.mxu0 0.0
  %1942 = vmatpush2.msra.mxu0 0.0
  %1943 = vmatprep.subr.mxu0 0.0
  %1944 = vmatpush2.msra.mxu0 0.0
  %1945 = vmatprep.subr.mxu0 0.0
  %1946 = vmatpush2.msra.mxu0 0.0
  %1947 = vmatprep.subr.mxu0 0.0
  %1948 = vmatpush2.msra.mxu0 0.0
  %1949 = vmatprep.subr.mxu0 0.0
  %1950 = vmatpush2.msra.mxu0 0.0
  %1951 = vmatprep.subr.mxu0 0.0
  %1952 = vmatpush2.msra.mxu0 0.0
  %1953 = vmatprep.subr.mxu0 0.0
  %1954 = vmatpush2.msra.mxu0 0.0
  %1955 = vmatprep.subr.mxu0 0.0
  %1956 = vmatpush2.msra.mxu0 0.0
  %1957 = vmatprep.mubr.f32.mxu0 0.0
  %1958 = vmatmul.mubr.f32.gmra.mxu0 %v93
  %v1959 = vpop.f32.mrf.mxu0
  %v1960 = vadd.f32 %v1891, %v1959
  %v1961 = vpop.f32.mrf.mxu0
  %1962 = vmatprep.mubr.f32.mxu0 0.0
  %1963 = vmatmul.mubr.f32.gmra.mxu0 %v96
  %v1964 = vpop.f32.mrf.mxu0
  %v1965 = vadd.f32 %v1891, %v1964
  %v1966 = vpop.f32.mrf.mxu0
  %1967 = vmatprep.mubr.f32.mxu0 0.0
  %1968 = vmatmul.mubr.f32.gmra.mxu0 %v99
  %v1969 = vpop.f32.mrf.mxu0
  %v1970 = vadd.f32 %v1891, %v1969
  %v1971 = vpop.f32.mrf.mxu0
  %1972 = vdwg.mxu0
  %s1973 = scalar_lea.vmem %s4, 224
  %v1974 = vld [vmem:[%s1973] sm:$0xff]
  %v1975 = vld [vmem:[%s1973 + $0x8] sm:$0xff]
  %v1976 = vld [vmem:[%s1973 + $0x10] sm:$0xff]
  %v1977 = vld [vmem:[%s1973 + $0x18] sm:$0xff]
  %s1978 = scalar_lea.vmem %s5, 7
  %v1979 = vld [vmem:[%s1978] sm:$0x1]
  %v1981 = vlaneseq
  %v1982 = vshrl.u32 %v1981, 7
  %v1983 = vsub.s32 0, %v1982
  %v1984 = vrot.slane %v1979, %v1983
  %1986 = vmatprep.subr.mxu0 0.0
  %1987 = vmatpush1.msra.mxu0 0.0
  %1988 = vmatprep.subr.mxu0 0.0
  %1989 = vmatpush1.msra.mxu0 0.0
  %1990 = vmatprep.subr.mxu0 0.0
  %1991 = vmatpush1.msra.mxu0 0.0
  %1992 = vmatprep.subr.mxu0 0.0
  %1993 = vmatpush1.msra.mxu0 0.0
  %1994 = vmatprep.subr.mxu0 0.0
  %1995 = vmatpush1.msra.mxu0 0.0
  %1996 = vmatprep.subr.mxu0 0.0
  %1997 = vmatpush1.msra.mxu0 0.0
  %1998 = vmatprep.subr.mxu0 0.0
  %1999 = vmatpush1.msra.mxu0 0.0
  %2000 = vmatprep.subr.mxu0 0.0
  %2001 = vmatpush1.msra.mxu0 0.0
  %2002 = vmatprep.subr.mxu0 0.0
  %2003 = vmatpush1.msra.mxu0 0.0
  %2004 = vmatprep.subr.mxu0 0.0
  %2005 = vmatpush1.msra.mxu0 0.0
  %2006 = vmatprep.subr.mxu0 0.0
  %2007 = vmatpush1.msra.mxu0 0.0
  %2008 = vmatprep.subr.mxu0 0.0
  %2009 = vmatpush1.msra.mxu0 0.0
  %2010 = vmatprep.subr.mxu0 0.0
  %2011 = vmatpush1.msra.mxu0 %v1977
  %2012 = vmatprep.subr.mxu0 0.0
  %2013 = vmatpush1.msra.mxu0 %v1976
  %2014 = vmatprep.subr.mxu0 0.0
  %2015 = vmatpush1.msra.mxu0 %v1975
  %2016 = vmatprep.subr.mxu0 0.0
  %2017 = vmatpush1.msra.mxu0 %v1974
  %2018 = vmatprep.subr.mxu0 0.0
  %2019 = vmatpush2.msra.mxu0 0.0
  %2020 = vmatprep.subr.mxu0 0.0
  %2021 = vmatpush2.msra.mxu0 0.0
  %2022 = vmatprep.subr.mxu0 0.0
  %2023 = vmatpush2.msra.mxu0 0.0
  %2024 = vmatprep.subr.mxu0 0.0
  %2025 = vmatpush2.msra.mxu0 0.0
  %2026 = vmatprep.subr.mxu0 0.0
  %2027 = vmatpush2.msra.mxu0 0.0
  %2028 = vmatprep.subr.mxu0 0.0
  %2029 = vmatpush2.msra.mxu0 0.0
  %2030 = vmatprep.subr.mxu0 0.0
  %2031 = vmatpush2.msra.mxu0 0.0
  %2032 = vmatprep.subr.mxu0 0.0
  %2033 = vmatpush2.msra.mxu0 0.0
  %2034 = vmatprep.subr.mxu0 0.0
  %2035 = vmatpush2.msra.mxu0 0.0
  %2036 = vmatprep.subr.mxu0 0.0
  %2037 = vmatpush2.msra.mxu0 0.0
  %2038 = vmatprep.subr.mxu0 0.0
  %2039 = vmatpush2.msra.mxu0 0.0
  %2040 = vmatprep.subr.mxu0 0.0
  %2041 = vmatpush2.msra.mxu0 0.0
  %2042 = vmatprep.subr.mxu0 0.0
  %2043 = vmatpush2.msra.mxu0 0.0
  %2044 = vmatprep.subr.mxu0 0.0
  %2045 = vmatpush2.msra.mxu0 0.0
  %2046 = vmatprep.subr.mxu0 0.0
  %2047 = vmatpush2.msra.mxu0 0.0
  %2048 = vmatprep.subr.mxu0 0.0
  %2049 = vmatpush2.msra.mxu0 0.0
  %2050 = vmatprep.mubr.f32.mxu0 0.0
  %2051 = vmatmul.mubr.f32.gmra.mxu0 %v93
  %v2052 = vpop.f32.mrf.mxu0
  %v2053 = vadd.f32 %v1984, %v2052
  %v2054 = vpop.f32.mrf.mxu0
  %2055 = vmatprep.mubr.f32.mxu0 0.0
  %2056 = vmatmul.mubr.f32.gmra.mxu0 %v96
  %v2057 = vpop.f32.mrf.mxu0
  %v2058 = vadd.f32 %v1984, %v2057
  %v2059 = vpop.f32.mrf.mxu0
  %2060 = vmatprep.mubr.f32.mxu0 0.0
  %2061 = vmatmul.mubr.f32.gmra.mxu0 %v99
  %v2062 = vpop.f32.mrf.mxu0
  %v2063 = vadd.f32 %v1984, %v2062
  %v2064 = vpop.f32.mrf.mxu0
  %2065 = vdwg.mxu0
  %s2066 = scalar_lea.vmem %s4, 352
  %v2067 = vld [vmem:[%s2066] sm:$0xff]
  %v2068 = vld [vmem:[%s2066 + $0x8] sm:$0xff]
  %v2069 = vld [vmem:[%s2066 + $0x10] sm:$0xff]
  %v2070 = vld [vmem:[%s2066 + $0x18] sm:$0xff]
  %s2071 = scalar_lea.vmem %s5, 11
  %v2072 = vld [vmem:[%s2071] sm:$0x1]
  %v2074 = vlaneseq
  %v2075 = vshrl.u32 %v2074, 7
  %v2076 = vsub.s32 0, %v2075
  %v2077 = vrot.slane %v2072, %v2076
  %2079 = vmatprep.subr.mxu0 0.0
  %2080 = vmatpush1.msra.mxu0 0.0
  %2081 = vmatprep.subr.mxu0 0.0
  %2082 = vmatpush1.msra.mxu0 0.0
  %2083 = vmatprep.subr.mxu0 0.0
  %2084 = vmatpush1.msra.mxu0 0.0
  %2085 = vmatprep.subr.mxu0 0.0
  %2086 = vmatpush1.msra.mxu0 0.0
  %2087 = vmatprep.subr.mxu0 0.0
  %2088 = vmatpush1.msra.mxu0 0.0
  %2089 = vmatprep.subr.mxu0 0.0
  %2090 = vmatpush1.msra.mxu0 0.0
  %2091 = vmatprep.subr.mxu0 0.0
  %2092 = vmatpush1.msra.mxu0 0.0
  %2093 = vmatprep.subr.mxu0 0.0
  %2094 = vmatpush1.msra.mxu0 0.0
  %2095 = vmatprep.subr.mxu0 0.0
  %2096 = vmatpush1.msra.mxu0 0.0
  %2097 = vmatprep.subr.mxu0 0.0
  %2098 = vmatpush1.msra.mxu0 0.0
  %2099 = vmatprep.subr.mxu0 0.0
  %2100 = vmatpush1.msra.mxu0 0.0
  %2101 = vmatprep.subr.mxu0 0.0
  %2102 = vmatpush1.msra.mxu0 0.0
  %2103 = vmatprep.subr.mxu0 0.0
  %2104 = vmatpush1.msra.mxu0 %v2070
  %2105 = vmatprep.subr.mxu0 0.0
  %2106 = vmatpush1.msra.mxu0 %v2069
  %2107 = vmatprep.subr.mxu0 0.0
  %2108 = vmatpush1.msra.mxu0 %v2068
  %2109 = vmatprep.subr.mxu0 0.0
  %2110 = vmatpush1.msra.mxu0 %v2067
  %2111 = vmatprep.subr.mxu0 0.0
  %2112 = vmatpush2.msra.mxu0 0.0
  %2113 = vmatprep.subr.mxu0 0.0
  %2114 = vmatpush2.msra.mxu0 0.0
  %2115 = vmatprep.subr.mxu0 0.0
  %2116 = vmatpush2.msra.mxu0 0.0
  %2117 = vmatprep.subr.mxu0 0.0
  %2118 = vmatpush2.msra.mxu0 0.0
  %2119 = vmatprep.subr.mxu0 0.0
  %2120 = vmatpush2.msra.mxu0 0.0
  %2121 = vmatprep.subr.mxu0 0.0
  %2122 = vmatpush2.msra.mxu0 0.0
  %2123 = vmatprep.subr.mxu0 0.0
  %2124 = vmatpush2.msra.mxu0 0.0
  %2125 = vmatprep.subr.mxu0 0.0
  %2126 = vmatpush2.msra.mxu0 0.0
  %2127 = vmatprep.subr.mxu0 0.0
  %2128 = vmatpush2.msra.mxu0 0.0
  %2129 = vmatprep.subr.mxu0 0.0
  %2130 = vmatpush2.msra.mxu0 0.0
  %2131 = vmatprep.subr.mxu0 0.0
  %2132 = vmatpush2.msra.mxu0 0.0
  %2133 = vmatprep.subr.mxu0 0.0
  %2134 = vmatpush2.msra.mxu0 0.0
  %2135 = vmatprep.subr.mxu0 0.0
  %2136 = vmatpush2.msra.mxu0 0.0
  %2137 = vmatprep.subr.mxu0 0.0
  %2138 = vmatpush2.msra.mxu0 0.0
  %2139 = vmatprep.subr.mxu0 0.0
  %2140 = vmatpush2.msra.mxu0 0.0
  %2141 = vmatprep.subr.mxu0 0.0
  %2142 = vmatpush2.msra.mxu0 0.0
  %2143 = vmatprep.mubr.f32.mxu0 0.0
  %2144 = vmatmul.mubr.f32.gmra.mxu0 %v93
  %v2145 = vpop.f32.mrf.mxu0
  %v2146 = vadd.f32 %v2077, %v2145
  %v2147 = vpop.f32.mrf.mxu0
  %2148 = vmatprep.mubr.f32.mxu0 0.0
  %2149 = vmatmul.mubr.f32.gmra.mxu0 %v96
  %v2150 = vpop.f32.mrf.mxu0
  %v2151 = vadd.f32 %v2077, %v2150
  %v2152 = vpop.f32.mrf.mxu0
  %2153 = vmatprep.mubr.f32.mxu0 0.0
  %2154 = vmatmul.mubr.f32.gmra.mxu0 %v99
  %v2155 = vpop.f32.mrf.mxu0
  %v2156 = vadd.f32 %v2077, %v2155
  %v2157 = vpop.f32.mrf.mxu0
  %2158 = vdwg.mxu0
  %v2160 = vsel %vm367, %v1960, 0
  %v2163 = vsel %vm367, %v1965, 0
  %v2166 = vsel %vm367, %v1970, 0
  %v2169 = vsel %vm367, %v2053, 0
  %v2172 = vsel %vm367, %v2058, 0
  %v2175 = vsel %vm367, %v2063, 0
  %2177 = vmatprep.subr.mxu0 0.0
  %2178 = vmatpush1.xpose.msra.mxu0 0.0
  %2179 = vmatprep.subr.mxu0 0.0
  %2180 = vmatpush1.xpose.msra.mxu0 0.0
  %2181 = vmatprep.subr.mxu0 0.0
  %2182 = vmatpush1.xpose.msra.mxu0 0.0
  %2183 = vmatprep.subr.mxu0 0.0
  %2184 = vmatpush1.xpose.msra.mxu0 0.0
  %2185 = vmatprep.subr.mxu0 0.0
  %2186 = vmatpush1.xpose.msra.mxu0 0.0
  %2187 = vmatprep.subr.mxu0 0.0
  %2188 = vmatpush1.xpose.msra.mxu0 0.0
  %2189 = vmatprep.subr.mxu0 0.0
  %2190 = vmatpush1.xpose.msra.mxu0 0.0
  %2191 = vmatprep.subr.mxu0 0.0
  %2192 = vmatpush1.xpose.msra.mxu0 0.0
  %2193 = vmatprep.subr.mxu0 0.0
  %2194 = vmatpush1.xpose.msra.mxu0 0.0
  %2195 = vmatprep.subr.mxu0 0.0
  %2196 = vmatpush1.xpose.msra.mxu0 0.0
  %2197 = vmatprep.subr.mxu0 0.0
  %2198 = vmatpush1.xpose.msra.mxu0 0.0
  %2199 = vmatprep.subr.mxu0 0.0
  %2200 = vmatpush1.xpose.msra.mxu0 0.0
  %2201 = vmatprep.subr.mxu0 0.0
  %2202 = vmatpush1.xpose.msra.mxu0 0.0
  %2203 = vmatprep.subr.mxu0 0.0
  %2204 = vmatpush1.xpose.msra.mxu0 %v2175
  %2205 = vmatprep.subr.mxu0 0.0
  %2206 = vmatpush1.xpose.msra.mxu0 %v2172
  %2207 = vmatprep.subr.mxu0 0.0
  %2208 = vmatpush1.xpose.msra.mxu0 %v2169
  %2209 = vmatprep.subr.mxu0 0.0
  %2210 = vmatpush2.xpose.msra.mxu0 0.0
  %2211 = vmatprep.subr.mxu0 0.0
  %2212 = vmatpush2.xpose.msra.mxu0 0.0
  %2213 = vmatprep.subr.mxu0 0.0
  %2214 = vmatpush2.xpose.msra.mxu0 0.0
  %2215 = vmatprep.subr.mxu0 0.0
  %2216 = vmatpush2.xpose.msra.mxu0 0.0
  %2217 = vmatprep.subr.mxu0 0.0
  %2218 = vmatpush2.xpose.msra.mxu0 0.0
  %2219 = vmatprep.subr.mxu0 0.0
  %2220 = vmatpush2.xpose.msra.mxu0 0.0
  %2221 = vmatprep.subr.mxu0 0.0
  %2222 = vmatpush2.xpose.msra.mxu0 0.0
  %2223 = vmatprep.subr.mxu0 0.0
  %2224 = vmatpush2.xpose.msra.mxu0 0.0
  %2225 = vmatprep.subr.mxu0 0.0
  %2226 = vmatpush2.xpose.msra.mxu0 0.0
  %2227 = vmatprep.subr.mxu0 0.0
  %2228 = vmatpush2.xpose.msra.mxu0 0.0
  %2229 = vmatprep.subr.mxu0 0.0
  %2230 = vmatpush2.xpose.msra.mxu0 0.0
  %2231 = vmatprep.subr.mxu0 0.0
  %2232 = vmatpush2.xpose.msra.mxu0 0.0
  %2233 = vmatprep.subr.mxu0 0.0
  %2234 = vmatpush2.xpose.msra.mxu0 0.0
  %2235 = vmatprep.subr.mxu0 0.0
  %2236 = vmatpush2.xpose.msra.mxu0 0.0
  %2237 = vmatprep.subr.mxu0 0.0
  %2238 = vmatpush2.xpose.msra.mxu0 0.0
  %2239 = vmatprep.subr.mxu0 0.0
  %2240 = vmatpush2.xpose.msra.mxu0 0.0
  %2241 = vmatprep.mubr.f32.mxu0 0.0
  %2242 = vmatmul.mubr.f32.gmra.mxu0 %v2160
  %v2243 = vpop.f32.mrf.mxu0
  %v2244 = vadd.f32 0.0, %v2243
  %v2245 = vpop.f32.mrf.mxu0
  %2246 = vmatprep.mubr.f32.mxu0 0.0
  %2247 = vmatmul.mubr.f32.gmra.mxu0 %v2163
  %v2248 = vpop.f32.mrf.mxu0
  %v2249 = vadd.f32 0.0, %v2248
  %v2250 = vpop.f32.mrf.mxu0
  %2251 = vmatprep.mubr.f32.mxu0 0.0
  %2252 = vmatmul.mubr.f32.gmra.mxu0 %v2166
  %v2253 = vpop.f32.mrf.mxu0
  %v2254 = vadd.f32 0.0, %v2253
  %v2255 = vpop.f32.mrf.mxu0
  %2256 = vdwg.mxu0
  %v2257 = vmul.f32 %v2244, 0.35355338
  %v2258 = vmul.f32 %v2249, 0.35355338
  %v2259 = vmul.f32 %v2254, 0.35355338
  %v2260 = vadd.f32 %v2257, %v77
  %v2261 = vadd.f32 %v2258, %v78
  %v2262 = vadd.f32 %v2259, %v79
  %v2263 = vsel %vm472, %v2260, -inf
  %2264 = vmax.xlane.f32.xlu0 %v2263
  %v2265 = vpop.xlane.xlu0 %2264
  %v2266 = vsel %vm472, %v2261, -inf
  %2267 = vmax.xlane.f32.xlu0 %v2266
  %v2268 = vpop.xlane.xlu0 %2267
  %v2269 = vsel %vm472, %v2262, -inf
  %2270 = vmax.xlane.f32.xlu0 %v2269
  %v2271 = vpop.xlane.xlu0 %2270
  %v2272 = vsub.f32 %v2260, %v2265
  %v2273 = vsub.f32 %v2261, %v2268
  %v2274 = vsub.f32 %v2262, %v2271
  %v2275 = vmul.f32 %v2272, 1.442695
  %v2276 = vpow.pop %v2275
  %v2277 = vmul.f32 %v2273, 1.442695
  %v2278 = vpow.pop %v2277
  %v2279 = vmul.f32 %v2274, 1.442695
  %v2280 = vpow.pop %v2279
  %v2281 = vsel %vm472, %v2276, 0.0
  %2282 = vadd.xlane.f32.xlu0 %v2281
  %v2283 = vpop.xlane.xlu0 %2282
  %v2284 = vsel %vm472, %v2278, 0.0
  %2285 = vadd.xlane.f32.xlu0 %v2284
  %v2286 = vpop.xlane.xlu0 %2285
  %v2287 = vsel %vm472, %v2280, 0.0
  %2288 = vadd.xlane.f32.xlu0 %v2287
  %v2289 = vpop.xlane.xlu0 %2288
  %v2290 = vrcp.pop %v2283
  %v2291 = vrcp.pop %v2286
  %v2292 = vrcp.pop %v2289
  %v2293 = vmul.f32 %v2276, %v2290
  %v2294 = vmul.f32 %v2278, %v2291
  %v2295 = vmul.f32 %v2280, %v2292
  %v2297 = vsel %vm472, %v2293, 0
  %v2300 = vsel %vm472, %v2294, 0
  %v2303 = vsel %vm472, %v2295, 0
  %2305 = vmatprep.subr.mxu0 0.0
  %2306 = vmatpush1.msra.mxu0 0.0
  %2307 = vmatprep.subr.mxu0 0.0
  %2308 = vmatpush1.msra.mxu0 0.0
  %2309 = vmatprep.subr.mxu0 0.0
  %2310 = vmatpush1.msra.mxu0 0.0
  %2311 = vmatprep.subr.mxu0 0.0
  %2312 = vmatpush1.msra.mxu0 0.0
  %2313 = vmatprep.subr.mxu0 0.0
  %2314 = vmatpush1.msra.mxu0 0.0
  %2315 = vmatprep.subr.mxu0 0.0
  %2316 = vmatpush1.msra.mxu0 0.0
  %2317 = vmatprep.subr.mxu0 0.0
  %2318 = vmatpush1.msra.mxu0 0.0
  %2319 = vmatprep.subr.mxu0 0.0
  %2320 = vmatpush1.msra.mxu0 0.0
  %2321 = vmatprep.subr.mxu0 0.0
  %2322 = vmatpush1.msra.mxu0 0.0
  %2323 = vmatprep.subr.mxu0 0.0
  %2324 = vmatpush1.msra.mxu0 0.0
  %2325 = vmatprep.subr.mxu0 0.0
  %2326 = vmatpush1.msra.mxu0 0.0
  %2327 = vmatprep.subr.mxu0 0.0
  %2328 = vmatpush1.msra.mxu0 0.0
  %2329 = vmatprep.subr.mxu0 0.0
  %2330 = vmatpush1.msra.mxu0 0.0
  %2331 = vmatprep.subr.mxu0 0.0
  %2332 = vmatpush1.msra.mxu0 %v2156
  %2333 = vmatprep.subr.mxu0 0.0
  %2334 = vmatpush1.msra.mxu0 %v2151
  %2335 = vmatprep.subr.mxu0 0.0
  %2336 = vmatpush1.msra.mxu0 %v2146
  %2337 = vmatprep.subr.mxu0 0.0
  %2338 = vmatpush2.msra.mxu0 0.0
  %2339 = vmatprep.subr.mxu0 0.0
  %2340 = vmatpush2.msra.mxu0 0.0
  %2341 = vmatprep.subr.mxu0 0.0
  %2342 = vmatpush2.msra.mxu0 0.0
  %2343 = vmatprep.subr.mxu0 0.0
  %2344 = vmatpush2.msra.mxu0 0.0
  %2345 = vmatprep.subr.mxu0 0.0
  %2346 = vmatpush2.msra.mxu0 0.0
  %2347 = vmatprep.subr.mxu0 0.0
  %2348 = vmatpush2.msra.mxu0 0.0
  %2349 = vmatprep.subr.mxu0 0.0
  %2350 = vmatpush2.msra.mxu0 0.0
  %2351 = vmatprep.subr.mxu0 0.0
  %2352 = vmatpush2.msra.mxu0 0.0
  %2353 = vmatprep.subr.mxu0 0.0
  %2354 = vmatpush2.msra.mxu0 0.0
  %2355 = vmatprep.subr.mxu0 0.0
  %2356 = vmatpush2.msra.mxu0 0.0
  %2357 = vmatprep.subr.mxu0 0.0
  %2358 = vmatpush2.msra.mxu0 0.0
  %2359 = vmatprep.subr.mxu0 0.0
  %2360 = vmatpush2.msra.mxu0 0.0
  %2361 = vmatprep.subr.mxu0 0.0
  %2362 = vmatpush2.msra.mxu0 0.0
  %2363 = vmatprep.subr.mxu0 0.0
  %2364 = vmatpush2.msra.mxu0 0.0
  %2365 = vmatprep.subr.mxu0 0.0
  %2366 = vmatpush2.msra.mxu0 0.0
  %2367 = vmatprep.subr.mxu0 0.0
  %2368 = vmatpush2.msra.mxu0 0.0
  %2369 = vmatprep.mubr.f32.mxu0 0.0
  %2370 = vmatmul.mubr.f32.gmra.mxu0 %v2297
  %v2371 = vpop.f32.mrf.mxu0
  %v2372 = vadd.f32 0.0, %v2371
  %v2373 = vpop.f32.mrf.mxu0
  %2374 = vmatprep.mubr.f32.mxu0 0.0
  %2375 = vmatmul.mubr.f32.gmra.mxu0 %v2300
  %v2376 = vpop.f32.mrf.mxu0
  %v2377 = vadd.f32 0.0, %v2376
  %v2378 = vpop.f32.mrf.mxu0
  %2379 = vmatprep.mubr.f32.mxu0 0.0
  %2380 = vmatmul.mubr.f32.gmra.mxu0 %v2303
  %v2381 = vpop.f32.mrf.mxu0
  %v2382 = vadd.f32 0.0, %v2381
  %v2383 = vpop.f32.mrf.mxu0
  %2384 = vdwg.mxu0
  %s2385 = scalar_lea.vmem %s6, 24
  %v2386 = vld [vmem:[%s2385] sm:$0xff]
  %v2388 = vsel %vm367, %v2372, 0
  %v2391 = vsel %vm367, %v2377, 0
  %v2394 = vsel %vm367, %v2382, 0
  %2396 = vmatprep.subr.mxu0 0.0
  %2397 = vmatpush1.msra.mxu0 0.0
  %2398 = vmatprep.subr.mxu0 0.0
  %2399 = vmatpush1.msra.mxu0 0.0
  %2400 = vmatprep.subr.mxu0 0.0
  %2401 = vmatpush1.msra.mxu0 0.0
  %2402 = vmatprep.subr.mxu0 0.0
  %2403 = vmatpush1.msra.mxu0 0.0
  %2404 = vmatprep.subr.mxu0 0.0
  %2405 = vmatpush1.msra.mxu0 0.0
  %2406 = vmatprep.subr.mxu0 0.0
  %2407 = vmatpush1.msra.mxu0 0.0
  %2408 = vmatprep.subr.mxu0 0.0
  %2409 = vmatpush1.msra.mxu0 0.0
  %2410 = vmatprep.subr.mxu0 0.0
  %2411 = vmatpush1.msra.mxu0 0.0
  %2412 = vmatprep.subr.mxu0 0.0
  %2413 = vmatpush1.msra.mxu0 0.0
  %2414 = vmatprep.subr.mxu0 0.0
  %2415 = vmatpush1.msra.mxu0 0.0
  %2416 = vmatprep.subr.mxu0 0.0
  %2417 = vmatpush1.msra.mxu0 0.0
  %2418 = vmatprep.subr.mxu0 0.0
  %2419 = vmatpush1.msra.mxu0 0.0
  %2420 = vmatprep.subr.mxu0 0.0
  %2421 = vmatpush1.msra.mxu0 0.0
  %2422 = vmatprep.subr.mxu0 0.0
  %2423 = vmatpush1.msra.mxu0 0.0
  %2424 = vmatprep.subr.mxu0 0.0
  %2425 = vmatpush1.msra.mxu0 0.0
  %2426 = vmatprep.subr.mxu0 0.0
  %2427 = vmatpush1.msra.mxu0 %v2386
  %2428 = vmatprep.subr.mxu0 0.0
  %2429 = vmatpush2.msra.mxu0 0.0
  %2430 = vmatprep.subr.mxu0 0.0
  %2431 = vmatpush2.msra.mxu0 0.0
  %2432 = vmatprep.subr.mxu0 0.0
  %2433 = vmatpush2.msra.mxu0 0.0
  %2434 = vmatprep.subr.mxu0 0.0
  %2435 = vmatpush2.msra.mxu0 0.0
  %2436 = vmatprep.subr.mxu0 0.0
  %2437 = vmatpush2.msra.mxu0 0.0
  %2438 = vmatprep.subr.mxu0 0.0
  %2439 = vmatpush2.msra.mxu0 0.0
  %2440 = vmatprep.subr.mxu0 0.0
  %2441 = vmatpush2.msra.mxu0 0.0
  %2442 = vmatprep.subr.mxu0 0.0
  %2443 = vmatpush2.msra.mxu0 0.0
  %2444 = vmatprep.subr.mxu0 0.0
  %2445 = vmatpush2.msra.mxu0 0.0
  %2446 = vmatprep.subr.mxu0 0.0
  %2447 = vmatpush2.msra.mxu0 0.0
  %2448 = vmatprep.subr.mxu0 0.0
  %2449 = vmatpush2.msra.mxu0 0.0
  %2450 = vmatprep.subr.mxu0 0.0
  %2451 = vmatpush2.msra.mxu0 0.0
  %2452 = vmatprep.subr.mxu0 0.0
  %2453 = vmatpush2.msra.mxu0 0.0
  %2454 = vmatprep.subr.mxu0 0.0
  %2455 = vmatpush2.msra.mxu0 0.0
  %2456 = vmatprep.subr.mxu0 0.0
  %2457 = vmatpush2.msra.mxu0 0.0
  %2458 = vmatprep.subr.mxu0 0.0
  %2459 = vmatpush2.msra.mxu0 0.0
  %2460 = vmatprep.mubr.f32.mxu0 0.0
  %2461 = vmatmul.mubr.f32.gmra.mxu0 %v2388
  %v2462 = vpop.f32.mrf.mxu0
  %v2463 = vadd.f32 0.0, %v2462
  %v2464 = vpop.f32.mrf.mxu0
  %2465 = vmatprep.mubr.f32.mxu0 0.0
  %2466 = vmatmul.mubr.f32.gmra.mxu0 %v2391
  %v2467 = vpop.f32.mrf.mxu0
  %v2468 = vadd.f32 0.0, %v2467
  %v2469 = vpop.f32.mrf.mxu0
  %2470 = vmatprep.mubr.f32.mxu0 0.0
  %2471 = vmatmul.mubr.f32.gmra.mxu0 %v2394
  %v2472 = vpop.f32.mrf.mxu0
  %v2473 = vadd.f32 0.0, %v2472
  %v2474 = vpop.f32.mrf.mxu0
  %2475 = vdwg.mxu0
  %v2476 = vadd.f32 %v1877, %v2463
  %v2477 = vadd.f32 %v1878, %v2468
  %v2478 = vadd.f32 %v1879, %v2473
  %v2479 = vld [vmem:[%s7] sm:$0x1]
  %v2481 = vlaneseq
  %v2482 = vshrl.u32 %v2481, 7
  %v2483 = vsub.s32 0, %v2482
  %v2484 = vrot.slane %v2479, %v2483
  %v2486 = vadd.f32 %v2476, %v2484
  %v2487 = vadd.f32 %v2477, %v2484
  %v2488 = vadd.f32 %v2478, %v2484
  %v2489 = vadd.f32 %v71, %v2486
  %v2490 = vadd.f32 %v72, %v2487
  %v2491 = vadd.f32 %v73, %v2488
  %v2492 = vld [vmem:[%s12] sm:$0x1]
  %v2493 = vld [vmem:[%s13] sm:$0x1]
  %v2494 = vsel %vm91, %v2489, 0.0
  %2495 = vadd.xlane.f32.xlu0 %v2494
  %v2496 = vpop.xlane.xlu0 %2495
  %v2497 = vsel %vm91, %v2490, 0.0
  %2498 = vadd.xlane.f32.xlu0 %v2497
  %v2499 = vpop.xlane.xlu0 %2498
  %v2500 = vsel %vm91, %v2491, 0.0
  %2501 = vadd.xlane.f32.xlu0 %v2500
  %v2502 = vpop.xlane.xlu0 %2501
  %v2503 = vrcp.pop 32.0
  %v2504 = vmul.f32 %v2496, %v2503
  %v2505 = vmul.f32 %v2499, %v2503
  %v2506 = vmul.f32 %v2502, %v2503
  %v2507 = vsub.f32 %v2489, %v2504
  %v2508 = vsub.f32 %v2490, %v2505
  %v2509 = vsub.f32 %v2491, %v2506
  %v2510 = vmul.f32 %v2507, %v2507
  %v2511 = vmul.f32 %v2508, %v2508
  %v2512 = vmul.f32 %v2509, %v2509
  %v2513 = vsel %vm91, %v2510, 0.0
  %2514 = vadd.xlane.f32.xlu0 %v2513
  %v2515 = vpop.xlane.xlu0 %2514
  %v2516 = vsel %vm91, %v2511, 0.0
  %2517 = vadd.xlane.f32.xlu0 %v2516
  %v2518 = vpop.xlane.xlu0 %2517
  %v2519 = vsel %vm91, %v2512, 0.0
  %2520 = vadd.xlane.f32.xlu0 %v2519
  %v2521 = vpop.xlane.xlu0 %2520
  %v2522 = vmul.f32 %v2515, %v2503
  %v2523 = vmul.f32 %v2518, %v2503
  %v2524 = vmul.f32 %v2521, %v2503
  %v2525 = vadd.f32 %v2522, 1e-05
  %v2526 = vadd.f32 %v2523, 1e-05
  %v2527 = vadd.f32 %v2524, 1e-05
  %v2528 = vrsqrt.pop %v2525
  %v2529 = vrsqrt.pop %v2526
  %v2530 = vrsqrt.pop %v2527
  %v2531 = vmul.f32 %v2507, %v2528
  %v2532 = vmul.f32 %v2508, %v2529
  %v2533 = vmul.f32 %v2509, %v2530
  %v2535 = vlaneseq
  %v2536 = vshrl.u32 %v2535, 7
  %v2537 = vsub.s32 0, %v2536
  %v2538 = vrot.slane %v2492, %v2537
  %v2540 = vmul.f32 %v2531, %v2538
  %v2541 = vmul.f32 %v2532, %v2538
  %v2542 = vmul.f32 %v2533, %v2538
  %v2544 = vlaneseq
  %v2545 = vshrl.u32 %v2544, 7
  %v2546 = vsub.s32 0, %v2545
  %v2547 = vrot.slane %v2493, %v2546
  %v2549 = vadd.f32 %v2540, %v2547
  %v2550 = vadd.f32 %v2541, %v2547
  %v2551 = vadd.f32 %v2542, %v2547
  %v2552 = vld [vmem:[%s3] sm:$0xff]
  %v2553 = vld [vmem:[%s3 + $0x8] sm:$0xff]
  %v2554 = vld [vmem:[%s3 + $0x10] sm:$0xff]
  %v2555 = vld [vmem:[%s8] sm:$0xff]
  %v2556 = vld [vmem:[%s8 + $0x8] sm:$0xff]
  %v2557 = vld [vmem:[%s8 + $0x10] sm:$0xff]
  %v2558 = vld [vmem:[%s8 + $0x18] sm:$0xff]
  %v2559 = vld [vmem:[%s9] sm:$0x1]
  %v2561 = vlaneseq
  %v2562 = vshrl.u32 %v2561, 7
  %v2563 = vsub.s32 0, %v2562
  %v2564 = vrot.slane %v2559, %v2563
  %v2567 = vsel %vm91, %v2549, 0
  %v2570 = vsel %vm91, %v2550, 0
  %v2573 = vsel %vm91, %v2551, 0
  %2575 = vmatprep.subr.mxu0 0.0
  %2576 = vmatpush1.msra.mxu0 0.0
  %2577 = vmatprep.subr.mxu0 0.0
  %2578 = vmatpush1.msra.mxu0 0.0
  %2579 = vmatprep.subr.mxu0 0.0
  %2580 = vmatpush1.msra.mxu0 0.0
  %2581 = vmatprep.subr.mxu0 0.0
  %2582 = vmatpush1.msra.mxu0 0.0
  %2583 = vmatprep.subr.mxu0 0.0
  %2584 = vmatpush1.msra.mxu0 0.0
  %2585 = vmatprep.subr.mxu0 0.0
  %2586 = vmatpush1.msra.mxu0 0.0
  %2587 = vmatprep.subr.mxu0 0.0
  %2588 = vmatpush1.msra.mxu0 0.0
  %2589 = vmatprep.subr.mxu0 0.0
  %2590 = vmatpush1.msra.mxu0 0.0
  %2591 = vmatprep.subr.mxu0 0.0
  %2592 = vmatpush1.msra.mxu0 0.0
  %2593 = vmatprep.subr.mxu0 0.0
  %2594 = vmatpush1.msra.mxu0 0.0
  %2595 = vmatprep.subr.mxu0 0.0
  %2596 = vmatpush1.msra.mxu0 0.0
  %2597 = vmatprep.subr.mxu0 0.0
  %2598 = vmatpush1.msra.mxu0 0.0
  %2599 = vmatprep.subr.mxu0 0.0
  %2600 = vmatpush1.msra.mxu0 %v2558
  %2601 = vmatprep.subr.mxu0 0.0
  %2602 = vmatpush1.msra.mxu0 %v2557
  %2603 = vmatprep.subr.mxu0 0.0
  %2604 = vmatpush1.msra.mxu0 %v2556
  %2605 = vmatprep.subr.mxu0 0.0
  %2606 = vmatpush1.msra.mxu0 %v2555
  %2607 = vmatprep.subr.mxu0 0.0
  %2608 = vmatpush2.msra.mxu0 0.0
  %2609 = vmatprep.subr.mxu0 0.0
  %2610 = vmatpush2.msra.mxu0 0.0
  %2611 = vmatprep.subr.mxu0 0.0
  %2612 = vmatpush2.msra.mxu0 0.0
  %2613 = vmatprep.subr.mxu0 0.0
  %2614 = vmatpush2.msra.mxu0 0.0
  %2615 = vmatprep.subr.mxu0 0.0
  %2616 = vmatpush2.msra.mxu0 0.0
  %2617 = vmatprep.subr.mxu0 0.0
  %2618 = vmatpush2.msra.mxu0 0.0
  %2619 = vmatprep.subr.mxu0 0.0
  %2620 = vmatpush2.msra.mxu0 0.0
  %2621 = vmatprep.subr.mxu0 0.0
  %2622 = vmatpush2.msra.mxu0 0.0
  %2623 = vmatprep.subr.mxu0 0.0
  %2624 = vmatpush2.msra.mxu0 0.0
  %2625 = vmatprep.subr.mxu0 0.0
  %2626 = vmatpush2.msra.mxu0 0.0
  %2627 = vmatprep.subr.mxu0 0.0
  %2628 = vmatpush2.msra.mxu0 0.0
  %2629 = vmatprep.subr.mxu0 0.0
  %2630 = vmatpush2.msra.mxu0 0.0
  %2631 = vmatprep.subr.mxu0 0.0
  %2632 = vmatpush2.msra.mxu0 0.0
  %2633 = vmatprep.subr.mxu0 0.0
  %2634 = vmatpush2.msra.mxu0 0.0
  %2635 = vmatprep.subr.mxu0 0.0
  %2636 = vmatpush2.msra.mxu0 0.0
  %2637 = vmatprep.subr.mxu0 0.0
  %2638 = vmatpush2.msra.mxu0 0.0
  %2639 = vmatprep.mubr.f32.mxu0 0.0
  %2640 = vmatmul.mubr.f32.gmra.mxu0 %v2567
  %v2641 = vpop.f32.mrf.mxu0
  %v2642 = vadd.f32 %v2564, %v2641
  %v2643 = vpop.f32.mrf.mxu0
  %2644 = vmatprep.mubr.f32.mxu0 0.0
  %2645 = vmatmul.mubr.f32.gmra.mxu0 %v2570
  %v2646 = vpop.f32.mrf.mxu0
  %v2647 = vadd.f32 %v2564, %v2646
  %v2648 = vpop.f32.mrf.mxu0
  %2649 = vmatprep.mubr.f32.mxu0 0.0
  %2650 = vmatmul.mubr.f32.gmra.mxu0 %v2573
  %v2651 = vpop.f32.mrf.mxu0
  %v2652 = vadd.f32 %v2564, %v2651
  %v2653 = vpop.f32.mrf.mxu0
  %2654 = vdwg.mxu0
  %s2655 = scalar_lea.vmem %s8, 128
  %v2656 = vld [vmem:[%s2655] sm:$0xff]
  %v2657 = vld [vmem:[%s2655 + $0x8] sm:$0xff]
  %v2658 = vld [vmem:[%s2655 + $0x10] sm:$0xff]
  %v2659 = vld [vmem:[%s2655 + $0x18] sm:$0xff]
  %s2660 = scalar_lea.vmem %s9, 4
  %v2661 = vld [vmem:[%s2660] sm:$0x1]
  %v2663 = vlaneseq
  %v2664 = vshrl.u32 %v2663, 7
  %v2665 = vsub.s32 0, %v2664
  %v2666 = vrot.slane %v2661, %v2665
  %v2669 = vsel %vm91, %v74, 0
  %v2672 = vsel %vm91, %v75, 0
  %v2675 = vsel %vm91, %v76, 0
  %2677 = vmatprep.subr.mxu0 0.0
  %2678 = vmatpush1.msra.mxu0 0.0
  %2679 = vmatprep.subr.mxu0 0.0
  %2680 = vmatpush1.msra.mxu0 0.0
  %2681 = vmatprep.subr.mxu0 0.0
  %2682 = vmatpush1.msra.mxu0 0.0
  %2683 = vmatprep.subr.mxu0 0.0
  %2684 = vmatpush1.msra.mxu0 0.0
  %2685 = vmatprep.subr.mxu0 0.0
  %2686 = vmatpush1.msra.mxu0 0.0
  %2687 = vmatprep.subr.mxu0 0.0
  %2688 = vmatpush1.msra.mxu0 0.0
  %2689 = vmatprep.subr.mxu0 0.0
  %2690 = vmatpush1.msra.mxu0 0.0
  %2691 = vmatprep.subr.mxu0 0.0
  %2692 = vmatpush1.msra.mxu0 0.0
  %2693 = vmatprep.subr.mxu0 0.0
  %2694 = vmatpush1.msra.mxu0 0.0
  %2695 = vmatprep.subr.mxu0 0.0
  %2696 = vmatpush1.msra.mxu0 0.0
  %2697 = vmatprep.subr.mxu0 0.0
  %2698 = vmatpush1.msra.mxu0 0.0
  %2699 = vmatprep.subr.mxu0 0.0
  %2700 = vmatpush1.msra.mxu0 0.0
  %2701 = vmatprep.subr.mxu0 0.0
  %2702 = vmatpush1.msra.mxu0 %v2659
  %2703 = vmatprep.subr.mxu0 0.0
  %2704 = vmatpush1.msra.mxu0 %v2658
  %2705 = vmatprep.subr.mxu0 0.0
  %2706 = vmatpush1.msra.mxu0 %v2657
  %2707 = vmatprep.subr.mxu0 0.0
  %2708 = vmatpush1.msra.mxu0 %v2656
  %2709 = vmatprep.subr.mxu0 0.0
  %2710 = vmatpush2.msra.mxu0 0.0
  %2711 = vmatprep.subr.mxu0 0.0
  %2712 = vmatpush2.msra.mxu0 0.0
  %2713 = vmatprep.subr.mxu0 0.0
  %2714 = vmatpush2.msra.mxu0 0.0
  %2715 = vmatprep.subr.mxu0 0.0
  %2716 = vmatpush2.msra.mxu0 0.0
  %2717 = vmatprep.subr.mxu0 0.0
  %2718 = vmatpush2.msra.mxu0 0.0
  %2719 = vmatprep.subr.mxu0 0.0
  %2720 = vmatpush2.msra.mxu0 0.0
  %2721 = vmatprep.subr.mxu0 0.0
  %2722 = vmatpush2.msra.mxu0 0.0
  %2723 = vmatprep.subr.mxu0 0.0
  %2724 = vmatpush2.msra.mxu0 0.0
  %2725 = vmatprep.subr.mxu0 0.0
  %2726 = vmatpush2.msra.mxu0 0.0
  %2727 = vmatprep.subr.mxu0 0.0
  %2728 = vmatpush2.msra.mxu0 0.0
  %2729 = vmatprep.subr.mxu0 0.0
  %2730 = vmatpush2.msra.mxu0 0.0
  %2731 = vmatprep.subr.mxu0 0.0
  %2732 = vmatpush2.msra.mxu0 0.0
  %2733 = vmatprep.subr.mxu0 0.0
  %2734 = vmatpush2.msra.mxu0 0.0
  %2735 = vmatprep.subr.mxu0 0.0
  %2736 = vmatpush2.msra.mxu0 0.0
  %2737 = vmatprep.subr.mxu0 0.0
  %2738 = vmatpush2.msra.mxu0 0.0
  %2739 = vmatprep.subr.mxu0 0.0
  %2740 = vmatpush2.msra.mxu0 0.0
  %2741 = vmatprep.mubr.f32.mxu0 0.0
  %2742 = vmatmul.mubr.f32.gmra.mxu0 %v2669
  %v2743 = vpop.f32.mrf.mxu0
  %v2744 = vadd.f32 %v2666, %v2743
  %v2745 = vpop.f32.mrf.mxu0
  %2746 = vmatprep.mubr.f32.mxu0 0.0
  %2747 = vmatmul.mubr.f32.gmra.mxu0 %v2672
  %v2748 = vpop.f32.mrf.mxu0
  %v2749 = vadd.f32 %v2666, %v2748
  %v2750 = vpop.f32.mrf.mxu0
  %2751 = vmatprep.mubr.f32.mxu0 0.0
  %2752 = vmatmul.mubr.f32.gmra.mxu0 %v2675
  %v2753 = vpop.f32.mrf.mxu0
  %v2754 = vadd.f32 %v2666, %v2753
  %v2755 = vpop.f32.mrf.mxu0
  %2756 = vdwg.mxu0
  %s2757 = scalar_lea.vmem %s8, 256
  %v2758 = vld [vmem:[%s2757] sm:$0xff]
  %v2759 = vld [vmem:[%s2757 + $0x8] sm:$0xff]
  %v2760 = vld [vmem:[%s2757 + $0x10] sm:$0xff]
  %v2761 = vld [vmem:[%s2757 + $0x18] sm:$0xff]
  %s2762 = scalar_lea.vmem %s9, 8
  %v2763 = vld [vmem:[%s2762] sm:$0x1]
  %v2765 = vlaneseq
  %v2766 = vshrl.u32 %v2765, 7
  %v2767 = vsub.s32 0, %v2766
  %v2768 = vrot.slane %v2763, %v2767
  %2770 = vmatprep.subr.mxu0 0.0
  %2771 = vmatpush1.msra.mxu0 0.0
  %2772 = vmatprep.subr.mxu0 0.0
  %2773 = vmatpush1.msra.mxu0 0.0
  %2774 = vmatprep.subr.mxu0 0.0
  %2775 = vmatpush1.msra.mxu0 0.0
  %2776 = vmatprep.subr.mxu0 0.0
  %2777 = vmatpush1.msra.mxu0 0.0
  %2778 = vmatprep.subr.mxu0 0.0
  %2779 = vmatpush1.msra.mxu0 0.0
  %2780 = vmatprep.subr.mxu0 0.0
  %2781 = vmatpush1.msra.mxu0 0.0
  %2782 = vmatprep.subr.mxu0 0.0
  %2783 = vmatpush1.msra.mxu0 0.0
  %2784 = vmatprep.subr.mxu0 0.0
  %2785 = vmatpush1.msra.mxu0 0.0
  %2786 = vmatprep.subr.mxu0 0.0
  %2787 = vmatpush1.msra.mxu0 0.0
  %2788 = vmatprep.subr.mxu0 0.0
  %2789 = vmatpush1.msra.mxu0 0.0
  %2790 = vmatprep.subr.mxu0 0.0
  %2791 = vmatpush1.msra.mxu0 0.0
  %2792 = vmatprep.subr.mxu0 0.0
  %2793 = vmatpush1.msra.mxu0 0.0
  %2794 = vmatprep.subr.mxu0 0.0
  %2795 = vmatpush1.msra.mxu0 %v2761
  %2796 = vmatprep.subr.mxu0 0.0
  %2797 = vmatpush1.msra.mxu0 %v2760
  %2798 = vmatprep.subr.mxu0 0.0
  %2799 = vmatpush1.msra.mxu0 %v2759
  %2800 = vmatprep.subr.mxu0 0.0
  %2801 = vmatpush1.msra.mxu0 %v2758
  %2802 = vmatprep.subr.mxu0 0.0
  %2803 = vmatpush2.msra.mxu0 0.0
  %2804 = vmatprep.subr.mxu0 0.0
  %2805 = vmatpush2.msra.mxu0 0.0
  %2806 = vmatprep.subr.mxu0 0.0
  %2807 = vmatpush2.msra.mxu0 0.0
  %2808 = vmatprep.subr.mxu0 0.0
  %2809 = vmatpush2.msra.mxu0 0.0
  %2810 = vmatprep.subr.mxu0 0.0
  %2811 = vmatpush2.msra.mxu0 0.0
  %2812 = vmatprep.subr.mxu0 0.0
  %2813 = vmatpush2.msra.mxu0 0.0
  %2814 = vmatprep.subr.mxu0 0.0
  %2815 = vmatpush2.msra.mxu0 0.0
  %2816 = vmatprep.subr.mxu0 0.0
  %2817 = vmatpush2.msra.mxu0 0.0
  %2818 = vmatprep.subr.mxu0 0.0
  %2819 = vmatpush2.msra.mxu0 0.0
  %2820 = vmatprep.subr.mxu0 0.0
  %2821 = vmatpush2.msra.mxu0 0.0
  %2822 = vmatprep.subr.mxu0 0.0
  %2823 = vmatpush2.msra.mxu0 0.0
  %2824 = vmatprep.subr.mxu0 0.0
  %2825 = vmatpush2.msra.mxu0 0.0
  %2826 = vmatprep.subr.mxu0 0.0
  %2827 = vmatpush2.msra.mxu0 0.0
  %2828 = vmatprep.subr.mxu0 0.0
  %2829 = vmatpush2.msra.mxu0 0.0
  %2830 = vmatprep.subr.mxu0 0.0
  %2831 = vmatpush2.msra.mxu0 0.0
  %2832 = vmatprep.subr.mxu0 0.0
  %2833 = vmatpush2.msra.mxu0 0.0
  %2834 = vmatprep.mubr.f32.mxu0 0.0
  %2835 = vmatmul.mubr.f32.gmra.mxu0 %v2669
  %v2836 = vpop.f32.mrf.mxu0
  %v2837 = vadd.f32 %v2768, %v2836
  %v2838 = vpop.f32.mrf.mxu0
  %2839 = vmatprep.mubr.f32.mxu0 0.0
  %2840 = vmatmul.mubr.f32.gmra.mxu0 %v2672
  %v2841 = vpop.f32.mrf.mxu0
  %v2842 = vadd.f32 %v2768, %v2841
  %v2843 = vpop.f32.mrf.mxu0
  %2844 = vmatprep.mubr.f32.mxu0 0.0
  %2845 = vmatmul.mubr.f32.gmra.mxu0 %v2675
  %v2846 = vpop.f32.mrf.mxu0
  %v2847 = vadd.f32 %v2768, %v2846
  %v2848 = vpop.f32.mrf.mxu0
  %2849 = vdwg.mxu0
  %v2851 = vsel %vm367, %v2642, 0
  %v2854 = vsel %vm367, %v2647, 0
  %v2857 = vsel %vm367, %v2652, 0
  %v2860 = vsel %vm367, %v2744, 0
  %v2863 = vsel %vm367, %v2749, 0
  %v2866 = vsel %vm367, %v2754, 0
  %2868 = vmatprep.subr.mxu0 0.0
  %2869 = vmatpush1.xpose.msra.mxu0 0.0
  %2870 = vmatprep.subr.mxu0 0.0
  %2871 = vmatpush1.xpose.msra.mxu0 0.0
  %2872 = vmatprep.subr.mxu0 0.0
  %2873 = vmatpush1.xpose.msra.mxu0 0.0
  %2874 = vmatprep.subr.mxu0 0.0
  %2875 = vmatpush1.xpose.msra.mxu0 0.0
  %2876 = vmatprep.subr.mxu0 0.0
  %2877 = vmatpush1.xpose.msra.mxu0 0.0
  %2878 = vmatprep.subr.mxu0 0.0
  %2879 = vmatpush1.xpose.msra.mxu0 0.0
  %2880 = vmatprep.subr.mxu0 0.0
  %2881 = vmatpush1.xpose.msra.mxu0 0.0
  %2882 = vmatprep.subr.mxu0 0.0
  %2883 = vmatpush1.xpose.msra.mxu0 0.0
  %2884 = vmatprep.subr.mxu0 0.0
  %2885 = vmatpush1.xpose.msra.mxu0 0.0
  %2886 = vmatprep.subr.mxu0 0.0
  %2887 = vmatpush1.xpose.msra.mxu0 0.0
  %2888 = vmatprep.subr.mxu0 0.0
  %2889 = vmatpush1.xpose.msra.mxu0 0.0
  %2890 = vmatprep.subr.mxu0 0.0
  %2891 = vmatpush1.xpose.msra.mxu0 0.0
  %2892 = vmatprep.subr.mxu0 0.0
  %2893 = vmatpush1.xpose.msra.mxu0 0.0
  %2894 = vmatprep.subr.mxu0 0.0
  %2895 = vmatpush1.xpose.msra.mxu0 %v2866
  %2896 = vmatprep.subr.mxu0 0.0
  %2897 = vmatpush1.xpose.msra.mxu0 %v2863
  %2898 = vmatprep.subr.mxu0 0.0
  %2899 = vmatpush1.xpose.msra.mxu0 %v2860
  %2900 = vmatprep.subr.mxu0 0.0
  %2901 = vmatpush2.xpose.msra.mxu0 0.0
  %2902 = vmatprep.subr.mxu0 0.0
  %2903 = vmatpush2.xpose.msra.mxu0 0.0
  %2904 = vmatprep.subr.mxu0 0.0
  %2905 = vmatpush2.xpose.msra.mxu0 0.0
  %2906 = vmatprep.subr.mxu0 0.0
  %2907 = vmatpush2.xpose.msra.mxu0 0.0
  %2908 = vmatprep.subr.mxu0 0.0
  %2909 = vmatpush2.xpose.msra.mxu0 0.0
  %2910 = vmatprep.subr.mxu0 0.0
  %2911 = vmatpush2.xpose.msra.mxu0 0.0
  %2912 = vmatprep.subr.mxu0 0.0
  %2913 = vmatpush2.xpose.msra.mxu0 0.0
  %2914 = vmatprep.subr.mxu0 0.0
  %2915 = vmatpush2.xpose.msra.mxu0 0.0
  %2916 = vmatprep.subr.mxu0 0.0
  %2917 = vmatpush2.xpose.msra.mxu0 0.0
  %2918 = vmatprep.subr.mxu0 0.0
  %2919 = vmatpush2.xpose.msra.mxu0 0.0
  %2920 = vmatprep.subr.mxu0 0.0
  %2921 = vmatpush2.xpose.msra.mxu0 0.0
  %2922 = vmatprep.subr.mxu0 0.0
  %2923 = vmatpush2.xpose.msra.mxu0 0.0
  %2924 = vmatprep.subr.mxu0 0.0
  %2925 = vmatpush2.xpose.msra.mxu0 0.0
  %2926 = vmatprep.subr.mxu0 0.0
  %2927 = vmatpush2.xpose.msra.mxu0 0.0
  %2928 = vmatprep.subr.mxu0 0.0
  %2929 = vmatpush2.xpose.msra.mxu0 0.0
  %2930 = vmatprep.subr.mxu0 0.0
  %2931 = vmatpush2.xpose.msra.mxu0 0.0
  %2932 = vmatprep.mubr.f32.mxu0 0.0
  %2933 = vmatmul.mubr.f32.gmra.mxu0 %v2851
  %v2934 = vpop.f32.mrf.mxu0
  %v2935 = vadd.f32 0.0, %v2934
  %v2936 = vpop.f32.mrf.mxu0
  %2937 = vmatprep.mubr.f32.mxu0 0.0
  %2938 = vmatmul.mubr.f32.gmra.mxu0 %v2854
  %v2939 = vpop.f32.mrf.mxu0
  %v2940 = vadd.f32 0.0, %v2939
  %v2941 = vpop.f32.mrf.mxu0
  %2942 = vmatprep.mubr.f32.mxu0 0.0
  %2943 = vmatmul.mubr.f32.gmra.mxu0 %v2857
  %v2944 = vpop.f32.mrf.mxu0
  %v2945 = vadd.f32 0.0, %v2944
  %v2946 = vpop.f32.mrf.mxu0
  %2947 = vdwg.mxu0
  %v2948 = vmul.f32 %v2935, 0.35355338
  %v2949 = vmul.f32 %v2940, 0.35355338
  %v2950 = vmul.f32 %v2945, 0.35355338
  %v2951 = vadd.f32 %v2948, %v2552
  %v2952 = vadd.f32 %v2949, %v2553
  %v2953 = vadd.f32 %v2950, %v2554
  %v2954 = vsel %vm472, %v2951, -inf
  %2955 = vmax.xlane.f32.xlu0 %v2954
  %v2956 = vpop.xlane.xlu0 %2955
  %v2957 = vsel %vm472, %v2952, -inf
  %2958 = vmax.xlane.f32.xlu0 %v2957
  %v2959 = vpop.xlane.xlu0 %2958
  %v2960 = vsel %vm472, %v2953, -inf
  %2961 = vmax.xlane.f32.xlu0 %v2960
  %v2962 = vpop.xlane.xlu0 %2961
  %v2963 = vsub.f32 %v2951, %v2956
  %v2964 = vsub.f32 %v2952, %v2959
  %v2965 = vsub.f32 %v2953, %v2962
  %v2966 = vmul.f32 %v2963, 1.442695
  %v2967 = vpow.pop %v2966
  %v2968 = vmul.f32 %v2964, 1.442695
  %v2969 = vpow.pop %v2968
  %v2970 = vmul.f32 %v2965, 1.442695
  %v2971 = vpow.pop %v2970
  %v2972 = vsel %vm472, %v2967, 0.0
  %2973 = vadd.xlane.f32.xlu0 %v2972
  %v2974 = vpop.xlane.xlu0 %2973
  %v2975 = vsel %vm472, %v2969, 0.0
  %2976 = vadd.xlane.f32.xlu0 %v2975
  %v2977 = vpop.xlane.xlu0 %2976
  %v2978 = vsel %vm472, %v2971, 0.0
  %2979 = vadd.xlane.f32.xlu0 %v2978
  %v2980 = vpop.xlane.xlu0 %2979
  %v2981 = vrcp.pop %v2974
  %v2982 = vrcp.pop %v2977
  %v2983 = vrcp.pop %v2980
  %v2984 = vmul.f32 %v2967, %v2981
  %v2985 = vmul.f32 %v2969, %v2982
  %v2986 = vmul.f32 %v2971, %v2983
  %v2988 = vsel %vm472, %v2984, 0
  %v2991 = vsel %vm472, %v2985, 0
  %v2994 = vsel %vm472, %v2986, 0
  %2996 = vmatprep.subr.mxu0 0.0
  %2997 = vmatpush1.msra.mxu0 0.0
  %2998 = vmatprep.subr.mxu0 0.0
  %2999 = vmatpush1.msra.mxu0 0.0
  %3000 = vmatprep.subr.mxu0 0.0
  %3001 = vmatpush1.msra.mxu0 0.0
  %3002 = vmatprep.subr.mxu0 0.0
  %3003 = vmatpush1.msra.mxu0 0.0
  %3004 = vmatprep.subr.mxu0 0.0
  %3005 = vmatpush1.msra.mxu0 0.0
  %3006 = vmatprep.subr.mxu0 0.0
  %3007 = vmatpush1.msra.mxu0 0.0
  %3008 = vmatprep.subr.mxu0 0.0
  %3009 = vmatpush1.msra.mxu0 0.0
  %3010 = vmatprep.subr.mxu0 0.0
  %3011 = vmatpush1.msra.mxu0 0.0
  %3012 = vmatprep.subr.mxu0 0.0
  %3013 = vmatpush1.msra.mxu0 0.0
  %3014 = vmatprep.subr.mxu0 0.0
  %3015 = vmatpush1.msra.mxu0 0.0
  %3016 = vmatprep.subr.mxu0 0.0
  %3017 = vmatpush1.msra.mxu0 0.0
  %3018 = vmatprep.subr.mxu0 0.0
  %3019 = vmatpush1.msra.mxu0 0.0
  %3020 = vmatprep.subr.mxu0 0.0
  %3021 = vmatpush1.msra.mxu0 0.0
  %3022 = vmatprep.subr.mxu0 0.0
  %3023 = vmatpush1.msra.mxu0 %v2847
  %3024 = vmatprep.subr.mxu0 0.0
  %3025 = vmatpush1.msra.mxu0 %v2842
  %3026 = vmatprep.subr.mxu0 0.0
  %3027 = vmatpush1.msra.mxu0 %v2837
  %3028 = vmatprep.subr.mxu0 0.0
  %3029 = vmatpush2.msra.mxu0 0.0
  %3030 = vmatprep.subr.mxu0 0.0
  %3031 = vmatpush2.msra.mxu0 0.0
  %3032 = vmatprep.subr.mxu0 0.0
  %3033 = vmatpush2.msra.mxu0 0.0
  %3034 = vmatprep.subr.mxu0 0.0
  %3035 = vmatpush2.msra.mxu0 0.0
  %3036 = vmatprep.subr.mxu0 0.0
  %3037 = vmatpush2.msra.mxu0 0.0
  %3038 = vmatprep.subr.mxu0 0.0
  %3039 = vmatpush2.msra.mxu0 0.0
  %3040 = vmatprep.subr.mxu0 0.0
  %3041 = vmatpush2.msra.mxu0 0.0
  %3042 = vmatprep.subr.mxu0 0.0
  %3043 = vmatpush2.msra.mxu0 0.0
  %3044 = vmatprep.subr.mxu0 0.0
  %3045 = vmatpush2.msra.mxu0 0.0
  %3046 = vmatprep.subr.mxu0 0.0
  %3047 = vmatpush2.msra.mxu0 0.0
  %3048 = vmatprep.subr.mxu0 0.0
  %3049 = vmatpush2.msra.mxu0 0.0
  %3050 = vmatprep.subr.mxu0 0.0
  %3051 = vmatpush2.msra.mxu0 0.0
  %3052 = vmatprep.subr.mxu0 0.0
  %3053 = vmatpush2.msra.mxu0 0.0
  %3054 = vmatprep.subr.mxu0 0.0
  %3055 = vmatpush2.msra.mxu0 0.0
  %3056 = vmatprep.subr.mxu0 0.0
  %3057 = vmatpush2.msra.mxu0 0.0
  %3058 = vmatprep.subr.mxu0 0.0
  %3059 = vmatpush2.msra.mxu0 0.0
  %3060 = vmatprep.mubr.f32.mxu0 0.0
  %3061 = vmatmul.mubr.f32.gmra.mxu0 %v2988
  %v3062 = vpop.f32.mrf.mxu0
  %v3063 = vadd.f32 0.0, %v3062
  %v3064 = vpop.f32.mrf.mxu0
  %3065 = vmatprep.mubr.f32.mxu0 0.0
  %3066 = vmatmul.mubr.f32.gmra.mxu0 %v2991
  %v3067 = vpop.f32.mrf.mxu0
  %v3068 = vadd.f32 0.0, %v3067
  %v3069 = vpop.f32.mrf.mxu0
  %3070 = vmatprep.mubr.f32.mxu0 0.0
  %3071 = vmatmul.mubr.f32.gmra.mxu0 %v2994
  %v3072 = vpop.f32.mrf.mxu0
  %v3073 = vadd.f32 0.0, %v3072
  %v3074 = vpop.f32.mrf.mxu0
  %3075 = vdwg.mxu0
  %v3076 = vld [vmem:[%s10] sm:$0xff]
  %s3077 = scalar_lea.vmem %s8, 32
  %v3078 = vld [vmem:[%s3077] sm:$0xff]
  %v3079 = vld [vmem:[%s3077 + $0x8] sm:$0xff]
  %v3080 = vld [vmem:[%s3077 + $0x10] sm:$0xff]
  %v3081 = vld [vmem:[%s3077 + $0x18] sm:$0xff]
  %s3082 = scalar_lea.vmem %s9, 1
  %v3083 = vld [vmem:[%s3082] sm:$0x1]
  %v3085 = vlaneseq
  %v3086 = vshrl.u32 %v3085, 7
  %v3087 = vsub.s32 0, %v3086
  %v3088 = vrot.slane %v3083, %v3087
  %3090 = vmatprep.subr.mxu0 0.0
  %3091 = vmatpush1.msra.mxu0 0.0
  %3092 = vmatprep.subr.mxu0 0.0
  %3093 = vmatpush1.msra.mxu0 0.0
  %3094 = vmatprep.subr.mxu0 0.0
  %3095 = vmatpush1.msra.mxu0 0.0
  %3096 = vmatprep.subr.mxu0 0.0
  %3097 = vmatpush1.msra.mxu0 0.0
  %3098 = vmatprep.subr.mxu0 0.0
  %3099 = vmatpush1.msra.mxu0 0.0
  %3100 = vmatprep.subr.mxu0 0.0
  %3101 = vmatpush1.msra.mxu0 0.0
  %3102 = vmatprep.subr.mxu0 0.0
  %3103 = vmatpush1.msra.mxu0 0.0
  %3104 = vmatprep.subr.mxu0 0.0
  %3105 = vmatpush1.msra.mxu0 0.0
  %3106 = vmatprep.subr.mxu0 0.0
  %3107 = vmatpush1.msra.mxu0 0.0
  %3108 = vmatprep.subr.mxu0 0.0
  %3109 = vmatpush1.msra.mxu0 0.0
  %3110 = vmatprep.subr.mxu0 0.0
  %3111 = vmatpush1.msra.mxu0 0.0
  %3112 = vmatprep.subr.mxu0 0.0
  %3113 = vmatpush1.msra.mxu0 0.0
  %3114 = vmatprep.subr.mxu0 0.0
  %3115 = vmatpush1.msra.mxu0 %v3081
  %3116 = vmatprep.subr.mxu0 0.0
  %3117 = vmatpush1.msra.mxu0 %v3080
  %3118 = vmatprep.subr.mxu0 0.0
  %3119 = vmatpush1.msra.mxu0 %v3079
  %3120 = vmatprep.subr.mxu0 0.0
  %3121 = vmatpush1.msra.mxu0 %v3078
  %3122 = vmatprep.subr.mxu0 0.0
  %3123 = vmatpush2.msra.mxu0 0.0
  %3124 = vmatprep.subr.mxu0 0.0
  %3125 = vmatpush2.msra.mxu0 0.0
  %3126 = vmatprep.subr.mxu0 0.0
  %3127 = vmatpush2.msra.mxu0 0.0
  %3128 = vmatprep.subr.mxu0 0.0
  %3129 = vmatpush2.msra.mxu0 0.0
  %3130 = vmatprep.subr.mxu0 0.0
  %3131 = vmatpush2.msra.mxu0 0.0
  %3132 = vmatprep.subr.mxu0 0.0
  %3133 = vmatpush2.msra.mxu0 0.0
  %3134 = vmatprep.subr.mxu0 0.0
  %3135 = vmatpush2.msra.mxu0 0.0
  %3136 = vmatprep.subr.mxu0 0.0
  %3137 = vmatpush2.msra.mxu0 0.0
  %3138 = vmatprep.subr.mxu0 0.0
  %3139 = vmatpush2.msra.mxu0 0.0
  %3140 = vmatprep.subr.mxu0 0.0
  %3141 = vmatpush2.msra.mxu0 0.0
  %3142 = vmatprep.subr.mxu0 0.0
  %3143 = vmatpush2.msra.mxu0 0.0
  %3144 = vmatprep.subr.mxu0 0.0
  %3145 = vmatpush2.msra.mxu0 0.0
  %3146 = vmatprep.subr.mxu0 0.0
  %3147 = vmatpush2.msra.mxu0 0.0
  %3148 = vmatprep.subr.mxu0 0.0
  %3149 = vmatpush2.msra.mxu0 0.0
  %3150 = vmatprep.subr.mxu0 0.0
  %3151 = vmatpush2.msra.mxu0 0.0
  %3152 = vmatprep.subr.mxu0 0.0
  %3153 = vmatpush2.msra.mxu0 0.0
  %3154 = vmatprep.mubr.f32.mxu0 0.0
  %3155 = vmatmul.mubr.f32.gmra.mxu0 %v2567
  %v3156 = vpop.f32.mrf.mxu0
  %v3157 = vadd.f32 %v3088, %v3156
  %v3158 = vpop.f32.mrf.mxu0
  %3159 = vmatprep.mubr.f32.mxu0 0.0
  %3160 = vmatmul.mubr.f32.gmra.mxu0 %v2570
  %v3161 = vpop.f32.mrf.mxu0
  %v3162 = vadd.f32 %v3088, %v3161
  %v3163 = vpop.f32.mrf.mxu0
  %3164 = vmatprep.mubr.f32.mxu0 0.0
  %3165 = vmatmul.mubr.f32.gmra.mxu0 %v2573
  %v3166 = vpop.f32.mrf.mxu0
  %v3167 = vadd.f32 %v3088, %v3166
  %v3168 = vpop.f32.mrf.mxu0
  %3169 = vdwg.mxu0
  %s3170 = scalar_lea.vmem %s8, 160
  %v3171 = vld [vmem:[%s3170] sm:$0xff]
  %v3172 = vld [vmem:[%s3170 + $0x8] sm:$0xff]
  %v3173 = vld [vmem:[%s3170 + $0x10] sm:$0xff]
  %v3174 = vld [vmem:[%s3170 + $0x18] sm:$0xff]
  %s3175 = scalar_lea.vmem %s9, 5
  %v3176 = vld [vmem:[%s3175] sm:$0x1]
  %v3178 = vlaneseq
  %v3179 = vshrl.u32 %v3178, 7
  %v3180 = vsub.s32 0, %v3179
  %v3181 = vrot.slane %v3176, %v3180
  %3183 = vmatprep.subr.mxu0 0.0
  %3184 = vmatpush1.msra.mxu0 0.0
  %3185 = vmatprep.subr.mxu0 0.0
  %3186 = vmatpush1.msra.mxu0 0.0
  %3187 = vmatprep.subr.mxu0 0.0
  %3188 = vmatpush1.msra.mxu0 0.0
  %3189 = vmatprep.subr.mxu0 0.0
  %3190 = vmatpush1.msra.mxu0 0.0
  %3191 = vmatprep.subr.mxu0 0.0
  %3192 = vmatpush1.msra.mxu0 0.0
  %3193 = vmatprep.subr.mxu0 0.0
  %3194 = vmatpush1.msra.mxu0 0.0
  %3195 = vmatprep.subr.mxu0 0.0
  %3196 = vmatpush1.msra.mxu0 0.0
  %3197 = vmatprep.subr.mxu0 0.0
  %3198 = vmatpush1.msra.mxu0 0.0
  %3199 = vmatprep.subr.mxu0 0.0
  %3200 = vmatpush1.msra.mxu0 0.0
  %3201 = vmatprep.subr.mxu0 0.0
  %3202 = vmatpush1.msra.mxu0 0.0
  %3203 = vmatprep.subr.mxu0 0.0
  %3204 = vmatpush1.msra.mxu0 0.0
  %3205 = vmatprep.subr.mxu0 0.0
  %3206 = vmatpush1.msra.mxu0 0.0
  %3207 = vmatprep.subr.mxu0 0.0
  %3208 = vmatpush1.msra.mxu0 %v3174
  %3209 = vmatprep.subr.mxu0 0.0
  %3210 = vmatpush1.msra.mxu0 %v3173
  %3211 = vmatprep.subr.mxu0 0.0
  %3212 = vmatpush1.msra.mxu0 %v3172
  %3213 = vmatprep.subr.mxu0 0.0
  %3214 = vmatpush1.msra.mxu0 %v3171
  %3215 = vmatprep.subr.mxu0 0.0
  %3216 = vmatpush2.msra.mxu0 0.0
  %3217 = vmatprep.subr.mxu0 0.0
  %3218 = vmatpush2.msra.mxu0 0.0
  %3219 = vmatprep.subr.mxu0 0.0
  %3220 = vmatpush2.msra.mxu0 0.0
  %3221 = vmatprep.subr.mxu0 0.0
  %3222 = vmatpush2.msra.mxu0 0.0
  %3223 = vmatprep.subr.mxu0 0.0
  %3224 = vmatpush2.msra.mxu0 0.0
  %3225 = vmatprep.subr.mxu0 0.0
  %3226 = vmatpush2.msra.mxu0 0.0
  %3227 = vmatprep.subr.mxu0 0.0
  %3228 = vmatpush2.msra.mxu0 0.0
  %3229 = vmatprep.subr.mxu0 0.0
  %3230 = vmatpush2.msra.mxu0 0.0
  %3231 = vmatprep.subr.mxu0 0.0
  %3232 = vmatpush2.msra.mxu0 0.0
  %3233 = vmatprep.subr.mxu0 0.0
  %3234 = vmatpush2.msra.mxu0 0.0
  %3235 = vmatprep.subr.mxu0 0.0
  %3236 = vmatpush2.msra.mxu0 0.0
  %3237 = vmatprep.subr.mxu0 0.0
  %3238 = vmatpush2.msra.mxu0 0.0
  %3239 = vmatprep.subr.mxu0 0.0
  %3240 = vmatpush2.msra.mxu0 0.0
  %3241 = vmatprep.subr.mxu0 0.0
  %3242 = vmatpush2.msra.mxu0 0.0
  %3243 = vmatprep.subr.mxu0 0.0
  %3244 = vmatpush2.msra.mxu0 0.0
  %3245 = vmatprep.subr.mxu0 0.0
  %3246 = vmatpush2.msra.mxu0 0.0
  %3247 = vmatprep.mubr.f32.mxu0 0.0
  %3248 = vmatmul.mubr.f32.gmra.mxu0 %v2669
  %v3249 = vpop.f32.mrf.mxu0
  %v3250 = vadd.f32 %v3181, %v3249
  %v3251 = vpop.f32.mrf.mxu0
  %3252 = vmatprep.mubr.f32.mxu0 0.0
  %3253 = vmatmul.mubr.f32.gmra.mxu0 %v2672
  %v3254 = vpop.f32.mrf.mxu0
  %v3255 = vadd.f32 %v3181, %v3254
  %v3256 = vpop.f32.mrf.mxu0
  %3257 = vmatprep.mubr.f32.mxu0 0.0
  %3258 = vmatmul.mubr.f32.gmra.mxu0 %v2675
  %v3259 = vpop.f32.mrf.mxu0
  %v3260 = vadd.f32 %v3181, %v3259
  %v3261 = vpop.f32.mrf.mxu0
  %3262 = vdwg.mxu0
  %s3263 = scalar_lea.vmem %s8, 288
  %v3264 = vld [vmem:[%s3263] sm:$0xff]
  %v3265 = vld [vmem:[%s3263 + $0x8] sm:$0xff]
  %v3266 = vld [vmem:[%s3263 + $0x10] sm:$0xff]
  %v3267 = vld [vmem:[%s3263 + $0x18] sm:$0xff]
  %s3268 = scalar_lea.vmem %s9, 9
  %v3269 = vld [vmem:[%s3268] sm:$0x1]
  %v3271 = vlaneseq
  %v3272 = vshrl.u32 %v3271, 7
  %v3273 = vsub.s32 0, %v3272
  %v3274 = vrot.slane %v3269, %v3273
  %3276 = vmatprep.subr.mxu0 0.0
  %3277 = vmatpush1.msra.mxu0 0.0
  %3278 = vmatprep.subr.mxu0 0.0
  %3279 = vmatpush1.msra.mxu0 0.0
  %3280 = vmatprep.subr.mxu0 0.0
  %3281 = vmatpush1.msra.mxu0 0.0
  %3282 = vmatprep.subr.mxu0 0.0
  %3283 = vmatpush1.msra.mxu0 0.0
  %3284 = vmatprep.subr.mxu0 0.0
  %3285 = vmatpush1.msra.mxu0 0.0
  %3286 = vmatprep.subr.mxu0 0.0
  %3287 = vmatpush1.msra.mxu0 0.0
  %3288 = vmatprep.subr.mxu0 0.0
  %3289 = vmatpush1.msra.mxu0 0.0
  %3290 = vmatprep.subr.mxu0 0.0
  %3291 = vmatpush1.msra.mxu0 0.0
  %3292 = vmatprep.subr.mxu0 0.0
  %3293 = vmatpush1.msra.mxu0 0.0
  %3294 = vmatprep.subr.mxu0 0.0
  %3295 = vmatpush1.msra.mxu0 0.0
  %3296 = vmatprep.subr.mxu0 0.0
  %3297 = vmatpush1.msra.mxu0 0.0
  %3298 = vmatprep.subr.mxu0 0.0
  %3299 = vmatpush1.msra.mxu0 0.0
  %3300 = vmatprep.subr.mxu0 0.0
  %3301 = vmatpush1.msra.mxu0 %v3267
  %3302 = vmatprep.subr.mxu0 0.0
  %3303 = vmatpush1.msra.mxu0 %v3266
  %3304 = vmatprep.subr.mxu0 0.0
  %3305 = vmatpush1.msra.mxu0 %v3265
  %3306 = vmatprep.subr.mxu0 0.0
  %3307 = vmatpush1.msra.mxu0 %v3264
  %3308 = vmatprep.subr.mxu0 0.0
  %3309 = vmatpush2.msra.mxu0 0.0
  %3310 = vmatprep.subr.mxu0 0.0
  %3311 = vmatpush2.msra.mxu0 0.0
  %3312 = vmatprep.subr.mxu0 0.0
  %3313 = vmatpush2.msra.mxu0 0.0
  %3314 = vmatprep.subr.mxu0 0.0
  %3315 = vmatpush2.msra.mxu0 0.0
  %3316 = vmatprep.subr.mxu0 0.0
  %3317 = vmatpush2.msra.mxu0 0.0
  %3318 = vmatprep.subr.mxu0 0.0
  %3319 = vmatpush2.msra.mxu0 0.0
  %3320 = vmatprep.subr.mxu0 0.0
  %3321 = vmatpush2.msra.mxu0 0.0
  %3322 = vmatprep.subr.mxu0 0.0
  %3323 = vmatpush2.msra.mxu0 0.0
  %3324 = vmatprep.subr.mxu0 0.0
  %3325 = vmatpush2.msra.mxu0 0.0
  %3326 = vmatprep.subr.mxu0 0.0
  %3327 = vmatpush2.msra.mxu0 0.0
  %3328 = vmatprep.subr.mxu0 0.0
  %3329 = vmatpush2.msra.mxu0 0.0
  %3330 = vmatprep.subr.mxu0 0.0
  %3331 = vmatpush2.msra.mxu0 0.0
  %3332 = vmatprep.subr.mxu0 0.0
  %3333 = vmatpush2.msra.mxu0 0.0
  %3334 = vmatprep.subr.mxu0 0.0
  %3335 = vmatpush2.msra.mxu0 0.0
  %3336 = vmatprep.subr.mxu0 0.0
  %3337 = vmatpush2.msra.mxu0 0.0
  %3338 = vmatprep.subr.mxu0 0.0
  %3339 = vmatpush2.msra.mxu0 0.0
  %3340 = vmatprep.mubr.f32.mxu0 0.0
  %3341 = vmatmul.mubr.f32.gmra.mxu0 %v2669
  %v3342 = vpop.f32.mrf.mxu0
  %v3343 = vadd.f32 %v3274, %v3342
  %v3344 = vpop.f32.mrf.mxu0
  %3345 = vmatprep.mubr.f32.mxu0 0.0
  %3346 = vmatmul.mubr.f32.gmra.mxu0 %v2672
  %v3347 = vpop.f32.mrf.mxu0
  %v3348 = vadd.f32 %v3274, %v3347
  %v3349 = vpop.f32.mrf.mxu0
  %3350 = vmatprep.mubr.f32.mxu0 0.0
  %3351 = vmatmul.mubr.f32.gmra.mxu0 %v2675
  %v3352 = vpop.f32.mrf.mxu0
  %v3353 = vadd.f32 %v3274, %v3352
  %v3354 = vpop.f32.mrf.mxu0
  %3355 = vdwg.mxu0
  %v3357 = vsel %vm367, %v3157, 0
  %v3360 = vsel %vm367, %v3162, 0
  %v3363 = vsel %vm367, %v3167, 0
  %v3366 = vsel %vm367, %v3250, 0
  %v3369 = vsel %vm367, %v3255, 0
  %v3372 = vsel %vm367, %v3260, 0
  %3374 = vmatprep.subr.mxu0 0.0
  %3375 = vmatpush1.xpose.msra.mxu0 0.0
  %3376 = vmatprep.subr.mxu0 0.0
  %3377 = vmatpush1.xpose.msra.mxu0 0.0
  %3378 = vmatprep.subr.mxu0 0.0
  %3379 = vmatpush1.xpose.msra.mxu0 0.0
  %3380 = vmatprep.subr.mxu0 0.0
  %3381 = vmatpush1.xpose.msra.mxu0 0.0
  %3382 = vmatprep.subr.mxu0 0.0
  %3383 = vmatpush1.xpose.msra.mxu0 0.0
  %3384 = vmatprep.subr.mxu0 0.0
  %3385 = vmatpush1.xpose.msra.mxu0 0.0
  %3386 = vmatprep.subr.mxu0 0.0
  %3387 = vmatpush1.xpose.msra.mxu0 0.0
  %3388 = vmatprep.subr.mxu0 0.0
  %3389 = vmatpush1.xpose.msra.mxu0 0.0
  %3390 = vmatprep.subr.mxu0 0.0
  %3391 = vmatpush1.xpose.msra.mxu0 0.0
  %3392 = vmatprep.subr.mxu0 0.0
  %3393 = vmatpush1.xpose.msra.mxu0 0.0
  %3394 = vmatprep.subr.mxu0 0.0
  %3395 = vmatpush1.xpose.msra.mxu0 0.0
  %3396 = vmatprep.subr.mxu0 0.0
  %3397 = vmatpush1.xpose.msra.mxu0 0.0
  %3398 = vmatprep.subr.mxu0 0.0
  %3399 = vmatpush1.xpose.msra.mxu0 0.0
  %3400 = vmatprep.subr.mxu0 0.0
  %3401 = vmatpush1.xpose.msra.mxu0 %v3372
  %3402 = vmatprep.subr.mxu0 0.0
  %3403 = vmatpush1.xpose.msra.mxu0 %v3369
  %3404 = vmatprep.subr.mxu0 0.0
  %3405 = vmatpush1.xpose.msra.mxu0 %v3366
  %3406 = vmatprep.subr.mxu0 0.0
  %3407 = vmatpush2.xpose.msra.mxu0 0.0
  %3408 = vmatprep.subr.mxu0 0.0
  %3409 = vmatpush2.xpose.msra.mxu0 0.0
  %3410 = vmatprep.subr.mxu0 0.0
  %3411 = vmatpush2.xpose.msra.mxu0 0.0
  %3412 = vmatprep.subr.mxu0 0.0
  %3413 = vmatpush2.xpose.msra.mxu0 0.0
  %3414 = vmatprep.subr.mxu0 0.0
  %3415 = vmatpush2.xpose.msra.mxu0 0.0
  %3416 = vmatprep.subr.mxu0 0.0
  %3417 = vmatpush2.xpose.msra.mxu0 0.0
  %3418 = vmatprep.subr.mxu0 0.0
  %3419 = vmatpush2.xpose.msra.mxu0 0.0
  %3420 = vmatprep.subr.mxu0 0.0
  %3421 = vmatpush2.xpose.msra.mxu0 0.0
  %3422 = vmatprep.subr.mxu0 0.0
  %3423 = vmatpush2.xpose.msra.mxu0 0.0
  %3424 = vmatprep.subr.mxu0 0.0
  %3425 = vmatpush2.xpose.msra.mxu0 0.0
  %3426 = vmatprep.subr.mxu0 0.0
  %3427 = vmatpush2.xpose.msra.mxu0 0.0
  %3428 = vmatprep.subr.mxu0 0.0
  %3429 = vmatpush2.xpose.msra.mxu0 0.0
  %3430 = vmatprep.subr.mxu0 0.0
  %3431 = vmatpush2.xpose.msra.mxu0 0.0
  %3432 = vmatprep.subr.mxu0 0.0
  %3433 = vmatpush2.xpose.msra.mxu0 0.0
  %3434 = vmatprep.subr.mxu0 0.0
  %3435 = vmatpush2.xpose.msra.mxu0 0.0
  %3436 = vmatprep.subr.mxu0 0.0
  %3437 = vmatpush2.xpose.msra.mxu0 0.0
  %3438 = vmatprep.mubr.f32.mxu0 0.0
  %3439 = vmatmul.mubr.f32.gmra.mxu0 %v3357
  %v3440 = vpop.f32.mrf.mxu0
  %v3441 = vadd.f32 0.0, %v3440
  %v3442 = vpop.f32.mrf.mxu0
  %3443 = vmatprep.mubr.f32.mxu0 0.0
  %3444 = vmatmul.mubr.f32.gmra.mxu0 %v3360
  %v3445 = vpop.f32.mrf.mxu0
  %v3446 = vadd.f32 0.0, %v3445
  %v3447 = vpop.f32.mrf.mxu0
  %3448 = vmatprep.mubr.f32.mxu0 0.0
  %3449 = vmatmul.mubr.f32.gmra.mxu0 %v3363
  %v3450 = vpop.f32.mrf.mxu0
  %v3451 = vadd.f32 0.0, %v3450
  %v3452 = vpop.f32.mrf.mxu0
  %3453 = vdwg.mxu0
  %v3454 = vmul.f32 %v3441, 0.35355338
  %v3455 = vmul.f32 %v3446, 0.35355338
  %v3456 = vmul.f32 %v3451, 0.35355338
  %v3457 = vadd.f32 %v3454, %v2552
  %v3458 = vadd.f32 %v3455, %v2553
  %v3459 = vadd.f32 %v3456, %v2554
  %v3460 = vsel %vm472, %v3457, -inf
  %3461 = vmax.xlane.f32.xlu0 %v3460
  %v3462 = vpop.xlane.xlu0 %3461
  %v3463 = vsel %vm472, %v3458, -inf
  %3464 = vmax.xlane.f32.xlu0 %v3463
  %v3465 = vpop.xlane.xlu0 %3464
  %v3466 = vsel %vm472, %v3459, -inf
  %3467 = vmax.xlane.f32.xlu0 %v3466
  %v3468 = vpop.xlane.xlu0 %3467
  %v3469 = vsub.f32 %v3457, %v3462
  %v3470 = vsub.f32 %v3458, %v3465
  %v3471 = vsub.f32 %v3459, %v3468
  %v3472 = vmul.f32 %v3469, 1.442695
  %v3473 = vpow.pop %v3472
  %v3474 = vmul.f32 %v3470, 1.442695
  %v3475 = vpow.pop %v3474
  %v3476 = vmul.f32 %v3471, 1.442695
  %v3477 = vpow.pop %v3476
  %v3478 = vsel %vm472, %v3473, 0.0
  %3479 = vadd.xlane.f32.xlu0 %v3478
  %v3480 = vpop.xlane.xlu0 %3479
  %v3481 = vsel %vm472, %v3475, 0.0
  %3482 = vadd.xlane.f32.xlu0 %v3481
  %v3483 = vpop.xlane.xlu0 %3482
  %v3484 = vsel %vm472, %v3477, 0.0
  %3485 = vadd.xlane.f32.xlu0 %v3484
  %v3486 = vpop.xlane.xlu0 %3485
  %v3487 = vrcp.pop %v3480
  %v3488 = vrcp.pop %v3483
  %v3489 = vrcp.pop %v3486
  %v3490 = vmul.f32 %v3473, %v3487
  %v3491 = vmul.f32 %v3475, %v3488
  %v3492 = vmul.f32 %v3477, %v3489
  %v3494 = vsel %vm472, %v3490, 0
  %v3497 = vsel %vm472, %v3491, 0
  %v3500 = vsel %vm472, %v3492, 0
  %3502 = vmatprep.subr.mxu0 0.0
  %3503 = vmatpush1.msra.mxu0 0.0
  %3504 = vmatprep.subr.mxu0 0.0
  %3505 = vmatpush1.msra.mxu0 0.0
  %3506 = vmatprep.subr.mxu0 0.0
  %3507 = vmatpush1.msra.mxu0 0.0
  %3508 = vmatprep.subr.mxu0 0.0
  %3509 = vmatpush1.msra.mxu0 0.0
  %3510 = vmatprep.subr.mxu0 0.0
  %3511 = vmatpush1.msra.mxu0 0.0
  %3512 = vmatprep.subr.mxu0 0.0
  %3513 = vmatpush1.msra.mxu0 0.0
  %3514 = vmatprep.subr.mxu0 0.0
  %3515 = vmatpush1.msra.mxu0 0.0
  %3516 = vmatprep.subr.mxu0 0.0
  %3517 = vmatpush1.msra.mxu0 0.0
  %3518 = vmatprep.subr.mxu0 0.0
  %3519 = vmatpush1.msra.mxu0 0.0
  %3520 = vmatprep.subr.mxu0 0.0
  %3521 = vmatpush1.msra.mxu0 0.0
  %3522 = vmatprep.subr.mxu0 0.0
  %3523 = vmatpush1.msra.mxu0 0.0
  %3524 = vmatprep.subr.mxu0 0.0
  %3525 = vmatpush1.msra.mxu0 0.0
  %3526 = vmatprep.subr.mxu0 0.0
  %3527 = vmatpush1.msra.mxu0 0.0
  %3528 = vmatprep.subr.mxu0 0.0
  %3529 = vmatpush1.msra.mxu0 %v3353
  %3530 = vmatprep.subr.mxu0 0.0
  %3531 = vmatpush1.msra.mxu0 %v3348
  %3532 = vmatprep.subr.mxu0 0.0
  %3533 = vmatpush1.msra.mxu0 %v3343
  %3534 = vmatprep.subr.mxu0 0.0
  %3535 = vmatpush2.msra.mxu0 0.0
  %3536 = vmatprep.subr.mxu0 0.0
  %3537 = vmatpush2.msra.mxu0 0.0
  %3538 = vmatprep.subr.mxu0 0.0
  %3539 = vmatpush2.msra.mxu0 0.0
  %3540 = vmatprep.subr.mxu0 0.0
  %3541 = vmatpush2.msra.mxu0 0.0
  %3542 = vmatprep.subr.mxu0 0.0
  %3543 = vmatpush2.msra.mxu0 0.0
  %3544 = vmatprep.subr.mxu0 0.0
  %3545 = vmatpush2.msra.mxu0 0.0
  %3546 = vmatprep.subr.mxu0 0.0
  %3547 = vmatpush2.msra.mxu0 0.0
  %3548 = vmatprep.subr.mxu0 0.0
  %3549 = vmatpush2.msra.mxu0 0.0
  %3550 = vmatprep.subr.mxu0 0.0
  %3551 = vmatpush2.msra.mxu0 0.0
  %3552 = vmatprep.subr.mxu0 0.0
  %3553 = vmatpush2.msra.mxu0 0.0
  %3554 = vmatprep.subr.mxu0 0.0
  %3555 = vmatpush2.msra.mxu0 0.0
  %3556 = vmatprep.subr.mxu0 0.0
  %3557 = vmatpush2.msra.mxu0 0.0
  %3558 = vmatprep.subr.mxu0 0.0
  %3559 = vmatpush2.msra.mxu0 0.0
  %3560 = vmatprep.subr.mxu0 0.0
  %3561 = vmatpush2.msra.mxu0 0.0
  %3562 = vmatprep.subr.mxu0 0.0
  %3563 = vmatpush2.msra.mxu0 0.0
  %3564 = vmatprep.subr.mxu0 0.0
  %3565 = vmatpush2.msra.mxu0 0.0
  %3566 = vmatprep.mubr.f32.mxu0 0.0
  %3567 = vmatmul.mubr.f32.gmra.mxu0 %v3494
  %v3568 = vpop.f32.mrf.mxu0
  %v3569 = vadd.f32 0.0, %v3568
  %v3570 = vpop.f32.mrf.mxu0
  %3571 = vmatprep.mubr.f32.mxu0 0.0
  %3572 = vmatmul.mubr.f32.gmra.mxu0 %v3497
  %v3573 = vpop.f32.mrf.mxu0
  %v3574 = vadd.f32 0.0, %v3573
  %v3575 = vpop.f32.mrf.mxu0
  %3576 = vmatprep.mubr.f32.mxu0 0.0
  %3577 = vmatmul.mubr.f32.gmra.mxu0 %v3500
  %v3578 = vpop.f32.mrf.mxu0
  %v3579 = vadd.f32 0.0, %v3578
  %v3580 = vpop.f32.mrf.mxu0
  %3581 = vdwg.mxu0
  %s3582 = scalar_lea.vmem %s10, 8
  %v3583 = vld [vmem:[%s3582] sm:$0xff]
  %v3585 = vsel %vm367, %v3569, 0
  %v3588 = vsel %vm367, %v3574, 0
  %v3591 = vsel %vm367, %v3579, 0
  %3593 = vmatprep.subr.mxu0 0.0
  %3594 = vmatpush1.msra.mxu0 0.0
  %3595 = vmatprep.subr.mxu0 0.0
  %3596 = vmatpush1.msra.mxu0 0.0
  %3597 = vmatprep.subr.mxu0 0.0
  %3598 = vmatpush1.msra.mxu0 0.0
  %3599 = vmatprep.subr.mxu0 0.0
  %3600 = vmatpush1.msra.mxu0 0.0
  %3601 = vmatprep.subr.mxu0 0.0
  %3602 = vmatpush1.msra.mxu0 0.0
  %3603 = vmatprep.subr.mxu0 0.0
  %3604 = vmatpush1.msra.mxu0 0.0
  %3605 = vmatprep.subr.mxu0 0.0
  %3606 = vmatpush1.msra.mxu0 0.0
  %3607 = vmatprep.subr.mxu0 0.0
  %3608 = vmatpush1.msra.mxu0 0.0
  %3609 = vmatprep.subr.mxu0 0.0
  %3610 = vmatpush1.msra.mxu0 0.0
  %3611 = vmatprep.subr.mxu0 0.0
  %3612 = vmatpush1.msra.mxu0 0.0
  %3613 = vmatprep.subr.mxu0 0.0
  %3614 = vmatpush1.msra.mxu0 0.0
  %3615 = vmatprep.subr.mxu0 0.0
  %3616 = vmatpush1.msra.mxu0 0.0
  %3617 = vmatprep.subr.mxu0 0.0
  %3618 = vmatpush1.msra.mxu0 0.0
  %3619 = vmatprep.subr.mxu0 0.0
  %3620 = vmatpush1.msra.mxu0 0.0
  %3621 = vmatprep.subr.mxu0 0.0
  %3622 = vmatpush1.msra.mxu0 0.0
  %3623 = vmatprep.subr.mxu0 0.0
  %3624 = vmatpush1.msra.mxu0 %v3583
  %3625 = vmatprep.subr.mxu0 0.0
  %3626 = vmatpush2.msra.mxu0 0.0
  %3627 = vmatprep.subr.mxu0 0.0
  %3628 = vmatpush2.msra.mxu0 0.0
  %3629 = vmatprep.subr.mxu0 0.0
  %3630 = vmatpush2.msra.mxu0 0.0
  %3631 = vmatprep.subr.mxu0 0.0
  %3632 = vmatpush2.msra.mxu0 0.0
  %3633 = vmatprep.subr.mxu0 0.0
  %3634 = vmatpush2.msra.mxu0 0.0
  %3635 = vmatprep.subr.mxu0 0.0
  %3636 = vmatpush2.msra.mxu0 0.0
  %3637 = vmatprep.subr.mxu0 0.0
  %3638 = vmatpush2.msra.mxu0 0.0
  %3639 = vmatprep.subr.mxu0 0.0
  %3640 = vmatpush2.msra.mxu0 0.0
  %3641 = vmatprep.subr.mxu0 0.0
  %3642 = vmatpush2.msra.mxu0 0.0
  %3643 = vmatprep.subr.mxu0 0.0
  %3644 = vmatpush2.msra.mxu0 0.0
  %3645 = vmatprep.subr.mxu0 0.0
  %3646 = vmatpush2.msra.mxu0 0.0
  %3647 = vmatprep.subr.mxu0 0.0
  %3648 = vmatpush2.msra.mxu0 0.0
  %3649 = vmatprep.subr.mxu0 0.0
  %3650 = vmatpush2.msra.mxu0 0.0
  %3651 = vmatprep.subr.mxu0 0.0
  %3652 = vmatpush2.msra.mxu0 0.0
  %3653 = vmatprep.subr.mxu0 0.0
  %3654 = vmatpush2.msra.mxu0 0.0
  %3655 = vmatprep.subr.mxu0 0.0
  %3656 = vmatpush2.msra.mxu0 0.0
  %3657 = vmatprep.mubr.f32.mxu0 0.0
  %3658 = vmatmul.mubr.f32.gmra.mxu0 %v3585
  %v3659 = vpop.f32.mrf.mxu0
  %v3660 = vadd.f32 0.0, %v3659
  %v3661 = vpop.f32.mrf.mxu0
  %3662 = vmatprep.mubr.f32.mxu0 0.0
  %3663 = vmatmul.mubr.f32.gmra.mxu0 %v3588
  %v3664 = vpop.f32.mrf.mxu0
  %v3665 = vadd.f32 0.0, %v3664
  %v3666 = vpop.f32.mrf.mxu0
  %3667 = vmatprep.mubr.f32.mxu0 0.0
  %3668 = vmatmul.mubr.f32.gmra.mxu0 %v3591
  %v3669 = vpop.f32.mrf.mxu0
  %v3670 = vadd.f32 0.0, %v3669
  %v3671 = vpop.f32.mrf.mxu0
  %3672 = vdwg.mxu0
  %v3674 = vsel %vm367, %v3063, 0
  %v3677 = vsel %vm367, %v3068, 0
  %v3680 = vsel %vm367, %v3073, 0
  %3682 = vmatprep.subr.mxu0 0.0
  %3683 = vmatpush1.msra.mxu0 0.0
  %3684 = vmatprep.subr.mxu0 0.0
  %3685 = vmatpush1.msra.mxu0 0.0
  %3686 = vmatprep.subr.mxu0 0.0
  %3687 = vmatpush1.msra.mxu0 0.0
  %3688 = vmatprep.subr.mxu0 0.0
  %3689 = vmatpush1.msra.mxu0 0.0
  %3690 = vmatprep.subr.mxu0 0.0
  %3691 = vmatpush1.msra.mxu0 0.0
  %3692 = vmatprep.subr.mxu0 0.0
  %3693 = vmatpush1.msra.mxu0 0.0
  %3694 = vmatprep.subr.mxu0 0.0
  %3695 = vmatpush1.msra.mxu0 0.0
  %3696 = vmatprep.subr.mxu0 0.0
  %3697 = vmatpush1.msra.mxu0 0.0
  %3698 = vmatprep.subr.mxu0 0.0
  %3699 = vmatpush1.msra.mxu0 0.0
  %3700 = vmatprep.subr.mxu0 0.0
  %3701 = vmatpush1.msra.mxu0 0.0
  %3702 = vmatprep.subr.mxu0 0.0
  %3703 = vmatpush1.msra.mxu0 0.0
  %3704 = vmatprep.subr.mxu0 0.0
  %3705 = vmatpush1.msra.mxu0 0.0
  %3706 = vmatprep.subr.mxu0 0.0
  %3707 = vmatpush1.msra.mxu0 0.0
  %3708 = vmatprep.subr.mxu0 0.0
  %3709 = vmatpush1.msra.mxu0 0.0
  %3710 = vmatprep.subr.mxu0 0.0
  %3711 = vmatpush1.msra.mxu0 0.0
  %3712 = vmatprep.subr.mxu0 0.0
  %3713 = vmatpush1.msra.mxu0 %v3076
  %3714 = vmatprep.subr.mxu0 0.0
  %3715 = vmatpush2.msra.mxu0 0.0
  %3716 = vmatprep.subr.mxu0 0.0
  %3717 = vmatpush2.msra.mxu0 0.0
  %3718 = vmatprep.subr.mxu0 0.0
  %3719 = vmatpush2.msra.mxu0 0.0
  %3720 = vmatprep.subr.mxu0 0.0
  %3721 = vmatpush2.msra.mxu0 0.0
  %3722 = vmatprep.subr.mxu0 0.0
  %3723 = vmatpush2.msra.mxu0 0.0
  %3724 = vmatprep.subr.mxu0 0.0
  %3725 = vmatpush2.msra.mxu0 0.0
  %3726 = vmatprep.subr.mxu0 0.0
  %3727 = vmatpush2.msra.mxu0 0.0
  %3728 = vmatprep.subr.mxu0 0.0
  %3729 = vmatpush2.msra.mxu0 0.0
  %3730 = vmatprep.subr.mxu0 0.0
  %3731 = vmatpush2.msra.mxu0 0.0
  %3732 = vmatprep.subr.mxu0 0.0
  %3733 = vmatpush2.msra.mxu0 0.0
  %3734 = vmatprep.subr.mxu0 0.0
  %3735 = vmatpush2.msra.mxu0 0.0
  %3736 = vmatprep.subr.mxu0 0.0
  %3737 = vmatpush2.msra.mxu0 0.0
  %3738 = vmatprep.subr.mxu0 0.0
  %3739 = vmatpush2.msra.mxu0 0.0
  %3740 = vmatprep.subr.mxu0 0.0
  %3741 = vmatpush2.msra.mxu0 0.0
  %3742 = vmatprep.subr.mxu0 0.0
  %3743 = vmatpush2.msra.mxu0 0.0
  %3744 = vmatprep.subr.mxu0 0.0
  %3745 = vmatpush2.msra.mxu0 0.0
  %3746 = vmatprep.mubr.f32.mxu0 0.0
  %3747 = vmatmul.mubr.f32.gmra.mxu0 %v3674
  %v3748 = vpop.f32.mrf.mxu0
  %v3749 = vadd.f32 %v3660, %v3748
  %v3750 = vpop.f32.mrf.mxu0
  %3751 = vmatprep.mubr.f32.mxu0 0.0
  %3752 = vmatmul.mubr.f32.gmra.mxu0 %v3677
  %v3753 = vpop.f32.mrf.mxu0
  %v3754 = vadd.f32 %v3665, %v3753
  %v3755 = vpop.f32.mrf.mxu0
  %3756 = vmatprep.mubr.f32.mxu0 0.0
  %3757 = vmatmul.mubr.f32.gmra.mxu0 %v3680
  %v3758 = vpop.f32.mrf.mxu0
  %v3759 = vadd.f32 %v3670, %v3758
  %v3760 = vpop.f32.mrf.mxu0
  %3761 = vdwg.mxu0
  %s3762 = scalar_lea.vmem %s8, 64
  %v3763 = vld [vmem:[%s3762] sm:$0xff]
  %v3764 = vld [vmem:[%s3762 + $0x8] sm:$0xff]
  %v3765 = vld [vmem:[%s3762 + $0x10] sm:$0xff]
  %v3766 = vld [vmem:[%s3762 + $0x18] sm:$0xff]
  %s3767 = scalar_lea.vmem %s9, 2
  %v3768 = vld [vmem:[%s3767] sm:$0x1]
  %v3770 = vlaneseq
  %v3771 = vshrl.u32 %v3770, 7
  %v3772 = vsub.s32 0, %v3771
  %v3773 = vrot.slane %v3768, %v3772
  %3775 = vmatprep.subr.mxu0 0.0
  %3776 = vmatpush1.msra.mxu0 0.0
  %3777 = vmatprep.subr.mxu0 0.0
  %3778 = vmatpush1.msra.mxu0 0.0
  %3779 = vmatprep.subr.mxu0 0.0
  %3780 = vmatpush1.msra.mxu0 0.0
  %3781 = vmatprep.subr.mxu0 0.0
  %3782 = vmatpush1.msra.mxu0 0.0
  %3783 = vmatprep.subr.mxu0 0.0
  %3784 = vmatpush1.msra.mxu0 0.0
  %3785 = vmatprep.subr.mxu0 0.0
  %3786 = vmatpush1.msra.mxu0 0.0
  %3787 = vmatprep.subr.mxu0 0.0
  %3788 = vmatpush1.msra.mxu0 0.0
  %3789 = vmatprep.subr.mxu0 0.0
  %3790 = vmatpush1.msra.mxu0 0.0
  %3791 = vmatprep.subr.mxu0 0.0
  %3792 = vmatpush1.msra.mxu0 0.0
  %3793 = vmatprep.subr.mxu0 0.0
  %3794 = vmatpush1.msra.mxu0 0.0
  %3795 = vmatprep.subr.mxu0 0.0
  %3796 = vmatpush1.msra.mxu0 0.0
  %3797 = vmatprep.subr.mxu0 0.0
  %3798 = vmatpush1.msra.mxu0 0.0
  %3799 = vmatprep.subr.mxu0 0.0
  %3800 = vmatpush1.msra.mxu0 %v3766
  %3801 = vmatprep.subr.mxu0 0.0
  %3802 = vmatpush1.msra.mxu0 %v3765
  %3803 = vmatprep.subr.mxu0 0.0
  %3804 = vmatpush1.msra.mxu0 %v3764
  %3805 = vmatprep.subr.mxu0 0.0
  %3806 = vmatpush1.msra.mxu0 %v3763
  %3807 = vmatprep.subr.mxu0 0.0
  %3808 = vmatpush2.msra.mxu0 0.0
  %3809 = vmatprep.subr.mxu0 0.0
  %3810 = vmatpush2.msra.mxu0 0.0
  %3811 = vmatprep.subr.mxu0 0.0
  %3812 = vmatpush2.msra.mxu0 0.0
  %3813 = vmatprep.subr.mxu0 0.0
  %3814 = vmatpush2.msra.mxu0 0.0
  %3815 = vmatprep.subr.mxu0 0.0
  %3816 = vmatpush2.msra.mxu0 0.0
  %3817 = vmatprep.subr.mxu0 0.0
  %3818 = vmatpush2.msra.mxu0 0.0
  %3819 = vmatprep.subr.mxu0 0.0
  %3820 = vmatpush2.msra.mxu0 0.0
  %3821 = vmatprep.subr.mxu0 0.0
  %3822 = vmatpush2.msra.mxu0 0.0
  %3823 = vmatprep.subr.mxu0 0.0
  %3824 = vmatpush2.msra.mxu0 0.0
  %3825 = vmatprep.subr.mxu0 0.0
  %3826 = vmatpush2.msra.mxu0 0.0
  %3827 = vmatprep.subr.mxu0 0.0
  %3828 = vmatpush2.msra.mxu0 0.0
  %3829 = vmatprep.subr.mxu0 0.0
  %3830 = vmatpush2.msra.mxu0 0.0
  %3831 = vmatprep.subr.mxu0 0.0
  %3832 = vmatpush2.msra.mxu0 0.0
  %3833 = vmatprep.subr.mxu0 0.0
  %3834 = vmatpush2.msra.mxu0 0.0
  %3835 = vmatprep.subr.mxu0 0.0
  %3836 = vmatpush2.msra.mxu0 0.0
  %3837 = vmatprep.subr.mxu0 0.0
  %3838 = vmatpush2.msra.mxu0 0.0
  %3839 = vmatprep.mubr.f32.mxu0 0.0
  %3840 = vmatmul.mubr.f32.gmra.mxu0 %v2567
  %v3841 = vpop.f32.mrf.mxu0
  %v3842 = vadd.f32 %v3773, %v3841
  %v3843 = vpop.f32.mrf.mxu0
  %3844 = vmatprep.mubr.f32.mxu0 0.0
  %3845 = vmatmul.mubr.f32.gmra.mxu0 %v2570
  %v3846 = vpop.f32.mrf.mxu0
  %v3847 = vadd.f32 %v3773, %v3846
  %v3848 = vpop.f32.mrf.mxu0
  %3849 = vmatprep.mubr.f32.mxu0 0.0
  %3850 = vmatmul.mubr.f32.gmra.mxu0 %v2573
  %v3851 = vpop.f32.mrf.mxu0
  %v3852 = vadd.f32 %v3773, %v3851
  %v3853 = vpop.f32.mrf.mxu0
  %3854 = vdwg.mxu0
  %s3855 = scalar_lea.vmem %s8, 192
  %v3856 = vld [vmem:[%s3855] sm:$0xff]
  %v3857 = vld [vmem:[%s3855 + $0x8] sm:$0xff]
  %v3858 = vld [vmem:[%s3855 + $0x10] sm:$0xff]
  %v3859 = vld [vmem:[%s3855 + $0x18] sm:$0xff]
  %s3860 = scalar_lea.vmem %s9, 6
  %v3861 = vld [vmem:[%s3860] sm:$0x1]
  %v3863 = vlaneseq
  %v3864 = vshrl.u32 %v3863, 7
  %v3865 = vsub.s32 0, %v3864
  %v3866 = vrot.slane %v3861, %v3865
  %3868 = vmatprep.subr.mxu0 0.0
  %3869 = vmatpush1.msra.mxu0 0.0
  %3870 = vmatprep.subr.mxu0 0.0
  %3871 = vmatpush1.msra.mxu0 0.0
  %3872 = vmatprep.subr.mxu0 0.0
  %3873 = vmatpush1.msra.mxu0 0.0
  %3874 = vmatprep.subr.mxu0 0.0
  %3875 = vmatpush1.msra.mxu0 0.0
  %3876 = vmatprep.subr.mxu0 0.0
  %3877 = vmatpush1.msra.mxu0 0.0
  %3878 = vmatprep.subr.mxu0 0.0
  %3879 = vmatpush1.msra.mxu0 0.0
  %3880 = vmatprep.subr.mxu0 0.0
  %3881 = vmatpush1.msra.mxu0 0.0
  %3882 = vmatprep.subr.mxu0 0.0
  %3883 = vmatpush1.msra.mxu0 0.0
  %3884 = vmatprep.subr.mxu0 0.0
  %3885 = vmatpush1.msra.mxu0 0.0
  %3886 = vmatprep.subr.mxu0 0.0
  %3887 = vmatpush1.msra.mxu0 0.0
  %3888 = vmatprep.subr.mxu0 0.0
  %3889 = vmatpush1.msra.mxu0 0.0
  %3890 = vmatprep.subr.mxu0 0.0
  %3891 = vmatpush1.msra.mxu0 0.0
  %3892 = vmatprep.subr.mxu0 0.0
  %3893 = vmatpush1.msra.mxu0 %v3859
  %3894 = vmatprep.subr.mxu0 0.0
  %3895 = vmatpush1.msra.mxu0 %v3858
  %3896 = vmatprep.subr.mxu0 0.0
  %3897 = vmatpush1.msra.mxu0 %v3857
  %3898 = vmatprep.subr.mxu0 0.0
  %3899 = vmatpush1.msra.mxu0 %v3856
  %3900 = vmatprep.subr.mxu0 0.0
  %3901 = vmatpush2.msra.mxu0 0.0
  %3902 = vmatprep.subr.mxu0 0.0
  %3903 = vmatpush2.msra.mxu0 0.0
  %3904 = vmatprep.subr.mxu0 0.0
  %3905 = vmatpush2.msra.mxu0 0.0
  %3906 = vmatprep.subr.mxu0 0.0
  %3907 = vmatpush2.msra.mxu0 0.0
  %3908 = vmatprep.subr.mxu0 0.0
  %3909 = vmatpush2.msra.mxu0 0.0
  %3910 = vmatprep.subr.mxu0 0.0
  %3911 = vmatpush2.msra.mxu0 0.0
  %3912 = vmatprep.subr.mxu0 0.0
  %3913 = vmatpush2.msra.mxu0 0.0
  %3914 = vmatprep.subr.mxu0 0.0
  %3915 = vmatpush2.msra.mxu0 0.0
  %3916 = vmatprep.subr.mxu0 0.0
  %3917 = vmatpush2.msra.mxu0 0.0
  %3918 = vmatprep.subr.mxu0 0.0
  %3919 = vmatpush2.msra.mxu0 0.0
  %3920 = vmatprep.subr.mxu0 0.0
  %3921 = vmatpush2.msra.mxu0 0.0
  %3922 = vmatprep.subr.mxu0 0.0
  %3923 = vmatpush2.msra.mxu0 0.0
  %3924 = vmatprep.subr.mxu0 0.0
  %3925 = vmatpush2.msra.mxu0 0.0
  %3926 = vmatprep.subr.mxu0 0.0
  %3927 = vmatpush2.msra.mxu0 0.0
  %3928 = vmatprep.subr.mxu0 0.0
  %3929 = vmatpush2.msra.mxu0 0.0
  %3930 = vmatprep.subr.mxu0 0.0
  %3931 = vmatpush2.msra.mxu0 0.0
  %3932 = vmatprep.mubr.f32.mxu0 0.0
  %3933 = vmatmul.mubr.f32.gmra.mxu0 %v2669
  %v3934 = vpop.f32.mrf.mxu0
  %v3935 = vadd.f32 %v3866, %v3934
  %v3936 = vpop.f32.mrf.mxu0
  %3937 = vmatprep.mubr.f32.mxu0 0.0
  %3938 = vmatmul.mubr.f32.gmra.mxu0 %v2672
  %v3939 = vpop.f32.mrf.mxu0
  %v3940 = vadd.f32 %v3866, %v3939
  %v3941 = vpop.f32.mrf.mxu0
  %3942 = vmatprep.mubr.f32.mxu0 0.0
  %3943 = vmatmul.mubr.f32.gmra.mxu0 %v2675
  %v3944 = vpop.f32.mrf.mxu0
  %v3945 = vadd.f32 %v3866, %v3944
  %v3946 = vpop.f32.mrf.mxu0
  %3947 = vdwg.mxu0
  %s3948 = scalar_lea.vmem %s8, 320
  %v3949 = vld [vmem:[%s3948] sm:$0xff]
  %v3950 = vld [vmem:[%s3948 + $0x8] sm:$0xff]
  %v3951 = vld [vmem:[%s3948 + $0x10] sm:$0xff]
  %v3952 = vld [vmem:[%s3948 + $0x18] sm:$0xff]
  %s3953 = scalar_lea.vmem %s9, 10
  %v3954 = vld [vmem:[%s3953] sm:$0x1]
  %v3956 = vlaneseq
  %v3957 = vshrl.u32 %v3956, 7
  %v3958 = vsub.s32 0, %v3957
  %v3959 = vrot.slane %v3954, %v3958
  %3961 = vmatprep.subr.mxu0 0.0
  %3962 = vmatpush1.msra.mxu0 0.0
  %3963 = vmatprep.subr.mxu0 0.0
  %3964 = vmatpush1.msra.mxu0 0.0
  %3965 = vmatprep.subr.mxu0 0.0
  %3966 = vmatpush1.msra.mxu0 0.0
  %3967 = vmatprep.subr.mxu0 0.0
  %3968 = vmatpush1.msra.mxu0 0.0
  %3969 = vmatprep.subr.mxu0 0.0
  %3970 = vmatpush1.msra.mxu0 0.0
  %3971 = vmatprep.subr.mxu0 0.0
  %3972 = vmatpush1.msra.mxu0 0.0
  %3973 = vmatprep.subr.mxu0 0.0
  %3974 = vmatpush1.msra.mxu0 0.0
  %3975 = vmatprep.subr.mxu0 0.0
  %3976 = vmatpush1.msra.mxu0 0.0
  %3977 = vmatprep.subr.mxu0 0.0
  %3978 = vmatpush1.msra.mxu0 0.0
  %3979 = vmatprep.subr.mxu0 0.0
  %3980 = vmatpush1.msra.mxu0 0.0
  %3981 = vmatprep.subr.mxu0 0.0
  %3982 = vmatpush1.msra.mxu0 0.0
  %3983 = vmatprep.subr.mxu0 0.0
  %3984 = vmatpush1.msra.mxu0 0.0
  %3985 = vmatprep.subr.mxu0 0.0
  %3986 = vmatpush1.msra.mxu0 %v3952
  %3987 = vmatprep.subr.mxu0 0.0
  %3988 = vmatpush1.msra.mxu0 %v3951
  %3989 = vmatprep.subr.mxu0 0.0
  %3990 = vmatpush1.msra.mxu0 %v3950
  %3991 = vmatprep.subr.mxu0 0.0
  %3992 = vmatpush1.msra.mxu0 %v3949
  %3993 = vmatprep.subr.mxu0 0.0
  %3994 = vmatpush2.msra.mxu0 0.0
  %3995 = vmatprep.subr.mxu0 0.0
  %3996 = vmatpush2.msra.mxu0 0.0
  %3997 = vmatprep.subr.mxu0 0.0
  %3998 = vmatpush2.msra.mxu0 0.0
  %3999 = vmatprep.subr.mxu0 0.0
  %4000 = vmatpush2.msra.mxu0 0.0
  %4001 = vmatprep.subr.mxu0 0.0
  %4002 = vmatpush2.msra.mxu0 0.0
  %4003 = vmatprep.subr.mxu0 0.0
  %4004 = vmatpush2.msra.mxu0 0.0
  %4005 = vmatprep.subr.mxu0 0.0
  %4006 = vmatpush2.msra.mxu0 0.0
  %4007 = vmatprep.subr.mxu0 0.0
  %4008 = vmatpush2.msra.mxu0 0.0
  %4009 = vmatprep.subr.mxu0 0.0
  %4010 = vmatpush2.msra.mxu0 0.0
  %4011 = vmatprep.subr.mxu0 0.0
  %4012 = vmatpush2.msra.mxu0 0.0
  %4013 = vmatprep.subr.mxu0 0.0
  %4014 = vmatpush2.msra.mxu0 0.0
  %4015 = vmatprep.subr.mxu0 0.0
  %4016 = vmatpush2.msra.mxu0 0.0
  %4017 = vmatprep.subr.mxu0 0.0
  %4018 = vmatpush2.msra.mxu0 0.0
  %4019 = vmatprep.subr.mxu0 0.0
  %4020 = vmatpush2.msra.mxu0 0.0
  %4021 = vmatprep.subr.mxu0 0.0
  %4022 = vmatpush2.msra.mxu0 0.0
  %4023 = vmatprep.subr.mxu0 0.0
  %4024 = vmatpush2.msra.mxu0 0.0
  %4025 = vmatprep.mubr.f32.mxu0 0.0
  %4026 = vmatmul.mubr.f32.gmra.mxu0 %v2669
  %v4027 = vpop.f32.mrf.mxu0
  %v4028 = vadd.f32 %v3959, %v4027
  %v4029 = vpop.f32.mrf.mxu0
  %4030 = vmatprep.mubr.f32.mxu0 0.0
  %4031 = vmatmul.mubr.f32.gmra.mxu0 %v2672
  %v4032 = vpop.f32.mrf.mxu0
  %v4033 = vadd.f32 %v3959, %v4032
  %v4034 = vpop.f32.mrf.mxu0
  %4035 = vmatprep.mubr.f32.mxu0 0.0
  %4036 = vmatmul.mubr.f32.gmra.mxu0 %v2675
  %v4037 = vpop.f32.mrf.mxu0
  %v4038 = vadd.f32 %v3959, %v4037
  %v4039 = vpop.f32.mrf.mxu0
  %4040 = vdwg.mxu0
  %v4042 = vsel %vm367, %v3842, 0
  %v4045 = vsel %vm367, %v3847, 0
  %v4048 = vsel %vm367, %v3852, 0
  %v4051 = vsel %vm367, %v3935, 0
  %v4054 = vsel %vm367, %v3940, 0
  %v4057 = vsel %vm367, %v3945, 0
  %4059 = vmatprep.subr.mxu0 0.0
  %4060 = vmatpush1.xpose.msra.mxu0 0.0
  %4061 = vmatprep.subr.mxu0 0.0
  %4062 = vmatpush1.xpose.msra.mxu0 0.0
  %4063 = vmatprep.subr.mxu0 0.0
  %4064 = vmatpush1.xpose.msra.mxu0 0.0
  %4065 = vmatprep.subr.mxu0 0.0
  %4066 = vmatpush1.xpose.msra.mxu0 0.0
  %4067 = vmatprep.subr.mxu0 0.0
  %4068 = vmatpush1.xpose.msra.mxu0 0.0
  %4069 = vmatprep.subr.mxu0 0.0
  %4070 = vmatpush1.xpose.msra.mxu0 0.0
  %4071 = vmatprep.subr.mxu0 0.0
  %4072 = vmatpush1.xpose.msra.mxu0 0.0
  %4073 = vmatprep.subr.mxu0 0.0
  %4074 = vmatpush1.xpose.msra.mxu0 0.0
  %4075 = vmatprep.subr.mxu0 0.0
  %4076 = vmatpush1.xpose.msra.mxu0 0.0
  %4077 = vmatprep.subr.mxu0 0.0
  %4078 = vmatpush1.xpose.msra.mxu0 0.0
  %4079 = vmatprep.subr.mxu0 0.0
  %4080 = vmatpush1.xpose.msra.mxu0 0.0
  %4081 = vmatprep.subr.mxu0 0.0
  %4082 = vmatpush1.xpose.msra.mxu0 0.0
  %4083 = vmatprep.subr.mxu0 0.0
  %4084 = vmatpush1.xpose.msra.mxu0 0.0
  %4085 = vmatprep.subr.mxu0 0.0
  %4086 = vmatpush1.xpose.msra.mxu0 %v4057
  %4087 = vmatprep.subr.mxu0 0.0
  %4088 = vmatpush1.xpose.msra.mxu0 %v4054
  %4089 = vmatprep.subr.mxu0 0.0
  %4090 = vmatpush1.xpose.msra.mxu0 %v4051
  %4091 = vmatprep.subr.mxu0 0.0
  %4092 = vmatpush2.xpose.msra.mxu0 0.0
  %4093 = vmatprep.subr.mxu0 0.0
  %4094 = vmatpush2.xpose.msra.mxu0 0.0
  %4095 = vmatprep.subr.mxu0 0.0
  %4096 = vmatpush2.xpose.msra.mxu0 0.0
  %4097 = vmatprep.subr.mxu0 0.0
  %4098 = vmatpush2.xpose.msra.mxu0 0.0
  %4099 = vmatprep.subr.mxu0 0.0
  %4100 = vmatpush2.xpose.msra.mxu0 0.0
  %4101 = vmatprep.subr.mxu0 0.0
  %4102 = vmatpush2.xpose.msra.mxu0 0.0
  %4103 = vmatprep.subr.mxu0 0.0
  %4104 = vmatpush2.xpose.msra.mxu0 0.0
  %4105 = vmatprep.subr.mxu0 0.0
  %4106 = vmatpush2.xpose.msra.mxu0 0.0
  %4107 = vmatprep.subr.mxu0 0.0
  %4108 = vmatpush2.xpose.msra.mxu0 0.0
  %4109 = vmatprep.subr.mxu0 0.0
  %4110 = vmatpush2.xpose.msra.mxu0 0.0
  %4111 = vmatprep.subr.mxu0 0.0
  %4112 = vmatpush2.xpose.msra.mxu0 0.0
  %4113 = vmatprep.subr.mxu0 0.0
  %4114 = vmatpush2.xpose.msra.mxu0 0.0
  %4115 = vmatprep.subr.mxu0 0.0
  %4116 = vmatpush2.xpose.msra.mxu0 0.0
  %4117 = vmatprep.subr.mxu0 0.0
  %4118 = vmatpush2.xpose.msra.mxu0 0.0
  %4119 = vmatprep.subr.mxu0 0.0
  %4120 = vmatpush2.xpose.msra.mxu0 0.0
  %4121 = vmatprep.subr.mxu0 0.0
  %4122 = vmatpush2.xpose.msra.mxu0 0.0
  %4123 = vmatprep.mubr.f32.mxu0 0.0
  %4124 = vmatmul.mubr.f32.gmra.mxu0 %v4042
  %v4125 = vpop.f32.mrf.mxu0
  %v4126 = vadd.f32 0.0, %v4125
  %v4127 = vpop.f32.mrf.mxu0
  %4128 = vmatprep.mubr.f32.mxu0 0.0
  %4129 = vmatmul.mubr.f32.gmra.mxu0 %v4045
  %v4130 = vpop.f32.mrf.mxu0
  %v4131 = vadd.f32 0.0, %v4130
  %v4132 = vpop.f32.mrf.mxu0
  %4133 = vmatprep.mubr.f32.mxu0 0.0
  %4134 = vmatmul.mubr.f32.gmra.mxu0 %v4048
  %v4135 = vpop.f32.mrf.mxu0
  %v4136 = vadd.f32 0.0, %v4135
  %v4137 = vpop.f32.mrf.mxu0
  %4138 = vdwg.mxu0
  %v4139 = vmul.f32 %v4126, 0.35355338
  %v4140 = vmul.f32 %v4131, 0.35355338
  %v4141 = vmul.f32 %v4136, 0.35355338
  %v4142 = vadd.f32 %v4139, %v2552
  %v4143 = vadd.f32 %v4140, %v2553
  %v4144 = vadd.f32 %v4141, %v2554
  %v4145 = vsel %vm472, %v4142, -inf
  %4146 = vmax.xlane.f32.xlu0 %v4145
  %v4147 = vpop.xlane.xlu0 %4146
  %v4148 = vsel %vm472, %v4143, -inf
  %4149 = vmax.xlane.f32.xlu0 %v4148
  %v4150 = vpop.xlane.xlu0 %4149
  %v4151 = vsel %vm472, %v4144, -inf
  %4152 = vmax.xlane.f32.xlu0 %v4151
  %v4153 = vpop.xlane.xlu0 %4152
  %v4154 = vsub.f32 %v4142, %v4147
  %v4155 = vsub.f32 %v4143, %v4150
  %v4156 = vsub.f32 %v4144, %v4153
  %v4157 = vmul.f32 %v4154, 1.442695
  %v4158 = vpow.pop %v4157
  %v4159 = vmul.f32 %v4155, 1.442695
  %v4160 = vpow.pop %v4159
  %v4161 = vmul.f32 %v4156, 1.442695
  %v4162 = vpow.pop %v4161
  %v4163 = vsel %vm472, %v4158, 0.0
  %4164 = vadd.xlane.f32.xlu0 %v4163
  %v4165 = vpop.xlane.xlu0 %4164
  %v4166 = vsel %vm472, %v4160, 0.0
  %4167 = vadd.xlane.f32.xlu0 %v4166
  %v4168 = vpop.xlane.xlu0 %4167
  %v4169 = vsel %vm472, %v4162, 0.0
  %4170 = vadd.xlane.f32.xlu0 %v4169
  %v4171 = vpop.xlane.xlu0 %4170
  %v4172 = vrcp.pop %v4165
  %v4173 = vrcp.pop %v4168
  %v4174 = vrcp.pop %v4171
  %v4175 = vmul.f32 %v4158, %v4172
  %v4176 = vmul.f32 %v4160, %v4173
  %v4177 = vmul.f32 %v4162, %v4174
  %v4179 = vsel %vm472, %v4175, 0
  %v4182 = vsel %vm472, %v4176, 0
  %v4185 = vsel %vm472, %v4177, 0
  %4187 = vmatprep.subr.mxu0 0.0
  %4188 = vmatpush1.msra.mxu0 0.0
  %4189 = vmatprep.subr.mxu0 0.0
  %4190 = vmatpush1.msra.mxu0 0.0
  %4191 = vmatprep.subr.mxu0 0.0
  %4192 = vmatpush1.msra.mxu0 0.0
  %4193 = vmatprep.subr.mxu0 0.0
  %4194 = vmatpush1.msra.mxu0 0.0
  %4195 = vmatprep.subr.mxu0 0.0
  %4196 = vmatpush1.msra.mxu0 0.0
  %4197 = vmatprep.subr.mxu0 0.0
  %4198 = vmatpush1.msra.mxu0 0.0
  %4199 = vmatprep.subr.mxu0 0.0
  %4200 = vmatpush1.msra.mxu0 0.0
  %4201 = vmatprep.subr.mxu0 0.0
  %4202 = vmatpush1.msra.mxu0 0.0
  %4203 = vmatprep.subr.mxu0 0.0
  %4204 = vmatpush1.msra.mxu0 0.0
  %4205 = vmatprep.subr.mxu0 0.0
  %4206 = vmatpush1.msra.mxu0 0.0
  %4207 = vmatprep.subr.mxu0 0.0
  %4208 = vmatpush1.msra.mxu0 0.0
  %4209 = vmatprep.subr.mxu0 0.0
  %4210 = vmatpush1.msra.mxu0 0.0
  %4211 = vmatprep.subr.mxu0 0.0
  %4212 = vmatpush1.msra.mxu0 0.0
  %4213 = vmatprep.subr.mxu0 0.0
  %4214 = vmatpush1.msra.mxu0 %v4038
  %4215 = vmatprep.subr.mxu0 0.0
  %4216 = vmatpush1.msra.mxu0 %v4033
  %4217 = vmatprep.subr.mxu0 0.0
  %4218 = vmatpush1.msra.mxu0 %v4028
  %4219 = vmatprep.subr.mxu0 0.0
  %4220 = vmatpush2.msra.mxu0 0.0
  %4221 = vmatprep.subr.mxu0 0.0
  %4222 = vmatpush2.msra.mxu0 0.0
  %4223 = vmatprep.subr.mxu0 0.0
  %4224 = vmatpush2.msra.mxu0 0.0
  %4225 = vmatprep.subr.mxu0 0.0
  %4226 = vmatpush2.msra.mxu0 0.0
  %4227 = vmatprep.subr.mxu0 0.0
  %4228 = vmatpush2.msra.mxu0 0.0
  %4229 = vmatprep.subr.mxu0 0.0
  %4230 = vmatpush2.msra.mxu0 0.0
  %4231 = vmatprep.subr.mxu0 0.0
  %4232 = vmatpush2.msra.mxu0 0.0
  %4233 = vmatprep.subr.mxu0 0.0
  %4234 = vmatpush2.msra.mxu0 0.0
  %4235 = vmatprep.subr.mxu0 0.0
  %4236 = vmatpush2.msra.mxu0 0.0
  %4237 = vmatprep.subr.mxu0 0.0
  %4238 = vmatpush2.msra.mxu0 0.0
  %4239 = vmatprep.subr.mxu0 0.0
  %4240 = vmatpush2.msra.mxu0 0.0
  %4241 = vmatprep.subr.mxu0 0.0
  %4242 = vmatpush2.msra.mxu0 0.0
  %4243 = vmatprep.subr.mxu0 0.0
  %4244 = vmatpush2.msra.mxu0 0.0
  %4245 = vmatprep.subr.mxu0 0.0
  %4246 = vmatpush2.msra.mxu0 0.0
  %4247 = vmatprep.subr.mxu0 0.0
  %4248 = vmatpush2.msra.mxu0 0.0
  %4249 = vmatprep.subr.mxu0 0.0
  %4250 = vmatpush2.msra.mxu0 0.0
  %4251 = vmatprep.mubr.f32.mxu0 0.0
  %4252 = vmatmul.mubr.f32.gmra.mxu0 %v4179
  %v4253 = vpop.f32.mrf.mxu0
  %v4254 = vadd.f32 0.0, %v4253
  %v4255 = vpop.f32.mrf.mxu0
  %4256 = vmatprep.mubr.f32.mxu0 0.0
  %4257 = vmatmul.mubr.f32.gmra.mxu0 %v4182
  %v4258 = vpop.f32.mrf.mxu0
  %v4259 = vadd.f32 0.0, %v4258
  %v4260 = vpop.f32.mrf.mxu0
  %4261 = vmatprep.mubr.f32.mxu0 0.0
  %4262 = vmatmul.mubr.f32.gmra.mxu0 %v4185
  %v4263 = vpop.f32.mrf.mxu0
  %v4264 = vadd.f32 0.0, %v4263
  %v4265 = vpop.f32.mrf.mxu0
  %4266 = vdwg.mxu0
  %s4267 = scalar_lea.vmem %s10, 16
  %v4268 = vld [vmem:[%s4267] sm:$0xff]
  %v4270 = vsel %vm367, %v4254, 0
  %v4273 = vsel %vm367, %v4259, 0
  %v4276 = vsel %vm367, %v4264, 0
  %4278 = vmatprep.subr.mxu0 0.0
  %4279 = vmatpush1.msra.mxu0 0.0
  %4280 = vmatprep.subr.mxu0 0.0
  %4281 = vmatpush1.msra.mxu0 0.0
  %4282 = vmatprep.subr.mxu0 0.0
  %4283 = vmatpush1.msra.mxu0 0.0
  %4284 = vmatprep.subr.mxu0 0.0
  %4285 = vmatpush1.msra.mxu0 0.0
  %4286 = vmatprep.subr.mxu0 0.0
  %4287 = vmatpush1.msra.mxu0 0.0
  %4288 = vmatprep.subr.mxu0 0.0
  %4289 = vmatpush1.msra.mxu0 0.0
  %4290 = vmatprep.subr.mxu0 0.0
  %4291 = vmatpush1.msra.mxu0 0.0
  %4292 = vmatprep.subr.mxu0 0.0
  %4293 = vmatpush1.msra.mxu0 0.0
  %4294 = vmatprep.subr.mxu0 0.0
  %4295 = vmatpush1.msra.mxu0 0.0
  %4296 = vmatprep.subr.mxu0 0.0
  %4297 = vmatpush1.msra.mxu0 0.0
  %4298 = vmatprep.subr.mxu0 0.0
  %4299 = vmatpush1.msra.mxu0 0.0
  %4300 = vmatprep.subr.mxu0 0.0
  %4301 = vmatpush1.msra.mxu0 0.0
  %4302 = vmatprep.subr.mxu0 0.0
  %4303 = vmatpush1.msra.mxu0 0.0
  %4304 = vmatprep.subr.mxu0 0.0
  %4305 = vmatpush1.msra.mxu0 0.0
  %4306 = vmatprep.subr.mxu0 0.0
  %4307 = vmatpush1.msra.mxu0 0.0
  %4308 = vmatprep.subr.mxu0 0.0
  %4309 = vmatpush1.msra.mxu0 %v4268
  %4310 = vmatprep.subr.mxu0 0.0
  %4311 = vmatpush2.msra.mxu0 0.0
  %4312 = vmatprep.subr.mxu0 0.0
  %4313 = vmatpush2.msra.mxu0 0.0
  %4314 = vmatprep.subr.mxu0 0.0
  %4315 = vmatpush2.msra.mxu0 0.0
  %4316 = vmatprep.subr.mxu0 0.0
  %4317 = vmatpush2.msra.mxu0 0.0
  %4318 = vmatprep.subr.mxu0 0.0
  %4319 = vmatpush2.msra.mxu0 0.0
  %4320 = vmatprep.subr.mxu0 0.0
  %4321 = vmatpush2.msra.mxu0 0.0
  %4322 = vmatprep.subr.mxu0 0.0
  %4323 = vmatpush2.msra.mxu0 0.0
  %4324 = vmatprep.subr.mxu0 0.0
  %4325 = vmatpush2.msra.mxu0 0.0
  %4326 = vmatprep.subr.mxu0 0.0
  %4327 = vmatpush2.msra.mxu0 0.0
  %4328 = vmatprep.subr.mxu0 0.0
  %4329 = vmatpush2.msra.mxu0 0.0
  %4330 = vmatprep.subr.mxu0 0.0
  %4331 = vmatpush2.msra.mxu0 0.0
  %4332 = vmatprep.subr.mxu0 0.0
  %4333 = vmatpush2.msra.mxu0 0.0
  %4334 = vmatprep.subr.mxu0 0.0
  %4335 = vmatpush2.msra.mxu0 0.0
  %4336 = vmatprep.subr.mxu0 0.0
  %4337 = vmatpush2.msra.mxu0 0.0
  %4338 = vmatprep.subr.mxu0 0.0
  %4339 = vmatpush2.msra.mxu0 0.0
  %4340 = vmatprep.subr.mxu0 0.0
  %4341 = vmatpush2.msra.mxu0 0.0
  %4342 = vmatprep.mubr.f32.mxu0 0.0
  %4343 = vmatmul.mubr.f32.gmra.mxu0 %v4270
  %v4344 = vpop.f32.mrf.mxu0
  %v4345 = vadd.f32 0.0, %v4344
  %v4346 = vpop.f32.mrf.mxu0
  %4347 = vmatprep.mubr.f32.mxu0 0.0
  %4348 = vmatmul.mubr.f32.gmra.mxu0 %v4273
  %v4349 = vpop.f32.mrf.mxu0
  %v4350 = vadd.f32 0.0, %v4349
  %v4351 = vpop.f32.mrf.mxu0
  %4352 = vmatprep.mubr.f32.mxu0 0.0
  %4353 = vmatmul.mubr.f32.gmra.mxu0 %v4276
  %v4354 = vpop.f32.mrf.mxu0
  %v4355 = vadd.f32 0.0, %v4354
  %v4356 = vpop.f32.mrf.mxu0
  %4357 = vdwg.mxu0
  %v4358 = vadd.f32 %v3749, %v4345
  %v4359 = vadd.f32 %v3754, %v4350
  %v4360 = vadd.f32 %v3759, %v4355
  %s4361 = scalar_lea.vmem %s8, 96
  %v4362 = vld [vmem:[%s4361] sm:$0xff]
  %v4363 = vld [vmem:[%s4361 + $0x8] sm:$0xff]
  %v4364 = vld [vmem:[%s4361 + $0x10] sm:$0xff]
  %v4365 = vld [vmem:[%s4361 + $0x18] sm:$0xff]
  %s4366 = scalar_lea.vmem %s9, 3
  %v4367 = vld [vmem:[%s4366] sm:$0x1]
  %v4369 = vlaneseq
  %v4370 = vshrl.u32 %v4369, 7
  %v4371 = vsub.s32 0, %v4370
  %v4372 = vrot.slane %v4367, %v4371
  %4374 = vmatprep.subr.mxu0 0.0
  %4375 = vmatpush1.msra.mxu0 0.0
  %4376 = vmatprep.subr.mxu0 0.0
  %4377 = vmatpush1.msra.mxu0 0.0
  %4378 = vmatprep.subr.mxu0 0.0
  %4379 = vmatpush1.msra.mxu0 0.0
  %4380 = vmatprep.subr.mxu0 0.0
  %4381 = vmatpush1.msra.mxu0 0.0
  %4382 = vmatprep.subr.mxu0 0.0
  %4383 = vmatpush1.msra.mxu0 0.0
  %4384 = vmatprep.subr.mxu0 0.0
  %4385 = vmatpush1.msra.mxu0 0.0
  %4386 = vmatprep.subr.mxu0 0.0
  %4387 = vmatpush1.msra.mxu0 0.0
  %4388 = vmatprep.subr.mxu0 0.0
  %4389 = vmatpush1.msra.mxu0 0.0
  %4390 = vmatprep.subr.mxu0 0.0
  %4391 = vmatpush1.msra.mxu0 0.0
  %4392 = vmatprep.subr.mxu0 0.0
  %4393 = vmatpush1.msra.mxu0 0.0
  %4394 = vmatprep.subr.mxu0 0.0
  %4395 = vmatpush1.msra.mxu0 0.0
  %4396 = vmatprep.subr.mxu0 0.0
  %4397 = vmatpush1.msra.mxu0 0.0
  %4398 = vmatprep.subr.mxu0 0.0
  %4399 = vmatpush1.msra.mxu0 %v4365
  %4400 = vmatprep.subr.mxu0 0.0
  %4401 = vmatpush1.msra.mxu0 %v4364
  %4402 = vmatprep.subr.mxu0 0.0
  %4403 = vmatpush1.msra.mxu0 %v4363
  %4404 = vmatprep.subr.mxu0 0.0
  %4405 = vmatpush1.msra.mxu0 %v4362
  %4406 = vmatprep.subr.mxu0 0.0
  %4407 = vmatpush2.msra.mxu0 0.0
  %4408 = vmatprep.subr.mxu0 0.0
  %4409 = vmatpush2.msra.mxu0 0.0
  %4410 = vmatprep.subr.mxu0 0.0
  %4411 = vmatpush2.msra.mxu0 0.0
  %4412 = vmatprep.subr.mxu0 0.0
  %4413 = vmatpush2.msra.mxu0 0.0
  %4414 = vmatprep.subr.mxu0 0.0
  %4415 = vmatpush2.msra.mxu0 0.0
  %4416 = vmatprep.subr.mxu0 0.0
  %4417 = vmatpush2.msra.mxu0 0.0
  %4418 = vmatprep.subr.mxu0 0.0
  %4419 = vmatpush2.msra.mxu0 0.0
  %4420 = vmatprep.subr.mxu0 0.0
  %4421 = vmatpush2.msra.mxu0 0.0
  %4422 = vmatprep.subr.mxu0 0.0
  %4423 = vmatpush2.msra.mxu0 0.0
  %4424 = vmatprep.subr.mxu0 0.0
  %4425 = vmatpush2.msra.mxu0 0.0
  %4426 = vmatprep.subr.mxu0 0.0
  %4427 = vmatpush2.msra.mxu0 0.0
  %4428 = vmatprep.subr.mxu0 0.0
  %4429 = vmatpush2.msra.mxu0 0.0
  %4430 = vmatprep.subr.mxu0 0.0
  %4431 = vmatpush2.msra.mxu0 0.0
  %4432 = vmatprep.subr.mxu0 0.0
  %4433 = vmatpush2.msra.mxu0 0.0
  %4434 = vmatprep.subr.mxu0 0.0
  %4435 = vmatpush2.msra.mxu0 0.0
  %4436 = vmatprep.subr.mxu0 0.0
  %4437 = vmatpush2.msra.mxu0 0.0
  %4438 = vmatprep.mubr.f32.mxu0 0.0
  %4439 = vmatmul.mubr.f32.gmra.mxu0 %v2567
  %v4440 = vpop.f32.mrf.mxu0
  %v4441 = vadd.f32 %v4372, %v4440
  %v4442 = vpop.f32.mrf.mxu0
  %4443 = vmatprep.mubr.f32.mxu0 0.0
  %4444 = vmatmul.mubr.f32.gmra.mxu0 %v2570
  %v4445 = vpop.f32.mrf.mxu0
  %v4446 = vadd.f32 %v4372, %v4445
  %v4447 = vpop.f32.mrf.mxu0
  %4448 = vmatprep.mubr.f32.mxu0 0.0
  %4449 = vmatmul.mubr.f32.gmra.mxu0 %v2573
  %v4450 = vpop.f32.mrf.mxu0
  %v4451 = vadd.f32 %v4372, %v4450
  %v4452 = vpop.f32.mrf.mxu0
  %4453 = vdwg.mxu0
  %s4454 = scalar_lea.vmem %s8, 224
  %v4455 = vld [vmem:[%s4454] sm:$0xff]
  %v4456 = vld [vmem:[%s4454 + $0x8] sm:$0xff]
  %v4457 = vld [vmem:[%s4454 + $0x10] sm:$0xff]
  %v4458 = vld [vmem:[%s4454 + $0x18] sm:$0xff]
  %s4459 = scalar_lea.vmem %s9, 7
  %v4460 = vld [vmem:[%s4459] sm:$0x1]
  %v4462 = vlaneseq
  %v4463 = vshrl.u32 %v4462, 7
  %v4464 = vsub.s32 0, %v4463
  %v4465 = vrot.slane %v4460, %v4464
  %4467 = vmatprep.subr.mxu0 0.0
  %4468 = vmatpush1.msra.mxu0 0.0
  %4469 = vmatprep.subr.mxu0 0.0
  %4470 = vmatpush1.msra.mxu0 0.0
  %4471 = vmatprep.subr.mxu0 0.0
  %4472 = vmatpush1.msra.mxu0 0.0
  %4473 = vmatprep.subr.mxu0 0.0
  %4474 = vmatpush1.msra.mxu0 0.0
  %4475 = vmatprep.subr.mxu0 0.0
  %4476 = vmatpush1.msra.mxu0 0.0
  %4477 = vmatprep.subr.mxu0 0.0
  %4478 = vmatpush1.msra.mxu0 0.0
  %4479 = vmatprep.subr.mxu0 0.0
  %4480 = vmatpush1.msra.mxu0 0.0
  %4481 = vmatprep.subr.mxu0 0.0
  %4482 = vmatpush1.msra.mxu0 0.0
  %4483 = vmatprep.subr.mxu0 0.0
  %4484 = vmatpush1.msra.mxu0 0.0
  %4485 = vmatprep.subr.mxu0 0.0
  %4486 = vmatpush1.msra.mxu0 0.0
  %4487 = vmatprep.subr.mxu0 0.0
  %4488 = vmatpush1.msra.mxu0 0.0
  %4489 = vmatprep.subr.mxu0 0.0
  %4490 = vmatpush1.msra.mxu0 0.0
  %4491 = vmatprep.subr.mxu0 0.0
  %4492 = vmatpush1.msra.mxu0 %v4458
  %4493 = vmatprep.subr.mxu0 0.0
  %4494 = vmatpush1.msra.mxu0 %v4457
  %4495 = vmatprep.subr.mxu0 0.0
  %4496 = vmatpush1.msra.mxu0 %v4456
  %4497 = vmatprep.subr.mxu0 0.0
  %4498 = vmatpush1.msra.mxu0 %v4455
  %4499 = vmatprep.subr.mxu0 0.0
  %4500 = vmatpush2.msra.mxu0 0.0
  %4501 = vmatprep.subr.mxu0 0.0
  %4502 = vmatpush2.msra.mxu0 0.0
  %4503 = vmatprep.subr.mxu0 0.0
  %4504 = vmatpush2.msra.mxu0 0.0
  %4505 = vmatprep.subr.mxu0 0.0
  %4506 = vmatpush2.msra.mxu0 0.0
  %4507 = vmatprep.subr.mxu0 0.0
  %4508 = vmatpush2.msra.mxu0 0.0
  %4509 = vmatprep.subr.mxu0 0.0
  %4510 = vmatpush2.msra.mxu0 0.0
  %4511 = vmatprep.subr.mxu0 0.0
  %4512 = vmatpush2.msra.mxu0 0.0
  %4513 = vmatprep.subr.mxu0 0.0
  %4514 = vmatpush2.msra.mxu0 0.0
  %4515 = vmatprep.subr.mxu0 0.0
  %4516 = vmatpush2.msra.mxu0 0.0
  %4517 = vmatprep.subr.mxu0 0.0
  %4518 = vmatpush2.msra.mxu0 0.0
  %4519 = vmatprep.subr.mxu0 0.0
  %4520 = vmatpush2.msra.mxu0 0.0
  %4521 = vmatprep.subr.mxu0 0.0
  %4522 = vmatpush2.msra.mxu0 0.0
  %4523 = vmatprep.subr.mxu0 0.0
  %4524 = vmatpush2.msra.mxu0 0.0
  %4525 = vmatprep.subr.mxu0 0.0
  %4526 = vmatpush2.msra.mxu0 0.0
  %4527 = vmatprep.subr.mxu0 0.0
  %4528 = vmatpush2.msra.mxu0 0.0
  %4529 = vmatprep.subr.mxu0 0.0
  %4530 = vmatpush2.msra.mxu0 0.0
  %4531 = vmatprep.mubr.f32.mxu0 0.0
  %4532 = vmatmul.mubr.f32.gmra.mxu0 %v2669
  %v4533 = vpop.f32.mrf.mxu0
  %v4534 = vadd.f32 %v4465, %v4533
  %v4535 = vpop.f32.mrf.mxu0
  %4536 = vmatprep.mubr.f32.mxu0 0.0
  %4537 = vmatmul.mubr.f32.gmra.mxu0 %v2672
  %v4538 = vpop.f32.mrf.mxu0
  %v4539 = vadd.f32 %v4465, %v4538
  %v4540 = vpop.f32.mrf.mxu0
  %4541 = vmatprep.mubr.f32.mxu0 0.0
  %4542 = vmatmul.mubr.f32.gmra.mxu0 %v2675
  %v4543 = vpop.f32.mrf.mxu0
  %v4544 = vadd.f32 %v4465, %v4543
  %v4545 = vpop.f32.mrf.mxu0
  %4546 = vdwg.mxu0
  %s4547 = scalar_lea.vmem %s8, 352
  %v4548 = vld [vmem:[%s4547] sm:$0xff]
  %v4549 = vld [vmem:[%s4547 + $0x8] sm:$0xff]
  %v4550 = vld [vmem:[%s4547 + $0x10] sm:$0xff]
  %v4551 = vld [vmem:[%s4547 + $0x18] sm:$0xff]
  %s4552 = scalar_lea.vmem %s9, 11
  %v4553 = vld [vmem:[%s4552] sm:$0x1]
  %v4555 = vlaneseq
  %v4556 = vshrl.u32 %v4555, 7
  %v4557 = vsub.s32 0, %v4556
  %v4558 = vrot.slane %v4553, %v4557
  %4560 = vmatprep.subr.mxu0 0.0
  %4561 = vmatpush1.msra.mxu0 0.0
  %4562 = vmatprep.subr.mxu0 0.0
  %4563 = vmatpush1.msra.mxu0 0.0
  %4564 = vmatprep.subr.mxu0 0.0
  %4565 = vmatpush1.msra.mxu0 0.0
  %4566 = vmatprep.subr.mxu0 0.0
  %4567 = vmatpush1.msra.mxu0 0.0
  %4568 = vmatprep.subr.mxu0 0.0
  %4569 = vmatpush1.msra.mxu0 0.0
  %4570 = vmatprep.subr.mxu0 0.0
  %4571 = vmatpush1.msra.mxu0 0.0
  %4572 = vmatprep.subr.mxu0 0.0
  %4573 = vmatpush1.msra.mxu0 0.0
  %4574 = vmatprep.subr.mxu0 0.0
  %4575 = vmatpush1.msra.mxu0 0.0
  %4576 = vmatprep.subr.mxu0 0.0
  %4577 = vmatpush1.msra.mxu0 0.0
  %4578 = vmatprep.subr.mxu0 0.0
  %4579 = vmatpush1.msra.mxu0 0.0
  %4580 = vmatprep.subr.mxu0 0.0
  %4581 = vmatpush1.msra.mxu0 0.0
  %4582 = vmatprep.subr.mxu0 0.0
  %4583 = vmatpush1.msra.mxu0 0.0
  %4584 = vmatprep.subr.mxu0 0.0
  %4585 = vmatpush1.msra.mxu0 %v4551
  %4586 = vmatprep.subr.mxu0 0.0
  %4587 = vmatpush1.msra.mxu0 %v4550
  %4588 = vmatprep.subr.mxu0 0.0
  %4589 = vmatpush1.msra.mxu0 %v4549
  %4590 = vmatprep.subr.mxu0 0.0
  %4591 = vmatpush1.msra.mxu0 %v4548
  %4592 = vmatprep.subr.mxu0 0.0
  %4593 = vmatpush2.msra.mxu0 0.0
  %4594 = vmatprep.subr.mxu0 0.0
  %4595 = vmatpush2.msra.mxu0 0.0
  %4596 = vmatprep.subr.mxu0 0.0
  %4597 = vmatpush2.msra.mxu0 0.0
  %4598 = vmatprep.subr.mxu0 0.0
  %4599 = vmatpush2.msra.mxu0 0.0
  %4600 = vmatprep.subr.mxu0 0.0
  %4601 = vmatpush2.msra.mxu0 0.0
  %4602 = vmatprep.subr.mxu0 0.0
  %4603 = vmatpush2.msra.mxu0 0.0
  %4604 = vmatprep.subr.mxu0 0.0
  %4605 = vmatpush2.msra.mxu0 0.0
  %4606 = vmatprep.subr.mxu0 0.0
  %4607 = vmatpush2.msra.mxu0 0.0
  %4608 = vmatprep.subr.mxu0 0.0
  %4609 = vmatpush2.msra.mxu0 0.0
  %4610 = vmatprep.subr.mxu0 0.0
  %4611 = vmatpush2.msra.mxu0 0.0
  %4612 = vmatprep.subr.mxu0 0.0
  %4613 = vmatpush2.msra.mxu0 0.0
  %4614 = vmatprep.subr.mxu0 0.0
  %4615 = vmatpush2.msra.mxu0 0.0
  %4616 = vmatprep.subr.mxu0 0.0
  %4617 = vmatpush2.msra.mxu0 0.0
  %4618 = vmatprep.subr.mxu0 0.0
  %4619 = vmatpush2.msra.mxu0 0.0
  %4620 = vmatprep.subr.mxu0 0.0
  %4621 = vmatpush2.msra.mxu0 0.0
  %4622 = vmatprep.subr.mxu0 0.0
  %4623 = vmatpush2.msra.mxu0 0.0
  %4624 = vmatprep.mubr.f32.mxu0 0.0
  %4625 = vmatmul.mubr.f32.gmra.mxu0 %v2669
  %v4626 = vpop.f32.mrf.mxu0
  %v4627 = vadd.f32 %v4558, %v4626
  %v4628 = vpop.f32.mrf.mxu0
  %4629 = vmatprep.mubr.f32.mxu0 0.0
  %4630 = vmatmul.mubr.f32.gmra.mxu0 %v2672
  %v4631 = vpop.f32.mrf.mxu0
  %v4632 = vadd.f32 %v4558, %v4631
  %v4633 = vpop.f32.mrf.mxu0
  %4634 = vmatprep.mubr.f32.mxu0 0.0
  %4635 = vmatmul.mubr.f32.gmra.mxu0 %v2675
  %v4636 = vpop.f32.mrf.mxu0
  %v4637 = vadd.f32 %v4558, %v4636
  %v4638 = vpop.f32.mrf.mxu0
  %4639 = vdwg.mxu0
  %v4641 = vsel %vm367, %v4441, 0
  %v4644 = vsel %vm367, %v4446, 0
  %v4647 = vsel %vm367, %v4451, 0
  %v4650 = vsel %vm367, %v4534, 0
  %v4653 = vsel %vm367, %v4539, 0
  %v4656 = vsel %vm367, %v4544, 0
  %4658 = vmatprep.subr.mxu0 0.0
  %4659 = vmatpush1.xpose.msra.mxu0 0.0
  %4660 = vmatprep.subr.mxu0 0.0
  %4661 = vmatpush1.xpose.msra.mxu0 0.0
  %4662 = vmatprep.subr.mxu0 0.0
  %4663 = vmatpush1.xpose.msra.mxu0 0.0
  %4664 = vmatprep.subr.mxu0 0.0
  %4665 = vmatpush1.xpose.msra.mxu0 0.0
  %4666 = vmatprep.subr.mxu0 0.0
  %4667 = vmatpush1.xpose.msra.mxu0 0.0
  %4668 = vmatprep.subr.mxu0 0.0
  %4669 = vmatpush1.xpose.msra.mxu0 0.0
  %4670 = vmatprep.subr.mxu0 0.0
  %4671 = vmatpush1.xpose.msra.mxu0 0.0
  %4672 = vmatprep.subr.mxu0 0.0
  %4673 = vmatpush1.xpose.msra.mxu0 0.0
  %4674 = vmatprep.subr.mxu0 0.0
  %4675 = vmatpush1.xpose.msra.mxu0 0.0
  %4676 = vmatprep.subr.mxu0 0.0
  %4677 = vmatpush1.xpose.msra.mxu0 0.0
  %4678 = vmatprep.subr.mxu0 0.0
  %4679 = vmatpush1.xpose.msra.mxu0 0.0
  %4680 = vmatprep.subr.mxu0 0.0
  %4681 = vmatpush1.xpose.msra.mxu0 0.0
  %4682 = vmatprep.subr.mxu0 0.0
  %4683 = vmatpush1.xpose.msra.mxu0 0.0
  %4684 = vmatprep.subr.mxu0 0.0
  %4685 = vmatpush1.xpose.msra.mxu0 %v4656
  %4686 = vmatprep.subr.mxu0 0.0
  %4687 = vmatpush1.xpose.msra.mxu0 %v4653
  %4688 = vmatprep.subr.mxu0 0.0
  %4689 = vmatpush1.xpose.msra.mxu0 %v4650
  %4690 = vmatprep.subr.mxu0 0.0
  %4691 = vmatpush2.xpose.msra.mxu0 0.0
  %4692 = vmatprep.subr.mxu0 0.0
  %4693 = vmatpush2.xpose.msra.mxu0 0.0
  %4694 = vmatprep.subr.mxu0 0.0
  %4695 = vmatpush2.xpose.msra.mxu0 0.0
  %4696 = vmatprep.subr.mxu0 0.0
  %4697 = vmatpush2.xpose.msra.mxu0 0.0
  %4698 = vmatprep.subr.mxu0 0.0
  %4699 = vmatpush2.xpose.msra.mxu0 0.0
  %4700 = vmatprep.subr.mxu0 0.0
  %4701 = vmatpush2.xpose.msra.mxu0 0.0
  %4702 = vmatprep.subr.mxu0 0.0
  %4703 = vmatpush2.xpose.msra.mxu0 0.0
  %4704 = vmatprep.subr.mxu0 0.0
  %4705 = vmatpush2.xpose.msra.mxu0 0.0
  %4706 = vmatprep.subr.mxu0 0.0
  %4707 = vmatpush2.xpose.msra.mxu0 0.0
  %4708 = vmatprep.subr.mxu0 0.0
  %4709 = vmatpush2.xpose.msra.mxu0 0.0
  %4710 = vmatprep.subr.mxu0 0.0
  %4711 = vmatpush2.xpose.msra.mxu0 0.0
  %4712 = vmatprep.subr.mxu0 0.0
  %4713 = vmatpush2.xpose.msra.mxu0 0.0
  %4714 = vmatprep.subr.mxu0 0.0
  %4715 = vmatpush2.xpose.msra.mxu0 0.0
  %4716 = vmatprep.subr.mxu0 0.0
  %4717 = vmatpush2.xpose.msra.mxu0 0.0
  %4718 = vmatprep.subr.mxu0 0.0
  %4719 = vmatpush2.xpose.msra.mxu0 0.0
  %4720 = vmatprep.subr.mxu0 0.0
  %4721 = vmatpush2.xpose.msra.mxu0 0.0
  %4722 = vmatprep.mubr.f32.mxu0 0.0
  %4723 = vmatmul.mubr.f32.gmra.mxu0 %v4641
  %v4724 = vpop.f32.mrf.mxu0
  %v4725 = vadd.f32 0.0, %v4724
  %v4726 = vpop.f32.mrf.mxu0
  %4727 = vmatprep.mubr.f32.mxu0 0.0
  %4728 = vmatmul.mubr.f32.gmra.mxu0 %v4644
  %v4729 = vpop.f32.mrf.mxu0
  %v4730 = vadd.f32 0.0, %v4729
  %v4731 = vpop.f32.mrf.mxu0
  %4732 = vmatprep.mubr.f32.mxu0 0.0
  %4733 = vmatmul.mubr.f32.gmra.mxu0 %v4647
  %v4734 = vpop.f32.mrf.mxu0
  %v4735 = vadd.f32 0.0, %v4734
  %v4736 = vpop.f32.mrf.mxu0
  %4737 = vdwg.mxu0
  %v4738 = vmul.f32 %v4725, 0.35355338
  %v4739 = vmul.f32 %v4730, 0.35355338
  %v4740 = vmul.f32 %v4735, 0.35355338
  %v4741 = vadd.f32 %v4738, %v2552
  %v4742 = vadd.f32 %v4739, %v2553
  %v4743 = vadd.f32 %v4740, %v2554
  %v4744 = vsel %vm472, %v4741, -inf
  %4745 = vmax.xlane.f32.xlu0 %v4744
  %v4746 = vpop.xlane.xlu0 %4745
  %v4747 = vsel %vm472, %v4742, -inf
  %4748 = vmax.xlane.f32.xlu0 %v4747
  %v4749 = vpop.xlane.xlu0 %4748
  %v4750 = vsel %vm472, %v4743, -inf
  %4751 = vmax.xlane.f32.xlu0 %v4750
  %v4752 = vpop.xlane.xlu0 %4751
  %v4753 = vsub.f32 %v4741, %v4746
  %v4754 = vsub.f32 %v4742, %v4749
  %v4755 = vsub.f32 %v4743, %v4752
  %v4756 = vmul.f32 %v4753, 1.442695
  %v4757 = vpow.pop %v4756
  %v4758 = vmul.f32 %v4754, 1.442695
  %v4759 = vpow.pop %v4758
  %v4760 = vmul.f32 %v4755, 1.442695
  %v4761 = vpow.pop %v4760
  %v4762 = vsel %vm472, %v4757, 0.0
  %4763 = vadd.xlane.f32.xlu0 %v4762
  %v4764 = vpop.xlane.xlu0 %4763
  %v4765 = vsel %vm472, %v4759, 0.0
  %4766 = vadd.xlane.f32.xlu0 %v4765
  %v4767 = vpop.xlane.xlu0 %4766
  %v4768 = vsel %vm472, %v4761, 0.0
  %4769 = vadd.xlane.f32.xlu0 %v4768
  %v4770 = vpop.xlane.xlu0 %4769
  %v4771 = vrcp.pop %v4764
  %v4772 = vrcp.pop %v4767
  %v4773 = vrcp.pop %v4770
  %v4774 = vmul.f32 %v4757, %v4771
  %v4775 = vmul.f32 %v4759, %v4772
  %v4776 = vmul.f32 %v4761, %v4773
  %v4778 = vsel %vm472, %v4774, 0
  %v4781 = vsel %vm472, %v4775, 0
  %v4784 = vsel %vm472, %v4776, 0
  %4786 = vmatprep.subr.mxu0 0.0
  %4787 = vmatpush1.msra.mxu0 0.0
  %4788 = vmatprep.subr.mxu0 0.0
  %4789 = vmatpush1.msra.mxu0 0.0
  %4790 = vmatprep.subr.mxu0 0.0
  %4791 = vmatpush1.msra.mxu0 0.0
  %4792 = vmatprep.subr.mxu0 0.0
  %4793 = vmatpush1.msra.mxu0 0.0
  %4794 = vmatprep.subr.mxu0 0.0
  %4795 = vmatpush1.msra.mxu0 0.0
  %4796 = vmatprep.subr.mxu0 0.0
  %4797 = vmatpush1.msra.mxu0 0.0
  %4798 = vmatprep.subr.mxu0 0.0
  %4799 = vmatpush1.msra.mxu0 0.0
  %4800 = vmatprep.subr.mxu0 0.0
  %4801 = vmatpush1.msra.mxu0 0.0
  %4802 = vmatprep.subr.mxu0 0.0
  %4803 = vmatpush1.msra.mxu0 0.0
  %4804 = vmatprep.subr.mxu0 0.0
  %4805 = vmatpush1.msra.mxu0 0.0
  %4806 = vmatprep.subr.mxu0 0.0
  %4807 = vmatpush1.msra.mxu0 0.0
  %4808 = vmatprep.subr.mxu0 0.0
  %4809 = vmatpush1.msra.mxu0 0.0
  %4810 = vmatprep.subr.mxu0 0.0
  %4811 = vmatpush1.msra.mxu0 0.0
  %4812 = vmatprep.subr.mxu0 0.0
  %4813 = vmatpush1.msra.mxu0 %v4637
  %4814 = vmatprep.subr.mxu0 0.0
  %4815 = vmatpush1.msra.mxu0 %v4632
  %4816 = vmatprep.subr.mxu0 0.0
  %4817 = vmatpush1.msra.mxu0 %v4627
  %4818 = vmatprep.subr.mxu0 0.0
  %4819 = vmatpush2.msra.mxu0 0.0
  %4820 = vmatprep.subr.mxu0 0.0
  %4821 = vmatpush2.msra.mxu0 0.0
  %4822 = vmatprep.subr.mxu0 0.0
  %4823 = vmatpush2.msra.mxu0 0.0
  %4824 = vmatprep.subr.mxu0 0.0
  %4825 = vmatpush2.msra.mxu0 0.0
  %4826 = vmatprep.subr.mxu0 0.0
  %4827 = vmatpush2.msra.mxu0 0.0
  %4828 = vmatprep.subr.mxu0 0.0
  %4829 = vmatpush2.msra.mxu0 0.0
  %4830 = vmatprep.subr.mxu0 0.0
  %4831 = vmatpush2.msra.mxu0 0.0
  %4832 = vmatprep.subr.mxu0 0.0
  %4833 = vmatpush2.msra.mxu0 0.0
  %4834 = vmatprep.subr.mxu0 0.0
  %4835 = vmatpush2.msra.mxu0 0.0
  %4836 = vmatprep.subr.mxu0 0.0
  %4837 = vmatpush2.msra.mxu0 0.0
  %4838 = vmatprep.subr.mxu0 0.0
  %4839 = vmatpush2.msra.mxu0 0.0
  %4840 = vmatprep.subr.mxu0 0.0
  %4841 = vmatpush2.msra.mxu0 0.0
  %4842 = vmatprep.subr.mxu0 0.0
  %4843 = vmatpush2.msra.mxu0 0.0
  %4844 = vmatprep.subr.mxu0 0.0
  %4845 = vmatpush2.msra.mxu0 0.0
  %4846 = vmatprep.subr.mxu0 0.0
  %4847 = vmatpush2.msra.mxu0 0.0
  %4848 = vmatprep.subr.mxu0 0.0
  %4849 = vmatpush2.msra.mxu0 0.0
  %4850 = vmatprep.mubr.f32.mxu0 0.0
  %4851 = vmatmul.mubr.f32.gmra.mxu0 %v4778
  %v4852 = vpop.f32.mrf.mxu0
  %v4853 = vadd.f32 0.0, %v4852
  %v4854 = vpop.f32.mrf.mxu0
  %4855 = vmatprep.mubr.f32.mxu0 0.0
  %4856 = vmatmul.mubr.f32.gmra.mxu0 %v4781
  %v4857 = vpop.f32.mrf.mxu0
  %v4858 = vadd.f32 0.0, %v4857
  %v4859 = vpop.f32.mrf.mxu0
  %4860 = vmatprep.mubr.f32.mxu0 0.0
  %4861 = vmatmul.mubr.f32.gmra.mxu0 %v4784
  %v4862 = vpop.f32.mrf.mxu0
  %v4863 = vadd.f32 0.0, %v4862
  %v4864 = vpop.f32.mrf.mxu0
  %4865 = vdwg.mxu0
  %s4866 = scalar_lea.vmem %s10, 24
  %v4867 = vld [vmem:[%s4866] sm:$0xff]
  %v4869 = vsel %vm367, %v4853, 0
  %v4872 = vsel %vm367, %v4858, 0
  %v4875 = vsel %vm367, %v4863, 0
  %4877 = vmatprep.subr.mxu0 0.0
  %4878 = vmatpush1.msra.mxu0 0.0
  %4879 = vmatprep.subr.mxu0 0.0
  %4880 = vmatpush1.msra.mxu0 0.0
  %4881 = vmatprep.subr.mxu0 0.0
  %4882 = vmatpush1.msra.mxu0 0.0
  %4883 = vmatprep.subr.mxu0 0.0
  %4884 = vmatpush1.msra.mxu0 0.0
  %4885 = vmatprep.subr.mxu0 0.0
  %4886 = vmatpush1.msra.mxu0 0.0
  %4887 = vmatprep.subr.mxu0 0.0
  %4888 = vmatpush1.msra.mxu0 0.0
  %4889 = vmatprep.subr.mxu0 0.0
  %4890 = vmatpush1.msra.mxu0 0.0
  %4891 = vmatprep.subr.mxu0 0.0
  %4892 = vmatpush1.msra.mxu0 0.0
  %4893 = vmatprep.subr.mxu0 0.0
  %4894 = vmatpush1.msra.mxu0 0.0
  %4895 = vmatprep.subr.mxu0 0.0
  %4896 = vmatpush1.msra.mxu0 0.0
  %4897 = vmatprep.subr.mxu0 0.0
  %4898 = vmatpush1.msra.mxu0 0.0
  %4899 = vmatprep.subr.mxu0 0.0
  %4900 = vmatpush1.msra.mxu0 0.0
  %4901 = vmatprep.subr.mxu0 0.0
  %4902 = vmatpush1.msra.mxu0 0.0
  %4903 = vmatprep.subr.mxu0 0.0
  %4904 = vmatpush1.msra.mxu0 0.0
  %4905 = vmatprep.subr.mxu0 0.0
  %4906 = vmatpush1.msra.mxu0 0.0
  %4907 = vmatprep.subr.mxu0 0.0
  %4908 = vmatpush1.msra.mxu0 %v4867
  %4909 = vmatprep.subr.mxu0 0.0
  %4910 = vmatpush2.msra.mxu0 0.0
  %4911 = vmatprep.subr.mxu0 0.0
  %4912 = vmatpush2.msra.mxu0 0.0
  %4913 = vmatprep.subr.mxu0 0.0
  %4914 = vmatpush2.msra.mxu0 0.0
  %4915 = vmatprep.subr.mxu0 0.0
  %4916 = vmatpush2.msra.mxu0 0.0
  %4917 = vmatprep.subr.mxu0 0.0
  %4918 = vmatpush2.msra.mxu0 0.0
  %4919 = vmatprep.subr.mxu0 0.0
  %4920 = vmatpush2.msra.mxu0 0.0
  %4921 = vmatprep.subr.mxu0 0.0
  %4922 = vmatpush2.msra.mxu0 0.0
  %4923 = vmatprep.subr.mxu0 0.0
  %4924 = vmatpush2.msra.mxu0 0.0
  %4925 = vmatprep.subr.mxu0 0.0
  %4926 = vmatpush2.msra.mxu0 0.0
  %4927 = vmatprep.subr.mxu0 0.0
  %4928 = vmatpush2.msra.mxu0 0.0
  %4929 = vmatprep.subr.mxu0 0.0
  %4930 = vmatpush2.msra.mxu0 0.0
  %4931 = vmatprep.subr.mxu0 0.0
  %4932 = vmatpush2.msra.mxu0 0.0
  %4933 = vmatprep.subr.mxu0 0.0
  %4934 = vmatpush2.msra.mxu0 0.0
  %4935 = vmatprep.subr.mxu0 0.0
  %4936 = vmatpush2.msra.mxu0 0.0
  %4937 = vmatprep.subr.mxu0 0.0
  %4938 = vmatpush2.msra.mxu0 0.0
  %4939 = vmatprep.subr.mxu0 0.0
  %4940 = vmatpush2.msra.mxu0 0.0
  %4941 = vmatprep.mubr.f32.mxu0 0.0
  %4942 = vmatmul.mubr.f32.gmra.mxu0 %v4869
  %v4943 = vpop.f32.mrf.mxu0
  %v4944 = vadd.f32 0.0, %v4943
  %v4945 = vpop.f32.mrf.mxu0
  %4946 = vmatprep.mubr.f32.mxu0 0.0
  %4947 = vmatmul.mubr.f32.gmra.mxu0 %v4872
  %v4948 = vpop.f32.mrf.mxu0
  %v4949 = vadd.f32 0.0, %v4948
  %v4950 = vpop.f32.mrf.mxu0
  %4951 = vmatprep.mubr.f32.mxu0 0.0
  %4952 = vmatmul.mubr.f32.gmra.mxu0 %v4875
  %v4953 = vpop.f32.mrf.mxu0
  %v4954 = vadd.f32 0.0, %v4953
  %v4955 = vpop.f32.mrf.mxu0
  %4956 = vdwg.mxu0
  %v4957 = vadd.f32 %v4358, %v4944
  %v4958 = vadd.f32 %v4359, %v4949
  %v4959 = vadd.f32 %v4360, %v4954
  %v4960 = vld [vmem:[%s11] sm:$0x1]
  %v4962 = vlaneseq
  %v4963 = vshrl.u32 %v4962, 7
  %v4964 = vsub.s32 0, %v4963
  %v4965 = vrot.slane %v4960, %v4964
  %v4967 = vadd.f32 %v4957, %v4965
  %v4968 = vadd.f32 %v4958, %v4965
  %v4969 = vadd.f32 %v4959, %v4965
  %v4970 = vadd.f32 %v2549, %v4967
  %v4971 = vadd.f32 %v2550, %v4968
  %v4972 = vadd.f32 %v2551, %v4969
  %v4973 = vld [vmem:[%s14] sm:$0x1]
  %v4974 = vld [vmem:[%s15] sm:$0x1]
  %v4975 = vsel %vm91, %v4970, 0.0
  %4976 = vadd.xlane.f32.xlu0 %v4975
  %v4977 = vpop.xlane.xlu0 %4976
  %v4978 = vsel %vm91, %v4971, 0.0
  %4979 = vadd.xlane.f32.xlu0 %v4978
  %v4980 = vpop.xlane.xlu0 %4979
  %v4981 = vsel %vm91, %v4972, 0.0
  %4982 = vadd.xlane.f32.xlu0 %v4981
  %v4983 = vpop.xlane.xlu0 %4982
  %v4984 = vmul.f32 %v4977, %v2503
  %v4985 = vmul.f32 %v4980, %v2503
  %v4986 = vmul.f32 %v4983, %v2503
  %v4987 = vsub.f32 %v4970, %v4984
  %v4988 = vsub.f32 %v4971, %v4985
  %v4989 = vsub.f32 %v4972, %v4986
  %v4990 = vmul.f32 %v4987, %v4987
  %v4991 = vmul.f32 %v4988, %v4988
  %v4992 = vmul.f32 %v4989, %v4989
  %v4993 = vsel %vm91, %v4990, 0.0
  %4994 = vadd.xlane.f32.xlu0 %v4993
  %v4995 = vpop.xlane.xlu0 %4994
  %v4996 = vsel %vm91, %v4991, 0.0
  %4997 = vadd.xlane.f32.xlu0 %v4996
  %v4998 = vpop.xlane.xlu0 %4997
  %v4999 = vsel %vm91, %v4992, 0.0
  %5000 = vadd.xlane.f32.xlu0 %v4999
  %v5001 = vpop.xlane.xlu0 %5000
  %v5002 = vmul.f32 %v4995, %v2503
  %v5003 = vmul.f32 %v4998, %v2503
  %v5004 = vmul.f32 %v5001, %v2503
  %v5005 = vadd.f32 %v5002, 1e-05
  %v5006 = vadd.f32 %v5003, 1e-05
  %v5007 = vadd.f32 %v5004, 1e-05
  %v5008 = vrsqrt.pop %v5005
  %v5009 = vrsqrt.pop %v5006
  %v5010 = vrsqrt.pop %v5007
  %v5011 = vmul.f32 %v4987, %v5008
  %v5012 = vmul.f32 %v4988, %v5009
  %v5013 = vmul.f32 %v4989, %v5010
  %v5015 = vlaneseq
  %v5016 = vshrl.u32 %v5015, 7
  %v5017 = vsub.s32 0, %v5016
  %v5018 = vrot.slane %v4973, %v5017
  %v5020 = vmul.f32 %v5011, %v5018
  %v5021 = vmul.f32 %v5012, %v5018
  %v5022 = vmul.f32 %v5013, %v5018
  %v5024 = vlaneseq
  %v5025 = vshrl.u32 %v5024, 7
  %v5026 = vsub.s32 0, %v5025
  %v5027 = vrot.slane %v4974, %v5026
  %v5029 = vadd.f32 %v5020, %v5027
  %v5030 = vadd.f32 %v5021, %v5027
  %v5031 = vadd.f32 %v5022, %v5027
  %v5032 = vld [vmem:[%s18] sm:$0xff]
  %v5033 = vld [vmem:[%s18 + $0x8] sm:$0xff]
  %v5034 = vld [vmem:[%s18 + $0x10] sm:$0xff]
  %v5035 = vld [vmem:[%s18 + $0x18] sm:$0xff]
  %v5036 = vld [vmem:[%s19] sm:$0x1]
  %v5038 = vlaneseq
  %v5039 = vshrl.u32 %v5038, 7
  %v5040 = vsub.s32 0, %v5039
  %v5041 = vrot.slane %v5036, %v5040
  %v5044 = vsel %vm91, %v5029, 0
  %v5047 = vsel %vm91, %v5030, 0
  %v5050 = vsel %vm91, %v5031, 0
  %5052 = vmatprep.subr.mxu0 0.0
  %5053 = vmatpush1.msra.mxu0 0.0
  %5054 = vmatprep.subr.mxu0 0.0
  %5055 = vmatpush1.msra.mxu0 0.0
  %5056 = vmatprep.subr.mxu0 0.0
  %5057 = vmatpush1.msra.mxu0 0.0
  %5058 = vmatprep.subr.mxu0 0.0
  %5059 = vmatpush1.msra.mxu0 0.0
  %5060 = vmatprep.subr.mxu0 0.0
  %5061 = vmatpush1.msra.mxu0 0.0
  %5062 = vmatprep.subr.mxu0 0.0
  %5063 = vmatpush1.msra.mxu0 0.0
  %5064 = vmatprep.subr.mxu0 0.0
  %5065 = vmatpush1.msra.mxu0 0.0
  %5066 = vmatprep.subr.mxu0 0.0
  %5067 = vmatpush1.msra.mxu0 0.0
  %5068 = vmatprep.subr.mxu0 0.0
  %5069 = vmatpush1.msra.mxu0 0.0
  %5070 = vmatprep.subr.mxu0 0.0
  %5071 = vmatpush1.msra.mxu0 0.0
  %5072 = vmatprep.subr.mxu0 0.0
  %5073 = vmatpush1.msra.mxu0 0.0
  %5074 = vmatprep.subr.mxu0 0.0
  %5075 = vmatpush1.msra.mxu0 0.0
  %5076 = vmatprep.subr.mxu0 0.0
  %5077 = vmatpush1.msra.mxu0 %v5035
  %5078 = vmatprep.subr.mxu0 0.0
  %5079 = vmatpush1.msra.mxu0 %v5034
  %5080 = vmatprep.subr.mxu0 0.0
  %5081 = vmatpush1.msra.mxu0 %v5033
  %5082 = vmatprep.subr.mxu0 0.0
  %5083 = vmatpush1.msra.mxu0 %v5032
  %5084 = vmatprep.subr.mxu0 0.0
  %5085 = vmatpush2.msra.mxu0 0.0
  %5086 = vmatprep.subr.mxu0 0.0
  %5087 = vmatpush2.msra.mxu0 0.0
  %5088 = vmatprep.subr.mxu0 0.0
  %5089 = vmatpush2.msra.mxu0 0.0
  %5090 = vmatprep.subr.mxu0 0.0
  %5091 = vmatpush2.msra.mxu0 0.0
  %5092 = vmatprep.subr.mxu0 0.0
  %5093 = vmatpush2.msra.mxu0 0.0
  %5094 = vmatprep.subr.mxu0 0.0
  %5095 = vmatpush2.msra.mxu0 0.0
  %5096 = vmatprep.subr.mxu0 0.0
  %5097 = vmatpush2.msra.mxu0 0.0
  %5098 = vmatprep.subr.mxu0 0.0
  %5099 = vmatpush2.msra.mxu0 0.0
  %5100 = vmatprep.subr.mxu0 0.0
  %5101 = vmatpush2.msra.mxu0 0.0
  %5102 = vmatprep.subr.mxu0 0.0
  %5103 = vmatpush2.msra.mxu0 0.0
  %5104 = vmatprep.subr.mxu0 0.0
  %5105 = vmatpush2.msra.mxu0 0.0
  %5106 = vmatprep.subr.mxu0 0.0
  %5107 = vmatpush2.msra.mxu0 0.0
  %5108 = vmatprep.subr.mxu0 0.0
  %5109 = vmatpush2.msra.mxu0 0.0
  %5110 = vmatprep.subr.mxu0 0.0
  %5111 = vmatpush2.msra.mxu0 0.0
  %5112 = vmatprep.subr.mxu0 0.0
  %5113 = vmatpush2.msra.mxu0 0.0
  %5114 = vmatprep.subr.mxu0 0.0
  %5115 = vmatpush2.msra.mxu0 0.0
  %5116 = vmatprep.mubr.f32.mxu0 0.0
  %5117 = vmatmul.mubr.f32.gmra.mxu0 %v5044
  %v5118 = vpop.f32.mrf.mxu0
  %v5119 = vadd.f32 %v5041, %v5118
  %v5120 = vpop.f32.mrf.mxu0
  %5121 = vmatprep.mubr.f32.mxu0 0.0
  %5122 = vmatmul.mubr.f32.gmra.mxu0 %v5047
  %v5123 = vpop.f32.mrf.mxu0
  %v5124 = vadd.f32 %v5041, %v5123
  %v5125 = vpop.f32.mrf.mxu0
  %5126 = vmatprep.mubr.f32.mxu0 0.0
  %5127 = vmatmul.mubr.f32.gmra.mxu0 %v5050
  %v5128 = vpop.f32.mrf.mxu0
  %v5129 = vadd.f32 %v5041, %v5128
  %v5130 = vpop.f32.mrf.mxu0
  %5131 = vdwg.mxu0
  %v5132 = vmax.f32 %v5119, 0.0
  %v5133 = vmax.f32 %v5124, 0.0
  %v5134 = vmax.f32 %v5129, 0.0
  %v5135 = vld [vmem:[%s20] sm:$0xff]
  %v5136 = vld [vmem:[%s20 + $0x8] sm:$0xff]
  %v5137 = vld [vmem:[%s20 + $0x10] sm:$0xff]
  %v5138 = vld [vmem:[%s20 + $0x18] sm:$0xff]
  %v5139 = vld [vmem:[%s20 + $0x20] sm:$0xff]
  %v5140 = vld [vmem:[%s20 + $0x28] sm:$0xff]
  %v5141 = vld [vmem:[%s20 + $0x30] sm:$0xff]
  %v5142 = vld [vmem:[%s20 + $0x38] sm:$0xff]
  %v5143 = vld [vmem:[%s21] sm:$0x1]
  %v5145 = vlaneseq
  %v5146 = vshrl.u32 %v5145, 7
  %v5147 = vsub.s32 0, %v5146
  %v5148 = vrot.slane %v5143, %v5147
  %vm5150 = vcmask 523264
  %v5152 = vsel %vm5150, %v5132, 0
  %v5155 = vsel %vm5150, %v5133, 0
  %v5158 = vsel %vm5150, %v5134, 0
  %5160 = vmatprep.subr.mxu0 0.0
  %5161 = vmatpush1.msra.mxu0 0.0
  %5162 = vmatprep.subr.mxu0 0.0
  %5163 = vmatpush1.msra.mxu0 0.0
  %5164 = vmatprep.subr.mxu0 0.0
  %5165 = vmatpush1.msra.mxu0 0.0
  %5166 = vmatprep.subr.mxu0 0.0
  %5167 = vmatpush1.msra.mxu0 0.0
  %5168 = vmatprep.subr.mxu0 0.0
  %5169 = vmatpush1.msra.mxu0 0.0
  %5170 = vmatprep.subr.mxu0 0.0
  %5171 = vmatpush1.msra.mxu0 0.0
  %5172 = vmatprep.subr.mxu0 0.0
  %5173 = vmatpush1.msra.mxu0 0.0
  %5174 = vmatprep.subr.mxu0 0.0
  %5175 = vmatpush1.msra.mxu0 0.0
  %5176 = vmatprep.subr.mxu0 0.0
  %5177 = vmatpush1.msra.mxu0 %v5142
  %5178 = vmatprep.subr.mxu0 0.0
  %5179 = vmatpush1.msra.mxu0 %v5141
  %5180 = vmatprep.subr.mxu0 0.0
  %5181 = vmatpush1.msra.mxu0 %v5140
  %5182 = vmatprep.subr.mxu0 0.0
  %5183 = vmatpush1.msra.mxu0 %v5139
  %5184 = vmatprep.subr.mxu0 0.0
  %5185 = vmatpush1.msra.mxu0 %v5138
  %5186 = vmatprep.subr.mxu0 0.0
  %5187 = vmatpush1.msra.mxu0 %v5137
  %5188 = vmatprep.subr.mxu0 0.0
  %5189 = vmatpush1.msra.mxu0 %v5136
  %5190 = vmatprep.subr.mxu0 0.0
  %5191 = vmatpush1.msra.mxu0 %v5135
  %5192 = vmatprep.subr.mxu0 0.0
  %5193 = vmatpush2.msra.mxu0 0.0
  %5194 = vmatprep.subr.mxu0 0.0
  %5195 = vmatpush2.msra.mxu0 0.0
  %5196 = vmatprep.subr.mxu0 0.0
  %5197 = vmatpush2.msra.mxu0 0.0
  %5198 = vmatprep.subr.mxu0 0.0
  %5199 = vmatpush2.msra.mxu0 0.0
  %5200 = vmatprep.subr.mxu0 0.0
  %5201 = vmatpush2.msra.mxu0 0.0
  %5202 = vmatprep.subr.mxu0 0.0
  %5203 = vmatpush2.msra.mxu0 0.0
  %5204 = vmatprep.subr.mxu0 0.0
  %5205 = vmatpush2.msra.mxu0 0.0
  %5206 = vmatprep.subr.mxu0 0.0
  %5207 = vmatpush2.msra.mxu0 0.0
  %5208 = vmatprep.subr.mxu0 0.0
  %5209 = vmatpush2.msra.mxu0 0.0
  %5210 = vmatprep.subr.mxu0 0.0
  %5211 = vmatpush2.msra.mxu0 0.0
  %5212 = vmatprep.subr.mxu0 0.0
  %5213 = vmatpush2.msra.mxu0 0.0
  %5214 = vmatprep.subr.mxu0 0.0
  %5215 = vmatpush2.msra.mxu0 0.0
  %5216 = vmatprep.subr.mxu0 0.0
  %5217 = vmatpush2.msra.mxu0 0.0
  %5218 = vmatprep.subr.mxu0 0.0
  %5219 = vmatpush2.msra.mxu0 0.0
  %5220 = vmatprep.subr.mxu0 0.0
  %5221 = vmatpush2.msra.mxu0 0.0
  %5222 = vmatprep.subr.mxu0 0.0
  %5223 = vmatpush2.msra.mxu0 0.0
  %5224 = vmatprep.mubr.f32.mxu0 0.0
  %5225 = vmatmul.mubr.f32.gmra.mxu0 %v5152
  %v5226 = vpop.f32.mrf.mxu0
  %v5227 = vadd.f32 %v5148, %v5226
  %v5228 = vpop.f32.mrf.mxu0
  %5229 = vmatprep.mubr.f32.mxu0 0.0
  %5230 = vmatmul.mubr.f32.gmra.mxu0 %v5155
  %v5231 = vpop.f32.mrf.mxu0
  %v5232 = vadd.f32 %v5148, %v5231
  %v5233 = vpop.f32.mrf.mxu0
  %5234 = vmatprep.mubr.f32.mxu0 0.0
  %5235 = vmatmul.mubr.f32.gmra.mxu0 %v5158
  %v5236 = vpop.f32.mrf.mxu0
  %v5237 = vadd.f32 %v5148, %v5236
  %v5238 = vpop.f32.mrf.mxu0
  %5239 = vdwg.mxu0
  %v5240 = vadd.f32 %v5029, %v5227
  %v5241 = vadd.f32 %v5030, %v5232
  %v5242 = vadd.f32 %v5031, %v5237
  %v5243 = vld [vmem:[%s16] sm:$0x1]
  %v5244 = vld [vmem:[%s17] sm:$0x1]
  %v5245 = vsel %vm91, %v5240, 0.0
  %5246 = vadd.xlane.f32.xlu0 %v5245
  %v5247 = vpop.xlane.xlu0 %5246
  %v5248 = vsel %vm91, %v5241, 0.0
  %5249 = vadd.xlane.f32.xlu0 %v5248
  %v5250 = vpop.xlane.xlu0 %5249
  %v5251 = vsel %vm91, %v5242, 0.0
  %5252 = vadd.xlane.f32.xlu0 %v5251
  %v5253 = vpop.xlane.xlu0 %5252
  %v5254 = vmul.f32 %v5247, %v2503
  %v5255 = vmul.f32 %v5250, %v2503
  %v5256 = vmul.f32 %v5253, %v2503
  %v5257 = vsub.f32 %v5240, %v5254
  %v5258 = vsub.f32 %v5241, %v5255
  %v5259 = vsub.f32 %v5242, %v5256
  %v5260 = vmul.f32 %v5257, %v5257
  %v5261 = vmul.f32 %v5258, %v5258
  %v5262 = vmul.f32 %v5259, %v5259
  %v5263 = vsel %vm91, %v5260, 0.0
  %5264 = vadd.xlane.f32.xlu0 %v5263
  %v5265 = vpop.xlane.xlu0 %5264
  %v5266 = vsel %vm91, %v5261, 0.0
  %5267 = vadd.xlane.f32.xlu0 %v5266
  %v5268 = vpop.xlane.xlu0 %5267
  %v5269 = vsel %vm91, %v5262, 0.0
  %5270 = vadd.xlane.f32.xlu0 %v5269
  %v5271 = vpop.xlane.xlu0 %5270
  %v5272 = vmul.f32 %v5265, %v2503
  %v5273 = vmul.f32 %v5268, %v2503
  %v5274 = vmul.f32 %v5271, %v2503
  %v5275 = vadd.f32 %v5272, 1e-05
  %v5276 = vadd.f32 %v5273, 1e-05
  %v5277 = vadd.f32 %v5274, 1e-05
  %v5278 = vrsqrt.pop %v5275
  %v5279 = vrsqrt.pop %v5276
  %v5280 = vrsqrt.pop %v5277
  %v5281 = vmul.f32 %v5257, %v5278
  %v5282 = vmul.f32 %v5258, %v5279
  %v5283 = vmul.f32 %v5259, %v5280
  %v5285 = vlaneseq
  %v5286 = vshrl.u32 %v5285, 7
  %v5287 = vsub.s32 0, %v5286
  %v5288 = vrot.slane %v5243, %v5287
  %v5290 = vmul.f32 %v5281, %v5288
  %v5291 = vmul.f32 %v5282, %v5288
  %v5292 = vmul.f32 %v5283, %v5288
  %v5294 = vlaneseq
  %v5295 = vshrl.u32 %v5294, 7
  %v5296 = vsub.s32 0, %v5295
  %v5297 = vrot.slane %v5244, %v5296
  %v5299 = vadd.f32 %v5290, %v5297
  %v5300 = vadd.f32 %v5291, %v5297
  %v5301 = vadd.f32 %v5292, %v5297
  %5302 = vst.msk [vmem:[%s22] sm:$0xff] %vm91, %v5299
  %5303 = vst.msk [vmem:[%s22 + $0x8] sm:$0xff] %vm91, %v5300
  %5304 = vst.msk [vmem:[%s22 + $0x10] sm:$0xff] %vm91, %v5301
  // Predicated region
  $region90: #{_lambda_.10} parent=0 // pred_check
    _
  $region91: #{_lambda_.10} parent=0 // pred_check_branch
    %5306 = sbr.rel (0) target = $region93
  $region92: #{_lambda_.10} parent=0 // pred_region
    _
  $region93: #{_lambda_.10} parent=0 // pred_fallthru
    _
  // Predicated region
  $region94: #{_lambda_.10} parent=0 // pred_check
    _
  $region95: #{_lambda_.10} parent=0 // pred_check_branch
    %5308 = sbr.rel (0) target = $region97
  $region96: #{_lambda_.10} parent=0 // pred_region
    _
  $region97: #{_lambda_.10} parent=0 // pred_fallthru
    _

</llo_original>
